<compile_context>
chip_gen: v7x
topology: tpu7x:2x2x1
jax: 0.10.0
libtpu: 0.0.40
codegen_flags: <defaults>
</compile_context>

<pallas_src>
import functools
import math

import numpy as np
import jax
import jax.numpy as jnp
from jax import lax
from jax.experimental import pallas as pl
from jax.experimental.pallas import tpu as pltpu

NUM_HEADS = 2
# Safe on all generations: v7x has 64 MiB physical VMEM/TC (32 MiB scoped default),
# v5e/v6e have 128 MiB. Tiles below are sized to stay far under this.
_VMEM_LIMIT = 32 * 1024 * 1024


def _round_up(x, m):
    return (x + m - 1) // m * m


# ----------------------------------------------------------------------------
# Pallas kernels
# ----------------------------------------------------------------------------
def _linear_kernel(activation, x_ref, w_ref, b_ref, o_ref, acc_ref):
    @pl.when(pl.program_id(2) == 0)
    def _():
        acc_ref[...] = jnp.zeros_like(acc_ref)

    acc_ref[...] += jnp.dot(x_ref[...], w_ref[...],
                            preferred_element_type=jnp.float32)

    @pl.when(pl.program_id(2) == pl.num_programs(2) - 1)
    def _():
        y = acc_ref[...] + b_ref[...]
        if activation == "relu":
            y = jnp.maximum(y, 0.0)
        elif activation == "gelu":
            y = jax.nn.gelu(y)
        o_ref[...] = y.astype(o_ref.dtype)


def pallas_linear(x2d, w, b, activation=None):
    """Tiled (M,K)@(K,N)+bias(+act): bf16 operands, f32 accumulation, padded lane-dense."""
    M, K = x2d.shape
    Kw, N = w.shape
    assert K == Kw
    tm = min(512, _round_up(M, 8))
    tn = min(256, _round_up(N, 128))
    tk = min(256, _round_up(K, 128))
    Mp, Np, Kp = _round_up(M, tm), _round_up(N, tn), _round_up(K, tk)

    xb = x2d.astype(jnp.bfloat16)
    wb = w.astype(jnp.bfloat16)
    if (Mp, Kp) != (M, K):
        xb = jnp.pad(xb, ((0, Mp - M), (0, Kp - K)))
    if (Kp, Np) != (K, N):
        wb = jnp.pad(wb, ((0, Kp - K), (0, Np - N)))
    bf = b.astype(jnp.float32)
    if Np != N:
        bf = jnp.pad(bf, (0, Np - N))

    out = pl.pallas_call(
        functools.partial(_linear_kernel, activation),
        grid_spec=pltpu.PrefetchScalarGridSpec(
            num_scalar_prefetch=0,
            grid=(Mp // tm, Np // tn, Kp // tk),
            in_specs=[
                pl.BlockSpec((tm, tk), lambda i, j, k: (i, k)),
                pl.BlockSpec((tk, tn), lambda i, j, k: (k, j)),
                pl.BlockSpec((1, tn), lambda i, j, k: (0, j)),
            ],
            out_specs=pl.BlockSpec((tm, tn), lambda i, j, k: (i, j)),
            scratch_shapes=[pltpu.VMEM((tm, tn), jnp.float32)],
        ),
        out_shape=jax.ShapeDtypeStruct((Mp, Np), jnp.float32),
        compiler_params=pltpu.CompilerParams(
            dimension_semantics=("parallel", "parallel", "arbitrary"),
            vmem_limit_bytes=_VMEM_LIMIT),
    )(xb, wb, bf.reshape(1, Np))
    if (Mp, Np) != (M, N):
        out = out[:M, :N]
    return out


def _mha_kernel(scale, num_heads, q_ref, k_ref, v_ref, o_ref):
    # Heads are sliced along the lane dimension inside the kernel, so the JAX
    # wrapper never round-trips head transposes through HBM.
    # TODO(synk): switch to an online-softmax (flash) loop over Tk tiles for
    # production sequence lengths (v5e scoped-VMEM budget); at these shapes the
    # full score matrix easily fits VMEM.
    q = q_ref[0]
    k = k_ref[0]
    v = v_ref[0]
    dh = q.shape[-1] // num_heads
    outs = []
    for h in range(num_heads):
        qh = q[:, h * dh:(h + 1) * dh].astype(jnp.bfloat16)
        kh = k[:, h * dh:(h + 1) * dh].astype(jnp.bfloat16)
        vh = v[:, h * dh:(h + 1) * dh].astype(jnp.bfloat16)
        s = lax.dot_general(qh, kh, (((1,), (1,)), ((), ())),
                            preferred_element_type=jnp.float32) * scale
        m = jnp.max(s, axis=-1, keepdims=True)
        p = jnp.exp(s - m)
        denom = jnp.sum(p, axis=-1, keepdims=True)
        a = (p * pl.reciprocal(denom, approx=True)).astype(jnp.bfloat16)
        outs.append(jnp.dot(a, vh, preferred_element_type=jnp.float32))
    o_ref[0] = jnp.concatenate(outs, axis=-1).astype(o_ref.dtype)


def pallas_mha(q, k, v, num_heads):
    # q: (B, Tq, D), k/v: (B, Tk, D); heads handled in-kernel.
    B, Tq, D = q.shape
    _, Tk, _ = k.shape
    scale = 1.0 / math.sqrt(D // num_heads)
    return pl.pallas_call(
        functools.partial(_mha_kernel, scale, num_heads),
        grid=(B,),
        in_specs=[pl.BlockSpec((1, Tq, D), lambda i: (i, 0, 0)),
                  pl.BlockSpec((1, Tk, D), lambda i: (i, 0, 0)),
                  pl.BlockSpec((1, Tk, D), lambda i: (i, 0, 0))],
        out_specs=pl.BlockSpec((1, Tq, D), lambda i: (i, 0, 0)),
        out_shape=jax.ShapeDtypeStruct((B, Tq, D), jnp.float32),
        compiler_params=pltpu.CompilerParams(
            dimension_semantics=("parallel",),
            vmem_limit_bytes=_VMEM_LIMIT),
    )(q, k, v)


def _ln_kernel(eps, x_ref, g_ref, b_ref, o_ref):
    x = x_ref[...].astype(jnp.float32)
    mu = jnp.mean(x, axis=-1, keepdims=True)
    var = jnp.mean(jnp.square(x - mu), axis=-1, keepdims=True)
    y = (x - mu) * lax.rsqrt(var + eps)
    o_ref[...] = (y * g_ref[...] + b_ref[...]).astype(o_ref.dtype)


def pallas_layernorm(x2d, g, b, eps=1e-5):
    M, D = x2d.shape
    tm = min(512, _round_up(M, 8))
    Mp = _round_up(M, tm)
    xp = jnp.pad(x2d, ((0, Mp - M), (0, 0))) if Mp != M else x2d
    out = pl.pallas_call(
        functools.partial(_ln_kernel, eps),
        grid=(Mp // tm,),
        in_specs=[pl.BlockSpec((tm, D), lambda i: (i, 0)),
                  pl.BlockSpec((1, D), lambda i: (0, 0)),
                  pl.BlockSpec((1, D), lambda i: (0, 0))],
        out_specs=pl.BlockSpec((tm, D), lambda i: (i, 0)),
        out_shape=jax.ShapeDtypeStruct((Mp, D), jnp.float32),
        compiler_params=pltpu.CompilerParams(
            dimension_semantics=("parallel",),
            vmem_limit_bytes=_VMEM_LIMIT),
    )(xp, g.reshape(1, D), b.reshape(1, D))
    return out[:M] if Mp != M else out


def _bias_act_kernel(activation, x_ref, b_ref, o_ref):
    y = x_ref[...].astype(jnp.float32) + b_ref[...]
    if activation == "relu":
        y = jnp.maximum(y, 0.0)
    o_ref[...] = y.astype(o_ref.dtype)


def pallas_bias_act(x2d, brow, activation="relu"):
    M, D = x2d.shape
    tm = min(512, _round_up(M, 8))
    Mp = _round_up(M, tm)
    xp = jnp.pad(x2d, ((0, Mp - M), (0, 0))) if Mp != M else x2d
    out = pl.pallas_call(
        functools.partial(_bias_act_kernel, activation),
        grid=(Mp // tm,),
        in_specs=[pl.BlockSpec((tm, D), lambda i: (i, 0)),
                  pl.BlockSpec((1, D), lambda i: (0, 0))],
        out_specs=pl.BlockSpec((tm, D), lambda i: (i, 0)),
        out_shape=jax.ShapeDtypeStruct((Mp, D), jnp.float32),
        compiler_params=pltpu.CompilerParams(
            dimension_semantics=("parallel",),
            vmem_limit_bytes=_VMEM_LIMIT),
    )(xp, brow.reshape(1, D))
    return out[:M] if Mp != M else out


def _kl_kernel(m_ref, lv_ref, o_ref):
    # Accumulates a single scalar (replicated over 128 lanes -> lane-dense store)
    # across the sequential grid; zero-padded rows contribute exactly 0.
    @pl.when(pl.program_id(0) == 0)
    def _():
        o_ref[...] = jnp.zeros_like(o_ref)
    m = m_ref[...].astype(jnp.float32)
    lv = lv_ref[...].astype(jnp.float32)
    part = jnp.sum(jnp.exp(lv) + m * m - lv - 1.0)
    o_ref[...] = o_ref[...] + part


def pallas_kl_total(means2d, log_vars2d):
    M, D = means2d.shape
    tm = min(512, _round_up(M, 8))
    Mp = _round_up(M, tm)
    if Mp != M:
        means2d = jnp.pad(means2d, ((0, Mp - M), (0, 0)))
        log_vars2d = jnp.pad(log_vars2d, ((0, Mp - M), (0, 0)))
    out = pl.pallas_call(
        _kl_kernel,
        grid=(Mp // tm,),
        in_specs=[pl.BlockSpec((tm, D), lambda i: (i, 0)),
                  pl.BlockSpec((tm, D), lambda i: (i, 0))],
        out_specs=pl.BlockSpec((1, 128), lambda i: (0, 0)),
        out_shape=jax.ShapeDtypeStruct((1, 128), jnp.float32),
        compiler_params=pltpu.CompilerParams(
            dimension_semantics=("arbitrary",),
            vmem_limit_bytes=_VMEM_LIMIT),
    )(means2d, log_vars2d)
    return out[0, 0]


def _mix_kernel(x_ref, n_ref, k_ref, o_ref):
    k = k_ref[...]
    o_ref[...] = k * x_ref[...] + (1.0 - k) * n_ref[...]


def pallas_priority_mix(x2d, noise2d, k2d):
    M, D = x2d.shape
    tm = min(512, _round_up(M, 8))
    Mp = _round_up(M, tm)
    if Mp != M:
        x2d = jnp.pad(x2d, ((0, Mp - M), (0, 0)))
        noise2d = jnp.pad(noise2d, ((0, Mp - M), (0, 0)))
        k2d = jnp.pad(k2d, ((0, Mp - M), (0, 0)))
    out = pl.pallas_call(
        _mix_kernel,
        grid=(Mp // tm,),
        in_specs=[pl.BlockSpec((tm, D), lambda i: (i, 0)),
                  pl.BlockSpec((tm, D), lambda i: (i, 0)),
                  pl.BlockSpec((tm, 1), lambda i: (i, 0))],
        out_specs=pl.BlockSpec((tm, D), lambda i: (i, 0)),
        out_shape=jax.ShapeDtypeStruct((Mp, D), jnp.float32),
        compiler_params=pltpu.CompilerParams(
            dimension_semantics=("parallel",),
            vmem_limit_bytes=_VMEM_LIMIT),
    )(x2d, noise2d, k2d)
    return out[:M] if Mp != M else out


# ----------------------------------------------------------------------------
# Parameter construction (deterministic, in-script)
# params: arrays only (safe to pass through jax.jit)
# meta:   static Python config (strides, token grids) closed over, never jitted
# ----------------------------------------------------------------------------
class KeyGen:
    def __init__(self, seed):
        self.key = jax.random.PRNGKey(seed)

    def __call__(self):
        self.key, sub = jax.random.split(self.key)
        return sub


def init_linear(kg, din, dout):
    # Weights stored bf16 (MXU-native operand dtype); bias kept f32.
    w = jax.random.normal(kg(), (din, dout), jnp.float32) / np.sqrt(din)
    return {"w": w.astype(jnp.bfloat16), "b": jnp.zeros((dout,), jnp.float32)}


def init_attn(kg, d):
    # Fused QKV projection: one (D, 3D) matmul instead of three (D, D) matmuls.
    wqkv = jax.random.normal(kg(), (d, 3 * d), jnp.float32) / np.sqrt(d)
    wo = jax.random.normal(kg(), (d, d), jnp.float32) / np.sqrt(d)
    return {"wqkv": wqkv.astype(jnp.bfloat16),
            "bqkv": jnp.zeros((3 * d,), jnp.float32),
            "wo": wo.astype(jnp.bfloat16),
            "bo": jnp.zeros((d,), jnp.float32)}


def init_transformer(kg, input_dim, output_dim, input_size, num_blocks,
                     embed_dim, cross_n):
    T = int(np.prod(input_size))
    blocks = []
    for _ in range(num_blocks):
        blocks.append({
            "ln1_g": jnp.ones((embed_dim,), jnp.float32),
            "ln1_b": jnp.zeros((embed_dim,), jnp.float32),
            "attn": init_attn(kg, embed_dim),
            "cross": [{"ln_g": jnp.ones((embed_dim,), jnp.float32),
                       "ln_b": jnp.zeros((embed_dim,), jnp.float32),
                       "attn": init_attn(kg, embed_dim)} for _ in range(cross_n)],
            "ln2_g": jnp.ones((embed_dim,), jnp.float32),
            "ln2_b": jnp.zeros((embed_dim,), jnp.float32),
            "fc1": init_linear(kg, embed_dim, 4 * embed_dim),
            "fc2": init_linear(kg, 4 * embed_dim, embed_dim),
        })
    return {"in_proj": init_linear(kg, input_dim, embed_dim),
            "pos": jax.random.normal(kg(), (T, embed_dim), jnp.float32) * 0.02,
            "blocks": blocks,
            "lnf_g": jnp.ones((embed_dim,), jnp.float32),
            "lnf_b": jnp.zeros((embed_dim,), jnp.float32),
            "out_proj": init_linear(kg, embed_dim, output_dim)}


def init_cnn(kg, convrec, convrepeat):
    # TODO(synk): original CNN source not provided; each channel stage is one
    # stride-2 3x3 conv followed by (convrepeat-1) stride-1 3x3 convs + ReLU.
    # Returns (layers, strides): strides is a STATIC Python tuple (kept out of
    # the jit-traced params pytree so conv_general_dilated sees plain ints).
    layers, strides = [], []
    for i in range(len(convrec) - 1):
        cin, cout = convrec[i], convrec[i + 1]
        layers.append({"w": jax.random.normal(kg(), (3, 3, cin, cout), jnp.float32)
                             / np.sqrt(9 * cin),
                       "b": jnp.zeros((cout,), jnp.float32)})
        strides.append(2)
        for _ in range(convrepeat - 1):
            layers.append({"w": jax.random.normal(kg(), (3, 3, cout, cout), jnp.float32)
                                 / np.sqrt(9 * cout),
                           "b": jnp.zeros((cout,), jnp.float32)})
            strides.append(1)
    return layers, tuple(strides)


def cnn_reduction_factor(convrec):
    return 2 ** (len(convrec) - 1)


# ----------------------------------------------------------------------------
# Forward pieces (JAX glue orchestrating Pallas kernels)
# ----------------------------------------------------------------------------
def conv2d_relu(x, w, b, stride):
    # Spatial gather via XLA conv (avoids materializing a 9x im2col tensor in
    # HBM); bias + ReLU epilogue runs in a lane-dense Pallas kernel over
    # (B*H, W*C) rows.
    y = lax.conv_general_dilated(
        x, w, window_strides=(stride, stride), padding=((1, 1), (1, 1)),
        dimension_numbers=("NHWC", "HWIO", "NHWC"))
    B, oh, ow, C = y.shape
    brow = jnp.tile(b, ow)                       # (ow*C,) matches (ow, C) flatten
    out = pallas_bias_act(y.reshape(B * oh, ow * C), brow, activation="relu")
    return out.reshape(B, oh, ow, C)


def cnn_forward(layers, strides, x):
    for l, s in zip(layers, strides):
        x = conv2d_relu(x, l["w"], l["b"], s)
    return x


def mha(x, ctx, p, num_heads):
    B, T, D = x.shape
    _, Tc, _ = ctx.shape
    if x is ctx:
        # self-attention: fused QKV projection (one matmul, lane-dense N=3D)
        qkv = pallas_linear(x.reshape(B * T, D), p["wqkv"], p["bqkv"])
        q, k, v = jnp.split(qkv.reshape(B, T, 3 * D), 3, axis=-1)
    else:
        # cross-attention: Q from x, fused KV projection from ctx
        q = pallas_linear(x.reshape(B * T, D), p["wqkv"][:, :D],
                          p["bqkv"][:D]).reshape(B, T, D)
        kv = pallas_linear(ctx.reshape(B * Tc, D), p["wqkv"][:, D:],
                           p["bqkv"][D:]).reshape(B, Tc, 2 * D)
        k, v = jnp.split(kv, 2, axis=-1)
    o = pallas_mha(q, k, v, num_heads)           # heads handled inside kernel
    return pallas_linear(o.reshape(B * T, D), p["wo"], p["bo"]).reshape(B, T, D)


def transformer_forward(p, x, crosses, input_size, num_heads, rearrange_back,
                        x_is_zero=False):
    # TODO(synk): original Transformer source not provided; standard pre-LN
    # blocks: self-attn -> cross_n cross-attns -> GELU MLP, learned pos-emb.
    B = x.shape[0]
    T = int(np.prod(input_size))
    D = p["pos"].shape[-1]
    if x_is_zero:
        # all-zero feed => in_proj reduces to its bias: skip the matmul entirely
        h = jnp.broadcast_to(p["in_proj"]["b"][None, :], (B * T, D))
    else:
        input_dim = x.shape[-1]
        h = pallas_linear(x.reshape(B * T, input_dim),
                          p["in_proj"]["w"], p["in_proj"]["b"])
    h = h.reshape(B, T, D) + p["pos"][None]
    for blk in p["blocks"]:
        n = pallas_layernorm(h.reshape(B * T, D), blk["ln1_g"], blk["ln1_b"]).reshape(B, T, D)
        h = h + mha(n, n, blk["attn"], num_heads)
        for cp, cx in zip(blk["cross"], crosses):
            n = pallas_layernorm(h.reshape(B * T, D), cp["ln_g"], cp["ln_b"]).reshape(B, T, D)
            h = h + mha(n, cx, cp["attn"], num_heads)
        n = pallas_layernorm(h.reshape(B * T, D), blk["ln2_g"], blk["ln2_b"])
        m = pallas_linear(n, blk["fc1"]["w"], blk["fc1"]["b"], activation="gelu")
        m = pallas_linear(m, blk["fc2"]["w"], blk["fc2"]["b"])
        h = h + m.reshape(B, T, D)
    n = pallas_layernorm(h.reshape(B * T, D), p["lnf_g"], p["lnf_b"])
    y = pallas_linear(n, p["out_proj"]["w"], p["out_proj"]["b"])
    out_dim = y.shape[-1]
    y = y.reshape(B, T, out_dim)
    if rearrange_back and len(input_size) > 1:
        y = y.reshape((B,) + tuple(input_size) + (out_dim,))
    return y


# ----------------------------------------------------------------------------
# EchoMorph parameters / model
# ----------------------------------------------------------------------------
class EchoMorphParameters:
    def __init__(self, **kwargs):
        one_sec_len = round(24000 / 84 / 64) * 64
        self.target_sample_len = one_sec_len // 16
        self.history_len = one_sec_len // 16
        self.fragment_len = one_sec_len // 16
        assert self.target_sample_len == self.history_len
        self.spect_width = 128
        self.length_of_patch = 8
        self.embed_dim = 128
        self.bottleneck_dim = 32
        self.se_convrec = (3, 8, 16)
        self.se_convrepeat = 4
        self.se_blocks = 12
        self.se_output_tokens = 512
        self.ae_convrec = (3, 8, 16)
        self.ae_convrepeat = 4
        self.ae_blocks = 6
        self.rs_blocks = 6
        self.ad_blocks = 12
        self.rm_k_min = 0.5
        self.rm_k_max = 1.0
        self.rm_fun = "lin"
        self.se_kl_loss_k = 0.0
        for key, value in kwargs.items():
            setattr(self, key, value)


def init_echomorph(pars, seed=0):
    kg = KeyGen(seed)
    se_red = cnn_reduction_factor(pars.se_convrec)
    ae_red = cnn_reduction_factor(pars.ae_convrec)
    se_tr_size = (pars.history_len // se_red, pars.spect_width // se_red)
    ae_tr_size = (pars.fragment_len // ae_red, pars.spect_width // ae_red)
    ae_num_tokens = ae_tr_size[0] * ae_tr_size[1]

    se_cnn, se_strides = init_cnn(kg, pars.se_convrec, pars.se_convrepeat)
    ae_cnn, ae_strides = init_cnn(kg, pars.ae_convrec, pars.ae_convrepeat)

    params = {
        "se": {
            "cnn": se_cnn,
            "tr": init_transformer(kg, pars.se_convrec[-1], pars.embed_dim,
                                   se_tr_size, pars.se_blocks, pars.embed_dim, 0),
            "mean": init_linear(kg, pars.embed_dim, pars.embed_dim),
            "log_var": init_linear(kg, pars.embed_dim, pars.embed_dim),
        },
        "ae": {
            "cnn": ae_cnn,
            "tr": init_transformer(kg, pars.ae_convrec[-1], pars.bottleneck_dim,
                                   ae_tr_size, pars.ae_blocks, pars.embed_dim, 1),
        },
        "rs": init_transformer(kg, pars.bottleneck_dim, pars.embed_dim,
                               (ae_num_tokens,), pars.rs_blocks, pars.embed_dim, 0),
        "ad": init_transformer(kg, 1, 3 * pars.length_of_patch,
                               (pars.fragment_len // pars.length_of_patch, pars.spect_width),
                               pars.ad_blocks, pars.embed_dim, 2),
    }
    meta = {
        "se": {"strides": se_strides, "tr_size": se_tr_size},
        "ae": {"strides": ae_strides, "tr_size": ae_tr_size},
        "ae_num_tokens": ae_num_tokens,
    }
    return params, meta


def speaker_vae_forward_train(p, m, pars, x, noise_key):
    if x.ndim < 4:
        x = x[None]
    h = cnn_forward(p["cnn"], m["strides"], x)
    tok = transformer_forward(p["tr"], h, [], m["tr_size"], NUM_HEADS, rearrange_back=False)
    ret = tok[..., :pars.se_output_tokens, :]
    B, T, D = ret.shape
    flat = ret.reshape(B * T, D)
    means = pallas_linear(flat, p["mean"]["w"], p["mean"]["b"])
    log_vars = pallas_linear(flat, p["log_var"]["w"], p["log_var"]["b"])
    kl_loss = 0.5 * pallas_kl_total(means, log_vars) / (B * T)
    eps = jax.random.normal(noise_key, means.shape, means.dtype)
    z = jnp.exp(0.5 * log_vars) * eps + means
    return z.reshape(B, T, D), kl_loss


def audio_encoder_forward(p, m, x, cross):
    h = cnn_forward(p["cnn"], m["strides"], x)
    return transformer_forward(p["tr"], h, [cross], m["tr_size"], NUM_HEADS,
                               rearrange_back=False)


def priority_noise(x, k_min, k_max, key):
    # TODO(synk): PriorityNoise source not provided; 'lin' interpolation of a
    # per-token priority k in [k_min, k_max] mixing signal with gaussian noise.
    B, T, D = x.shape
    k_key, n_key = jax.random.split(key)
    k = k_min + (k_max - k_min) * jax.random.uniform(k_key, (B * T, 1), x.dtype)
    noise = jax.random.normal(n_key, (B * T, D), x.dtype)
    return pallas_priority_mix(x.reshape(B * T, D), noise, k).reshape(B, T, D)


def audio_decoder_forward(p, pars, im, sc):
    B = im.shape[0]
    l = pars.fragment_len // pars.length_of_patch
    w = pars.spect_width
    ld = pars.length_of_patch
    feed = jnp.zeros((B, l, w, 1), im.dtype)     # shape carrier only (in_proj skipped)
    x = transformer_forward(p, feed, [im, sc], (l, w), NUM_HEADS,
                            rearrange_back=True, x_is_zero=True)
    # einops '... l w (c ld) -> ... (l ld) w c'
    x = x.reshape(B, l, w, 3, ld)
    x = jnp.transpose(x, (0, 1, 4, 2, 3))
    return x.reshape(B, l * ld, w, 3)


def echomorph_forward(params, meta, pars, target_sample, source_fragment, rng):
    k1, k2 = jax.random.split(rng)
    speaker_characteristic, se_loss = speaker_vae_forward_train(
        params["se"], meta["se"], pars, target_sample, k1)
    intermediate = audio_encoder_forward(params["ae"], meta["ae"], source_fragment,
                                         speaker_characteristic)
    intermediate = priority_noise(intermediate, pars.rm_k_min, pars.rm_k_max, k2)
    intermediate = transformer_forward(params["rs"], intermediate, [],
                                       (meta["ae_num_tokens"],), NUM_HEADS, True)
    output = audio_decoder_forward(params["ad"], pars, intermediate,
                                   speaker_characteristic)
    extra_loss = pars.se_kl_loss_k * se_loss
    return output, extra_loss


# ----------------------------------------------------------------------------
if __name__ == "__main__":
    pars = EchoMorphParameters(
        spect_width=16, length_of_patch=8, embed_dim=32, bottleneck_dim=16,
        se_convrec=(3, 4, 8), se_convrepeat=1, se_blocks=2, se_output_tokens=8,
        ae_convrec=(3, 4, 8), ae_convrepeat=1, ae_blocks=2,
        rs_blocks=2, ad_blocks=2,
    )
    params, meta = init_echomorph(pars, seed=0)

    key = jax.random.PRNGKey(0)
    k_t, k_s, k_fwd = jax.random.split(key, 3)
    # (B, time, spect_width, 3) NHWC spectrogram-like inputs
    target_sample = jax.random.normal(k_t, (2, pars.history_len, pars.spect_width, 3),
                                      jnp.float32)
    source_fragment = jax.random.normal(k_s, (2, pars.fragment_len, pars.spect_width, 3),
                                        jnp.float32)

    # meta/pars are static Python config closed over here (NOT jit arguments),
    # so strides / token grids stay concrete ints during tracing.
    fwd = jax.jit(lambda prm, ts, sf, k: echomorph_forward(prm, meta, pars, ts, sf, k))
    out, extra_loss = fwd(params, target_sample, source_fragment, k_fwd)
    out = jax.block_until_ready(out)
    extra_loss = jax.block_until_ready(extra_loss)

    assert out.shape == (2, pars.fragment_len, pars.spect_width, 3), out.shape
    assert jnp.all(jnp.isfinite(out)), "non-finite output"
    assert bool(jnp.isfinite(extra_loss)), "non-finite loss"
    print("KERNEL_OK")
</pallas_src>

<mosaic_0001>
module attributes {stable_mosaic.version = 11 : i64} {
  func.func @_bias_act_kernel(%arg0: i32, %arg1: memref<16x32xf32, #tpu.memory_space<vmem>>, %arg2: memref<1x32xf32, #tpu.memory_space<vmem>>, %arg3: memref<16x32xf32, #tpu.memory_space<vmem>>) attributes {dimension_semantics = [#tpu.dimension_semantics<parallel>], iteration_bounds = array<i64: 1>, scalar_prefetch = 0 : i64, scratch_operands = 0 : i64, tpu.core_type = #tpu.core_type<tc>, window_params = [{transform_indices = @transform_0, window_bounds = array<i64: 16, 32>}, {pipeline_mode = #tpu.pipeline_mode<synchronous>, transform_indices = @transform_1, window_bounds = array<i64: 1, 32>}, {transform_indices = @transform_2, window_bounds = array<i64: 16, 32>}]} {
    %c0 = arith.constant 0 : index
    %c0_0 = arith.constant 0 : index
    %0 = vector.load %arg1[%c0, %c0_0] : memref<16x32xf32, #tpu.memory_space<vmem>>, vector<16x32xf32>
    %c0_1 = arith.constant 0 : index
    %c0_2 = arith.constant 0 : index
    %1 = vector.load %arg2[%c0_1, %c0_2] : memref<1x32xf32, #tpu.memory_space<vmem>>, vector<1x32xf32>
    %2 = vector.broadcast %1 : vector<1x32xf32> to vector<16x32xf32>
    %3 = arith.addf %0, %2 : vector<16x32xf32>
    %cst = arith.constant 0.000000e+00 : f32
    %4 = vector.broadcast %cst : f32 to vector<16x32xf32>
    %5 = arith.maximumf %3, %4 : vector<16x32xf32>
    %c0_3 = arith.constant 0 : index
    %c0_4 = arith.constant 0 : index
    %6 = vector.load %arg3[%c0_3, %c0_4] : memref<16x32xf32, #tpu.memory_space<vmem>>, vector<16x32xf32>
    tpu.vector_store %arg3[%c0_3, %c0_4], %5 {strides = array<i32>} : memref<16x32xf32, #tpu.memory_space<vmem>>, vector<16x32xf32>,
    return
  }
  func.func @transform_0(%arg0: i32) -> (i32, i32) {
    %c0_i32 = arith.constant 0 : i32
    %c0_i32_0 = arith.constant 0 : i32
    return %arg0, %c0_i32 : i32, i32
  }
  func.func @transform_1(%arg0: i32) -> (i32, i32) {
    %c0_i32 = arith.constant 0 : i32
    %c0_i32_0 = arith.constant 0 : i32
    %c0_i32_1 = arith.constant 0 : i32
    return %c0_i32, %c0_i32_0 : i32, i32
  }
  func.func @transform_2(%arg0: i32) -> (i32, i32) {
    %c0_i32 = arith.constant 0 : i32
    %c0_i32_0 = arith.constant 0 : i32
    return %arg0, %c0_i32 : i32, i32
  }
}

module attributes {stable_mosaic.version = 11 : i64} {
  func.func @_linear_kernel(%arg0: i32, %arg1: i32, %arg2: i32, %arg3: memref<32x128xbf16, #tpu.memory_space<vmem>>, %arg4: memref<128x128xbf16, #tpu.memory_space<vmem>>, %arg5: memref<1x128xf32, #tpu.memory_space<vmem>>, %arg6: memref<32x128xf32, #tpu.memory_space<vmem>>, %arg7: memref<32x128xf32, #tpu.memory_space<vmem>>) attributes {dimension_semantics = [#tpu.dimension_semantics<parallel>, #tpu.dimension_semantics<parallel>, #tpu.dimension_semantics<arbitrary>], iteration_bounds = array<i64: 1, 1, 1>, scalar_prefetch = 0 : i64, scratch_operands = 1 : i64, tpu.core_type = #tpu.core_type<tc>, window_params = [{transform_indices = @transform_0, window_bounds = array<i64: 32, 128>}, {transform_indices = @transform_1, window_bounds = array<i64: 128, 128>}, {transform_indices = @transform_2, window_bounds = array<i64: 1, 128>}, {transform_indices = @transform_3, window_bounds = array<i64: 32, 128>}]} {
    %c0_i32 = arith.constant 0 : i32
    %0 = arith.cmpi eq, %arg2, %c0_i32 : i32
    %1 = arith.extui %0 : i1 to i32
    %c0_i32_0 = arith.constant 0 : i32
    %2 = arith.cmpi ne, %1, %c0_i32_0 : i32
    scf.if %2 {
      %cst_10 = arith.constant 0.000000e+00 : f32
      %12 = vector.broadcast %cst_10 : f32 to vector<32x128xf32>
      %c0_11 = arith.constant 0 : index
      %c0_12 = arith.constant 0 : index
      %13 = vector.load %arg7[%c0_11, %c0_12] : memref<32x128xf32, #tpu.memory_space<vmem>>, vector<32x128xf32>
      tpu.vector_store %arg7[%c0_11, %c0_12], %12 {strides = array<i32>} : memref<32x128xf32, #tpu.memory_space<vmem>>, vector<32x128xf32>,
    } else {
    }
    %c0 = arith.constant 0 : index
    %c0_1 = arith.constant 0 : index
    %3 = vector.load %arg7[%c0, %c0_1] : memref<32x128xf32, #tpu.memory_space<vmem>>, vector<32x128xf32>
    %c0_2 = arith.constant 0 : index
    %c0_3 = arith.constant 0 : index
    %4 = vector.load %arg3[%c0_2, %c0_3] : memref<32x128xbf16, #tpu.memory_space<vmem>>, vector<32x128xbf16>
    %c0_4 = arith.constant 0 : index
    %c0_5 = arith.constant 0 : index
    %5 = vector.load %arg4[%c0_4, %c0_5] : memref<128x128xbf16, #tpu.memory_space<vmem>>, vector<128x128xbf16>
    %cst = arith.constant dense<0.000000e+00> : vector<32x128xf32>
    %6 = tpu.matmul %4, %5, %cst {dimension_numbers = #tpu.dot_dimension_numbers<[1], [0], [0], [1], [0, 0, 1, 1], [], []>} : vector<32x128xbf16>, vector<128x128xbf16>, vector<32x128xf32> -> vector<32x128xf32>
    %7 = arith.addf %3, %6 : vector<32x128xf32>
    %c0_6 = arith.constant 0 : index
    %c0_7 = arith.constant 0 : index
    %8 = vector.load %arg7[%c0_6, %c0_7] : memref<32x128xf32, #tpu.memory_space<vmem>>, vector<32x128xf32>
    tpu.vector_store %arg7[%c0_6, %c0_7], %7 {strides = array<i32>} : memref<32x128xf32, #tpu.memory_space<vmem>>, vector<32x128xf32>,
    %c0_i32_8 = arith.constant 0 : i32
    %9 = arith.cmpi eq, %arg2, %c0_i32_8 : i32
    %10 = arith.extui %9 : i1 to i32
    %c0_i32_9 = arith.constant 0 : i32
    %11 = arith.cmpi ne, %10, %c0_i32_9 : i32
    scf.if %11 {
      %c0_10 = arith.constant 0 : index
      %c0_11 = arith.constant 0 : index
      %12 = vector.load %arg7[%c0_10, %c0_11] : memref<32x128xf32, #tpu.memory_space<vmem>>, vector<32x128xf32>
      %c0_12 = arith.constant 0 : index
      %c0_13 = arith.constant 0 : index
      %13 = vector.load %arg5[%c0_12, %c0_13] : memref<1x128xf32, #tpu.memory_space<vmem>>, vector<1x128xf32>
      %14 = vector.broadcast %13 : vector<1x128xf32> to vector<32x128xf32>
      %15 = arith.addf %12, %14 : vector<32x128xf32>
      %c0_14 = arith.constant 0 : index
      %c0_15 = arith.constant 0 : index
      %16 = vector.load %arg6[%c0_14, %c0_15] : memref<32x128xf32, #tpu.memory_space<vmem>>, vector<32x128xf32>
      tpu.vector_store %arg6[%c0_14, %c0_15], %15 {strides = array<i32>} : memref<32x128xf32, #tpu.memory_space<vmem>>, vector<32x128xf32>,
    } else {
    }
    return
  }
  func.func @transform_0(%arg0: i32, %arg1: i32, %arg2: i32) -> (i32, i32) {
    %c0_i32 = arith.constant 0 : i32
    return %arg0, %arg2 : i32, i32
  }
  func.func @transform_1(%arg0: i32, %arg1: i32, %arg2: i32) -> (i32, i32) {
    %c0_i32 = arith.constant 0 : i32
    return %arg2, %arg1 : i32, i32
  }
  func.func @transform_2(%arg0: i32, %arg1: i32, %arg2: i32) -> (i32, i32) {
    %c0_i32 = arith.constant 0 : i32
    %c0_i32_0 = arith.constant 0 : i32
    return %c0_i32, %arg1 : i32, i32
  }
  func.func @transform_3(%arg0: i32, %arg1: i32, %arg2: i32) -> (i32, i32) {
    %c0_i32 = arith.constant 0 : i32
    return %arg0, %arg1 : i32, i32
  }
}

module attributes {stable_mosaic.version = 11 : i64} {
  func.func @_bias_act_kernel(%arg0: i32, %arg1: memref<8x32xf32, #tpu.memory_space<vmem>>, %arg2: memref<1x32xf32, #tpu.memory_space<vmem>>, %arg3: memref<8x32xf32, #tpu.memory_space<vmem>>) attributes {dimension_semantics = [#tpu.dimension_semantics<parallel>], iteration_bounds = array<i64: 1>, scalar_prefetch = 0 : i64, scratch_operands = 0 : i64, tpu.core_type = #tpu.core_type<tc>, window_params = [{transform_indices = @transform_0, window_bounds = array<i64: 8, 32>}, {pipeline_mode = #tpu.pipeline_mode<synchronous>, transform_indices = @transform_1, window_bounds = array<i64: 1, 32>}, {transform_indices = @transform_2, window_bounds = array<i64: 8, 32>}]} {
    %c0 = arith.constant 0 : index
    %c0_0 = arith.constant 0 : index
    %0 = vector.load %arg1[%c0, %c0_0] : memref<8x32xf32, #tpu.memory_space<vmem>>, vector<8x32xf32>
    %c0_1 = arith.constant 0 : index
    %c0_2 = arith.constant 0 : index
    %1 = vector.load %arg2[%c0_1, %c0_2] : memref<1x32xf32, #tpu.memory_space<vmem>>, vector<1x32xf32>
    %2 = vector.broadcast %1 : vector<1x32xf32> to vector<8x32xf32>
    %3 = arith.addf %0, %2 : vector<8x32xf32>
    %cst = arith.constant 0.000000e+00 : f32
    %4 = vector.broadcast %cst : f32 to vector<8x32xf32>
    %5 = arith.maximumf %3, %4 : vector<8x32xf32>
    %c0_3 = arith.constant 0 : index
    %c0_4 = arith.constant 0 : index
    %6 = vector.load %arg3[%c0_3, %c0_4] : memref<8x32xf32, #tpu.memory_space<vmem>>, vector<8x32xf32>
    tpu.vector_store %arg3[%c0_3, %c0_4], %5 {strides = array<i32>} : memref<8x32xf32, #tpu.memory_space<vmem>>, vector<8x32xf32>,
    return
  }
  func.func @transform_0(%arg0: i32) -> (i32, i32) {
    %c0_i32 = arith.constant 0 : i32
    %c0_i32_0 = arith.constant 0 : i32
    return %arg0, %c0_i32 : i32, i32
  }
  func.func @transform_1(%arg0: i32) -> (i32, i32) {
    %c0_i32 = arith.constant 0 : i32
    %c0_i32_0 = arith.constant 0 : i32
    %c0_i32_1 = arith.constant 0 : i32
    return %c0_i32, %c0_i32_0 : i32, i32
  }
  func.func @transform_2(%arg0: i32) -> (i32, i32) {
    %c0_i32 = arith.constant 0 : i32
    %c0_i32_0 = arith.constant 0 : i32
    return %arg0, %c0_i32 : i32, i32
  }
}

module attributes {stable_mosaic.version = 11 : i64} {
  func.func @_ln_kernel(%arg0: i32, %arg1: memref<32x32xf32, #tpu.memory_space<vmem>>, %arg2: memref<1x32xf32, #tpu.memory_space<vmem>>, %arg3: memref<1x32xf32, #tpu.memory_space<vmem>>, %arg4: memref<32x32xf32, #tpu.memory_space<vmem>>) attributes {dimension_semantics = [#tpu.dimension_semantics<parallel>], iteration_bounds = array<i64: 1>, scalar_prefetch = 0 : i64, scratch_operands = 0 : i64, tpu.core_type = #tpu.core_type<tc>, window_params = [{transform_indices = @transform_0, window_bounds = array<i64: 32, 32>}, {pipeline_mode = #tpu.pipeline_mode<synchronous>, transform_indices = @transform_1, window_bounds = array<i64: 1, 32>}, {pipeline_mode = #tpu.pipeline_mode<synchronous>, transform_indices = @transform_2, window_bounds = array<i64: 1, 32>}, {transform_indices = @transform_3, window_bounds = array<i64: 32, 32>}]} {
    %c0 = arith.constant 0 : index
    %c0_0 = arith.constant 0 : index
    %0 = vector.load %arg1[%c0, %c0_0] : memref<32x32xf32, #tpu.memory_space<vmem>>, vector<32x32xf32>
    %cst = arith.constant dense<0.000000e+00> : vector<32xf32>
    %1 = vector.multi_reduction <add>, %0, %cst [1] : vector<32x32xf32> to vector<32xf32>
    %2 = vector.shape_cast %1 : vector<32xf32> to vector<32x1xf32>
    %cst_1 = arith.constant 3.200000e+01 : f32
    %3 = vector.broadcast %cst_1 : f32 to vector<32x1xf32>
    %4 = arith.divf %2, %3 : vector<32x1xf32>
    %5 = vector.broadcast %4 : vector<32x1xf32> to vector<32x32xf32>
    %6 = arith.subf %0, %5 : vector<32x32xf32>
    %7 = arith.mulf %6, %6 : vector<32x32xf32>
    %cst_2 = arith.constant dense<0.000000e+00> : vector<32xf32>
    %8 = vector.multi_reduction <add>, %7, %cst_2 [1] : vector<32x32xf32> to vector<32xf32>
    %9 = vector.shape_cast %8 : vector<32xf32> to vector<32x1xf32>
    %cst_3 = arith.constant 3.200000e+01 : f32
    %10 = vector.broadcast %cst_3 : f32 to vector<32x1xf32>
    %11 = arith.divf %9, %10 : vector<32x1xf32>
    %12 = vector.broadcast %4 : vector<32x1xf32> to vector<32x32xf32>
    %13 = arith.subf %0, %12 : vector<32x32xf32>
    %cst_4 = arith.constant 9.99999974E-6 : f32
    %14 = vector.broadcast %cst_4 : f32 to vector<32x1xf32>
    %15 = arith.addf %11, %14 : vector<32x1xf32>
    %16 = math.rsqrt %15 : vector<32x1xf32>
    %17 = vector.broadcast %16 : vector<32x1xf32> to vector<32x32xf32>
    %18 = arith.mulf %13, %17 : vector<32x32xf32>
    %c0_5 = arith.constant 0 : index
    %c0_6 = arith.constant 0 : index
    %19 = vector.load %arg2[%c0_5, %c0_6] : memref<1x32xf32, #tpu.memory_space<vmem>>, vector<1x32xf32>
    %20 = vector.broadcast %19 : vector<1x32xf32> to vector<32x32xf32>
    %21 = arith.mulf %18, %20 : vector<32x32xf32>
    %c0_7 = arith.constant 0 : index
    %c0_8 = arith.constant 0 : index
    %22 = vector.load %arg3[%c0_7, %c0_8] : memref<1x32xf32, #tpu.memory_space<vmem>>, vector<1x32xf32>
    %23 = vector.broadcast %22 : vector<1x32xf32> to vector<32x32xf32>
    %24 = arith.addf %21, %23 : vector<32x32xf32>
    %c0_9 = arith.constant 0 : index
    %c0_10 = arith.constant 0 : index
    %25 = vector.load %arg4[%c0_9, %c0_10] : memref<32x32xf32, #tpu.memory_space<vmem>>, vector<32x32xf32>
    tpu.vector_store %arg4[%c0_9, %c0_10], %24 {strides = array<i32>} : memref<32x32xf32, #tpu.memory_space<vmem>>, vector<32x32xf32>,
    return
  }
  func.func @transform_0(%arg0: i32) -> (i32, i32) {
    %c0_i32 = arith.constant 0 : i32
    %c0_i32_0 = arith.constant 0 : i32
    return %arg0, %c0_i32 : i32, i32
  }
  func.func @transform_1(%arg0: i32) -> (i32, i32) {
    %c0_i32 = arith.constant 0 : i32
    %c0_i32_0 = arith.constant 0 : i32
    %c0_i32_1 = arith.constant 0 : i32
    return %c0_i32, %c0_i32_0 : i32, i32
  }
  func.func @transform_2(%arg0: i32) -> (i32, i32) {
    %c0_i32 = arith.constant 0 : i32
    %c0_i32_0 = arith.constant 0 : i32
    %c0_i32_1 = arith.constant 0 : i32
    return %c0_i32, %c0_i32_0 : i32, i32
  }
  func.func @transform_3(%arg0: i32) -> (i32, i32) {
    %c0_i32 = arith.constant 0 : i32
    %c0_i32_0 = arith.constant 0 : i32
    return %arg0, %c0_i32 : i32, i32
  }
}

module attributes {stable_mosaic.version = 11 : i64} {
  func.func @_linear_kernel(%arg0: i32, %arg1: i32, %arg2: i32, %arg3: memref<32x128xbf16, #tpu.memory_space<vmem>>, %arg4: memref<128x128xbf16, #tpu.memory_space<vmem>>, %arg5: memref<1x128xf32, #tpu.memory_space<vmem>>, %arg6: memref<32x128xf32, #tpu.memory_space<vmem>>, %arg7: memref<32x128xf32, #tpu.memory_space<vmem>>) attributes {dimension_semantics = [#tpu.dimension_semantics<parallel>, #tpu.dimension_semantics<parallel>, #tpu.dimension_semantics<arbitrary>], iteration_bounds = array<i64: 1, 1, 1>, scalar_prefetch = 0 : i64, scratch_operands = 1 : i64, tpu.core_type = #tpu.core_type<tc>, window_params = [{transform_indices = @transform_0, window_bounds = array<i64: 32, 128>}, {transform_indices = @transform_1, window_bounds = array<i64: 128, 128>}, {transform_indices = @transform_2, window_bounds = array<i64: 1, 128>}, {transform_indices = @transform_3, window_bounds = array<i64: 32, 128>}]} {
    %c0_i32 = arith.constant 0 : i32
    %0 = arith.cmpi eq, %arg2, %c0_i32 : i32
    %1 = arith.extui %0 : i1 to i32
    %c0_i32_0 = arith.constant 0 : i32
    %2 = arith.cmpi ne, %1, %c0_i32_0 : i32
    scf.if %2 {
      %cst_10 = arith.constant 0.000000e+00 : f32
      %12 = vector.broadcast %cst_10 : f32 to vector<32x128xf32>
      %c0_11 = arith.constant 0 : index
      %c0_12 = arith.constant 0 : index
      %13 = vector.load %arg7[%c0_11, %c0_12] : memref<32x128xf32, #tpu.memory_space<vmem>>, vector<32x128xf32>
      tpu.vector_store %arg7[%c0_11, %c0_12], %12 {strides = array<i32>} : memref<32x128xf32, #tpu.memory_space<vmem>>, vector<32x128xf32>,
    } else {
    }
    %c0 = arith.constant 0 : index
    %c0_1 = arith.constant 0 : index
    %3 = vector.load %arg7[%c0, %c0_1] : memref<32x128xf32, #tpu.memory_space<vmem>>, vector<32x128xf32>
    %c0_2 = arith.constant 0 : index
    %c0_3 = arith.constant 0 : index
    %4 = vector.load %arg3[%c0_2, %c0_3] : memref<32x128xbf16, #tpu.memory_space<vmem>>, vector<32x128xbf16>
    %c0_4 = arith.constant 0 : index
    %c0_5 = arith.constant 0 : index
    %5 = vector.load %arg4[%c0_4, %c0_5] : memref<128x128xbf16, #tpu.memory_space<vmem>>, vector<128x128xbf16>
    %cst = arith.constant dense<0.000000e+00> : vector<32x128xf32>
    %6 = tpu.matmul %4, %5, %cst {dimension_numbers = #tpu.dot_dimension_numbers<[1], [0], [0], [1], [0, 0, 1, 1], [], []>} : vector<32x128xbf16>, vector<128x128xbf16>, vector<32x128xf32> -> vector<32x128xf32>
    %7 = arith.addf %3, %6 : vector<32x128xf32>
    %c0_6 = arith.constant 0 : index
    %c0_7 = arith.constant 0 : index
    %8 = vector.load %arg7[%c0_6, %c0_7] : memref<32x128xf32, #tpu.memory_space<vmem>>, vector<32x128xf32>
    tpu.vector_store %arg7[%c0_6, %c0_7], %7 {strides = array<i32>} : memref<32x128xf32, #tpu.memory_space<vmem>>, vector<32x128xf32>,
    %c0_i32_8 = arith.constant 0 : i32
    %9 = arith.cmpi eq, %arg2, %c0_i32_8 : i32
    %10 = arith.extui %9 : i1 to i32
    %c0_i32_9 = arith.constant 0 : i32
    %11 = arith.cmpi ne, %10, %c0_i32_9 : i32
    scf.if %11 {
      %c0_10 = arith.constant 0 : index
      %c0_11 = arith.constant 0 : index
      %12 = vector.load %arg7[%c0_10, %c0_11] : memref<32x128xf32, #tpu.memory_space<vmem>>, vector<32x128xf32>
      %c0_12 = arith.constant 0 : index
      %c0_13 = arith.constant 0 : index
      %13 = vector.load %arg5[%c0_12, %c0_13] : memref<1x128xf32, #tpu.memory_space<vmem>>, vector<1x128xf32>
      %14 = vector.broadcast %13 : vector<1x128xf32> to vector<32x128xf32>
      %15 = arith.addf %12, %14 : vector<32x128xf32>
      %16 = arith.mulf %15, %15 : vector<32x128xf32>
      %17 = arith.mulf %15, %16 : vector<32x128xf32>
      %cst_14 = arith.constant 4.471500e-02 : f32
      %18 = vector.broadcast %cst_14 : f32 to vector<32x128xf32>
      %19 = arith.mulf %18, %17 : vector<32x128xf32>
      %20 = arith.addf %15, %19 : vector<32x128xf32>
      %cst_15 = arith.constant 0.797884583 : f32
      %21 = vector.broadcast %cst_15 : f32 to vector<32x128xf32>
      %22 = arith.mulf %21, %20 : vector<32x128xf32>
      %23 = math.tanh %22 : vector<32x128xf32>
      %cst_16 = arith.constant 1.000000e+00 : f32
      %24 = vector.broadcast %cst_16 : f32 to vector<32x128xf32>
      %25 = arith.addf %24, %23 : vector<32x128xf32>
      %cst_17 = arith.constant 5.000000e-01 : f32
      %26 = vector.broadcast %cst_17 : f32 to vector<32x128xf32>
      %27 = arith.mulf %26, %25 : vector<32x128xf32>
      %28 = arith.mulf %15, %27 : vector<32x128xf32>
      %c0_18 = arith.constant 0 : index
      %c0_19 = arith.constant 0 : index
      %29 = vector.load %arg6[%c0_18, %c0_19] : memref<32x128xf32, #tpu.memory_space<vmem>>, vector<32x128xf32>
      tpu.vector_store %arg6[%c0_18, %c0_19], %28 {strides = array<i32>} : memref<32x128xf32, #tpu.memory_space<vmem>>, vector<32x128xf32>,
    } else {
    }
    return
  }
  func.func @transform_0(%arg0: i32, %arg1: i32, %arg2: i32) -> (i32, i32) {
    %c0_i32 = arith.constant 0 : i32
    return %arg0, %arg2 : i32, i32
  }
  func.func @transform_1(%arg0: i32, %arg1: i32, %arg2: i32) -> (i32, i32) {
    %c0_i32 = arith.constant 0 : i32
    return %arg2, %arg1 : i32, i32
  }
  func.func @transform_2(%arg0: i32, %arg1: i32, %arg2: i32) -> (i32, i32) {
    %c0_i32 = arith.constant 0 : i32
    %c0_i32_0 = arith.constant 0 : i32
    return %c0_i32, %arg1 : i32, i32
  }
  func.func @transform_3(%arg0: i32, %arg1: i32, %arg2: i32) -> (i32, i32) {
    %c0_i32 = arith.constant 0 : i32
    return %arg0, %arg1 : i32, i32
  }
}

module attributes {stable_mosaic.version = 11 : i64} {
  func.func @_mha_kernel(%arg0: i32, %arg1: memref<1x16x32xf32, #tpu.memory_space<vmem>>, %arg2: memref<1x16x32xf32, #tpu.memory_space<vmem>>, %arg3: memref<1x16x32xf32, #tpu.memory_space<vmem>>, %arg4: memref<1x16x32xf32, #tpu.memory_space<vmem>>) attributes {dimension_semantics = [#tpu.dimension_semantics<parallel>], iteration_bounds = array<i64: 2>, scalar_prefetch = 0 : i64, scratch_operands = 0 : i64, tpu.core_type = #tpu.core_type<tc>, window_params = [{transform_indices = @transform_0, window_bounds = array<i64: 1, 16, 32>}, {transform_indices = @transform_1, window_bounds = array<i64: 1, 16, 32>}, {transform_indices = @transform_2, window_bounds = array<i64: 1, 16, 32>}, {transform_indices = @transform_3, window_bounds = array<i64: 1, 16, 32>}]} {
    %c0 = arith.constant 0 : index
    %c0_0 = arith.constant 0 : index
    %c0_1 = arith.constant 0 : index
    %0 = vector.load %arg1[%c0, %c0_0, %c0_1] : memref<1x16x32xf32, #tpu.memory_space<vmem>>, vector<1x16x32xf32>
    %1 = vector.shape_cast %0 : vector<1x16x32xf32> to vector<16x32xf32>
    %c0_2 = arith.constant 0 : index
    %c0_3 = arith.constant 0 : index
    %c0_4 = arith.constant 0 : index
    %2 = vector.load %arg2[%c0_2, %c0_3, %c0_4] : memref<1x16x32xf32, #tpu.memory_space<vmem>>, vector<1x16x32xf32>
    %3 = vector.shape_cast %2 : vector<1x16x32xf32> to vector<16x32xf32>
    %c0_5 = arith.constant 0 : index
    %c0_6 = arith.constant 0 : index
    %c0_7 = arith.constant 0 : index
    %4 = vector.load %arg3[%c0_5, %c0_6, %c0_7] : memref<1x16x32xf32, #tpu.memory_space<vmem>>, vector<1x16x32xf32>
    %5 = vector.shape_cast %4 : vector<1x16x32xf32> to vector<16x32xf32>
    %6 = vector.extract_strided_slice %1 {offsets = [0, 0], sizes = [16, 16], strides = [1, 1]} : vector<16x32xf32> to vector<16x16xf32>
    %7 = arith.truncf %6 : vector<16x16xf32> to vector<16x16xbf16>
    %8 = vector.extract_strided_slice %3 {offsets = [0, 0], sizes = [16, 16], strides = [1, 1]} : vector<16x32xf32> to vector<16x16xf32>
    %9 = arith.truncf %8 : vector<16x16xf32> to vector<16x16xbf16>
    %10 = vector.extract_strided_slice %5 {offsets = [0, 0], sizes = [16, 16], strides = [1, 1]} : vector<16x32xf32> to vector<16x16xf32>
    %11 = arith.truncf %10 : vector<16x16xf32> to vector<16x16xbf16>
    %cst = arith.constant dense<0.000000e+00> : vector<16x16xf32>
    %12 = tpu.matmul %7, %9, %cst {dimension_numbers = #tpu.dot_dimension_numbers<[1], [1], [0], [0], [0, 0, 1, 0], [], []>} : vector<16x16xbf16>, vector<16x16xbf16>, vector<16x16xf32> -> vector<16x16xf32>
    %cst_8 = arith.constant 2.500000e-01 : f32
    %13 = vector.broadcast %cst_8 : f32 to vector<16x16xf32>
    %14 = arith.mulf %12, %13 : vector<16x16xf32>
    %cst_9 = arith.constant dense<0xFF800000> : vector<16xf32>
    %15 = vector.multi_reduction <maximumf>, %14, %cst_9 [1] : vector<16x16xf32> to vector<16xf32>
    %16 = vector.shape_cast %15 : vector<16xf32> to vector<16x1xf32>
    %17 = vector.broadcast %16 : vector<16x1xf32> to vector<16x16xf32>
    %18 = arith.subf %14, %17 : vector<16x16xf32>
    %19 = math.exp %18 : vector<16x16xf32>
    %cst_10 = arith.constant dense<0.000000e+00> : vector<16xf32>
    %20 = vector.multi_reduction <add>, %19, %cst_10 [1] : vector<16x16xf32> to vector<16xf32>
    %21 = vector.shape_cast %20 : vector<16xf32> to vector<16x1xf32>
    %22 = tpu.reciprocal %21 {approx = true} : vector<16x1xf32> -> vector<16x1xf32>
    %23 = vector.broadcast %22 : vector<16x1xf32> to vector<16x16xf32>
    %24 = arith.mulf %19, %23 : vector<16x16xf32>
    %25 = arith.truncf %24 : vector<16x16xf32> to vector<16x16xbf16>
    %cst_11 = arith.constant dense<0.000000e+00> : vector<16x16xf32>
    %26 = tpu.matmul %25, %11, %cst_11 {dimension_numbers = #tpu.dot_dimension_numbers<[1], [0], [0], [1], [0, 0, 1, 1], [], []>} : vector<16x16xbf16>, vector<16x16xbf16>, vector<16x16xf32> -> vector<16x16xf32>
    %27 = vector.extract_strided_slice %1 {offsets = [0, 16], sizes = [16, 16], strides = [1, 1]} : vector<16x32xf32> to vector<16x16xf32>
    %28 = arith.truncf %27 : vector<16x16xf32> to vector<16x16xbf16>
    %29 = vector.extract_strided_slice %3 {offsets = [0, 16], sizes = [16, 16], strides = [1, 1]} : vector<16x32xf32> to vector<16x16xf32>
    %30 = arith.truncf %29 : vector<16x16xf32> to vector<16x16xbf16>
    %31 = vector.extract_strided_slice %5 {offsets = [0, 16], sizes = [16, 16], strides = [1, 1]} : vector<16x32xf32> to vector<16x16xf32>
    %32 = arith.truncf %31 : vector<16x16xf32> to vector<16x16xbf16>
    %cst_12 = arith.constant dense<0.000000e+00> : vector<16x16xf32>
    %33 = tpu.matmul %28, %30, %cst_12 {dimension_numbers = #tpu.dot_dimension_numbers<[1], [1], [0], [0], [0, 0, 1, 0], [], []>} : vector<16x16xbf16>, vector<16x16xbf16>, vector<16x16xf32> -> vector<16x16xf32>
    %cst_13 = arith.constant 2.500000e-01 : f32
    %34 = vector.broadcast %cst_13 : f32 to vector<16x16xf32>
    %35 = arith.mulf %33, %34 : vector<16x16xf32>
    %cst_14 = arith.constant dense<0xFF800000> : vector<16xf32>
    %36 = vector.multi_reduction <maximumf>, %35, %cst_14 [1] : vector<16x16xf32> to vector<16xf32>
    %37 = vector.shape_cast %36 : vector<16xf32> to vector<16x1xf32>
    %38 = vector.broadcast %37 : vector<16x1xf32> to vector<16x16xf32>
    %39 = arith.subf %35, %38 : vector<16x16xf32>
    %40 = math.exp %39 : vector<16x16xf32>
    %cst_15 = arith.constant dense<0.000000e+00> : vector<16xf32>
    %41 = vector.multi_reduction <add>, %40, %cst_15 [1] : vector<16x16xf32> to vector<16xf32>
    %42 = vector.shape_cast %41 : vector<16xf32> to vector<16x1xf32>
    %43 = tpu.reciprocal %42 {approx = true} : vector<16x1xf32> -> vector<16x1xf32>
    %44 = vector.broadcast %43 : vector<16x1xf32> to vector<16x16xf32>
    %45 = arith.mulf %40, %44 : vector<16x16xf32>
    %46 = arith.truncf %45 : vector<16x16xf32> to vector<16x16xbf16>
    %cst_16 = arith.constant dense<0.000000e+00> : vector<16x16xf32>
    %47 = tpu.matmul %46, %32, %cst_16 {dimension_numbers = #tpu.dot_dimension_numbers<[1], [0], [0], [1], [0, 0, 1, 1], [], []>} : vector<16x16xbf16>, vector<16x16xbf16>, vector<16x16xf32> -> vector<16x16xf32>
    %48 = tpu.concatenate %26, %47 in 1 : vector<16x16xf32>, vector<16x16xf32> -> vector<16x32xf32>
    %c0_17 = arith.constant 0 : index
    %c0_18 = arith.constant 0 : index
    %c0_19 = arith.constant 0 : index
    %49 = vector.load %arg4[%c0_17, %c0_18, %c0_19] : memref<1x16x32xf32, #tpu.memory_space<vmem>>, vector<1x16x32xf32>
    %50 = vector.shape_cast %49 : vector<1x16x32xf32> to vector<16x32xf32>
    %51 = vector.shape_cast %48 : vector<16x32xf32> to vector<1x16x32xf32>
    tpu.vector_store %arg4[%c0_17, %c0_18, %c0_19], %51 {strides = array<i32>} : memref<1x16x32xf32, #tpu.memory_space<vmem>>, vector<1x16x32xf32>,
    return
  }
  func.func @transform_0(%arg0: i32) -> (i32, i32, i32) {
    %c0_i32 = arith.constant 0 : i32
    %c0_i32_0 = arith.constant 0 : i32
    %c0_i32_1 = arith.constant 0 : i32
    return %arg0, %c0_i32, %c0_i32_0 : i32, i32, i32
  }
  func.func @transform_1(%arg0: i32) -> (i32, i32, i32) {
    %c0_i32 = arith.constant 0 : i32
    %c0_i32_0 = arith.constant 0 : i32
    %c0_i32_1 = arith.constant 0 : i32
    return %arg0, %c0_i32, %c0_i32_0 : i32, i32, i32
  }
  func.func @transform_2(%arg0: i32) -> (i32, i32, i32) {
    %c0_i32 = arith.constant 0 : i32
    %c0_i32_0 = arith.constant 0 : i32
    %c0_i32_1 = arith.constant 0 : i32
    return %arg0, %c0_i32, %c0_i32_0 : i32, i32, i32
  }
  func.func @transform_3(%arg0: i32) -> (i32, i32, i32) {
    %c0_i32 = arith.constant 0 : i32
    %c0_i32_0 = arith.constant 0 : i32
    %c0_i32_1 = arith.constant 0 : i32
    return %arg0, %c0_i32, %c0_i32_0 : i32, i32, i32
  }
}

module attributes {stable_mosaic.version = 11 : i64} {
  func.func @_linear_kernel(%arg0: i32, %arg1: i32, %arg2: i32, %arg3: memref<16x128xbf16, #tpu.memory_space<vmem>>, %arg4: memref<128x128xbf16, #tpu.memory_space<vmem>>, %arg5: memref<1x128xf32, #tpu.memory_space<vmem>>, %arg6: memref<16x128xf32, #tpu.memory_space<vmem>>, %arg7: memref<16x128xf32, #tpu.memory_space<vmem>>) attributes {dimension_semantics = [#tpu.dimension_semantics<parallel>, #tpu.dimension_semantics<parallel>, #tpu.dimension_semantics<arbitrary>], iteration_bounds = array<i64: 1, 1, 1>, scalar_prefetch = 0 : i64, scratch_operands = 1 : i64, tpu.core_type = #tpu.core_type<tc>, window_params = [{transform_indices = @transform_0, window_bounds = array<i64: 16, 128>}, {transform_indices = @transform_1, window_bounds = array<i64: 128, 128>}, {transform_indices = @transform_2, window_bounds = array<i64: 1, 128>}, {transform_indices = @transform_3, window_bounds = array<i64: 16, 128>}]} {
    %c0_i32 = arith.constant 0 : i32
    %0 = arith.cmpi eq, %arg2, %c0_i32 : i32
    %1 = arith.extui %0 : i1 to i32
    %c0_i32_0 = arith.constant 0 : i32
    %2 = arith.cmpi ne, %1, %c0_i32_0 : i32
    scf.if %2 {
      %cst_10 = arith.constant 0.000000e+00 : f32
      %12 = vector.broadcast %cst_10 : f32 to vector<16x128xf32>
      %c0_11 = arith.constant 0 : index
      %c0_12 = arith.constant 0 : index
      %13 = vector.load %arg7[%c0_11, %c0_12] : memref<16x128xf32, #tpu.memory_space<vmem>>, vector<16x128xf32>
      tpu.vector_store %arg7[%c0_11, %c0_12], %12 {strides = array<i32>} : memref<16x128xf32, #tpu.memory_space<vmem>>, vector<16x128xf32>,
    } else {
    }
    %c0 = arith.constant 0 : index
    %c0_1 = arith.constant 0 : index
    %3 = vector.load %arg7[%c0, %c0_1] : memref<16x128xf32, #tpu.memory_space<vmem>>, vector<16x128xf32>
    %c0_2 = arith.constant 0 : index
    %c0_3 = arith.constant 0 : index
    %4 = vector.load %arg3[%c0_2, %c0_3] : memref<16x128xbf16, #tpu.memory_space<vmem>>, vector<16x128xbf16>
    %c0_4 = arith.constant 0 : index
    %c0_5 = arith.constant 0 : index
    %5 = vector.load %arg4[%c0_4, %c0_5] : memref<128x128xbf16, #tpu.memory_space<vmem>>, vector<128x128xbf16>
    %cst = arith.constant dense<0.000000e+00> : vector<16x128xf32>
    %6 = tpu.matmul %4, %5, %cst {dimension_numbers = #tpu.dot_dimension_numbers<[1], [0], [0], [1], [0, 0, 1, 1], [], []>} : vector<16x128xbf16>, vector<128x128xbf16>, vector<16x128xf32> -> vector<16x128xf32>
    %7 = arith.addf %3, %6 : vector<16x128xf32>
    %c0_6 = arith.constant 0 : index
    %c0_7 = arith.constant 0 : index
    %8 = vector.load %arg7[%c0_6, %c0_7] : memref<16x128xf32, #tpu.memory_space<vmem>>, vector<16x128xf32>
    tpu.vector_store %arg7[%c0_6, %c0_7], %7 {strides = array<i32>} : memref<16x128xf32, #tpu.memory_space<vmem>>, vector<16x128xf32>,
    %c0_i32_8 = arith.constant 0 : i32
    %9 = arith.cmpi eq, %arg2, %c0_i32_8 : i32
    %10 = arith.extui %9 : i1 to i32
    %c0_i32_9 = arith.constant 0 : i32
    %11 = arith.cmpi ne, %10, %c0_i32_9 : i32
    scf.if %11 {
      %c0_10 = arith.constant 0 : index
      %c0_11 = arith.constant 0 : index
      %12 = vector.load %arg7[%c0_10, %c0_11] : memref<16x128xf32, #tpu.memory_space<vmem>>, vector<16x128xf32>
      %c0_12 = arith.constant 0 : index
      %c0_13 = arith.constant 0 : index
      %13 = vector.load %arg5[%c0_12, %c0_13] : memref<1x128xf32, #tpu.memory_space<vmem>>, vector<1x128xf32>
      %14 = vector.broadcast %13 : vector<1x128xf32> to vector<16x128xf32>
      %15 = arith.addf %12, %14 : vector<16x128xf32>
      %c0_14 = arith.constant 0 : index
      %c0_15 = arith.constant 0 : index
      %16 = vector.load %arg6[%c0_14, %c0_15] : memref<16x128xf32, #tpu.memory_space<vmem>>, vector<16x128xf32>
      tpu.vector_store %arg6[%c0_14, %c0_15], %15 {strides = array<i32>} : memref<16x128xf32, #tpu.memory_space<vmem>>, vector<16x128xf32>,
    } else {
    }
    return
  }
  func.func @transform_0(%arg0: i32, %arg1: i32, %arg2: i32) -> (i32, i32) {
    %c0_i32 = arith.constant 0 : i32
    return %arg0, %arg2 : i32, i32
  }
  func.func @transform_1(%arg0: i32, %arg1: i32, %arg2: i32) -> (i32, i32) {
    %c0_i32 = arith.constant 0 : i32
    return %arg2, %arg1 : i32, i32
  }
  func.func @transform_2(%arg0: i32, %arg1: i32, %arg2: i32) -> (i32, i32) {
    %c0_i32 = arith.constant 0 : i32
    %c0_i32_0 = arith.constant 0 : i32
    return %c0_i32, %arg1 : i32, i32
  }
  func.func @transform_3(%arg0: i32, %arg1: i32, %arg2: i32) -> (i32, i32) {
    %c0_i32 = arith.constant 0 : i32
    return %arg0, %arg1 : i32, i32
  }
}

module attributes {stable_mosaic.version = 11 : i64} {
  func.func @_mha_kernel(%arg0: i32, %arg1: memref<1x16x32xf32, #tpu.memory_space<vmem>>, %arg2: memref<1x8x32xf32, #tpu.memory_space<vmem>>, %arg3: memref<1x8x32xf32, #tpu.memory_space<vmem>>, %arg4: memref<1x16x32xf32, #tpu.memory_space<vmem>>) attributes {dimension_semantics = [#tpu.dimension_semantics<parallel>], iteration_bounds = array<i64: 2>, scalar_prefetch = 0 : i64, scratch_operands = 0 : i64, tpu.core_type = #tpu.core_type<tc>, window_params = [{transform_indices = @transform_0, window_bounds = array<i64: 1, 16, 32>}, {transform_indices = @transform_1, window_bounds = array<i64: 1, 8, 32>}, {transform_indices = @transform_2, window_bounds = array<i64: 1, 8, 32>}, {transform_indices = @transform_3, window_bounds = array<i64: 1, 16, 32>}]} {
    %c0 = arith.constant 0 : index
    %c0_0 = arith.constant 0 : index
    %c0_1 = arith.constant 0 : index
    %0 = vector.load %arg1[%c0, %c0_0, %c0_1] : memref<1x16x32xf32, #tpu.memory_space<vmem>>, vector<1x16x32xf32>
    %1 = vector.shape_cast %0 : vector<1x16x32xf32> to vector<16x32xf32>
    %c0_2 = arith.constant 0 : index
    %c0_3 = arith.constant 0 : index
    %c0_4 = arith.constant 0 : index
    %2 = vector.load %arg2[%c0_2, %c0_3, %c0_4] : memref<1x8x32xf32, #tpu.memory_space<vmem>>, vector<1x8x32xf32>
    %3 = vector.shape_cast %2 : vector<1x8x32xf32> to vector<8x32xf32>
    %c0_5 = arith.constant 0 : index
    %c0_6 = arith.constant 0 : index
    %c0_7 = arith.constant 0 : index
    %4 = vector.load %arg3[%c0_5, %c0_6, %c0_7] : memref<1x8x32xf32, #tpu.memory_space<vmem>>, vector<1x8x32xf32>
    %5 = vector.shape_cast %4 : vector<1x8x32xf32> to vector<8x32xf32>
    %6 = vector.extract_strided_slice %1 {offsets = [0, 0], sizes = [16, 16], strides = [1, 1]} : vector<16x32xf32> to vector<16x16xf32>
    %7 = arith.truncf %6 : vector<16x16xf32> to vector<16x16xbf16>
    %8 = vector.extract_strided_slice %3 {offsets = [0, 0], sizes = [8, 16], strides = [1, 1]} : vector<8x32xf32> to vector<8x16xf32>
    %9 = arith.truncf %8 : vector<8x16xf32> to vector<8x16xbf16>
    %10 = vector.extract_strided_slice %5 {offsets = [0, 0], sizes = [8, 16], strides = [1, 1]} : vector<8x32xf32> to vector<8x16xf32>
    %11 = arith.truncf %10 : vector<8x16xf32> to vector<8x16xbf16>
    %cst = arith.constant dense<0.000000e+00> : vector<16x8xf32>
    %12 = tpu.matmul %7, %9, %cst {dimension_numbers = #tpu.dot_dimension_numbers<[1], [1], [0], [0], [0, 0, 1, 0], [], []>} : vector<16x16xbf16>, vector<8x16xbf16>, vector<16x8xf32> -> vector<16x8xf32>
    %cst_8 = arith.constant 2.500000e-01 : f32
    %13 = vector.broadcast %cst_8 : f32 to vector<16x8xf32>
    %14 = arith.mulf %12, %13 : vector<16x8xf32>
    %cst_9 = arith.constant dense<0xFF800000> : vector<16xf32>
    %15 = vector.multi_reduction <maximumf>, %14, %cst_9 [1] : vector<16x8xf32> to vector<16xf32>
    %16 = vector.shape_cast %15 : vector<16xf32> to vector<16x1xf32>
    %17 = vector.broadcast %16 : vector<16x1xf32> to vector<16x8xf32>
    %18 = arith.subf %14, %17 : vector<16x8xf32>
    %19 = math.exp %18 : vector<16x8xf32>
    %cst_10 = arith.constant dense<0.000000e+00> : vector<16xf32>
    %20 = vector.multi_reduction <add>, %19, %cst_10 [1] : vector<16x8xf32> to vector<16xf32>
    %21 = vector.shape_cast %20 : vector<16xf32> to vector<16x1xf32>
    %22 = tpu.reciprocal %21 {approx = true} : vector<16x1xf32> -> vector<16x1xf32>
    %23 = vector.broadcast %22 : vector<16x1xf32> to vector<16x8xf32>
    %24 = arith.mulf %19, %23 : vector<16x8xf32>
    %25 = arith.truncf %24 : vector<16x8xf32> to vector<16x8xbf16>
    %cst_11 = arith.constant dense<0.000000e+00> : vector<16x16xf32>
    %26 = tpu.matmul %25, %11, %cst_11 {dimension_numbers = #tpu.dot_dimension_numbers<[1], [0], [0], [1], [0, 0, 1, 1], [], []>} : vector<16x8xbf16>, vector<8x16xbf16>, vector<16x16xf32> -> vector<16x16xf32>
    %27 = vector.extract_strided_slice %1 {offsets = [0, 16], sizes = [16, 16], strides = [1, 1]} : vector<16x32xf32> to vector<16x16xf32>
    %28 = arith.truncf %27 : vector<16x16xf32> to vector<16x16xbf16>
    %29 = vector.extract_strided_slice %3 {offsets = [0, 16], sizes = [8, 16], strides = [1, 1]} : vector<8x32xf32> to vector<8x16xf32>
    %30 = arith.truncf %29 : vector<8x16xf32> to vector<8x16xbf16>
    %31 = vector.extract_strided_slice %5 {offsets = [0, 16], sizes = [8, 16], strides = [1, 1]} : vector<8x32xf32> to vector<8x16xf32>
    %32 = arith.truncf %31 : vector<8x16xf32> to vector<8x16xbf16>
    %cst_12 = arith.constant dense<0.000000e+00> : vector<16x8xf32>
    %33 = tpu.matmul %28, %30, %cst_12 {dimension_numbers = #tpu.dot_dimension_numbers<[1], [1], [0], [0], [0, 0, 1, 0], [], []>} : vector<16x16xbf16>, vector<8x16xbf16>, vector<16x8xf32> -> vector<16x8xf32>
    %cst_13 = arith.constant 2.500000e-01 : f32
    %34 = vector.broadcast %cst_13 : f32 to vector<16x8xf32>
    %35 = arith.mulf %33, %34 : vector<16x8xf32>
    %cst_14 = arith.constant dense<0xFF800000> : vector<16xf32>
    %36 = vector.multi_reduction <maximumf>, %35, %cst_14 [1] : vector<16x8xf32> to vector<16xf32>
    %37 = vector.shape_cast %36 : vector<16xf32> to vector<16x1xf32>
    %38 = vector.broadcast %37 : vector<16x1xf32> to vector<16x8xf32>
    %39 = arith.subf %35, %38 : vector<16x8xf32>
    %40 = math.exp %39 : vector<16x8xf32>
    %cst_15 = arith.constant dense<0.000000e+00> : vector<16xf32>
    %41 = vector.multi_reduction <add>, %40, %cst_15 [1] : vector<16x8xf32> to vector<16xf32>
    %42 = vector.shape_cast %41 : vector<16xf32> to vector<16x1xf32>
    %43 = tpu.reciprocal %42 {approx = true} : vector<16x1xf32> -> vector<16x1xf32>
    %44 = vector.broadcast %43 : vector<16x1xf32> to vector<16x8xf32>
    %45 = arith.mulf %40, %44 : vector<16x8xf32>
    %46 = arith.truncf %45 : vector<16x8xf32> to vector<16x8xbf16>
    %cst_16 = arith.constant dense<0.000000e+00> : vector<16x16xf32>
    %47 = tpu.matmul %46, %32, %cst_16 {dimension_numbers = #tpu.dot_dimension_numbers<[1], [0], [0], [1], [0, 0, 1, 1], [], []>} : vector<16x8xbf16>, vector<8x16xbf16>, vector<16x16xf32> -> vector<16x16xf32>
    %48 = tpu.concatenate %26, %47 in 1 : vector<16x16xf32>, vector<16x16xf32> -> vector<16x32xf32>
    %c0_17 = arith.constant 0 : index
    %c0_18 = arith.constant 0 : index
    %c0_19 = arith.constant 0 : index
    %49 = vector.load %arg4[%c0_17, %c0_18, %c0_19] : memref<1x16x32xf32, #tpu.memory_space<vmem>>, vector<1x16x32xf32>
    %50 = vector.shape_cast %49 : vector<1x16x32xf32> to vector<16x32xf32>
    %51 = vector.shape_cast %48 : vector<16x32xf32> to vector<1x16x32xf32>
    tpu.vector_store %arg4[%c0_17, %c0_18, %c0_19], %51 {strides = array<i32>} : memref<1x16x32xf32, #tpu.memory_space<vmem>>, vector<1x16x32xf32>,
    return
  }
  func.func @transform_0(%arg0: i32) -> (i32, i32, i32) {
    %c0_i32 = arith.constant 0 : i32
    %c0_i32_0 = arith.constant 0 : i32
    %c0_i32_1 = arith.constant 0 : i32
    return %arg0, %c0_i32, %c0_i32_0 : i32, i32, i32
  }
  func.func @transform_1(%arg0: i32) -> (i32, i32, i32) {
    %c0_i32 = arith.constant 0 : i32
    %c0_i32_0 = arith.constant 0 : i32
    %c0_i32_1 = arith.constant 0 : i32
    return %arg0, %c0_i32, %c0_i32_0 : i32, i32, i32
  }
  func.func @transform_2(%arg0: i32) -> (i32, i32, i32) {
    %c0_i32 = arith.constant 0 : i32
    %c0_i32_0 = arith.constant 0 : i32
    %c0_i32_1 = arith.constant 0 : i32
    return %arg0, %c0_i32, %c0_i32_0 : i32, i32, i32
  }
  func.func @transform_3(%arg0: i32) -> (i32, i32, i32) {
    %c0_i32 = arith.constant 0 : i32
    %c0_i32_0 = arith.constant 0 : i32
    %c0_i32_1 = arith.constant 0 : i32
    return %arg0, %c0_i32, %c0_i32_0 : i32, i32, i32
  }
}

module attributes {stable_mosaic.version = 11 : i64} {
  func.func @_mix_kernel(%arg0: i32, %arg1: memref<32x16xf32, #tpu.memory_space<vmem>>, %arg2: memref<32x16xf32, #tpu.memory_space<vmem>>, %arg3: memref<32x1xf32, #tpu.memory_space<vmem>>, %arg4: memref<32x16xf32, #tpu.memory_space<vmem>>) attributes {dimension_semantics = [#tpu.dimension_semantics<parallel>], iteration_bounds = array<i64: 1>, scalar_prefetch = 0 : i64, scratch_operands = 0 : i64, tpu.core_type = #tpu.core_type<tc>, window_params = [{transform_indices = @transform_0, window_bounds = array<i64: 32, 16>}, {transform_indices = @transform_1, window_bounds = array<i64: 32, 16>}, {transform_indices = @transform_2, window_bounds = array<i64: 32, 1>}, {transform_indices = @transform_3, window_bounds = array<i64: 32, 16>}]} {
    %c0 = arith.constant 0 : index
    %c0_0 = arith.constant 0 : index
    %0 = vector.load %arg3[%c0, %c0_0] : memref<32x1xf32, #tpu.memory_space<vmem>>, vector<32x1xf32>
    %c0_1 = arith.constant 0 : index
    %c0_2 = arith.constant 0 : index
    %1 = vector.load %arg1[%c0_1, %c0_2] : memref<32x16xf32, #tpu.memory_space<vmem>>, vector<32x16xf32>
    %2 = vector.broadcast %0 : vector<32x1xf32> to vector<32x16xf32>
    %3 = arith.mulf %2, %1 : vector<32x16xf32>
    %cst = arith.constant 1.000000e+00 : f32
    %4 = vector.broadcast %cst : f32 to vector<32x1xf32>
    %5 = arith.subf %4, %0 : vector<32x1xf32>
    %c0_3 = arith.constant 0 : index
    %c0_4 = arith.constant 0 : index
    %6 = vector.load %arg2[%c0_3, %c0_4] : memref<32x16xf32, #tpu.memory_space<vmem>>, vector<32x16xf32>
    %7 = vector.broadcast %5 : vector<32x1xf32> to vector<32x16xf32>
    %8 = arith.mulf %7, %6 : vector<32x16xf32>
    %9 = arith.addf %3, %8 : vector<32x16xf32>
    %c0_5 = arith.constant 0 : index
    %c0_6 = arith.constant 0 : index
    %10 = vector.load %arg4[%c0_5, %c0_6] : memref<32x16xf32, #tpu.memory_space<vmem>>, vector<32x16xf32>
    tpu.vector_store %arg4[%c0_5, %c0_6], %9 {strides = array<i32>} : memref<32x16xf32, #tpu.memory_space<vmem>>, vector<32x16xf32>,
    return
  }
  func.func @transform_0(%arg0: i32) -> (i32, i32) {
    %c0_i32 = arith.constant 0 : i32
    %c0_i32_0 = arith.constant 0 : i32
    return %arg0, %c0_i32 : i32, i32
  }
  func.func @transform_1(%arg0: i32) -> (i32, i32) {
    %c0_i32 = arith.constant 0 : i32
    %c0_i32_0 = arith.constant 0 : i32
    return %arg0, %c0_i32 : i32, i32
  }
  func.func @transform_2(%arg0: i32) -> (i32, i32) {
    %c0_i32 = arith.constant 0 : i32
    %c0_i32_0 = arith.constant 0 : i32
    return %arg0, %c0_i32 : i32, i32
  }
  func.func @transform_3(%arg0: i32) -> (i32, i32) {
    %c0_i32 = arith.constant 0 : i32
    %c0_i32_0 = arith.constant 0 : i32
    return %arg0, %c0_i32 : i32, i32
  }
}

module attributes {stable_mosaic.version = 11 : i64} {
  func.func @_ln_kernel(%arg0: i32, %arg1: memref<64x32xf32, #tpu.memory_space<vmem>>, %arg2: memref<1x32xf32, #tpu.memory_space<vmem>>, %arg3: memref<1x32xf32, #tpu.memory_space<vmem>>, %arg4: memref<64x32xf32, #tpu.memory_space<vmem>>) attributes {dimension_semantics = [#tpu.dimension_semantics<parallel>], iteration_bounds = array<i64: 1>, scalar_prefetch = 0 : i64, scratch_operands = 0 : i64, tpu.core_type = #tpu.core_type<tc>, window_params = [{transform_indices = @transform_0, window_bounds = array<i64: 64, 32>}, {pipeline_mode = #tpu.pipeline_mode<synchronous>, transform_indices = @transform_1, window_bounds = array<i64: 1, 32>}, {pipeline_mode = #tpu.pipeline_mode<synchronous>, transform_indices = @transform_2, window_bounds = array<i64: 1, 32>}, {transform_indices = @transform_3, window_bounds = array<i64: 64, 32>}]} {
    %c0 = arith.constant 0 : index
    %c0_0 = arith.constant 0 : index
    %0 = vector.load %arg1[%c0, %c0_0] : memref<64x32xf32, #tpu.memory_space<vmem>>, vector<64x32xf32>
    %cst = arith.constant dense<0.000000e+00> : vector<64xf32>
    %1 = vector.multi_reduction <add>, %0, %cst [1] : vector<64x32xf32> to vector<64xf32>
    %2 = vector.shape_cast %1 : vector<64xf32> to vector<64x1xf32>
    %cst_1 = arith.constant 3.200000e+01 : f32
    %3 = vector.broadcast %cst_1 : f32 to vector<64x1xf32>
    %4 = arith.divf %2, %3 : vector<64x1xf32>
    %5 = vector.broadcast %4 : vector<64x1xf32> to vector<64x32xf32>
    %6 = arith.subf %0, %5 : vector<64x32xf32>
    %7 = arith.mulf %6, %6 : vector<64x32xf32>
    %cst_2 = arith.constant dense<0.000000e+00> : vector<64xf32>
    %8 = vector.multi_reduction <add>, %7, %cst_2 [1] : vector<64x32xf32> to vector<64xf32>
    %9 = vector.shape_cast %8 : vector<64xf32> to vector<64x1xf32>
    %cst_3 = arith.constant 3.200000e+01 : f32
    %10 = vector.broadcast %cst_3 : f32 to vector<64x1xf32>
    %11 = arith.divf %9, %10 : vector<64x1xf32>
    %12 = vector.broadcast %4 : vector<64x1xf32> to vector<64x32xf32>
    %13 = arith.subf %0, %12 : vector<64x32xf32>
    %cst_4 = arith.constant 9.99999974E-6 : f32
    %14 = vector.broadcast %cst_4 : f32 to vector<64x1xf32>
    %15 = arith.addf %11, %14 : vector<64x1xf32>
    %16 = math.rsqrt %15 : vector<64x1xf32>
    %17 = vector.broadcast %16 : vector<64x1xf32> to vector<64x32xf32>
    %18 = arith.mulf %13, %17 : vector<64x32xf32>
    %c0_5 = arith.constant 0 : index
    %c0_6 = arith.constant 0 : index
    %19 = vector.load %arg2[%c0_5, %c0_6] : memref<1x32xf32, #tpu.memory_space<vmem>>, vector<1x32xf32>
    %20 = vector.broadcast %19 : vector<1x32xf32> to vector<64x32xf32>
    %21 = arith.mulf %18, %20 : vector<64x32xf32>
    %c0_7 = arith.constant 0 : index
    %c0_8 = arith.constant 0 : index
    %22 = vector.load %arg3[%c0_7, %c0_8] : memref<1x32xf32, #tpu.memory_space<vmem>>, vector<1x32xf32>
    %23 = vector.broadcast %22 : vector<1x32xf32> to vector<64x32xf32>
    %24 = arith.addf %21, %23 : vector<64x32xf32>
    %c0_9 = arith.constant 0 : index
    %c0_10 = arith.constant 0 : index
    %25 = vector.load %arg4[%c0_9, %c0_10] : memref<64x32xf32, #tpu.memory_space<vmem>>, vector<64x32xf32>
    tpu.vector_store %arg4[%c0_9, %c0_10], %24 {strides = array<i32>} : memref<64x32xf32, #tpu.memory_space<vmem>>, vector<64x32xf32>,
    return
  }
  func.func @transform_0(%arg0: i32) -> (i32, i32) {
    %c0_i32 = arith.constant 0 : i32
    %c0_i32_0 = arith.constant 0 : i32
    return %arg0, %c0_i32 : i32, i32
  }
  func.func @transform_1(%arg0: i32) -> (i32, i32) {
    %c0_i32 = arith.constant 0 : i32
    %c0_i32_0 = arith.constant 0 : i32
    %c0_i32_1 = arith.constant 0 : i32
    return %c0_i32, %c0_i32_0 : i32, i32
  }
  func.func @transform_2(%arg0: i32) -> (i32, i32) {
    %c0_i32 = arith.constant 0 : i32
    %c0_i32_0 = arith.constant 0 : i32
    %c0_i32_1 = arith.constant 0 : i32
    return %c0_i32, %c0_i32_0 : i32, i32
  }
  func.func @transform_3(%arg0: i32) -> (i32, i32) {
    %c0_i32 = arith.constant 0 : i32
    %c0_i32_0 = arith.constant 0 : i32
    return %arg0, %c0_i32 : i32, i32
  }
}

module attributes {stable_mosaic.version = 11 : i64} {
  func.func @_linear_kernel(%arg0: i32, %arg1: i32, %arg2: i32, %arg3: memref<64x128xbf16, #tpu.memory_space<vmem>>, %arg4: memref<128x128xbf16, #tpu.memory_space<vmem>>, %arg5: memref<1x128xf32, #tpu.memory_space<vmem>>, %arg6: memref<64x128xf32, #tpu.memory_space<vmem>>, %arg7: memref<64x128xf32, #tpu.memory_space<vmem>>) attributes {dimension_semantics = [#tpu.dimension_semantics<parallel>, #tpu.dimension_semantics<parallel>, #tpu.dimension_semantics<arbitrary>], iteration_bounds = array<i64: 1, 1, 1>, scalar_prefetch = 0 : i64, scratch_operands = 1 : i64, tpu.core_type = #tpu.core_type<tc>, window_params = [{transform_indices = @transform_0, window_bounds = array<i64: 64, 128>}, {transform_indices = @transform_1, window_bounds = array<i64: 128, 128>}, {transform_indices = @transform_2, window_bounds = array<i64: 1, 128>}, {transform_indices = @transform_3, window_bounds = array<i64: 64, 128>}]} {
    %c0_i32 = arith.constant 0 : i32
    %0 = arith.cmpi eq, %arg2, %c0_i32 : i32
    %1 = arith.extui %0 : i1 to i32
    %c0_i32_0 = arith.constant 0 : i32
    %2 = arith.cmpi ne, %1, %c0_i32_0 : i32
    scf.if %2 {
      %cst_10 = arith.constant 0.000000e+00 : f32
      %12 = vector.broadcast %cst_10 : f32 to vector<64x128xf32>
      %c0_11 = arith.constant 0 : index
      %c0_12 = arith.constant 0 : index
      %13 = vector.load %arg7[%c0_11, %c0_12] : memref<64x128xf32, #tpu.memory_space<vmem>>, vector<64x128xf32>
      tpu.vector_store %arg7[%c0_11, %c0_12], %12 {strides = array<i32>} : memref<64x128xf32, #tpu.memory_space<vmem>>, vector<64x128xf32>,
    } else {
    }
    %c0 = arith.constant 0 : index
    %c0_1 = arith.constant 0 : index
    %3 = vector.load %arg7[%c0, %c0_1] : memref<64x128xf32, #tpu.memory_space<vmem>>, vector<64x128xf32>
    %c0_2 = arith.constant 0 : index
    %c0_3 = arith.constant 0 : index
    %4 = vector.load %arg3[%c0_2, %c0_3] : memref<64x128xbf16, #tpu.memory_space<vmem>>, vector<64x128xbf16>
    %c0_4 = arith.constant 0 : index
    %c0_5 = arith.constant 0 : index
    %5 = vector.load %arg4[%c0_4, %c0_5] : memref<128x128xbf16, #tpu.memory_space<vmem>>, vector<128x128xbf16>
    %cst = arith.constant dense<0.000000e+00> : vector<64x128xf32>
    %6 = tpu.matmul %4, %5, %cst {dimension_numbers = #tpu.dot_dimension_numbers<[1], [0], [0], [1], [0, 0, 1, 1], [], []>} : vector<64x128xbf16>, vector<128x128xbf16>, vector<64x128xf32> -> vector<64x128xf32>
    %7 = arith.addf %3, %6 : vector<64x128xf32>
    %c0_6 = arith.constant 0 : index
    %c0_7 = arith.constant 0 : index
    %8 = vector.load %arg7[%c0_6, %c0_7] : memref<64x128xf32, #tpu.memory_space<vmem>>, vector<64x128xf32>
    tpu.vector_store %arg7[%c0_6, %c0_7], %7 {strides = array<i32>} : memref<64x128xf32, #tpu.memory_space<vmem>>, vector<64x128xf32>,
    %c0_i32_8 = arith.constant 0 : i32
    %9 = arith.cmpi eq, %arg2, %c0_i32_8 : i32
    %10 = arith.extui %9 : i1 to i32
    %c0_i32_9 = arith.constant 0 : i32
    %11 = arith.cmpi ne, %10, %c0_i32_9 : i32
    scf.if %11 {
      %c0_10 = arith.constant 0 : index
      %c0_11 = arith.constant 0 : index
      %12 = vector.load %arg7[%c0_10, %c0_11] : memref<64x128xf32, #tpu.memory_space<vmem>>, vector<64x128xf32>
      %c0_12 = arith.constant 0 : index
      %c0_13 = arith.constant 0 : index
      %13 = vector.load %arg5[%c0_12, %c0_13] : memref<1x128xf32, #tpu.memory_space<vmem>>, vector<1x128xf32>
      %14 = vector.broadcast %13 : vector<1x128xf32> to vector<64x128xf32>
      %15 = arith.addf %12, %14 : vector<64x128xf32>
      %c0_14 = arith.constant 0 : index
      %c0_15 = arith.constant 0 : index
      %16 = vector.load %arg6[%c0_14, %c0_15] : memref<64x128xf32, #tpu.memory_space<vmem>>, vector<64x128xf32>
      tpu.vector_store %arg6[%c0_14, %c0_15], %15 {strides = array<i32>} : memref<64x128xf32, #tpu.memory_space<vmem>>, vector<64x128xf32>,
    } else {
    }
    return
  }
  func.func @transform_0(%arg0: i32, %arg1: i32, %arg2: i32) -> (i32, i32) {
    %c0_i32 = arith.constant 0 : i32
    return %arg0, %arg2 : i32, i32
  }
  func.func @transform_1(%arg0: i32, %arg1: i32, %arg2: i32) -> (i32, i32) {
    %c0_i32 = arith.constant 0 : i32
    return %arg2, %arg1 : i32, i32
  }
  func.func @transform_2(%arg0: i32, %arg1: i32, %arg2: i32) -> (i32, i32) {
    %c0_i32 = arith.constant 0 : i32
    %c0_i32_0 = arith.constant 0 : i32
    return %c0_i32, %arg1 : i32, i32
  }
  func.func @transform_3(%arg0: i32, %arg1: i32, %arg2: i32) -> (i32, i32) {
    %c0_i32 = arith.constant 0 : i32
    return %arg0, %arg1 : i32, i32
  }
}

module attributes {stable_mosaic.version = 11 : i64} {
  func.func @_mha_kernel(%arg0: i32, %arg1: memref<1x32x32xf32, #tpu.memory_space<vmem>>, %arg2: memref<1x32x32xf32, #tpu.memory_space<vmem>>, %arg3: memref<1x32x32xf32, #tpu.memory_space<vmem>>, %arg4: memref<1x32x32xf32, #tpu.memory_space<vmem>>) attributes {dimension_semantics = [#tpu.dimension_semantics<parallel>], iteration_bounds = array<i64: 2>, scalar_prefetch = 0 : i64, scratch_operands = 0 : i64, tpu.core_type = #tpu.core_type<tc>, window_params = [{transform_indices = @transform_0, window_bounds = array<i64: 1, 32, 32>}, {transform_indices = @transform_1, window_bounds = array<i64: 1, 32, 32>}, {transform_indices = @transform_2, window_bounds = array<i64: 1, 32, 32>}, {transform_indices = @transform_3, window_bounds = array<i64: 1, 32, 32>}]} {
    %c0 = arith.constant 0 : index
    %c0_0 = arith.constant 0 : index
    %c0_1 = arith.constant 0 : index
    %0 = vector.load %arg1[%c0, %c0_0, %c0_1] : memref<1x32x32xf32, #tpu.memory_space<vmem>>, vector<1x32x32xf32>
    %1 = vector.shape_cast %0 : vector<1x32x32xf32> to vector<32x32xf32>
    %c0_2 = arith.constant 0 : index
    %c0_3 = arith.constant 0 : index
    %c0_4 = arith.constant 0 : index
    %2 = vector.load %arg2[%c0_2, %c0_3, %c0_4] : memref<1x32x32xf32, #tpu.memory_space<vmem>>, vector<1x32x32xf32>
    %3 = vector.shape_cast %2 : vector<1x32x32xf32> to vector<32x32xf32>
    %c0_5 = arith.constant 0 : index
    %c0_6 = arith.constant 0 : index
    %c0_7 = arith.constant 0 : index
    %4 = vector.load %arg3[%c0_5, %c0_6, %c0_7] : memref<1x32x32xf32, #tpu.memory_space<vmem>>, vector<1x32x32xf32>
    %5 = vector.shape_cast %4 : vector<1x32x32xf32> to vector<32x32xf32>
    %6 = vector.extract_strided_slice %1 {offsets = [0, 0], sizes = [32, 16], strides = [1, 1]} : vector<32x32xf32> to vector<32x16xf32>
    %7 = arith.truncf %6 : vector<32x16xf32> to vector<32x16xbf16>
    %8 = vector.extract_strided_slice %3 {offsets = [0, 0], sizes = [32, 16], strides = [1, 1]} : vector<32x32xf32> to vector<32x16xf32>
    %9 = arith.truncf %8 : vector<32x16xf32> to vector<32x16xbf16>
    %10 = vector.extract_strided_slice %5 {offsets = [0, 0], sizes = [32, 16], strides = [1, 1]} : vector<32x32xf32> to vector<32x16xf32>
    %11 = arith.truncf %10 : vector<32x16xf32> to vector<32x16xbf16>
    %cst = arith.constant dense<0.000000e+00> : vector<32x32xf32>
    %12 = tpu.matmul %7, %9, %cst {dimension_numbers = #tpu.dot_dimension_numbers<[1], [1], [0], [0], [0, 0, 1, 0], [], []>} : vector<32x16xbf16>, vector<32x16xbf16>, vector<32x32xf32> -> vector<32x32xf32>
    %cst_8 = arith.constant 2.500000e-01 : f32
    %13 = vector.broadcast %cst_8 : f32 to vector<32x32xf32>
    %14 = arith.mulf %12, %13 : vector<32x32xf32>
    %cst_9 = arith.constant dense<0xFF800000> : vector<32xf32>
    %15 = vector.multi_reduction <maximumf>, %14, %cst_9 [1] : vector<32x32xf32> to vector<32xf32>
    %16 = vector.shape_cast %15 : vector<32xf32> to vector<32x1xf32>
    %17 = vector.broadcast %16 : vector<32x1xf32> to vector<32x32xf32>
    %18 = arith.subf %14, %17 : vector<32x32xf32>
    %19 = math.exp %18 : vector<32x32xf32>
    %cst_10 = arith.constant dense<0.000000e+00> : vector<32xf32>
    %20 = vector.multi_reduction <add>, %19, %cst_10 [1] : vector<32x32xf32> to vector<32xf32>
    %21 = vector.shape_cast %20 : vector<32xf32> to vector<32x1xf32>
    %22 = tpu.reciprocal %21 {approx = true} : vector<32x1xf32> -> vector<32x1xf32>
    %23 = vector.broadcast %22 : vector<32x1xf32> to vector<32x32xf32>
    %24 = arith.mulf %19, %23 : vector<32x32xf32>
    %25 = arith.truncf %24 : vector<32x32xf32> to vector<32x32xbf16>
    %cst_11 = arith.constant dense<0.000000e+00> : vector<32x16xf32>
    %26 = tpu.matmul %25, %11, %cst_11 {dimension_numbers = #tpu.dot_dimension_numbers<[1], [0], [0], [1], [0, 0, 1, 1], [], []>} : vector<32x32xbf16>, vector<32x16xbf16>, vector<32x16xf32> -> vector<32x16xf32>
    %27 = vector.extract_strided_slice %1 {offsets = [0, 16], sizes = [32, 16], strides = [1, 1]} : vector<32x32xf32> to vector<32x16xf32>
    %28 = arith.truncf %27 : vector<32x16xf32> to vector<32x16xbf16>
    %29 = vector.extract_strided_slice %3 {offsets = [0, 16], sizes = [32, 16], strides = [1, 1]} : vector<32x32xf32> to vector<32x16xf32>
    %30 = arith.truncf %29 : vector<32x16xf32> to vector<32x16xbf16>
    %31 = vector.extract_strided_slice %5 {offsets = [0, 16], sizes = [32, 16], strides = [1, 1]} : vector<32x32xf32> to vector<32x16xf32>
    %32 = arith.truncf %31 : vector<32x16xf32> to vector<32x16xbf16>
    %cst_12 = arith.constant dense<0.000000e+00> : vector<32x32xf32>
    %33 = tpu.matmul %28, %30, %cst_12 {dimension_numbers = #tpu.dot_dimension_numbers<[1], [1], [0], [0], [0, 0, 1, 0], [], []>} : vector<32x16xbf16>, vector<32x16xbf16>, vector<32x32xf32> -> vector<32x32xf32>
    %cst_13 = arith.constant 2.500000e-01 : f32
    %34 = vector.broadcast %cst_13 : f32 to vector<32x32xf32>
    %35 = arith.mulf %33, %34 : vector<32x32xf32>
    %cst_14 = arith.constant dense<0xFF800000> : vector<32xf32>
    %36 = vector.multi_reduction <maximumf>, %35, %cst_14 [1] : vector<32x32xf32> to vector<32xf32>
    %37 = vector.shape_cast %36 : vector<32xf32> to vector<32x1xf32>
    %38 = vector.broadcast %37 : vector<32x1xf32> to vector<32x32xf32>
    %39 = arith.subf %35, %38 : vector<32x32xf32>
    %40 = math.exp %39 : vector<32x32xf32>
    %cst_15 = arith.constant dense<0.000000e+00> : vector<32xf32>
    %41 = vector.multi_reduction <add>, %40, %cst_15 [1] : vector<32x32xf32> to vector<32xf32>
    %42 = vector.shape_cast %41 : vector<32xf32> to vector<32x1xf32>
    %43 = tpu.reciprocal %42 {approx = true} : vector<32x1xf32> -> vector<32x1xf32>
    %44 = vector.broadcast %43 : vector<32x1xf32> to vector<32x32xf32>
    %45 = arith.mulf %40, %44 : vector<32x32xf32>
    %46 = arith.truncf %45 : vector<32x32xf32> to vector<32x32xbf16>
    %cst_16 = arith.constant dense<0.000000e+00> : vector<32x16xf32>
    %47 = tpu.matmul %46, %32, %cst_16 {dimension_numbers = #tpu.dot_dimension_numbers<[1], [0], [0], [1], [0, 0, 1, 1], [], []>} : vector<32x32xbf16>, vector<32x16xbf16>, vector<32x16xf32> -> vector<32x16xf32>
    %48 = tpu.concatenate %26, %47 in 1 : vector<32x16xf32>, vector<32x16xf32> -> vector<32x32xf32>
    %c0_17 = arith.constant 0 : index
    %c0_18 = arith.constant 0 : index
    %c0_19 = arith.constant 0 : index
    %49 = vector.load %arg4[%c0_17, %c0_18, %c0_19] : memref<1x32x32xf32, #tpu.memory_space<vmem>>, vector<1x32x32xf32>
    %50 = vector.shape_cast %49 : vector<1x32x32xf32> to vector<32x32xf32>
    %51 = vector.shape_cast %48 : vector<32x32xf32> to vector<1x32x32xf32>
    tpu.vector_store %arg4[%c0_17, %c0_18, %c0_19], %51 {strides = array<i32>} : memref<1x32x32xf32, #tpu.memory_space<vmem>>, vector<1x32x32xf32>,
    return
  }
  func.func @transform_0(%arg0: i32) -> (i32, i32, i32) {
    %c0_i32 = arith.constant 0 : i32
    %c0_i32_0 = arith.constant 0 : i32
    %c0_i32_1 = arith.constant 0 : i32
    return %arg0, %c0_i32, %c0_i32_0 : i32, i32, i32
  }
  func.func @transform_1(%arg0: i32) -> (i32, i32, i32) {
    %c0_i32 = arith.constant 0 : i32
    %c0_i32_0 = arith.constant 0 : i32
    %c0_i32_1 = arith.constant 0 : i32
    return %arg0, %c0_i32, %c0_i32_0 : i32, i32, i32
  }
  func.func @transform_2(%arg0: i32) -> (i32, i32, i32) {
    %c0_i32 = arith.constant 0 : i32
    %c0_i32_0 = arith.constant 0 : i32
    %c0_i32_1 = arith.constant 0 : i32
    return %arg0, %c0_i32, %c0_i32_0 : i32, i32, i32
  }
  func.func @transform_3(%arg0: i32) -> (i32, i32, i32) {
    %c0_i32 = arith.constant 0 : i32
    %c0_i32_0 = arith.constant 0 : i32
    %c0_i32_1 = arith.constant 0 : i32
    return %arg0, %c0_i32, %c0_i32_0 : i32, i32, i32
  }
}

module attributes {stable_mosaic.version = 11 : i64} {
  func.func @_mha_kernel(%arg0: i32, %arg1: memref<1x32x32xf32, #tpu.memory_space<vmem>>, %arg2: memref<1x16x32xf32, #tpu.memory_space<vmem>>, %arg3: memref<1x16x32xf32, #tpu.memory_space<vmem>>, %arg4: memref<1x32x32xf32, #tpu.memory_space<vmem>>) attributes {dimension_semantics = [#tpu.dimension_semantics<parallel>], iteration_bounds = array<i64: 2>, scalar_prefetch = 0 : i64, scratch_operands = 0 : i64, tpu.core_type = #tpu.core_type<tc>, window_params = [{transform_indices = @transform_0, window_bounds = array<i64: 1, 32, 32>}, {transform_indices = @transform_1, window_bounds = array<i64: 1, 16, 32>}, {transform_indices = @transform_2, window_bounds = array<i64: 1, 16, 32>}, {transform_indices = @transform_3, window_bounds = array<i64: 1, 32, 32>}]} {
    %c0 = arith.constant 0 : index
    %c0_0 = arith.constant 0 : index
    %c0_1 = arith.constant 0 : index
    %0 = vector.load %arg1[%c0, %c0_0, %c0_1] : memref<1x32x32xf32, #tpu.memory_space<vmem>>, vector<1x32x32xf32>
    %1 = vector.shape_cast %0 : vector<1x32x32xf32> to vector<32x32xf32>
    %c0_2 = arith.constant 0 : index
    %c0_3 = arith.constant 0 : index
    %c0_4 = arith.constant 0 : index
    %2 = vector.load %arg2[%c0_2, %c0_3, %c0_4] : memref<1x16x32xf32, #tpu.memory_space<vmem>>, vector<1x16x32xf32>
    %3 = vector.shape_cast %2 : vector<1x16x32xf32> to vector<16x32xf32>
    %c0_5 = arith.constant 0 : index
    %c0_6 = arith.constant 0 : index
    %c0_7 = arith.constant 0 : index
    %4 = vector.load %arg3[%c0_5, %c0_6, %c0_7] : memref<1x16x32xf32, #tpu.memory_space<vmem>>, vector<1x16x32xf32>
    %5 = vector.shape_cast %4 : vector<1x16x32xf32> to vector<16x32xf32>
    %6 = vector.extract_strided_slice %1 {offsets = [0, 0], sizes = [32, 16], strides = [1, 1]} : vector<32x32xf32> to vector<32x16xf32>
    %7 = arith.truncf %6 : vector<32x16xf32> to vector<32x16xbf16>
    %8 = vector.extract_strided_slice %3 {offsets = [0, 0], sizes = [16, 16], strides = [1, 1]} : vector<16x32xf32> to vector<16x16xf32>
    %9 = arith.truncf %8 : vector<16x16xf32> to vector<16x16xbf16>
    %10 = vector.extract_strided_slice %5 {offsets = [0, 0], sizes = [16, 16], strides = [1, 1]} : vector<16x32xf32> to vector<16x16xf32>
    %11 = arith.truncf %10 : vector<16x16xf32> to vector<16x16xbf16>
    %cst = arith.constant dense<0.000000e+00> : vector<32x16xf32>
    %12 = tpu.matmul %7, %9, %cst {dimension_numbers = #tpu.dot_dimension_numbers<[1], [1], [0], [0], [0, 0, 1, 0], [], []>} : vector<32x16xbf16>, vector<16x16xbf16>, vector<32x16xf32> -> vector<32x16xf32>
    %cst_8 = arith.constant 2.500000e-01 : f32
    %13 = vector.broadcast %cst_8 : f32 to vector<32x16xf32>
    %14 = arith.mulf %12, %13 : vector<32x16xf32>
    %cst_9 = arith.constant dense<0xFF800000> : vector<32xf32>
    %15 = vector.multi_reduction <maximumf>, %14, %cst_9 [1] : vector<32x16xf32> to vector<32xf32>
    %16 = vector.shape_cast %15 : vector<32xf32> to vector<32x1xf32>
    %17 = vector.broadcast %16 : vector<32x1xf32> to vector<32x16xf32>
    %18 = arith.subf %14, %17 : vector<32x16xf32>
    %19 = math.exp %18 : vector<32x16xf32>
    %cst_10 = arith.constant dense<0.000000e+00> : vector<32xf32>
    %20 = vector.multi_reduction <add>, %19, %cst_10 [1] : vector<32x16xf32> to vector<32xf32>
    %21 = vector.shape_cast %20 : vector<32xf32> to vector<32x1xf32>
    %22 = tpu.reciprocal %21 {approx = true} : vector<32x1xf32> -> vector<32x1xf32>
    %23 = vector.broadcast %22 : vector<32x1xf32> to vector<32x16xf32>
    %24 = arith.mulf %19, %23 : vector<32x16xf32>
    %25 = arith.truncf %24 : vector<32x16xf32> to vector<32x16xbf16>
    %cst_11 = arith.constant dense<0.000000e+00> : vector<32x16xf32>
    %26 = tpu.matmul %25, %11, %cst_11 {dimension_numbers = #tpu.dot_dimension_numbers<[1], [0], [0], [1], [0, 0, 1, 1], [], []>} : vector<32x16xbf16>, vector<16x16xbf16>, vector<32x16xf32> -> vector<32x16xf32>
    %27 = vector.extract_strided_slice %1 {offsets = [0, 16], sizes = [32, 16], strides = [1, 1]} : vector<32x32xf32> to vector<32x16xf32>
    %28 = arith.truncf %27 : vector<32x16xf32> to vector<32x16xbf16>
    %29 = vector.extract_strided_slice %3 {offsets = [0, 16], sizes = [16, 16], strides = [1, 1]} : vector<16x32xf32> to vector<16x16xf32>
    %30 = arith.truncf %29 : vector<16x16xf32> to vector<16x16xbf16>
    %31 = vector.extract_strided_slice %5 {offsets = [0, 16], sizes = [16, 16], strides = [1, 1]} : vector<16x32xf32> to vector<16x16xf32>
    %32 = arith.truncf %31 : vector<16x16xf32> to vector<16x16xbf16>
    %cst_12 = arith.constant dense<0.000000e+00> : vector<32x16xf32>
    %33 = tpu.matmul %28, %30, %cst_12 {dimension_numbers = #tpu.dot_dimension_numbers<[1], [1], [0], [0], [0, 0, 1, 0], [], []>} : vector<32x16xbf16>, vector<16x16xbf16>, vector<32x16xf32> -> vector<32x16xf32>
    %cst_13 = arith.constant 2.500000e-01 : f32
    %34 = vector.broadcast %cst_13 : f32 to vector<32x16xf32>
    %35 = arith.mulf %33, %34 : vector<32x16xf32>
    %cst_14 = arith.constant dense<0xFF800000> : vector<32xf32>
    %36 = vector.multi_reduction <maximumf>, %35, %cst_14 [1] : vector<32x16xf32> to vector<32xf32>
    %37 = vector.shape_cast %36 : vector<32xf32> to vector<32x1xf32>
    %38 = vector.broadcast %37 : vector<32x1xf32> to vector<32x16xf32>
    %39 = arith.subf %35, %38 : vector<32x16xf32>
    %40 = math.exp %39 : vector<32x16xf32>
    %cst_15 = arith.constant dense<0.000000e+00> : vector<32xf32>
    %41 = vector.multi_reduction <add>, %40, %cst_15 [1] : vector<32x16xf32> to vector<32xf32>
    %42 = vector.shape_cast %41 : vector<32xf32> to vector<32x1xf32>
    %43 = tpu.reciprocal %42 {approx = true} : vector<32x1xf32> -> vector<32x1xf32>
    %44 = vector.broadcast %43 : vector<32x1xf32> to vector<32x16xf32>
    %45 = arith.mulf %40, %44 : vector<32x16xf32>
    %46 = arith.truncf %45 : vector<32x16xf32> to vector<32x16xbf16>
    %cst_16 = arith.constant dense<0.000000e+00> : vector<32x16xf32>
    %47 = tpu.matmul %46, %32, %cst_16 {dimension_numbers = #tpu.dot_dimension_numbers<[1], [0], [0], [1], [0, 0, 1, 1], [], []>} : vector<32x16xbf16>, vector<16x16xbf16>, vector<32x16xf32> -> vector<32x16xf32>
    %48 = tpu.concatenate %26, %47 in 1 : vector<32x16xf32>, vector<32x16xf32> -> vector<32x32xf32>
    %c0_17 = arith.constant 0 : index
    %c0_18 = arith.constant 0 : index
    %c0_19 = arith.constant 0 : index
    %49 = vector.load %arg4[%c0_17, %c0_18, %c0_19] : memref<1x32x32xf32, #tpu.memory_space<vmem>>, vector<1x32x32xf32>
    %50 = vector.shape_cast %49 : vector<1x32x32xf32> to vector<32x32xf32>
    %51 = vector.shape_cast %48 : vector<32x32xf32> to vector<1x32x32xf32>
    tpu.vector_store %arg4[%c0_17, %c0_18, %c0_19], %51 {strides = array<i32>} : memref<1x32x32xf32, #tpu.memory_space<vmem>>, vector<1x32x32xf32>,
    return
  }
  func.func @transform_0(%arg0: i32) -> (i32, i32, i32) {
    %c0_i32 = arith.constant 0 : i32
    %c0_i32_0 = arith.constant 0 : i32
    %c0_i32_1 = arith.constant 0 : i32
    return %arg0, %c0_i32, %c0_i32_0 : i32, i32, i32
  }
  func.func @transform_1(%arg0: i32) -> (i32, i32, i32) {
    %c0_i32 = arith.constant 0 : i32
    %c0_i32_0 = arith.constant 0 : i32
    %c0_i32_1 = arith.constant 0 : i32
    return %arg0, %c0_i32, %c0_i32_0 : i32, i32, i32
  }
  func.func @transform_2(%arg0: i32) -> (i32, i32, i32) {
    %c0_i32 = arith.constant 0 : i32
    %c0_i32_0 = arith.constant 0 : i32
    %c0_i32_1 = arith.constant 0 : i32
    return %arg0, %c0_i32, %c0_i32_0 : i32, i32, i32
  }
  func.func @transform_3(%arg0: i32) -> (i32, i32, i32) {
    %c0_i32 = arith.constant 0 : i32
    %c0_i32_0 = arith.constant 0 : i32
    %c0_i32_1 = arith.constant 0 : i32
    return %arg0, %c0_i32, %c0_i32_0 : i32, i32, i32
  }
}

module attributes {stable_mosaic.version = 11 : i64} {
  func.func @_mha_kernel(%arg0: i32, %arg1: memref<1x32x32xf32, #tpu.memory_space<vmem>>, %arg2: memref<1x8x32xf32, #tpu.memory_space<vmem>>, %arg3: memref<1x8x32xf32, #tpu.memory_space<vmem>>, %arg4: memref<1x32x32xf32, #tpu.memory_space<vmem>>) attributes {dimension_semantics = [#tpu.dimension_semantics<parallel>], iteration_bounds = array<i64: 2>, scalar_prefetch = 0 : i64, scratch_operands = 0 : i64, tpu.core_type = #tpu.core_type<tc>, window_params = [{transform_indices = @transform_0, window_bounds = array<i64: 1, 32, 32>}, {transform_indices = @transform_1, window_bounds = array<i64: 1, 8, 32>}, {transform_indices = @transform_2, window_bounds = array<i64: 1, 8, 32>}, {transform_indices = @transform_3, window_bounds = array<i64: 1, 32, 32>}]} {
    %c0 = arith.constant 0 : index
    %c0_0 = arith.constant 0 : index
    %c0_1 = arith.constant 0 : index
    %0 = vector.load %arg1[%c0, %c0_0, %c0_1] : memref<1x32x32xf32, #tpu.memory_space<vmem>>, vector<1x32x32xf32>
    %1 = vector.shape_cast %0 : vector<1x32x32xf32> to vector<32x32xf32>
    %c0_2 = arith.constant 0 : index
    %c0_3 = arith.constant 0 : index
    %c0_4 = arith.constant 0 : index
    %2 = vector.load %arg2[%c0_2, %c0_3, %c0_4] : memref<1x8x32xf32, #tpu.memory_space<vmem>>, vector<1x8x32xf32>
    %3 = vector.shape_cast %2 : vector<1x8x32xf32> to vector<8x32xf32>
    %c0_5 = arith.constant 0 : index
    %c0_6 = arith.constant 0 : index
    %c0_7 = arith.constant 0 : index
    %4 = vector.load %arg3[%c0_5, %c0_6, %c0_7] : memref<1x8x32xf32, #tpu.memory_space<vmem>>, vector<1x8x32xf32>
    %5 = vector.shape_cast %4 : vector<1x8x32xf32> to vector<8x32xf32>
    %6 = vector.extract_strided_slice %1 {offsets = [0, 0], sizes = [32, 16], strides = [1, 1]} : vector<32x32xf32> to vector<32x16xf32>
    %7 = arith.truncf %6 : vector<32x16xf32> to vector<32x16xbf16>
    %8 = vector.extract_strided_slice %3 {offsets = [0, 0], sizes = [8, 16], strides = [1, 1]} : vector<8x32xf32> to vector<8x16xf32>
    %9 = arith.truncf %8 : vector<8x16xf32> to vector<8x16xbf16>
    %10 = vector.extract_strided_slice %5 {offsets = [0, 0], sizes = [8, 16], strides = [1, 1]} : vector<8x32xf32> to vector<8x16xf32>
    %11 = arith.truncf %10 : vector<8x16xf32> to vector<8x16xbf16>
    %cst = arith.constant dense<0.000000e+00> : vector<32x8xf32>
    %12 = tpu.matmul %7, %9, %cst {dimension_numbers = #tpu.dot_dimension_numbers<[1], [1], [0], [0], [0, 0, 1, 0], [], []>} : vector<32x16xbf16>, vector<8x16xbf16>, vector<32x8xf32> -> vector<32x8xf32>
    %cst_8 = arith.constant 2.500000e-01 : f32
    %13 = vector.broadcast %cst_8 : f32 to vector<32x8xf32>
    %14 = arith.mulf %12, %13 : vector<32x8xf32>
    %cst_9 = arith.constant dense<0xFF800000> : vector<32xf32>
    %15 = vector.multi_reduction <maximumf>, %14, %cst_9 [1] : vector<32x8xf32> to vector<32xf32>
    %16 = vector.shape_cast %15 : vector<32xf32> to vector<32x1xf32>
    %17 = vector.broadcast %16 : vector<32x1xf32> to vector<32x8xf32>
    %18 = arith.subf %14, %17 : vector<32x8xf32>
    %19 = math.exp %18 : vector<32x8xf32>
    %cst_10 = arith.constant dense<0.000000e+00> : vector<32xf32>
    %20 = vector.multi_reduction <add>, %19, %cst_10 [1] : vector<32x8xf32> to vector<32xf32>
    %21 = vector.shape_cast %20 : vector<32xf32> to vector<32x1xf32>
    %22 = tpu.reciprocal %21 {approx = true} : vector<32x1xf32> -> vector<32x1xf32>
    %23 = vector.broadcast %22 : vector<32x1xf32> to vector<32x8xf32>
    %24 = arith.mulf %19, %23 : vector<32x8xf32>
    %25 = arith.truncf %24 : vector<32x8xf32> to vector<32x8xbf16>
    %cst_11 = arith.constant dense<0.000000e+00> : vector<32x16xf32>
    %26 = tpu.matmul %25, %11, %cst_11 {dimension_numbers = #tpu.dot_dimension_numbers<[1], [0], [0], [1], [0, 0, 1, 1], [], []>} : vector<32x8xbf16>, vector<8x16xbf16>, vector<32x16xf32> -> vector<32x16xf32>
    %27 = vector.extract_strided_slice %1 {offsets = [0, 16], sizes = [32, 16], strides = [1, 1]} : vector<32x32xf32> to vector<32x16xf32>
    %28 = arith.truncf %27 : vector<32x16xf32> to vector<32x16xbf16>
    %29 = vector.extract_strided_slice %3 {offsets = [0, 16], sizes = [8, 16], strides = [1, 1]} : vector<8x32xf32> to vector<8x16xf32>
    %30 = arith.truncf %29 : vector<8x16xf32> to vector<8x16xbf16>
    %31 = vector.extract_strided_slice %5 {offsets = [0, 16], sizes = [8, 16], strides = [1, 1]} : vector<8x32xf32> to vector<8x16xf32>
    %32 = arith.truncf %31 : vector<8x16xf32> to vector<8x16xbf16>
    %cst_12 = arith.constant dense<0.000000e+00> : vector<32x8xf32>
    %33 = tpu.matmul %28, %30, %cst_12 {dimension_numbers = #tpu.dot_dimension_numbers<[1], [1], [0], [0], [0, 0, 1, 0], [], []>} : vector<32x16xbf16>, vector<8x16xbf16>, vector<32x8xf32> -> vector<32x8xf32>
    %cst_13 = arith.constant 2.500000e-01 : f32
    %34 = vector.broadcast %cst_13 : f32 to vector<32x8xf32>
    %35 = arith.mulf %33, %34 : vector<32x8xf32>
    %cst_14 = arith.constant dense<0xFF800000> : vector<32xf32>
    %36 = vector.multi_reduction <maximumf>, %35, %cst_14 [1] : vector<32x8xf32> to vector<32xf32>
    %37 = vector.shape_cast %36 : vector<32xf32> to vector<32x1xf32>
    %38 = vector.broadcast %37 : vector<32x1xf32> to vector<32x8xf32>
    %39 = arith.subf %35, %38 : vector<32x8xf32>
    %40 = math.exp %39 : vector<32x8xf32>
    %cst_15 = arith.constant dense<0.000000e+00> : vector<32xf32>
    %41 = vector.multi_reduction <add>, %40, %cst_15 [1] : vector<32x8xf32> to vector<32xf32>
    %42 = vector.shape_cast %41 : vector<32xf32> to vector<32x1xf32>
    %43 = tpu.reciprocal %42 {approx = true} : vector<32x1xf32> -> vector<32x1xf32>
    %44 = vector.broadcast %43 : vector<32x1xf32> to vector<32x8xf32>
    %45 = arith.mulf %40, %44 : vector<32x8xf32>
    %46 = arith.truncf %45 : vector<32x8xf32> to vector<32x8xbf16>
    %cst_16 = arith.constant dense<0.000000e+00> : vector<32x16xf32>
    %47 = tpu.matmul %46, %32, %cst_16 {dimension_numbers = #tpu.dot_dimension_numbers<[1], [0], [0], [1], [0, 0, 1, 1], [], []>} : vector<32x8xbf16>, vector<8x16xbf16>, vector<32x16xf32> -> vector<32x16xf32>
    %48 = tpu.concatenate %26, %47 in 1 : vector<32x16xf32>, vector<32x16xf32> -> vector<32x32xf32>
    %c0_17 = arith.constant 0 : index
    %c0_18 = arith.constant 0 : index
    %c0_19 = arith.constant 0 : index
    %49 = vector.load %arg4[%c0_17, %c0_18, %c0_19] : memref<1x32x32xf32, #tpu.memory_space<vmem>>, vector<1x32x32xf32>
    %50 = vector.shape_cast %49 : vector<1x32x32xf32> to vector<32x32xf32>
    %51 = vector.shape_cast %48 : vector<32x32xf32> to vector<1x32x32xf32>
    tpu.vector_store %arg4[%c0_17, %c0_18, %c0_19], %51 {strides = array<i32>} : memref<1x32x32xf32, #tpu.memory_space<vmem>>, vector<1x32x32xf32>,
    return
  }
  func.func @transform_0(%arg0: i32) -> (i32, i32, i32) {
    %c0_i32 = arith.constant 0 : i32
    %c0_i32_0 = arith.constant 0 : i32
    %c0_i32_1 = arith.constant 0 : i32
    return %arg0, %c0_i32, %c0_i32_0 : i32, i32, i32
  }
  func.func @transform_1(%arg0: i32) -> (i32, i32, i32) {
    %c0_i32 = arith.constant 0 : i32
    %c0_i32_0 = arith.constant 0 : i32
    %c0_i32_1 = arith.constant 0 : i32
    return %arg0, %c0_i32, %c0_i32_0 : i32, i32, i32
  }
  func.func @transform_2(%arg0: i32) -> (i32, i32, i32) {
    %c0_i32 = arith.constant 0 : i32
    %c0_i32_0 = arith.constant 0 : i32
    %c0_i32_1 = arith.constant 0 : i32
    return %arg0, %c0_i32, %c0_i32_0 : i32, i32, i32
  }
  func.func @transform_3(%arg0: i32) -> (i32, i32, i32) {
    %c0_i32 = arith.constant 0 : i32
    %c0_i32_0 = arith.constant 0 : i32
    %c0_i32_1 = arith.constant 0 : i32
    return %arg0, %c0_i32, %c0_i32_0 : i32, i32, i32
  }
}

module attributes {stable_mosaic.version = 11 : i64} {
  func.func @_linear_kernel(%arg0: i32, %arg1: i32, %arg2: i32, %arg3: memref<64x128xbf16, #tpu.memory_space<vmem>>, %arg4: memref<128x128xbf16, #tpu.memory_space<vmem>>, %arg5: memref<1x128xf32, #tpu.memory_space<vmem>>, %arg6: memref<64x128xf32, #tpu.memory_space<vmem>>, %arg7: memref<64x128xf32, #tpu.memory_space<vmem>>) attributes {dimension_semantics = [#tpu.dimension_semantics<parallel>, #tpu.dimension_semantics<parallel>, #tpu.dimension_semantics<arbitrary>], iteration_bounds = array<i64: 1, 1, 1>, scalar_prefetch = 0 : i64, scratch_operands = 1 : i64, tpu.core_type = #tpu.core_type<tc>, window_params = [{transform_indices = @transform_0, window_bounds = array<i64: 64, 128>}, {transform_indices = @transform_1, window_bounds = array<i64: 128, 128>}, {transform_indices = @transform_2, window_bounds = array<i64: 1, 128>}, {transform_indices = @transform_3, window_bounds = array<i64: 64, 128>}]} {
    %c0_i32 = arith.constant 0 : i32
    %0 = arith.cmpi eq, %arg2, %c0_i32 : i32
    %1 = arith.extui %0 : i1 to i32
    %c0_i32_0 = arith.constant 0 : i32
    %2 = arith.cmpi ne, %1, %c0_i32_0 : i32
    scf.if %2 {
      %cst_10 = arith.constant 0.000000e+00 : f32
      %12 = vector.broadcast %cst_10 : f32 to vector<64x128xf32>
      %c0_11 = arith.constant 0 : index
      %c0_12 = arith.constant 0 : index
      %13 = vector.load %arg7[%c0_11, %c0_12] : memref<64x128xf32, #tpu.memory_space<vmem>>, vector<64x128xf32>
      tpu.vector_store %arg7[%c0_11, %c0_12], %12 {strides = array<i32>} : memref<64x128xf32, #tpu.memory_space<vmem>>, vector<64x128xf32>,
    } else {
    }
    %c0 = arith.constant 0 : index
    %c0_1 = arith.constant 0 : index
    %3 = vector.load %arg7[%c0, %c0_1] : memref<64x128xf32, #tpu.memory_space<vmem>>, vector<64x128xf32>
    %c0_2 = arith.constant 0 : index
    %c0_3 = arith.constant 0 : index
    %4 = vector.load %arg3[%c0_2, %c0_3] : memref<64x128xbf16, #tpu.memory_space<vmem>>, vector<64x128xbf16>
    %c0_4 = arith.constant 0 : index
    %c0_5 = arith.constant 0 : index
    %5 = vector.load %arg4[%c0_4, %c0_5] : memref<128x128xbf16, #tpu.memory_space<vmem>>, vector<128x128xbf16>
    %cst = arith.constant dense<0.000000e+00> : vector<64x128xf32>
    %6 = tpu.matmul %4, %5, %cst {dimension_numbers = #tpu.dot_dimension_numbers<[1], [0], [0], [1], [0, 0, 1, 1], [], []>} : vector<64x128xbf16>, vector<128x128xbf16>, vector<64x128xf32> -> vector<64x128xf32>
    %7 = arith.addf %3, %6 : vector<64x128xf32>
    %c0_6 = arith.constant 0 : index
    %c0_7 = arith.constant 0 : index
    %8 = vector.load %arg7[%c0_6, %c0_7] : memref<64x128xf32, #tpu.memory_space<vmem>>, vector<64x128xf32>
    tpu.vector_store %arg7[%c0_6, %c0_7], %7 {strides = array<i32>} : memref<64x128xf32, #tpu.memory_space<vmem>>, vector<64x128xf32>,
    %c0_i32_8 = arith.constant 0 : i32
    %9 = arith.cmpi eq, %arg2, %c0_i32_8 : i32
    %10 = arith.extui %9 : i1 to i32
    %c0_i32_9 = arith.constant 0 : i32
    %11 = arith.cmpi ne, %10, %c0_i32_9 : i32
    scf.if %11 {
      %c0_10 = arith.constant 0 : index
      %c0_11 = arith.constant 0 : index
      %12 = vector.load %arg7[%c0_10, %c0_11] : memref<64x128xf32, #tpu.memory_space<vmem>>, vector<64x128xf32>
      %c0_12 = arith.constant 0 : index
      %c0_13 = arith.constant 0 : index
      %13 = vector.load %arg5[%c0_12, %c0_13] : memref<1x128xf32, #tpu.memory_space<vmem>>, vector<1x128xf32>
      %14 = vector.broadcast %13 : vector<1x128xf32> to vector<64x128xf32>
      %15 = arith.addf %12, %14 : vector<64x128xf32>
      %16 = arith.mulf %15, %15 : vector<64x128xf32>
      %17 = arith.mulf %15, %16 : vector<64x128xf32>
      %cst_14 = arith.constant 4.471500e-02 : f32
      %18 = vector.broadcast %cst_14 : f32 to vector<64x128xf32>
      %19 = arith.mulf %18, %17 : vector<64x128xf32>
      %20 = arith.addf %15, %19 : vector<64x128xf32>
      %cst_15 = arith.constant 0.797884583 : f32
      %21 = vector.broadcast %cst_15 : f32 to vector<64x128xf32>
      %22 = arith.mulf %21, %20 : vector<64x128xf32>
      %23 = math.tanh %22 : vector<64x128xf32>
      %cst_16 = arith.constant 1.000000e+00 : f32
      %24 = vector.broadcast %cst_16 : f32 to vector<64x128xf32>
      %25 = arith.addf %24, %23 : vector<64x128xf32>
      %cst_17 = arith.constant 5.000000e-01 : f32
      %26 = vector.broadcast %cst_17 : f32 to vector<64x128xf32>
      %27 = arith.mulf %26, %25 : vector<64x128xf32>
      %28 = arith.mulf %15, %27 : vector<64x128xf32>
      %c0_18 = arith.constant 0 : index
      %c0_19 = arith.constant 0 : index
      %29 = vector.load %arg6[%c0_18, %c0_19] : memref<64x128xf32, #tpu.memory_space<vmem>>, vector<64x128xf32>
      tpu.vector_store %arg6[%c0_18, %c0_19], %28 {strides = array<i32>} : memref<64x128xf32, #tpu.memory_space<vmem>>, vector<64x128xf32>,
    } else {
    }
    return
  }
  func.func @transform_0(%arg0: i32, %arg1: i32, %arg2: i32) -> (i32, i32) {
    %c0_i32 = arith.constant 0 : i32
    return %arg0, %arg2 : i32, i32
  }
  func.func @transform_1(%arg0: i32, %arg1: i32, %arg2: i32) -> (i32, i32) {
    %c0_i32 = arith.constant 0 : i32
    return %arg2, %arg1 : i32, i32
  }
  func.func @transform_2(%arg0: i32, %arg1: i32, %arg2: i32) -> (i32, i32) {
    %c0_i32 = arith.constant 0 : i32
    %c0_i32_0 = arith.constant 0 : i32
    return %c0_i32, %arg1 : i32, i32
  }
  func.func @transform_3(%arg0: i32, %arg1: i32, %arg2: i32) -> (i32, i32) {
    %c0_i32 = arith.constant 0 : i32
    return %arg0, %arg1 : i32, i32
  }
}

module attributes {stable_mosaic.version = 11 : i64} {
  func.func @_kl_kernel(%arg0: i32, %arg1: memref<16x32xf32, #tpu.memory_space<vmem>>, %arg2: memref<16x32xf32, #tpu.memory_space<vmem>>, %arg3: memref<1x128xf32, #tpu.memory_space<vmem>>) attributes {dimension_semantics = [#tpu.dimension_semantics<arbitrary>], iteration_bounds = array<i64: 1>, scalar_prefetch = 0 : i64, scratch_operands = 0 : i64, tpu.core_type = #tpu.core_type<tc>, window_params = [{transform_indices = @transform_0, window_bounds = array<i64: 16, 32>}, {transform_indices = @transform_1, window_bounds = array<i64: 16, 32>}, {pipeline_mode = #tpu.pipeline_mode<synchronous>, transform_indices = @transform_2, window_bounds = array<i64: 1, 128>}]} {
    %c0_i32 = arith.constant 0 : i32
    %0 = arith.cmpi eq, %arg0, %c0_i32 : i32
    %1 = arith.extui %0 : i1 to i32
    %c0_i32_0 = arith.constant 0 : i32
    %2 = arith.cmpi ne, %1, %c0_i32_0 : i32
    scf.if %2 {
      %cst_9 = arith.constant 0.000000e+00 : f32
      %19 = vector.broadcast %cst_9 : f32 to vector<1x128xf32>
      %c0_10 = arith.constant 0 : index
      %c0_11 = arith.constant 0 : index
      %20 = vector.load %arg3[%c0_10, %c0_11] : memref<1x128xf32, #tpu.memory_space<vmem>>, vector<1x128xf32>
      tpu.vector_store %arg3[%c0_10, %c0_11], %19 {strides = array<i32>} : memref<1x128xf32, #tpu.memory_space<vmem>>, vector<1x128xf32>,
    } else {
    }
    %c0 = arith.constant 0 : index
    %c0_1 = arith.constant 0 : index
    %3 = vector.load %arg1[%c0, %c0_1] : memref<16x32xf32, #tpu.memory_space<vmem>>, vector<16x32xf32>
    %c0_2 = arith.constant 0 : index
    %c0_3 = arith.constant 0 : index
    %4 = vector.load %arg2[%c0_2, %c0_3] : memref<16x32xf32, #tpu.memory_space<vmem>>, vector<16x32xf32>
    %5 = math.exp %4 : vector<16x32xf32>
    %6 = arith.mulf %3, %3 : vector<16x32xf32>
    %7 = arith.addf %5, %6 : vector<16x32xf32>
    %8 = arith.subf %7, %4 : vector<16x32xf32>
    %cst = arith.constant 1.000000e+00 : f32
    %9 = vector.broadcast %cst : f32 to vector<16x32xf32>
    %10 = arith.subf %8, %9 : vector<16x32xf32>
    %11 = vector.shape_cast %10 : vector<16x32xf32> to vector<1x16x32xf32>
    %cst_4 = arith.constant dense<0.000000e+00> : vector<1xf32>
    %12 = vector.multi_reduction <add>, %11, %cst_4 [1, 2] : vector<1x16x32xf32> to vector<1xf32>
    %13 = vector.shape_cast %12 : vector<1xf32> to vector<1x1x1xf32>
    %14 = vector.extract %13[0, 0, 0] : f32 from vector<1x1x1xf32>
    %c0_5 = arith.constant 0 : index
    %c0_6 = arith.constant 0 : index
    %15 = vector.load %arg3[%c0_5, %c0_6] : memref<1x128xf32, #tpu.memory_space<vmem>>, vector<1x128xf32>
    %16 = vector.broadcast %14 : f32 to vector<1x128xf32>
    %17 = arith.addf %15, %16 : vector<1x128xf32>
    %c0_7 = arith.constant 0 : index
    %c0_8 = arith.constant 0 : index
    %18 = vector.load %arg3[%c0_7, %c0_8] : memref<1x128xf32, #tpu.memory_space<vmem>>, vector<1x128xf32>
    tpu.vector_store %arg3[%c0_7, %c0_8], %17 {strides = array<i32>} : memref<1x128xf32, #tpu.memory_space<vmem>>, vector<1x128xf32>,
    return
  }
  func.func @transform_0(%arg0: i32) -> (i32, i32) {
    %c0_i32 = arith.constant 0 : i32
    %c0_i32_0 = arith.constant 0 : i32
    return %arg0, %c0_i32 : i32, i32
  }
  func.func @transform_1(%arg0: i32) -> (i32, i32) {
    %c0_i32 = arith.constant 0 : i32
    %c0_i32_0 = arith.constant 0 : i32
    return %arg0, %c0_i32 : i32, i32
  }
  func.func @transform_2(%arg0: i32) -> (i32, i32) {
    %c0_i32 = arith.constant 0 : i32
    %c0_i32_0 = arith.constant 0 : i32
    %c0_i32_1 = arith.constant 0 : i32
    return %c0_i32, %c0_i32_0 : i32, i32
  }
}

</mosaic_0001>

<llo_original>
// kernel: tile.23
$region0: #{tile.23}
  #allocation0 [shape = 's32[1]{0}', space=sflag, size = 0x4, scoped, tag = 'scoped memory for tile.23']
  %s0 = inlined_call_operand.vmem [shape: f32[4], index: 0, kind: input, shape index: {}]
  %s1 = inlined_call_operand.vmem [shape: f32[8,4], index: 1, kind: output, shape index: {}]
  // Predicated region
  $region2: #{tile.23} parent=0 // pred_check
    _
  $region3: #{tile.23} parent=0 // pred_check_branch
    %3 = sbr.rel (0) target = $region5
  $region4: #{tile.23} parent=0 // pred_region
    _
  $region5: #{tile.23} parent=0 // pred_fallthru
    _
  %v4 = vld [vmem:[%s0] ss:$0 sm:$0xff]
  %5 = vst [vmem:[%s1] sm:$0xff] %v4

// kernel: tile.24
$region0: #{tile.24}
  %s0 = inlined_call_operand.vmem [shape: f32[8,4], index: 0, kind: input, shape index: {}]
  %s1 = inlined_call_operand.vmem [shape: f32[1,32], index: 1, kind: output, shape index: {}]
  $region1: #{tile.24} parent=0
    #allocation0 [shape = 'u8[4096]{0}', space=vmem, size = 0x1000, scoped, tag = 'scoped mem for output reshape']
    %v2 = vld [vmem:[%s0] sm:$0x1]
    %vm3 = vcmask 31744
    %4 = vst.msk [vmem:[#allocation0] sm:$0x1] %vm3, %v2
    %s5 = scalar_lea.vmem %s0, 7
    %v6 = vld [vmem:[%s5] sm:$0x1]
    %7 = vrot.lane.b32.xlu0 %v6, 28
    %v8 = vpop.permute.xlu0 %7
    %vm9 = vcmask 261344
    %10 = vst.msk [vmem:[#allocation0] sm:$0x1] %vm9, %v8
    %s11 = scalar_lea.vmem %s0, 6
    %v12 = vld [vmem:[%s11] sm:$0x1]
    %13 = vrot.lane.b32.xlu0 %v12, 24
    %v14 = vpop.permute.xlu0 %13
    %vm15 = vcmask 228544
    %16 = vst.msk [vmem:[#allocation0] sm:$0x1] %vm15, %v14
    %s17 = scalar_lea.vmem %s0, 5
    %v18 = vld [vmem:[%s17] sm:$0x1]
    %19 = vrot.lane.b32.xlu0 %v18, 20
    %v20 = vpop.permute.xlu0 %19
    %vm21 = vcmask 195744
    %22 = vst.msk [vmem:[#allocation0] sm:$0x1] %vm21, %v20
    %s23 = scalar_lea.vmem %s0, 4
    %v24 = vld [vmem:[%s23] sm:$0x1]
    %25 = vrot.lane.b32.xlu0 %v24, 16
    %v26 = vpop.permute.xlu0 %25
    %vm27 = vcmask 162944
    %28 = vst.msk [vmem:[#allocation0] sm:$0x1] %vm27, %v26
    %s29 = scalar_lea.vmem %s0, 3
    %v30 = vld [vmem:[%s29] sm:$0x1]
    %31 = vrot.lane.b32.xlu0 %v30, 12
    %v32 = vpop.permute.xlu0 %31
    %vm33 = vcmask 130144
    %34 = vst.msk [vmem:[#allocation0] sm:$0x1] %vm33, %v32
    %s35 = scalar_lea.vmem %s0, 2
    %v36 = vld [vmem:[%s35] sm:$0x1]
    %37 = vrot.lane.b32.xlu0 %v36, 8
    %v38 = vpop.permute.xlu0 %37
    %vm39 = vcmask 97344
    %40 = vst.msk [vmem:[#allocation0] sm:$0x1] %vm39, %v38
    %s41 = scalar_lea.vmem %s0, 1
    %v42 = vld [vmem:[%s41] sm:$0x1]
    %43 = vrot.lane.b32.xlu0 %v42, 4
    %v44 = vpop.permute.xlu0 %43
    %vm45 = vcmask 64544
    %46 = vst.msk [vmem:[#allocation0] sm:$0x1] %vm45, %v44
    %s48 = sshllo.u32 0, 1
    %v50 = vld [vmem:[#allocation0] sm:%s48]
    %s51 = sshllo.u32 0, 1
    %52 = vst [vmem:[%s1] sm:%s51] %v50

// kernel: tile.28
$region0: #{tile.28}
  #allocation0 [shape = 's32[1]{0}', space=sflag, size = 0x4, scoped, tag = 'scoped memory for tile.28']
  %s0 = inlined_call_operand.vmem [shape: f32[8], index: 0, kind: input, shape index: {}]
  %s1 = inlined_call_operand.vmem [shape: f32[4,8], index: 1, kind: output, shape index: {}]
  // Predicated region
  $region2: #{tile.28} parent=0 // pred_check
    _
  $region3: #{tile.28} parent=0 // pred_check_branch
    %3 = sbr.rel (0) target = $region5
  $region4: #{tile.28} parent=0 // pred_region
    _
  $region5: #{tile.28} parent=0 // pred_fallthru
    _
  %v4 = vld [vmem:[%s0] ss:$0 sm:$0xff]
  %5 = vst [vmem:[%s1] sm:$0xf] %v4

// kernel: tile.29
$region0: #{tile.29}
  %s0 = inlined_call_operand.vmem [shape: f32[4,8], index: 0, kind: input, shape index: {}]
  %s1 = inlined_call_operand.vmem [shape: f32[1,32], index: 1, kind: output, shape index: {}]
  $region1: #{tile.29} parent=0
    #allocation0 [shape = 'u8[4096]{0}', space=vmem, size = 0x1000, scoped, tag = 'scoped mem for output reshape']
    #allocation1 [shape = 'u8[4096]{0}', space=vmem, size = 0x1000, scoped, tag = 'scoped mem for input reshape']
    %s3 = sshllo.u32 0, 4
    %v4 = vld [vmem:[%s0] sm:%s3]
    %5 = vst [vmem:[#allocation1] sm:%s3] %v4
    %v6 = vld [vmem:[#allocation1] sm:$0x1]
    %vm7 = vcmask 64512
    %8 = vst.msk [vmem:[#allocation0] sm:$0x1] %vm7, %v6
    %s9 = scalar_lea.vmem [#allocation1], 3
    %v10 = vld [vmem:[%s9] sm:$0x1]
    %11 = vrot.lane.b32.xlu0 %v10, 24
    %v12 = vpop.permute.xlu0 %11
    %vm13 = vcmask 261312
    %14 = vst.msk [vmem:[#allocation0] sm:$0x1] %vm13, %v12
    %s15 = scalar_lea.vmem [#allocation1], 2
    %v16 = vld [vmem:[%s15] sm:$0x1]
    %17 = vrot.lane.b32.xlu0 %v16, 16
    %v18 = vpop.permute.xlu0 %17
    %vm19 = vcmask 195712
    %20 = vst.msk [vmem:[#allocation0] sm:$0x1] %vm19, %v18
    %s21 = scalar_lea.vmem [#allocation1], 1
    %v22 = vld [vmem:[%s21] sm:$0x1]
    %23 = vrot.lane.b32.xlu0 %v22, 8
    %v24 = vpop.permute.xlu0 %23
    %vm25 = vcmask 130112
    %26 = vst.msk [vmem:[#allocation0] sm:$0x1] %vm25, %v24
    %s28 = sshllo.u32 0, 1
    %v30 = vld [vmem:[#allocation0] sm:%s28]
    %s31 = sshllo.u32 0, 1
    %32 = vst [vmem:[%s1] sm:%s31] %v30

// kernel: _lambda_.120
$region0: #{_lambda_.120}
  #allocation0 [shape = 'u32[]', space=smem, size = 0x4, offset = 0x4, fixed_abs, tag = 'smem constant byte address 0x4 - core index']
  #allocation1 [shape = 'u32[144,128]{1,0:T(1,128)}', space=vmem, size = 0x12000, scoped, tag = 'internal scratch']
  %s0 = inlined_call_operand.vmem [shape: f32[16,32], index: 0, kind: input, shape index: {}]
  %s1 = inlined_call_operand.vmem [shape: f32[1,32], index: 1, kind: input, shape index: {}]
  %s2 = inlined_call_operand.vmem [shape: f32[16,32], index: 2, kind: output, shape index: {}]
  %s3 = sld [smem:[#allocation0]]
  $region18: #{_lambda_.120} parent=0
    _
  %s5 = ssub.s32 1, %s3
  %s6 = scalar_select 0, %s5, %s3
  // Predicated region
  $region2: #{_lambda_.120} parent=0 // pred_check
    _
  $region3: #{_lambda_.120} parent=0 // pred_check_branch
    %8 = sbr.rel (0) target = $region5
  $region4: #{_lambda_.120} parent=0 // pred_region
    _
  $region5: #{_lambda_.120} parent=0 // pred_fallthru
    _
  // Predicated region
  $region6: #{_lambda_.120} parent=0 // pred_check
    _
  $region7: #{_lambda_.120} parent=0 // pred_check_branch
    %10 = sbr.rel (0) target = $region9
  $region8: #{_lambda_.120} parent=0 // pred_region
    _
  $region9: #{_lambda_.120} parent=0 // pred_fallthru
    _
  %v11 = vld [vmem:[%s0] sm:$0xff]
  %v12 = vld [vmem:[%s0 + $0x8] sm:$0xff]
  %v13 = vld [vmem:[%s1] sm:$0x1]
  %v15 = vlaneseq
  %v16 = vshrl.u32 %v15, 7
  %v17 = vsub.s32 0, %v16
  %v18 = vrot.slane %v13, %v17
  %v20 = vadd.f32 %v11, %v18
  %v21 = vadd.f32 %v12, %v18
  %v22 = vmax.f32 %v20, 0.0
  %v23 = vmax.f32 %v21, 0.0
  %vm24 = vcmask 261120
  %25 = vst.msk [vmem:[%s2] sm:$0xff] %vm24, %v22
  %26 = vst.msk [vmem:[%s2 + $0x8] sm:$0xff] %vm24, %v23
  // Predicated region
  $region10: #{_lambda_.120} parent=0 // pred_check
    _
  $region11: #{_lambda_.120} parent=0 // pred_check_branch
    %28 = sbr.rel (0) target = $region13
  $region12: #{_lambda_.120} parent=0 // pred_region
    _
  $region13: #{_lambda_.120} parent=0 // pred_fallthru
    _
  // Predicated region
  $region14: #{_lambda_.120} parent=0 // pred_check
    _
  $region15: #{_lambda_.120} parent=0 // pred_check_branch
    %30 = sbr.rel (0) target = $region17
  $region16: #{_lambda_.120} parent=0 // pred_region
    _
  $region17: #{_lambda_.120} parent=0 // pred_fallthru
    _

// kernel: _lambda_.121
$region0: #{_lambda_.121}
  #allocation0 [shape = 'u32[]', space=smem, size = 0x4, offset = 0x4, fixed_abs, tag = 'smem constant byte address 0x4 - core index']
  #allocation1 [shape = 'u32[144,128]{1,0:T(1,128)}', space=vmem, size = 0x12000, scoped, tag = 'internal scratch']
  %s0 = inlined_call_operand.vmem [shape: f32[8,32], index: 0, kind: input, shape index: {}]
  %s1 = inlined_call_operand.vmem [shape: f32[1,32], index: 1, kind: input, shape index: {}]
  %s2 = inlined_call_operand.vmem [shape: f32[8,32], index: 2, kind: output, shape index: {}]
  %s3 = sld [smem:[#allocation0]]
  $region18: #{_lambda_.121} parent=0
    _
  %s5 = ssub.s32 1, %s3
  %s6 = scalar_select 0, %s5, %s3
  // Predicated region
  $region2: #{_lambda_.121} parent=0 // pred_check
    _
  $region3: #{_lambda_.121} parent=0 // pred_check_branch
    %8 = sbr.rel (0) target = $region5
  $region4: #{_lambda_.121} parent=0 // pred_region
    _
  $region5: #{_lambda_.121} parent=0 // pred_fallthru
    _
  // Predicated region
  $region6: #{_lambda_.121} parent=0 // pred_check
    _
  $region7: #{_lambda_.121} parent=0 // pred_check_branch
    %10 = sbr.rel (0) target = $region9
  $region8: #{_lambda_.121} parent=0 // pred_region
    _
  $region9: #{_lambda_.121} parent=0 // pred_fallthru
    _
  %v11 = vld [vmem:[%s0] sm:$0xff]
  %v12 = vld [vmem:[%s1] sm:$0x1]
  %v14 = vlaneseq
  %v15 = vshrl.u32 %v14, 7
  %v16 = vsub.s32 0, %v15
  %v17 = vrot.slane %v12, %v16
  %v19 = vadd.f32 %v11, %v17
  %v20 = vmax.f32 %v19, 0.0
  %vm21 = vcmask 261120
  %22 = vst.msk [vmem:[%s2] sm:$0xff] %vm21, %v20
  // Predicated region
  $region10: #{_lambda_.121} parent=0 // pred_check
    _
  $region11: #{_lambda_.121} parent=0 // pred_check_branch
    %24 = sbr.rel (0) target = $region13
  $region12: #{_lambda_.121} parent=0 // pred_region
    _
  $region13: #{_lambda_.121} parent=0 // pred_fallthru
    _
  // Predicated region
  $region14: #{_lambda_.121} parent=0 // pred_check
    _
  $region15: #{_lambda_.121} parent=0 // pred_check_branch
    %26 = sbr.rel (0) target = $region17
  $region16: #{_lambda_.121} parent=0 // pred_region
    _
  $region17: #{_lambda_.121} parent=0 // pred_fallthru
    _

// kernel: _lambda_.122
$region0: #{_lambda_.122}
  #allocation0 [shape = 'u32[]', space=smem, size = 0x4, offset = 0x4, fixed_abs, tag = 'smem constant byte address 0x4 - core index']
  #allocation1 [shape = 'u32[144,128]{1,0:T(1,128)}', space=vmem, size = 0x12000, scoped, tag = 'internal scratch']
  #allocation2 [shape = 'f32[32,128]{1,0:T(8,128)}', space=vmem, size = 0x4000, scoped, tag = 'scratch operand']
  %s0 = inlined_call_operand.vmem [shape: bf16[32,128], index: 0, kind: input, shape index: {}]
  %s1 = inlined_call_operand.vmem [shape: bf16[128,128], index: 1, kind: input, shape index: {}]
  %s2 = inlined_call_operand.vmem [shape: f32[1,128], index: 2, kind: input, shape index: {}]
  %s3 = inlined_call_operand.vmem [shape: f32[32,128], index: 3, kind: output, shape index: {}]
  %s4 = sld [smem:[#allocation0]]
  $region30: #{_lambda_.122} parent=0
    _
  %s6 = ssub.s32 1, %s4
  %s7 = scalar_select 0, %s6, %s4
  // Predicated region
  $region2: #{_lambda_.122} parent=0 // pred_check
    _
  $region3: #{_lambda_.122} parent=0 // pred_check_branch
    %9 = sbr.rel (0) target = $region5
  $region4: #{_lambda_.122} parent=0 // pred_region
    _
  $region5: #{_lambda_.122} parent=0 // pred_fallthru
    _
  // Predicated region
  $region6: #{_lambda_.122} parent=0 // pred_check
    _
  $region7: #{_lambda_.122} parent=0 // pred_check_branch
    %11 = sbr.rel (0) target = $region9
  $region8: #{_lambda_.122} parent=0 // pred_region
    _
  $region9: #{_lambda_.122} parent=0 // pred_fallthru
    _
  // Predicated region
  $region10: #{_lambda_.122} parent=0 // pred_check
    _
  $region11: #{_lambda_.122} parent=0 // pred_check_branch
    %13 = sbr.rel (0) target = $region13
  $region12: #{_lambda_.122} parent=0 // pred_region
    _
  $region13: #{_lambda_.122} parent=0 // pred_fallthru
    _
  %p15 = scmp.eq.s32.totalorder 0, 0
  // Predicated region
  $region14: #{_lambda_.122} parent=0 // pred_check
    %p16 = pneg %p15
  $region15: #{_lambda_.122} parent=0 // pred_check_branch
    %18 = sbr.rel (%p16) target = $region17
  $region16: #{_lambda_.122} parent=0 // pred_region
    %19 = vst [vmem:[#allocation2] sm:$0xff] 0.0
    %20 = vst [vmem:[#allocation2 + $0x8] sm:$0xff] 0.0
    %21 = vst [vmem:[#allocation2 + $0x10] sm:$0xff] 0.0
    %22 = vst [vmem:[#allocation2 + $0x18] sm:$0xff] 0.0
  $region17: #{_lambda_.122} parent=0 // pred_fallthru
    _
  %v23 = vld [vmem:[#allocation2] sm:$0xff]
  %v24 = vld [vmem:[#allocation2 + $0x8] sm:$0xff]
  %v25 = vld [vmem:[#allocation2 + $0x10] sm:$0xff]
  %v26 = vld [vmem:[#allocation2 + $0x18] sm:$0xff]
  %v27 = vld [vmem:[%s0] sm:$0xf]
  %v28 = vld [vmem:[%s0 + $0x4] sm:$0xf]
  %v29 = vld [vmem:[%s0 + $0x8] sm:$0xf]
  %v30 = vld [vmem:[%s0 + $0xc] sm:$0xf]
  %v31 = vld [vmem:[%s1] sm:$0xf]
  %v32 = vld [vmem:[%s1 + $0x4] sm:$0xf]
  %v33 = vld [vmem:[%s1 + $0x8] sm:$0xf]
  %v34 = vld [vmem:[%s1 + $0xc] sm:$0xf]
  %v35 = vld [vmem:[%s1 + $0x10] sm:$0xf]
  %v36 = vld [vmem:[%s1 + $0x14] sm:$0xf]
  %v37 = vld [vmem:[%s1 + $0x18] sm:$0xf]
  %v38 = vld [vmem:[%s1 + $0x1c] sm:$0xf]
  %v39 = vld [vmem:[%s1 + $0x20] sm:$0xf]
  %v40 = vld [vmem:[%s1 + $0x24] sm:$0xf]
  %v41 = vld [vmem:[%s1 + $0x28] sm:$0xf]
  %v42 = vld [vmem:[%s1 + $0x2c] sm:$0xf]
  %v43 = vld [vmem:[%s1 + $0x30] sm:$0xf]
  %v44 = vld [vmem:[%s1 + $0x34] sm:$0xf]
  %v45 = vld [vmem:[%s1 + $0x38] sm:$0xf]
  %v46 = vld [vmem:[%s1 + $0x3c] sm:$0xf]
  %v51 = vunpack.c.l.b16 %v27
  %v52 = vunpack.c.l.b16 %v28
  %v53 = vunpack.c.l.b16 %v29
  %v54 = vunpack.c.l.b16 %v30
  %v55 = vpack.c.b16 %v52, %v51
  %v56 = vpack.c.b16 %v54, %v53
  %v75 = vunpack.c.l.b16 %v31
  %v76 = vunpack.c.l.b16 %v32
  %v77 = vunpack.c.l.b16 %v33
  %v78 = vunpack.c.l.b16 %v34
  %v79 = vunpack.c.l.b16 %v35
  %v80 = vunpack.c.l.b16 %v36
  %v81 = vunpack.c.l.b16 %v37
  %v82 = vunpack.c.l.b16 %v38
  %v83 = vunpack.c.l.b16 %v39
  %v84 = vunpack.c.l.b16 %v40
  %v85 = vunpack.c.l.b16 %v41
  %v86 = vunpack.c.l.b16 %v42
  %v87 = vunpack.c.l.b16 %v43
  %v88 = vunpack.c.l.b16 %v44
  %v89 = vunpack.c.l.b16 %v45
  %v90 = vunpack.c.l.b16 %v46
  %v91 = vpack.c.b16 %v76, %v75
  %v92 = vpack.c.b16 %v78, %v77
  %v93 = vpack.c.b16 %v80, %v79
  %v94 = vpack.c.b16 %v82, %v81
  %v95 = vpack.c.b16 %v84, %v83
  %v96 = vpack.c.b16 %v86, %v85
  %v97 = vpack.c.b16 %v88, %v87
  %v98 = vpack.c.b16 %v90, %v89
  %107 = vmatprep.subr.bf16.mxu0 0
  %108 = vmatpush1.bf16.msra.mxu0 %v91
  %109 = vmatprep.subr.bf16.mxu0 0
  %110 = vmatpush1.bf16.msra.mxu0 %v92
  %111 = vmatprep.subr.bf16.mxu0 0
  %112 = vmatpush1.bf16.msra.mxu0 %v93
  %113 = vmatprep.subr.bf16.mxu0 0
  %114 = vmatpush1.bf16.msra.mxu0 %v94
  %115 = vmatprep.subr.bf16.mxu0 0
  %116 = vmatpush1.bf16.msra.mxu0 %v95
  %117 = vmatprep.subr.bf16.mxu0 0
  %118 = vmatpush1.bf16.msra.mxu0 %v96
  %119 = vmatprep.subr.bf16.mxu0 0
  %120 = vmatpush1.bf16.msra.mxu0 %v97
  %121 = vmatprep.subr.bf16.mxu0 0
  %122 = vmatpush1.bf16.msra.mxu0 %v98
  %123 = vmatprep.subr.bf16.mxu0 0
  %124 = vmatpush1.bf16.msra.mxu0 0
  %125 = vmatprep.subr.bf16.mxu0 0
  %126 = vmatpush1.bf16.msra.mxu0 0
  %127 = vmatprep.subr.bf16.mxu0 0
  %128 = vmatpush1.bf16.msra.mxu0 0
  %129 = vmatprep.subr.bf16.mxu0 0
  %130 = vmatpush1.bf16.msra.mxu0 0
  %131 = vmatprep.subr.bf16.mxu0 0
  %132 = vmatpush1.bf16.msra.mxu0 0
  %133 = vmatprep.subr.bf16.mxu0 0
  %134 = vmatpush1.bf16.msra.mxu0 0
  %135 = vmatprep.subr.bf16.mxu0 0
  %136 = vmatpush1.bf16.msra.mxu0 0
  %137 = vmatprep.subr.bf16.mxu0 0
  %138 = vmatpush1.bf16.msra.mxu0 0
  %139 = vmatprep.mubr.bf16.mxu0 0
  %140 = vmatmul.mubr.bf16.gmra.mrb[0].mxu0 %v55
  %v141 = vpop.f32.mrb[0].mxu0
  %v142 = vadd.f32 0.0, %v141
  %v143 = vpop.f32.mrb[0].mxu0
  %v144 = vpop.f32.mrb[0].mxu0
  %v145 = vadd.f32 0.0, %v144
  %v146 = vpop.f32.mrb[0].mxu0
  %147 = vmatprep.mubr.bf16.mxu0 0
  %148 = vmatmul.mubr.bf16.gmra.mrb[0].mxu0 %v56
  %v149 = vpop.f32.mrb[0].mxu0
  %v150 = vadd.f32 0.0, %v149
  %v151 = vpop.f32.mrb[0].mxu0
  %v152 = vpop.f32.mrb[0].mxu0
  %v153 = vadd.f32 0.0, %v152
  %v154 = vpop.f32.mrb[0].mxu0
  %155 = vdwg.mxu0
  %v156 = vadd.f32 %v23, %v142
  %v157 = vadd.f32 %v24, %v145
  %v158 = vadd.f32 %v25, %v150
  %v159 = vadd.f32 %v26, %v153
  %160 = vst [vmem:[#allocation2] sm:$0xff] %v156
  %161 = vst [vmem:[#allocation2 + $0x8] sm:$0xff] %v157
  %162 = vst [vmem:[#allocation2 + $0x10] sm:$0xff] %v158
  %163 = vst [vmem:[#allocation2 + $0x18] sm:$0xff] %v159
  // Predicated region
  $region18: #{_lambda_.122} parent=0 // pred_check
    %p164 = pneg %p15
  $region19: #{_lambda_.122} parent=0 // pred_check_branch
    %166 = sbr.rel (%p164) target = $region21
  $region20: #{_lambda_.122} parent=0 // pred_region
    %v167 = vld [vmem:[#allocation2] sm:$0xff]
    %v168 = vld [vmem:[#allocation2 + $0x8] sm:$0xff]
    %v169 = vld [vmem:[#allocation2 + $0x10] sm:$0xff]
    %v170 = vld [vmem:[#allocation2 + $0x18] sm:$0xff]
    %v171 = vld [vmem:[%s2] sm:$0x1]
    %v173 = vlaneseq
    %v174 = vshrl.u32 %v173, 7
    %v175 = vsub.s32 0, %v174
    %v176 = vrot.slane %v171, %v175
    %v178 = vadd.f32 %v167, %v176
    %v179 = vadd.f32 %v168, %v176
    %v180 = vadd.f32 %v169, %v176
    %v181 = vadd.f32 %v170, %v176
    %182 = vst [vmem:[%s3] sm:$0xff] %v178
    %183 = vst [vmem:[%s3 + $0x8] sm:$0xff] %v179
    %184 = vst [vmem:[%s3 + $0x10] sm:$0xff] %v180
    %185 = vst [vmem:[%s3 + $0x18] sm:$0xff] %v181
  $region21: #{_lambda_.122} parent=0 // pred_fallthru
    _
  // Predicated region
  $region22: #{_lambda_.122} parent=0 // pred_check
    _
  $region23: #{_lambda_.122} parent=0 // pred_check_branch
    %187 = sbr.rel (0) target = $region25
  $region24: #{_lambda_.122} parent=0 // pred_region
    _
  $region25: #{_lambda_.122} parent=0 // pred_fallthru
    _
  // Predicated region
  $region26: #{_lambda_.122} parent=0 // pred_check
    _
  $region27: #{_lambda_.122} parent=0 // pred_check_branch
    %189 = sbr.rel (0) target = $region29
  $region28: #{_lambda_.122} parent=0 // pred_region
    _
  $region29: #{_lambda_.122} parent=0 // pred_fallthru
    _

// kernel: _lambda_.123
$region0: #{_lambda_.123}
  #allocation0 [shape = 'u32[]', space=smem, size = 0x4, offset = 0x4, fixed_abs, tag = 'smem constant byte address 0x4 - core index']
  #allocation1 [shape = 'u32[144,128]{1,0:T(1,128)}', space=vmem, size = 0x12000, scoped, tag = 'internal scratch']
  %s0 = inlined_call_operand.vmem [shape: f32[32,32], index: 0, kind: input, shape index: {}]
  %s1 = inlined_call_operand.vmem [shape: f32[1,32], index: 1, kind: input, shape index: {}]
  %s2 = inlined_call_operand.vmem [shape: f32[1,32], index: 2, kind: input, shape index: {}]
  %s3 = inlined_call_operand.vmem [shape: f32[32,32], index: 3, kind: output, shape index: {}]
  %s4 = sld [smem:[#allocation0]]
  $region22: #{_lambda_.123} parent=0
    _
  %s6 = ssub.s32 1, %s4
  %s7 = scalar_select 0, %s6, %s4
  // Predicated region
  $region2: #{_lambda_.123} parent=0 // pred_check
    _
  $region3: #{_lambda_.123} parent=0 // pred_check_branch
    %9 = sbr.rel (0) target = $region5
  $region4: #{_lambda_.123} parent=0 // pred_region
    _
  $region5: #{_lambda_.123} parent=0 // pred_fallthru
    _
  // Predicated region
  $region6: #{_lambda_.123} parent=0 // pred_check
    _
  $region7: #{_lambda_.123} parent=0 // pred_check_branch
    %11 = sbr.rel (0) target = $region9
  $region8: #{_lambda_.123} parent=0 // pred_region
    _
  $region9: #{_lambda_.123} parent=0 // pred_fallthru
    _
  // Predicated region
  $region10: #{_lambda_.123} parent=0 // pred_check
    _
  $region11: #{_lambda_.123} parent=0 // pred_check_branch
    %13 = sbr.rel (0) target = $region13
  $region12: #{_lambda_.123} parent=0 // pred_region
    _
  $region13: #{_lambda_.123} parent=0 // pred_fallthru
    _
  %v14 = vld [vmem:[%s0] sm:$0xff]
  %v15 = vld [vmem:[%s0 + $0x8] sm:$0xff]
  %v16 = vld [vmem:[%s0 + $0x10] sm:$0xff]
  %v17 = vld [vmem:[%s0 + $0x18] sm:$0xff]
  %vm18 = vcmask 261120
  %v19 = vsel %vm18, %v14, 0.0
  %20 = vadd.xlane.f32.xlu0 %v19
  %v21 = vpop.xlane.xlu0 %20
  %v22 = vsel %vm18, %v15, 0.0
  %23 = vadd.xlane.f32.xlu0 %v22
  %v24 = vpop.xlane.xlu0 %23
  %v25 = vsel %vm18, %v16, 0.0
  %26 = vadd.xlane.f32.xlu0 %v25
  %v27 = vpop.xlane.xlu0 %26
  %v28 = vsel %vm18, %v17, 0.0
  %29 = vadd.xlane.f32.xlu0 %v28
  %v30 = vpop.xlane.xlu0 %29
  %v31 = vrcp.pop 32.0
  %v32 = vmul.f32 %v21, %v31
  %v33 = vmul.f32 %v24, %v31
  %v34 = vmul.f32 %v27, %v31
  %v35 = vmul.f32 %v30, %v31
  %v36 = vsub.f32 %v14, %v32
  %v37 = vsub.f32 %v15, %v33
  %v38 = vsub.f32 %v16, %v34
  %v39 = vsub.f32 %v17, %v35
  %v40 = vmul.f32 %v36, %v36
  %v41 = vmul.f32 %v37, %v37
  %v42 = vmul.f32 %v38, %v38
  %v43 = vmul.f32 %v39, %v39
  %v44 = vsel %vm18, %v40, 0.0
  %45 = vadd.xlane.f32.xlu0 %v44
  %v46 = vpop.xlane.xlu0 %45
  %v47 = vsel %vm18, %v41, 0.0
  %48 = vadd.xlane.f32.xlu0 %v47
  %v49 = vpop.xlane.xlu0 %48
  %v50 = vsel %vm18, %v42, 0.0
  %51 = vadd.xlane.f32.xlu0 %v50
  %v52 = vpop.xlane.xlu0 %51
  %v53 = vsel %vm18, %v43, 0.0
  %54 = vadd.xlane.f32.xlu0 %v53
  %v55 = vpop.xlane.xlu0 %54
  %v56 = vmul.f32 %v46, %v31
  %v57 = vmul.f32 %v49, %v31
  %v58 = vmul.f32 %v52, %v31
  %v59 = vmul.f32 %v55, %v31
  %v60 = vadd.f32 %v56, 1e-05
  %v61 = vadd.f32 %v57, 1e-05
  %v62 = vadd.f32 %v58, 1e-05
  %v63 = vadd.f32 %v59, 1e-05
  %v64 = vrsqrt.pop %v60
  %v65 = vrsqrt.pop %v61
  %v66 = vrsqrt.pop %v62
  %v67 = vrsqrt.pop %v63
  %v68 = vmul.f32 %v36, %v64
  %v69 = vmul.f32 %v37, %v65
  %v70 = vmul.f32 %v38, %v66
  %v71 = vmul.f32 %v39, %v67
  %v72 = vld [vmem:[%s1] sm:$0x1]
  %v74 = vlaneseq
  %v75 = vshrl.u32 %v74, 7
  %v76 = vsub.s32 0, %v75
  %v77 = vrot.slane %v72, %v76
  %v79 = vmul.f32 %v68, %v77
  %v80 = vmul.f32 %v69, %v77
  %v81 = vmul.f32 %v70, %v77
  %v82 = vmul.f32 %v71, %v77
  %v83 = vld [vmem:[%s2] sm:$0x1]
  %v85 = vlaneseq
  %v86 = vshrl.u32 %v85, 7
  %v87 = vsub.s32 0, %v86
  %v88 = vrot.slane %v83, %v87
  %v90 = vadd.f32 %v79, %v88
  %v91 = vadd.f32 %v80, %v88
  %v92 = vadd.f32 %v81, %v88
  %v93 = vadd.f32 %v82, %v88
  %94 = vst.msk [vmem:[%s3] sm:$0xff] %vm18, %v90
  %95 = vst.msk [vmem:[%s3 + $0x8] sm:$0xff] %vm18, %v91
  %96 = vst.msk [vmem:[%s3 + $0x10] sm:$0xff] %vm18, %v92
  %97 = vst.msk [vmem:[%s3 + $0x18] sm:$0xff] %vm18, %v93
  // Predicated region
  $region14: #{_lambda_.123} parent=0 // pred_check
    _
  $region15: #{_lambda_.123} parent=0 // pred_check_branch
    %99 = sbr.rel (0) target = $region17
  $region16: #{_lambda_.123} parent=0 // pred_region
    _
  $region17: #{_lambda_.123} parent=0 // pred_fallthru
    _
  // Predicated region
  $region18: #{_lambda_.123} parent=0 // pred_check
    _
  $region19: #{_lambda_.123} parent=0 // pred_check_branch
    %101 = sbr.rel (0) target = $region21
  $region20: #{_lambda_.123} parent=0 // pred_region
    _
  $region21: #{_lambda_.123} parent=0 // pred_fallthru
    _

// kernel: _lambda_.128
$region0: #{_lambda_.128}
  #allocation0 [shape = 'u32[]', space=smem, size = 0x4, offset = 0x4, fixed_abs, tag = 'smem constant byte address 0x4 - core index']
  #allocation1 [shape = 'u32[144,128]{1,0:T(1,128)}', space=vmem, size = 0x12000, scoped, tag = 'internal scratch']
  #allocation2 [shape = 'f32[32,128]{1,0:T(8,128)}', space=vmem, size = 0x4000, scoped, tag = 'scratch operand']
  %s0 = inlined_call_operand.vmem [shape: bf16[32,128], index: 0, kind: input, shape index: {}]
  %s1 = inlined_call_operand.vmem [shape: bf16[128,128], index: 1, kind: input, shape index: {}]
  %s2 = inlined_call_operand.vmem [shape: f32[1,128], index: 2, kind: input, shape index: {}]
  %s3 = inlined_call_operand.vmem [shape: f32[32,128], index: 3, kind: output, shape index: {}]
  %s4 = sld [smem:[#allocation0]]
  $region30: #{_lambda_.128} parent=0
    _
  %s6 = ssub.s32 1, %s4
  %s7 = scalar_select 0, %s6, %s4
  // Predicated region
  $region2: #{_lambda_.128} parent=0 // pred_check
    _
  $region3: #{_lambda_.128} parent=0 // pred_check_branch
    %9 = sbr.rel (0) target = $region5
  $region4: #{_lambda_.128} parent=0 // pred_region
    _
  $region5: #{_lambda_.128} parent=0 // pred_fallthru
    _
  // Predicated region
  $region6: #{_lambda_.128} parent=0 // pred_check
    _
  $region7: #{_lambda_.128} parent=0 // pred_check_branch
    %11 = sbr.rel (0) target = $region9
  $region8: #{_lambda_.128} parent=0 // pred_region
    _
  $region9: #{_lambda_.128} parent=0 // pred_fallthru
    _
  // Predicated region
  $region10: #{_lambda_.128} parent=0 // pred_check
    _
  $region11: #{_lambda_.128} parent=0 // pred_check_branch
    %13 = sbr.rel (0) target = $region13
  $region12: #{_lambda_.128} parent=0 // pred_region
    _
  $region13: #{_lambda_.128} parent=0 // pred_fallthru
    _
  %p15 = scmp.eq.s32.totalorder 0, 0
  // Predicated region
  $region14: #{_lambda_.128} parent=0 // pred_check
    %p16 = pneg %p15
  $region15: #{_lambda_.128} parent=0 // pred_check_branch
    %18 = sbr.rel (%p16) target = $region17
  $region16: #{_lambda_.128} parent=0 // pred_region
    %19 = vst [vmem:[#allocation2] sm:$0xff] 0.0
    %20 = vst [vmem:[#allocation2 + $0x8] sm:$0xff] 0.0
    %21 = vst [vmem:[#allocation2 + $0x10] sm:$0xff] 0.0
    %22 = vst [vmem:[#allocation2 + $0x18] sm:$0xff] 0.0
  $region17: #{_lambda_.128} parent=0 // pred_fallthru
    _
  %v23 = vld [vmem:[#allocation2] sm:$0xff]
  %v24 = vld [vmem:[#allocation2 + $0x8] sm:$0xff]
  %v25 = vld [vmem:[#allocation2 + $0x10] sm:$0xff]
  %v26 = vld [vmem:[#allocation2 + $0x18] sm:$0xff]
  %v27 = vld [vmem:[%s0] sm:$0xf]
  %v28 = vld [vmem:[%s0 + $0x4] sm:$0xf]
  %v29 = vld [vmem:[%s0 + $0x8] sm:$0xf]
  %v30 = vld [vmem:[%s0 + $0xc] sm:$0xf]
  %v31 = vld [vmem:[%s1] sm:$0xf]
  %v32 = vld [vmem:[%s1 + $0x4] sm:$0xf]
  %v33 = vld [vmem:[%s1 + $0x8] sm:$0xf]
  %v34 = vld [vmem:[%s1 + $0xc] sm:$0xf]
  %v35 = vld [vmem:[%s1 + $0x10] sm:$0xf]
  %v36 = vld [vmem:[%s1 + $0x14] sm:$0xf]
  %v37 = vld [vmem:[%s1 + $0x18] sm:$0xf]
  %v38 = vld [vmem:[%s1 + $0x1c] sm:$0xf]
  %v39 = vld [vmem:[%s1 + $0x20] sm:$0xf]
  %v40 = vld [vmem:[%s1 + $0x24] sm:$0xf]
  %v41 = vld [vmem:[%s1 + $0x28] sm:$0xf]
  %v42 = vld [vmem:[%s1 + $0x2c] sm:$0xf]
  %v43 = vld [vmem:[%s1 + $0x30] sm:$0xf]
  %v44 = vld [vmem:[%s1 + $0x34] sm:$0xf]
  %v45 = vld [vmem:[%s1 + $0x38] sm:$0xf]
  %v46 = vld [vmem:[%s1 + $0x3c] sm:$0xf]
  %v51 = vunpack.c.l.b16 %v27
  %v52 = vunpack.c.l.b16 %v28
  %v53 = vunpack.c.l.b16 %v29
  %v54 = vunpack.c.l.b16 %v30
  %v55 = vpack.c.b16 %v52, %v51
  %v56 = vpack.c.b16 %v54, %v53
  %v75 = vunpack.c.l.b16 %v31
  %v76 = vunpack.c.l.b16 %v32
  %v77 = vunpack.c.l.b16 %v33
  %v78 = vunpack.c.l.b16 %v34
  %v79 = vunpack.c.l.b16 %v35
  %v80 = vunpack.c.l.b16 %v36
  %v81 = vunpack.c.l.b16 %v37
  %v82 = vunpack.c.l.b16 %v38
  %v83 = vunpack.c.l.b16 %v39
  %v84 = vunpack.c.l.b16 %v40
  %v85 = vunpack.c.l.b16 %v41
  %v86 = vunpack.c.l.b16 %v42
  %v87 = vunpack.c.l.b16 %v43
  %v88 = vunpack.c.l.b16 %v44
  %v89 = vunpack.c.l.b16 %v45
  %v90 = vunpack.c.l.b16 %v46
  %v91 = vpack.c.b16 %v76, %v75
  %v92 = vpack.c.b16 %v78, %v77
  %v93 = vpack.c.b16 %v80, %v79
  %v94 = vpack.c.b16 %v82, %v81
  %v95 = vpack.c.b16 %v84, %v83
  %v96 = vpack.c.b16 %v86, %v85
  %v97 = vpack.c.b16 %v88, %v87
  %v98 = vpack.c.b16 %v90, %v89
  %107 = vmatprep.subr.bf16.mxu0 0
  %108 = vmatpush1.bf16.msra.mxu0 %v91
  %109 = vmatprep.subr.bf16.mxu0 0
  %110 = vmatpush1.bf16.msra.mxu0 %v92
  %111 = vmatprep.subr.bf16.mxu0 0
  %112 = vmatpush1.bf16.msra.mxu0 %v93
  %113 = vmatprep.subr.bf16.mxu0 0
  %114 = vmatpush1.bf16.msra.mxu0 %v94
  %115 = vmatprep.subr.bf16.mxu0 0
  %116 = vmatpush1.bf16.msra.mxu0 %v95
  %117 = vmatprep.subr.bf16.mxu0 0
  %118 = vmatpush1.bf16.msra.mxu0 %v96
  %119 = vmatprep.subr.bf16.mxu0 0
  %120 = vmatpush1.bf16.msra.mxu0 %v97
  %121 = vmatprep.subr.bf16.mxu0 0
  %122 = vmatpush1.bf16.msra.mxu0 %v98
  %123 = vmatprep.subr.bf16.mxu0 0
  %124 = vmatpush1.bf16.msra.mxu0 0
  %125 = vmatprep.subr.bf16.mxu0 0
  %126 = vmatpush1.bf16.msra.mxu0 0
  %127 = vmatprep.subr.bf16.mxu0 0
  %128 = vmatpush1.bf16.msra.mxu0 0
  %129 = vmatprep.subr.bf16.mxu0 0
  %130 = vmatpush1.bf16.msra.mxu0 0
  %131 = vmatprep.subr.bf16.mxu0 0
  %132 = vmatpush1.bf16.msra.mxu0 0
  %133 = vmatprep.subr.bf16.mxu0 0
  %134 = vmatpush1.bf16.msra.mxu0 0
  %135 = vmatprep.subr.bf16.mxu0 0
  %136 = vmatpush1.bf16.msra.mxu0 0
  %137 = vmatprep.subr.bf16.mxu0 0
  %138 = vmatpush1.bf16.msra.mxu0 0
  %139 = vmatprep.mubr.bf16.mxu0 0
  %140 = vmatmul.mubr.bf16.gmra.mrb[0].mxu0 %v55
  %v141 = vpop.f32.mrb[0].mxu0
  %v142 = vadd.f32 0.0, %v141
  %v143 = vpop.f32.mrb[0].mxu0
  %v144 = vpop.f32.mrb[0].mxu0
  %v145 = vadd.f32 0.0, %v144
  %v146 = vpop.f32.mrb[0].mxu0
  %147 = vmatprep.mubr.bf16.mxu0 0
  %148 = vmatmul.mubr.bf16.gmra.mrb[0].mxu0 %v56
  %v149 = vpop.f32.mrb[0].mxu0
  %v150 = vadd.f32 0.0, %v149
  %v151 = vpop.f32.mrb[0].mxu0
  %v152 = vpop.f32.mrb[0].mxu0
  %v153 = vadd.f32 0.0, %v152
  %v154 = vpop.f32.mrb[0].mxu0
  %155 = vdwg.mxu0
  %v156 = vadd.f32 %v23, %v142
  %v157 = vadd.f32 %v24, %v145
  %v158 = vadd.f32 %v25, %v150
  %v159 = vadd.f32 %v26, %v153
  %160 = vst [vmem:[#allocation2] sm:$0xff] %v156
  %161 = vst [vmem:[#allocation2 + $0x8] sm:$0xff] %v157
  %162 = vst [vmem:[#allocation2 + $0x10] sm:$0xff] %v158
  %163 = vst [vmem:[#allocation2 + $0x18] sm:$0xff] %v159
  // Predicated region
  $region18: #{_lambda_.128} parent=0 // pred_check
    %p164 = pneg %p15
  $region19: #{_lambda_.128} parent=0 // pred_check_branch
    %166 = sbr.rel (%p164) target = $region21
  $region20: #{_lambda_.128} parent=0 // pred_region
    %v167 = vld [vmem:[#allocation2] sm:$0xff]
    %v168 = vld [vmem:[#allocation2 + $0x8] sm:$0xff]
    %v169 = vld [vmem:[#allocation2 + $0x10] sm:$0xff]
    %v170 = vld [vmem:[#allocation2 + $0x18] sm:$0xff]
    %v171 = vld [vmem:[%s2] sm:$0x1]
    %v173 = vlaneseq
    %v174 = vshrl.u32 %v173, 7
    %v175 = vsub.s32 0, %v174
    %v176 = vrot.slane %v171, %v175
    %v178 = vadd.f32 %v167, %v176
    %v179 = vadd.f32 %v168, %v176
    %v180 = vadd.f32 %v169, %v176
    %v181 = vadd.f32 %v170, %v176
    %v182 = vmul.f32 %v178, %v178
    %v183 = vmul.f32 %v179, %v179
    %v184 = vmul.f32 %v180, %v180
    %v185 = vmul.f32 %v181, %v181
    %v186 = vmul.f32 %v178, %v182
    %v187 = vmul.f32 %v179, %v183
    %v188 = vmul.f32 %v180, %v184
    %v189 = vmul.f32 %v181, %v185
    %v190 = vmul.f32 %v186, 0.044715
    %v191 = vmul.f32 %v187, 0.044715
    %v192 = vmul.f32 %v188, 0.044715
    %v193 = vmul.f32 %v189, 0.044715
    %v194 = vadd.f32 %v178, %v190
    %v195 = vadd.f32 %v179, %v191
    %v196 = vadd.f32 %v180, %v192
    %v197 = vadd.f32 %v181, %v193
    %v198 = vmul.f32 %v194, 0.7978846
    %v199 = vmul.f32 %v195, 0.7978846
    %v200 = vmul.f32 %v196, 0.7978846
    %v201 = vmul.f32 %v197, 0.7978846
    %v202 = vtanh.pop %v198
    %v203 = vtanh.pop %v199
    %v204 = vtanh.pop %v200
    %v205 = vtanh.pop %v201
    %v206 = vadd.f32 %v202, 1.0
    %v207 = vadd.f32 %v203, 1.0
    %v208 = vadd.f32 %v204, 1.0
    %v209 = vadd.f32 %v205, 1.0
    %v210 = vmul.f32 %v206, 0.5
    %v211 = vmul.f32 %v207, 0.5
    %v212 = vmul.f32 %v208, 0.5
    %v213 = vmul.f32 %v209, 0.5
    %v214 = vmul.f32 %v178, %v210
    %v215 = vmul.f32 %v179, %v211
    %v216 = vmul.f32 %v180, %v212
    %v217 = vmul.f32 %v181, %v213
    %218 = vst [vmem:[%s3] sm:$0xff] %v214
    %219 = vst [vmem:[%s3 + $0x8] sm:$0xff] %v215
    %220 = vst [vmem:[%s3 + $0x10] sm:$0xff] %v216
    %221 = vst [vmem:[%s3 + $0x18] sm:$0xff] %v217
  $region21: #{_lambda_.128} parent=0 // pred_fallthru
    _
  // Predicated region
  $region22: #{_lambda_.128} parent=0 // pred_check
    _
  $region23: #{_lambda_.128} parent=0 // pred_check_branch
    %223 = sbr.rel (0) target = $region25
  $region24: #{_lambda_.128} parent=0 // pred_region
    _
  $region25: #{_lambda_.128} parent=0 // pred_fallthru
    _
  // Predicated region
  $region26: #{_lambda_.128} parent=0 // pred_check
    _
  $region27: #{_lambda_.128} parent=0 // pred_check_branch
    %225 = sbr.rel (0) target = $region29
  $region28: #{_lambda_.128} parent=0 // pred_region
    _
  $region29: #{_lambda_.128} parent=0 // pred_fallthru
    _

// kernel: _lambda_.125
$region0: #{_lambda_.125}
  #allocation0 [shape = 'u32[]', space=smem, size = 0x4, offset = 0x4, fixed_abs, tag = 'smem constant byte address 0x4 - core index']
  #allocation1 [shape = 'u32[144,128]{1,0:T(1,128)}', space=vmem, size = 0x12000, scoped, tag = 'internal scratch']
  %s0 = inlined_call_operand.vmem [shape: f32[2,16,32], index: 0, kind: input, shape index: {}]
  %s1 = inlined_call_operand.vmem [shape: f32[2,16,32], index: 1, kind: input, shape index: {}]
  %s2 = inlined_call_operand.vmem [shape: f32[2,16,32], index: 2, kind: input, shape index: {}]
  %s3 = inlined_call_operand.vmem [shape: f32[2,16,32], index: 3, kind: output, shape index: {}]
  %s4 = sld [smem:[#allocation0]]
  $region45: #{_lambda_.125} parent=0
    _
  %s6 = ssub.s32 1, %s4
  %s7 = scalar_select 0, %s6, %s4
  loop: start=0, step=1, limit=4
  $region2: #{_lambda_.125} parent=0 // loop_pre_header
    _
  $region3: #{_lambda_.125} parent=0 // loop_header
    %s9 = sphi 0, %s13
    %p10 = scmp.ge.s32.totalorder %s9, 4
    %s19 = sphi 0, %s21
    %s22 = sphi 0, %s19
    %s23 = sphi 0, %s22
    %s39 = sphi 0, %s23
    %s45 = sphi 0, %s47
    %s48 = sphi 0, %s45
    %s49 = sphi 0, %s48
    %s65 = sphi 0, %s49
    %s71 = sphi 0, %s73
    %s74 = sphi 0, %s71
    %s75 = sphi 0, %s74
    %s91 = sphi 0, %s75
    %s97 = sphi 0, %s99
    %s100 = sphi 0, %s97
    %s101 = sphi 0, %s100
    %s117 = sphi 0, %s101
  $region4: #{_lambda_.125} parent=0 // loop_header_branch
    %12 = sbr.rel (%p10) target = $region8
  $region5: #{_lambda_.125} parent=0 // loop_body
    %s14 = ssub.s32 %s9, 1
    %s15 = ssub.s32 %s9, 2
    %s16 = sadd.s32 %s9, 1
    %s17 = ssub.s32 %s9, %s16
    %p18 = scmp.eq.s32.totalorder %s17, 0
    %s20 = sadd.s32 %s19, 1
    %s21 = scalar_select %p18, %s19, %s20
    %p24 = pneg %p18
    %p25 = scmp.eq.s32.totalorder %s9, 1
    %p26 = por %p24, %p25
    %p27 = scmp.ne.s32.totalorder %s19, %s22
    %p28 = scmp.eq.s32.totalorder %s9, 0
    %p29 = por %p27, %p28
    %p30 = scmp.ne.s32.totalorder %s19, %s22
    %p31 = scmp.eq.s32.totalorder %s14, 1
    %p32 = por %p30, %p31
    %p33 = scmp.ne.s32.totalorder %s22, %s23
    %p34 = scmp.eq.s32.totalorder %s14, 0
    %p35 = por %p33, %p34
    %p36 = scmp.ne.s32.totalorder %s22, %s23
    %p37 = scmp.eq.s32.totalorder %s15, 1
    %p38 = por %p36, %p37
    %p40 = scmp.ne.s32.totalorder %s23, %s39
    %p41 = scmp.eq.s32.totalorder %s15, 0
    %p42 = por %p40, %p41
    %s43 = ssub.s32 %s9, %s16
    %p44 = scmp.eq.s32.totalorder %s43, 0
    %s46 = sadd.s32 %s45, 1
    %s47 = scalar_select %p44, %s45, %s46
    %p50 = pneg %p44
    %p51 = scmp.eq.s32.totalorder %s9, 1
    %p52 = por %p50, %p51
    %p53 = scmp.ne.s32.totalorder %s45, %s48
    %p54 = scmp.eq.s32.totalorder %s9, 0
    %p55 = por %p53, %p54
    %p56 = scmp.ne.s32.totalorder %s45, %s48
    %p57 = scmp.eq.s32.totalorder %s14, 1
    %p58 = por %p56, %p57
    %p59 = scmp.ne.s32.totalorder %s48, %s49
    %p60 = scmp.eq.s32.totalorder %s14, 0
    %p61 = por %p59, %p60
    %p62 = scmp.ne.s32.totalorder %s48, %s49
    %p63 = scmp.eq.s32.totalorder %s15, 1
    %p64 = por %p62, %p63
    %p66 = scmp.ne.s32.totalorder %s49, %s65
    %p67 = scmp.eq.s32.totalorder %s15, 0
    %p68 = por %p66, %p67
    %s69 = ssub.s32 %s9, %s16
    %p70 = scmp.eq.s32.totalorder %s69, 0
    %s72 = sadd.s32 %s71, 1
    %s73 = scalar_select %p70, %s71, %s72
    %p76 = pneg %p70
    %p77 = scmp.eq.s32.totalorder %s9, 1
    %p78 = por %p76, %p77
    %p79 = scmp.ne.s32.totalorder %s71, %s74
    %p80 = scmp.eq.s32.totalorder %s9, 0
    %p81 = por %p79, %p80
    %p82 = scmp.ne.s32.totalorder %s71, %s74
    %p83 = scmp.eq.s32.totalorder %s14, 1
    %p84 = por %p82, %p83
    %p85 = scmp.ne.s32.totalorder %s74, %s75
    %p86 = scmp.eq.s32.totalorder %s14, 0
    %p87 = por %p85, %p86
    %p88 = scmp.ne.s32.totalorder %s74, %s75
    %p89 = scmp.eq.s32.totalorder %s15, 1
    %p90 = por %p88, %p89
    %p92 = scmp.ne.s32.totalorder %s75, %s91
    %p93 = scmp.eq.s32.totalorder %s15, 0
    %p94 = por %p92, %p93
    %s95 = ssub.s32 %s9, %s16
    %p96 = scmp.eq.s32.totalorder %s95, 0
    %s98 = sadd.s32 %s97, 1
    %s99 = scalar_select %p96, %s97, %s98
    %p102 = pneg %p96
    %p103 = scmp.eq.s32.totalorder %s9, 1
    %p104 = por %p102, %p103
    %p105 = scmp.ne.s32.totalorder %s97, %s100
    %p106 = scmp.eq.s32.totalorder %s9, 0
    %p107 = por %p105, %p106
    %p108 = scmp.ne.s32.totalorder %s97, %s100
    %p109 = scmp.eq.s32.totalorder %s14, 1
    %p110 = por %p108, %p109
    %p111 = scmp.ne.s32.totalorder %s100, %s101
    %p112 = scmp.eq.s32.totalorder %s14, 0
    %p113 = por %p111, %p112
    %p114 = scmp.ne.s32.totalorder %s100, %s101
    %p115 = scmp.eq.s32.totalorder %s15, 1
    %p116 = por %p114, %p115
    %p118 = scmp.ne.s32.totalorder %s101, %s117
    %p119 = scmp.eq.s32.totalorder %s15, 0
    %p120 = por %p118, %p119
    %p121 = scmp.le.s32.totalorder 1, %s9
    %p122 = scmp.lt.s32.totalorder %s9, 3
    %p123 = pnand %p121, %p122
    %p124 = pneg %p123
    // Predicated region
    $region9: #{_lambda_.125} parent=5 // pred_check
      _
    $region10: #{_lambda_.125} parent=5 // pred_check_branch
      %126 = sbr.rel (%p123) target = $region12
    $region11: #{_lambda_.125} parent=5 // pred_region
      %s127 = ssub.s32 %s9, 1
    $region12: #{_lambda_.125} parent=5 // pred_fallthru
      _
    %p128 = scmp.lt.s32.totalorder %s9, 2
    // Predicated region
    $region13: #{_lambda_.125} parent=5 // pred_check
      %p129 = pneg %p128
    $region14: #{_lambda_.125} parent=5 // pred_check_branch
      %131 = sbr.rel (%p129) target = $region16
    $region15: #{_lambda_.125} parent=5 // pred_region
      // Predicated region
      $region17: #{_lambda_.125} parent=15 // pred_check
        %p132 = pneg %p29
      $region18: #{_lambda_.125} parent=15 // pred_check_branch
        %134 = sbr.rel (%p132) target = $region20
      $region19: #{_lambda_.125} parent=15 // pred_region
        %p135 = scmp.lt.s32.totalorder %s9, 1
        %s136 = scalar_select %p135, %s9, 1
        %s137 = smul.addr %s136, 2
        %s138 = smul.addr %s137, 8
        %s139 = scalar_lea.vmem %s0, %s138
      $region20: #{_lambda_.125} parent=15 // pred_fallthru
        _
      // Predicated region
      $region21: #{_lambda_.125} parent=15 // pred_check
        %p140 = pneg %p55
      $region22: #{_lambda_.125} parent=15 // pred_check_branch
        %142 = sbr.rel (%p140) target = $region24
      $region23: #{_lambda_.125} parent=15 // pred_region
        %p143 = scmp.lt.s32.totalorder %s9, 1
        %s144 = scalar_select %p143, %s9, 1
        %s145 = smul.addr %s144, 2
        %s146 = smul.addr %s145, 8
        %s147 = scalar_lea.vmem %s1, %s146
      $region24: #{_lambda_.125} parent=15 // pred_fallthru
        _
      // Predicated region
      $region25: #{_lambda_.125} parent=15 // pred_check
        %p148 = pneg %p81
      $region26: #{_lambda_.125} parent=15 // pred_check_branch
        %150 = sbr.rel (%p148) target = $region28
      $region27: #{_lambda_.125} parent=15 // pred_region
        %p151 = scmp.lt.s32.totalorder %s9, 1
        %s152 = scalar_select %p151, %s9, 1
        %s153 = smul.addr %s152, 2
        %s154 = smul.addr %s153, 8
        %s155 = scalar_lea.vmem %s2, %s154
      $region28: #{_lambda_.125} parent=15 // pred_fallthru
        _
    $region16: #{_lambda_.125} parent=5 // pred_fallthru
      _
    %p156 = scmp.le.s32.totalorder 1, %s9
    %p157 = scmp.lt.s32.totalorder %s9, 3
    %p158 = pnand %p156, %p157
    %p159 = pneg %p158
    // Predicated region
    $region29: #{_lambda_.125} parent=5 // pred_check
      _
    $region30: #{_lambda_.125} parent=5 // pred_check_branch
      %161 = sbr.rel (%p158) target = $region32
    $region31: #{_lambda_.125} parent=5 // pred_region
      %s162 = ssub.s32 %s9, 1
      %p163 = scmp.lt.s32.totalorder %s14, 1
      %s164 = scalar_select %p163, %s14, 1
      %s165 = smul.addr %s164, 2
      %s166 = smul.addr %s165, 8
      %s167 = scalar_lea.vmem %s0, %s166
      %p168 = pneg %p35
      %p169 = pneg %p32
      %p170 = scmp.lt.s32.totalorder %s14, 1
      %s171 = scalar_select %p170, %s14, 1
      %s172 = smul.addr %s171, 2
      %s173 = smul.addr %s172, 8
      %s174 = scalar_lea.vmem %s1, %s173
      %p175 = pneg %p61
      %p176 = pneg %p58
      %p177 = scmp.lt.s32.totalorder %s14, 1
      %s178 = scalar_select %p177, %s14, 1
      %s179 = smul.addr %s178, 2
      %s180 = smul.addr %s179, 8
      %s181 = scalar_lea.vmem %s2, %s180
      %p182 = pneg %p87
      %p183 = pneg %p84
      %p184 = pneg %p113
      %p185 = pneg %p110
      %p186 = scmp.lt.s32.totalorder %s14, 1
      %s187 = scalar_select %p186, %s14, 1
      %s188 = smul.addr %s187, 2
      %s189 = smul.addr %s188, 8
      %s190 = scalar_lea.vmem %s3, %s189
      %p191 = scmp.lt.s32.totalorder %s14, 1
      %s192 = scalar_select %p191, %s14, 1
      %s193 = smul.addr %s192, 2
      %s194 = smul.addr %s193, 8
      %s195 = scalar_lea.vmem %s0, %s194
      %p196 = scmp.lt.s32.totalorder %s14, 1
      %s197 = scalar_select %p196, %s14, 1
      %s198 = smul.addr %s197, 2
      %s199 = smul.addr %s198, 8
      %s200 = scalar_lea.vmem %s1, %s199
      %p201 = scmp.lt.s32.totalorder %s14, 1
      %s202 = scalar_select %p201, %s14, 1
      %s203 = smul.addr %s202, 2
      %s204 = smul.addr %s203, 8
      %s205 = scalar_lea.vmem %s2, %s204
      %p206 = scmp.lt.s32.totalorder %s14, 1
      %s207 = scalar_select %p206, %s14, 1
      %s208 = smul.addr %s207, 2
      %s209 = smul.addr %s208, 8
      %s210 = scalar_lea.vmem %s3, %s209
      %v212 = vld [vmem:[%s195] sm:$0xff]
      %v213 = vld [vmem:[%s195 + $0x8] sm:$0xff]
      %v214 = vld [vmem:[%s200] sm:$0xff]
      %v215 = vld [vmem:[%s200 + $0x8] sm:$0xff]
      %v216 = vld [vmem:[%s205] sm:$0xff]
      %v217 = vld [vmem:[%s205 + $0x8] sm:$0xff]
      %v218 = vpack.c.bf16 %v213, %v212
      %v219 = vpack.c.bf16 %v215, %v214
      %v220 = vpack.c.bf16 %v217, %v216
      %vm221 = vcmask 130048
      %v223 = vsel %vm221, %v218, 0
      %v226 = vsel %vm221, %v219, 0
      %228 = vmatprep.subr.bf16.mxu0 0
      %229 = vmatpush1.bf16.xpose.msra.mxu0 %v226
      %230 = vmatprep.subr.bf16.mxu0 0
      %231 = vmatpush1.bf16.xpose.msra.mxu0 0
      %232 = vmatprep.subr.bf16.mxu0 0
      %233 = vmatpush1.bf16.xpose.msra.mxu0 0
      %234 = vmatprep.subr.bf16.mxu0 0
      %235 = vmatpush1.bf16.xpose.msra.mxu0 0
      %236 = vmatprep.subr.bf16.mxu0 0
      %237 = vmatpush1.bf16.xpose.msra.mxu0 0
      %238 = vmatprep.subr.bf16.mxu0 0
      %239 = vmatpush1.bf16.xpose.msra.mxu0 0
      %240 = vmatprep.subr.bf16.mxu0 0
      %241 = vmatpush1.bf16.xpose.msra.mxu0 0
      %242 = vmatprep.subr.bf16.mxu0 0
      %243 = vmatpush1.bf16.xpose.msra.mxu0 0
      %244 = vmatprep.subr.bf16.mxu0 0
      %245 = vmatpush1.bf16.xpose.msra.mxu0 0
      %246 = vmatprep.subr.bf16.mxu0 0
      %247 = vmatpush1.bf16.xpose.msra.mxu0 0
      %248 = vmatprep.subr.bf16.mxu0 0
      %249 = vmatpush1.bf16.xpose.msra.mxu0 0
      %250 = vmatprep.subr.bf16.mxu0 0
      %251 = vmatpush1.bf16.xpose.msra.mxu0 0
      %252 = vmatprep.subr.bf16.mxu0 0
      %253 = vmatpush1.bf16.xpose.msra.mxu0 0
      %254 = vmatprep.subr.bf16.mxu0 0
      %255 = vmatpush1.bf16.xpose.msra.mxu0 0
      %256 = vmatprep.subr.bf16.mxu0 0
      %257 = vmatpush1.bf16.xpose.msra.mxu0 0
      %258 = vmatprep.subr.bf16.mxu0 0
      %259 = vmatpush1.bf16.xpose.msra.mxu0 0
      %260 = vmatprep.mubr.bf16.mxu0 0
      %261 = vmatmul.mubr.bf16.gmra.mrb[0].mxu0 %v223
      %v262 = vpop.f32.mrb[0].mxu0
      %v263 = vadd.f32 0.0, %v262
      %v264 = vpop.f32.mrb[0].mxu0
      %v265 = vpop.f32.mrb[0].mxu0
      %v266 = vadd.f32 0.0, %v265
      %v267 = vpop.f32.mrb[0].mxu0
      %268 = vdwg.mxu0
      %v269 = vmul.f32 %v263, 0.25
      %v270 = vmul.f32 %v266, 0.25
      %v271 = vsel %vm221, %v269, -inf
      %272 = vmax.xlane.f32.xlu0 %v271
      %v273 = vpop.xlane.xlu0 %272
      %v274 = vsel %vm221, %v270, -inf
      %275 = vmax.xlane.f32.xlu0 %v274
      %v276 = vpop.xlane.xlu0 %275
      %v277 = vsub.f32 %v269, %v273
      %v278 = vsub.f32 %v270, %v276
      %v279 = vmul.f32 %v277, 1.442695
      %v280 = vpow.pop %v279
      %v281 = vmul.f32 %v278, 1.442695
      %v282 = vpow.pop %v281
      %v283 = vsel %vm221, %v280, 0.0
      %284 = vadd.xlane.f32.xlu0 %v283
      %v285 = vpop.xlane.xlu0 %284
      %v286 = vsel %vm221, %v282, 0.0
      %287 = vadd.xlane.f32.xlu0 %v286
      %v288 = vpop.xlane.xlu0 %287
      %v289 = vrcp.pop %v285
      %v290 = vrcp.pop %v288
      %v291 = vmul.f32 %v280, %v289
      %v292 = vmul.f32 %v282, %v290
      %v293 = vpack.c.bf16 %v292, %v291
      %v295 = vsel %vm221, %v293, 0
      %297 = vmatprep.subr.bf16.mxu0 0
      %298 = vmatpush1.bf16.msra.mxu0 %v220
      %299 = vmatprep.subr.bf16.mxu0 0
      %300 = vmatpush1.bf16.msra.mxu0 0
      %301 = vmatprep.subr.bf16.mxu0 0
      %302 = vmatpush1.bf16.msra.mxu0 0
      %303 = vmatprep.subr.bf16.mxu0 0
      %304 = vmatpush1.bf16.msra.mxu0 0
      %305 = vmatprep.subr.bf16.mxu0 0
      %306 = vmatpush1.bf16.msra.mxu0 0
      %307 = vmatprep.subr.bf16.mxu0 0
      %308 = vmatpush1.bf16.msra.mxu0 0
      %309 = vmatprep.subr.bf16.mxu0 0
      %310 = vmatpush1.bf16.msra.mxu0 0
      %311 = vmatprep.subr.bf16.mxu0 0
      %312 = vmatpush1.bf16.msra.mxu0 0
      %313 = vmatprep.subr.bf16.mxu0 0
      %314 = vmatpush1.bf16.msra.mxu0 0
      %315 = vmatprep.subr.bf16.mxu0 0
      %316 = vmatpush1.bf16.msra.mxu0 0
      %317 = vmatprep.subr.bf16.mxu0 0
      %318 = vmatpush1.bf16.msra.mxu0 0
      %319 = vmatprep.subr.bf16.mxu0 0
      %320 = vmatpush1.bf16.msra.mxu0 0
      %321 = vmatprep.subr.bf16.mxu0 0
      %322 = vmatpush1.bf16.msra.mxu0 0
      %323 = vmatprep.subr.bf16.mxu0 0
      %324 = vmatpush1.bf16.msra.mxu0 0
      %325 = vmatprep.subr.bf16.mxu0 0
      %326 = vmatpush1.bf16.msra.mxu0 0
      %327 = vmatprep.subr.bf16.mxu0 0
      %328 = vmatpush1.bf16.msra.mxu0 0
      %329 = vmatprep.mubr.bf16.mxu0 0
      %330 = vmatmul.mubr.bf16.gmra.mrb[0].mxu0 %v295
      %v331 = vpop.f32.mrb[0].mxu0
      %v332 = vadd.f32 0.0, %v331
      %v333 = vpop.f32.mrb[0].mxu0
      %v334 = vpop.f32.mrb[0].mxu0
      %v335 = vadd.f32 0.0, %v334
      %v336 = vpop.f32.mrb[0].mxu0
      %337 = vdwg.mxu0
      %339 = vrot.lane.b32.xlu0 %v218, 112
      %v340 = vpop.permute.xlu0 %339
      %342 = vrot.lane.b32.xlu0 %v219, 112
      %v343 = vpop.permute.xlu0 %342
      %v345 = vsel %vm221, %v340, 0
      %v348 = vsel %vm221, %v343, 0
      %350 = vmatprep.subr.bf16.mxu0 0
      %351 = vmatpush1.bf16.xpose.msra.mxu0 %v348
      %352 = vmatprep.subr.bf16.mxu0 0
      %353 = vmatpush1.bf16.xpose.msra.mxu0 0
      %354 = vmatprep.subr.bf16.mxu0 0
      %355 = vmatpush1.bf16.xpose.msra.mxu0 0
      %356 = vmatprep.subr.bf16.mxu0 0
      %357 = vmatpush1.bf16.xpose.msra.mxu0 0
      %358 = vmatprep.subr.bf16.mxu0 0
      %359 = vmatpush1.bf16.xpose.msra.mxu0 0
      %360 = vmatprep.subr.bf16.mxu0 0
      %361 = vmatpush1.bf16.xpose.msra.mxu0 0
      %362 = vmatprep.subr.bf16.mxu0 0
      %363 = vmatpush1.bf16.xpose.msra.mxu0 0
      %364 = vmatprep.subr.bf16.mxu0 0
      %365 = vmatpush1.bf16.xpose.msra.mxu0 0
      %366 = vmatprep.subr.bf16.mxu0 0
      %367 = vmatpush1.bf16.xpose.msra.mxu0 0
      %368 = vmatprep.subr.bf16.mxu0 0
      %369 = vmatpush1.bf16.xpose.msra.mxu0 0
      %370 = vmatprep.subr.bf16.mxu0 0
      %371 = vmatpush1.bf16.xpose.msra.mxu0 0
      %372 = vmatprep.subr.bf16.mxu0 0
      %373 = vmatpush1.bf16.xpose.msra.mxu0 0
      %374 = vmatprep.subr.bf16.mxu0 0
      %375 = vmatpush1.bf16.xpose.msra.mxu0 0
      %376 = vmatprep.subr.bf16.mxu0 0
      %377 = vmatpush1.bf16.xpose.msra.mxu0 0
      %378 = vmatprep.subr.bf16.mxu0 0
      %379 = vmatpush1.bf16.xpose.msra.mxu0 0
      %380 = vmatprep.subr.bf16.mxu0 0
      %381 = vmatpush1.bf16.xpose.msra.mxu0 0
      %382 = vmatprep.mubr.bf16.mxu0 0
      %383 = vmatmul.mubr.bf16.gmra.mrb[0].mxu0 %v345
      %v384 = vpop.f32.mrb[0].mxu0
      %v385 = vadd.f32 0.0, %v384
      %v386 = vpop.f32.mrb[0].mxu0
      %v387 = vpop.f32.mrb[0].mxu0
      %v388 = vadd.f32 0.0, %v387
      %v389 = vpop.f32.mrb[0].mxu0
      %390 = vdwg.mxu0
      %v391 = vmul.f32 %v385, 0.25
      %v392 = vmul.f32 %v388, 0.25
      %v393 = vsel %vm221, %v391, -inf
      %394 = vmax.xlane.f32.xlu0 %v393
      %v395 = vpop.xlane.xlu0 %394
      %v396 = vsel %vm221, %v392, -inf
      %397 = vmax.xlane.f32.xlu0 %v396
      %v398 = vpop.xlane.xlu0 %397
      %v399 = vsub.f32 %v391, %v395
      %v400 = vsub.f32 %v392, %v398
      %v401 = vmul.f32 %v399, 1.442695
      %v402 = vpow.pop %v401
      %v403 = vmul.f32 %v400, 1.442695
      %v404 = vpow.pop %v403
      %v405 = vsel %vm221, %v402, 0.0
      %406 = vadd.xlane.f32.xlu0 %v405
      %v407 = vpop.xlane.xlu0 %406
      %v408 = vsel %vm221, %v404, 0.0
      %409 = vadd.xlane.f32.xlu0 %v408
      %v410 = vpop.xlane.xlu0 %409
      %v411 = vrcp.pop %v407
      %v412 = vrcp.pop %v410
      %v413 = vmul.f32 %v402, %v411
      %v414 = vmul.f32 %v404, %v412
      %v415 = vpack.c.bf16 %v414, %v413
      %417 = vrot.lane.b32.xlu0 %v220, 112
      %v418 = vpop.permute.xlu0 %417
      %v421 = vsel %vm221, %v415, 0
      %423 = vmatprep.subr.bf16.mxu0 0
      %424 = vmatpush1.bf16.msra.mxu0 %v418
      %425 = vmatprep.subr.bf16.mxu0 0
      %426 = vmatpush1.bf16.msra.mxu0 0
      %427 = vmatprep.subr.bf16.mxu0 0
      %428 = vmatpush1.bf16.msra.mxu0 0
      %429 = vmatprep.subr.bf16.mxu0 0
      %430 = vmatpush1.bf16.msra.mxu0 0
      %431 = vmatprep.subr.bf16.mxu0 0
      %432 = vmatpush1.bf16.msra.mxu0 0
      %433 = vmatprep.subr.bf16.mxu0 0
      %434 = vmatpush1.bf16.msra.mxu0 0
      %435 = vmatprep.subr.bf16.mxu0 0
      %436 = vmatpush1.bf16.msra.mxu0 0
      %437 = vmatprep.subr.bf16.mxu0 0
      %438 = vmatpush1.bf16.msra.mxu0 0
      %439 = vmatprep.subr.bf16.mxu0 0
      %440 = vmatpush1.bf16.msra.mxu0 0
      %441 = vmatprep.subr.bf16.mxu0 0
      %442 = vmatpush1.bf16.msra.mxu0 0
      %443 = vmatprep.subr.bf16.mxu0 0
      %444 = vmatpush1.bf16.msra.mxu0 0
      %445 = vmatprep.subr.bf16.mxu0 0
      %446 = vmatpush1.bf16.msra.mxu0 0
      %447 = vmatprep.subr.bf16.mxu0 0
      %448 = vmatpush1.bf16.msra.mxu0 0
      %449 = vmatprep.subr.bf16.mxu0 0
      %450 = vmatpush1.bf16.msra.mxu0 0
      %451 = vmatprep.subr.bf16.mxu0 0
      %452 = vmatpush1.bf16.msra.mxu0 0
      %453 = vmatprep.subr.bf16.mxu0 0
      %454 = vmatpush1.bf16.msra.mxu0 0
      %455 = vmatprep.mubr.bf16.mxu0 0
      %456 = vmatmul.mubr.bf16.gmra.mrb[0].mxu0 %v421
      %v457 = vpop.f32.mrb[0].mxu0
      %v458 = vadd.f32 0.0, %v457
      %v459 = vpop.f32.mrb[0].mxu0
      %v460 = vpop.f32.mrb[0].mxu0
      %v461 = vadd.f32 0.0, %v460
      %v462 = vpop.f32.mrb[0].mxu0
      %463 = vdwg.mxu0
      %466 = vrot.lane.b32.xlu0 %v458, 16
      %v467 = vpop.permute.xlu0 %466
      %468 = vrot.lane.b32.xlu0 %v461, 16
      %v469 = vpop.permute.xlu0 %468
      %v472 = vsel %vm221, %v332, %v467
      %v473 = vsel %vm221, %v335, %v469
      %vm474 = vcmask 261120
      %475 = vst.msk [vmem:[%s210] sm:$0xff] %vm474, %v472
      %476 = vst.msk [vmem:[%s210 + $0x8] sm:$0xff] %vm474, %v473
      %p477 = scmp.lt.s32.totalorder %s14, 1
      %s478 = scalar_select %p477, %s14, 1
      %s479 = smul.addr %s478, 2
      %s480 = smul.addr %s479, 8
      %s481 = scalar_lea.vmem %s3, %s480
      // Predicated region
      $region33: #{_lambda_.125} parent=31 // pred_check
        %p482 = pneg %p110
      $region34: #{_lambda_.125} parent=31 // pred_check_branch
        %484 = sbr.rel (%p482) target = $region36
      $region35: #{_lambda_.125} parent=31 // pred_region
        _
      $region36: #{_lambda_.125} parent=31 // pred_fallthru
        _
    $region32: #{_lambda_.125} parent=5 // pred_fallthru
      _
    %p485 = scmp.le.s32.totalorder 2, %s9
    // Predicated region
    $region37: #{_lambda_.125} parent=5 // pred_check
      %p486 = pneg %p485
    $region38: #{_lambda_.125} parent=5 // pred_check_branch
      %488 = sbr.rel (%p486) target = $region40
    $region39: #{_lambda_.125} parent=5 // pred_region
      %s489 = ssub.s32 %s9, 2
      // Predicated region
      $region41: #{_lambda_.125} parent=39 // pred_check
        %p490 = pneg %p116
      $region42: #{_lambda_.125} parent=39 // pred_check_branch
        %492 = sbr.rel (%p490) target = $region44
      $region43: #{_lambda_.125} parent=39 // pred_region
        %p493 = scmp.lt.s32.totalorder %s15, 1
        %s494 = scalar_select %p493, %s15, 1
        %s495 = smul.addr %s494, 2
        %s496 = smul.addr %s495, 8
        %s497 = scalar_lea.vmem %s3, %s496
      $region44: #{_lambda_.125} parent=39 // pred_fallthru
        _
    $region40: #{_lambda_.125} parent=5 // pred_fallthru
      _
  $region6: #{_lambda_.125} parent=0 // loop_footer
    %s13 = sadd.s32 1, %s9
  $region7: #{_lambda_.125} parent=0 // loop_footer_branch
    %8 = sbr.rel target = $region3
  $region8: #{_lambda_.125} parent=0 // loop_exit
    _

// kernel: _lambda_.139
$region0: #{_lambda_.139}
  #allocation0 [shape = 'u32[]', space=smem, size = 0x4, offset = 0x4, fixed_abs, tag = 'smem constant byte address 0x4 - core index']
  #allocation1 [shape = 'u32[144,128]{1,0:T(1,128)}', space=vmem, size = 0x12000, scoped, tag = 'internal scratch']
  #allocation2 [shape = 'f32[16,128]{1,0:T(8,128)}', space=vmem, size = 0x2000, scoped, tag = 'scratch operand']
  %s0 = inlined_call_operand.vmem [shape: bf16[16,128], index: 0, kind: input, shape index: {}]
  %s1 = inlined_call_operand.vmem [shape: bf16[128,128], index: 1, kind: input, shape index: {}]
  %s2 = inlined_call_operand.vmem [shape: f32[1,128], index: 2, kind: input, shape index: {}]
  %s3 = inlined_call_operand.vmem [shape: f32[16,128], index: 3, kind: output, shape index: {}]
  %s4 = sld [smem:[#allocation0]]
  $region30: #{_lambda_.139} parent=0
    _
  %s6 = ssub.s32 1, %s4
  %s7 = scalar_select 0, %s6, %s4
  // Predicated region
  $region2: #{_lambda_.139} parent=0 // pred_check
    _
  $region3: #{_lambda_.139} parent=0 // pred_check_branch
    %9 = sbr.rel (0) target = $region5
  $region4: #{_lambda_.139} parent=0 // pred_region
    _
  $region5: #{_lambda_.139} parent=0 // pred_fallthru
    _
  // Predicated region
  $region6: #{_lambda_.139} parent=0 // pred_check
    _
  $region7: #{_lambda_.139} parent=0 // pred_check_branch
    %11 = sbr.rel (0) target = $region9
  $region8: #{_lambda_.139} parent=0 // pred_region
    _
  $region9: #{_lambda_.139} parent=0 // pred_fallthru
    _
  // Predicated region
  $region10: #{_lambda_.139} parent=0 // pred_check
    _
  $region11: #{_lambda_.139} parent=0 // pred_check_branch
    %13 = sbr.rel (0) target = $region13
  $region12: #{_lambda_.139} parent=0 // pred_region
    _
  $region13: #{_lambda_.139} parent=0 // pred_fallthru
    _
  %p15 = scmp.eq.s32.totalorder 0, 0
  // Predicated region
  $region14: #{_lambda_.139} parent=0 // pred_check
    %p16 = pneg %p15
  $region15: #{_lambda_.139} parent=0 // pred_check_branch
    %18 = sbr.rel (%p16) target = $region17
  $region16: #{_lambda_.139} parent=0 // pred_region
    %19 = vst [vmem:[#allocation2] sm:$0xff] 0.0
    %20 = vst [vmem:[#allocation2 + $0x8] sm:$0xff] 0.0
  $region17: #{_lambda_.139} parent=0 // pred_fallthru
    _
  %v21 = vld [vmem:[#allocation2] sm:$0xff]
  %v22 = vld [vmem:[#allocation2 + $0x8] sm:$0xff]
  %v23 = vld [vmem:[%s0] sm:$0xf]
  %v24 = vld [vmem:[%s0 + $0x4] sm:$0xf]
  %v25 = vld [vmem:[%s1] sm:$0xf]
  %v26 = vld [vmem:[%s1 + $0x4] sm:$0xf]
  %v27 = vld [vmem:[%s1 + $0x8] sm:$0xf]
  %v28 = vld [vmem:[%s1 + $0xc] sm:$0xf]
  %v29 = vld [vmem:[%s1 + $0x10] sm:$0xf]
  %v30 = vld [vmem:[%s1 + $0x14] sm:$0xf]
  %v31 = vld [vmem:[%s1 + $0x18] sm:$0xf]
  %v32 = vld [vmem:[%s1 + $0x1c] sm:$0xf]
  %v33 = vld [vmem:[%s1 + $0x20] sm:$0xf]
  %v34 = vld [vmem:[%s1 + $0x24] sm:$0xf]
  %v35 = vld [vmem:[%s1 + $0x28] sm:$0xf]
  %v36 = vld [vmem:[%s1 + $0x2c] sm:$0xf]
  %v37 = vld [vmem:[%s1 + $0x30] sm:$0xf]
  %v38 = vld [vmem:[%s1 + $0x34] sm:$0xf]
  %v39 = vld [vmem:[%s1 + $0x38] sm:$0xf]
  %v40 = vld [vmem:[%s1 + $0x3c] sm:$0xf]
  %v43 = vunpack.c.l.b16 %v23
  %v44 = vunpack.c.l.b16 %v24
  %v45 = vpack.c.b16 %v44, %v43
  %v63 = vunpack.c.l.b16 %v25
  %v64 = vunpack.c.l.b16 %v26
  %v65 = vunpack.c.l.b16 %v27
  %v66 = vunpack.c.l.b16 %v28
  %v67 = vunpack.c.l.b16 %v29
  %v68 = vunpack.c.l.b16 %v30
  %v69 = vunpack.c.l.b16 %v31
  %v70 = vunpack.c.l.b16 %v32
  %v71 = vunpack.c.l.b16 %v33
  %v72 = vunpack.c.l.b16 %v34
  %v73 = vunpack.c.l.b16 %v35
  %v74 = vunpack.c.l.b16 %v36
  %v75 = vunpack.c.l.b16 %v37
  %v76 = vunpack.c.l.b16 %v38
  %v77 = vunpack.c.l.b16 %v39
  %v78 = vunpack.c.l.b16 %v40
  %v79 = vpack.c.b16 %v64, %v63
  %v80 = vpack.c.b16 %v66, %v65
  %v81 = vpack.c.b16 %v68, %v67
  %v82 = vpack.c.b16 %v70, %v69
  %v83 = vpack.c.b16 %v72, %v71
  %v84 = vpack.c.b16 %v74, %v73
  %v85 = vpack.c.b16 %v76, %v75
  %v86 = vpack.c.b16 %v78, %v77
  %95 = vmatprep.subr.bf16.mxu0 0
  %96 = vmatpush1.bf16.msra.mxu0 %v79
  %97 = vmatprep.subr.bf16.mxu0 0
  %98 = vmatpush1.bf16.msra.mxu0 %v80
  %99 = vmatprep.subr.bf16.mxu0 0
  %100 = vmatpush1.bf16.msra.mxu0 %v81
  %101 = vmatprep.subr.bf16.mxu0 0
  %102 = vmatpush1.bf16.msra.mxu0 %v82
  %103 = vmatprep.subr.bf16.mxu0 0
  %104 = vmatpush1.bf16.msra.mxu0 %v83
  %105 = vmatprep.subr.bf16.mxu0 0
  %106 = vmatpush1.bf16.msra.mxu0 %v84
  %107 = vmatprep.subr.bf16.mxu0 0
  %108 = vmatpush1.bf16.msra.mxu0 %v85
  %109 = vmatprep.subr.bf16.mxu0 0
  %110 = vmatpush1.bf16.msra.mxu0 %v86
  %111 = vmatprep.subr.bf16.mxu0 0
  %112 = vmatpush1.bf16.msra.mxu0 0
  %113 = vmatprep.subr.bf16.mxu0 0
  %114 = vmatpush1.bf16.msra.mxu0 0
  %115 = vmatprep.subr.bf16.mxu0 0
  %116 = vmatpush1.bf16.msra.mxu0 0
  %117 = vmatprep.subr.bf16.mxu0 0
  %118 = vmatpush1.bf16.msra.mxu0 0
  %119 = vmatprep.subr.bf16.mxu0 0
  %120 = vmatpush1.bf16.msra.mxu0 0
  %121 = vmatprep.subr.bf16.mxu0 0
  %122 = vmatpush1.bf16.msra.mxu0 0
  %123 = vmatprep.subr.bf16.mxu0 0
  %124 = vmatpush1.bf16.msra.mxu0 0
  %125 = vmatprep.subr.bf16.mxu0 0
  %126 = vmatpush1.bf16.msra.mxu0 0
  %127 = vmatprep.mubr.bf16.mxu0 0
  %128 = vmatmul.mubr.bf16.gmra.mrb[0].mxu0 %v45
  %v129 = vpop.f32.mrb[0].mxu0
  %v130 = vadd.f32 0.0, %v129
  %v131 = vpop.f32.mrb[0].mxu0
  %v132 = vpop.f32.mrb[0].mxu0
  %v133 = vadd.f32 0.0, %v132
  %v134 = vpop.f32.mrb[0].mxu0
  %135 = vdwg.mxu0
  %v136 = vadd.f32 %v21, %v130
  %v137 = vadd.f32 %v22, %v133
  %138 = vst [vmem:[#allocation2] sm:$0xff] %v136
  %139 = vst [vmem:[#allocation2 + $0x8] sm:$0xff] %v137
  // Predicated region
  $region18: #{_lambda_.139} parent=0 // pred_check
    %p140 = pneg %p15
  $region19: #{_lambda_.139} parent=0 // pred_check_branch
    %142 = sbr.rel (%p140) target = $region21
  $region20: #{_lambda_.139} parent=0 // pred_region
    %v143 = vld [vmem:[#allocation2] sm:$0xff]
    %v144 = vld [vmem:[#allocation2 + $0x8] sm:$0xff]
    %v145 = vld [vmem:[%s2] sm:$0x1]
    %v147 = vlaneseq
    %v148 = vshrl.u32 %v147, 7
    %v149 = vsub.s32 0, %v148
    %v150 = vrot.slane %v145, %v149
    %v152 = vadd.f32 %v143, %v150
    %v153 = vadd.f32 %v144, %v150
    %154 = vst [vmem:[%s3] sm:$0xff] %v152
    %155 = vst [vmem:[%s3 + $0x8] sm:$0xff] %v153
  $region21: #{_lambda_.139} parent=0 // pred_fallthru
    _
  // Predicated region
  $region22: #{_lambda_.139} parent=0 // pred_check
    _
  $region23: #{_lambda_.139} parent=0 // pred_check_branch
    %157 = sbr.rel (0) target = $region25
  $region24: #{_lambda_.139} parent=0 // pred_region
    _
  $region25: #{_lambda_.139} parent=0 // pred_fallthru
    _
  // Predicated region
  $region26: #{_lambda_.139} parent=0 // pred_check
    _
  $region27: #{_lambda_.139} parent=0 // pred_check_branch
    %159 = sbr.rel (0) target = $region29
  $region28: #{_lambda_.139} parent=0 // pred_region
    _
  $region29: #{_lambda_.139} parent=0 // pred_fallthru
    _

// kernel: _lambda_.161
$region0: #{_lambda_.161}
  #allocation0 [shape = 'u32[]', space=smem, size = 0x4, offset = 0x4, fixed_abs, tag = 'smem constant byte address 0x4 - core index']
  #allocation1 [shape = 'u32[144,128]{1,0:T(1,128)}', space=vmem, size = 0x12000, scoped, tag = 'internal scratch']
  %s0 = inlined_call_operand.vmem [shape: f32[32,16], index: 0, kind: input, shape index: {}]
  %s1 = inlined_call_operand.vmem [shape: f32[32,16], index: 1, kind: input, shape index: {}]
  %s2 = inlined_call_operand.vmem [shape: f32[32,1], index: 2, kind: input, shape index: {}]
  %s3 = inlined_call_operand.vmem [shape: f32[32,16], index: 3, kind: output, shape index: {}]
  %s4 = sld [smem:[#allocation0]]
  $region22: #{_lambda_.161} parent=0
    _
  %s6 = ssub.s32 1, %s4
  %s7 = scalar_select 0, %s6, %s4
  // Predicated region
  $region2: #{_lambda_.161} parent=0 // pred_check
    _
  $region3: #{_lambda_.161} parent=0 // pred_check_branch
    %9 = sbr.rel (0) target = $region5
  $region4: #{_lambda_.161} parent=0 // pred_region
    _
  $region5: #{_lambda_.161} parent=0 // pred_fallthru
    _
  // Predicated region
  $region6: #{_lambda_.161} parent=0 // pred_check
    _
  $region7: #{_lambda_.161} parent=0 // pred_check_branch
    %11 = sbr.rel (0) target = $region9
  $region8: #{_lambda_.161} parent=0 // pred_region
    _
  $region9: #{_lambda_.161} parent=0 // pred_fallthru
    _
  // Predicated region
  $region10: #{_lambda_.161} parent=0 // pred_check
    _
  $region11: #{_lambda_.161} parent=0 // pred_check_branch
    %13 = sbr.rel (0) target = $region13
  $region12: #{_lambda_.161} parent=0 // pred_region
    _
  $region13: #{_lambda_.161} parent=0 // pred_fallthru
    _
  %v14 = vld [vmem:[%s2] sm:$0xff]
  %v15 = vld [vmem:[%s2 + $0x8] sm:$0xff]
  %v16 = vld [vmem:[%s2 + $0x10] sm:$0xff]
  %v17 = vld [vmem:[%s2 + $0x18] sm:$0xff]
  %v18 = vld [vmem:[%s0] sm:$0xff]
  %v19 = vld [vmem:[%s0 + $0x8] sm:$0xff]
  %v20 = vld [vmem:[%s0 + $0x10] sm:$0xff]
  %v21 = vld [vmem:[%s0 + $0x18] sm:$0xff]
  %23 = vset.pattern.permute.xlu0 0
  %24 = vperm.xlu0 %23, %v14
  %v25 = vpop.permute.xlu0 %24
  %28 = vset.pattern.permute.xlu0 0
  %29 = vperm.xlu0 %28, %v15
  %v30 = vpop.permute.xlu0 %29
  %33 = vset.pattern.permute.xlu0 0
  %34 = vperm.xlu0 %33, %v16
  %v35 = vpop.permute.xlu0 %34
  %38 = vset.pattern.permute.xlu0 0
  %39 = vperm.xlu0 %38, %v17
  %v40 = vpop.permute.xlu0 %39
  %v42 = vmul.f32 %v25, %v18
  %v43 = vmul.f32 %v30, %v19
  %v44 = vmul.f32 %v35, %v20
  %v45 = vmul.f32 %v40, %v21
  %v46 = vsub.f32 1.0, %v14
  %v47 = vsub.f32 1.0, %v15
  %v48 = vsub.f32 1.0, %v16
  %v49 = vsub.f32 1.0, %v17
  %v50 = vld [vmem:[%s1] sm:$0xff]
  %v51 = vld [vmem:[%s1 + $0x8] sm:$0xff]
  %v52 = vld [vmem:[%s1 + $0x10] sm:$0xff]
  %v53 = vld [vmem:[%s1 + $0x18] sm:$0xff]
  %55 = vset.pattern.permute.xlu0 0
  %56 = vperm.xlu0 %55, %v46
  %v57 = vpop.permute.xlu0 %56
  %60 = vset.pattern.permute.xlu0 0
  %61 = vperm.xlu0 %60, %v47
  %v62 = vpop.permute.xlu0 %61
  %65 = vset.pattern.permute.xlu0 0
  %66 = vperm.xlu0 %65, %v48
  %v67 = vpop.permute.xlu0 %66
  %70 = vset.pattern.permute.xlu0 0
  %71 = vperm.xlu0 %70, %v49
  %v72 = vpop.permute.xlu0 %71
  %v74 = vmul.f32 %v57, %v50
  %v75 = vmul.f32 %v62, %v51
  %v76 = vmul.f32 %v67, %v52
  %v77 = vmul.f32 %v72, %v53
  %v78 = vadd.f32 %v42, %v74
  %v79 = vadd.f32 %v43, %v75
  %v80 = vadd.f32 %v44, %v76
  %v81 = vadd.f32 %v45, %v77
  %vm82 = vcmask 130048
  %83 = vst.msk [vmem:[%s3] sm:$0xff] %vm82, %v78
  %84 = vst.msk [vmem:[%s3 + $0x8] sm:$0xff] %vm82, %v79
  %85 = vst.msk [vmem:[%s3 + $0x10] sm:$0xff] %vm82, %v80
  %86 = vst.msk [vmem:[%s3 + $0x18] sm:$0xff] %vm82, %v81
  // Predicated region
  $region14: #{_lambda_.161} parent=0 // pred_check
    _
  $region15: #{_lambda_.161} parent=0 // pred_check_branch
    %88 = sbr.rel (0) target = $region17
  $region16: #{_lambda_.161} parent=0 // pred_region
    _
  $region17: #{_lambda_.161} parent=0 // pred_fallthru
    _
  // Predicated region
  $region18: #{_lambda_.161} parent=0 // pred_check
    _
  $region19: #{_lambda_.161} parent=0 // pred_check_branch
    %90 = sbr.rel (0) target = $region21
  $region20: #{_lambda_.161} parent=0 // pred_region
    _
  $region21: #{_lambda_.161} parent=0 // pred_fallthru
    _

// kernel: _lambda_.142
$region0: #{_lambda_.142}
  #allocation0 [shape = 'u32[]', space=smem, size = 0x4, offset = 0x4, fixed_abs, tag = 'smem constant byte address 0x4 - core index']
  #allocation1 [shape = 'u32[144,128]{1,0:T(1,128)}', space=vmem, size = 0x12000, scoped, tag = 'internal scratch']
  %s0 = inlined_call_operand.vmem [shape: f32[2,16,32], index: 0, kind: input, shape index: {}]
  %s1 = inlined_call_operand.vmem [shape: f32[2,8,32], index: 1, kind: input, shape index: {}]
  %s2 = inlined_call_operand.vmem [shape: f32[2,8,32], index: 2, kind: input, shape index: {}]
  %s3 = inlined_call_operand.vmem [shape: f32[2,16,32], index: 3, kind: output, shape index: {}]
  %s4 = sld [smem:[#allocation0]]
  $region45: #{_lambda_.142} parent=0
    _
  %s6 = ssub.s32 1, %s4
  %s7 = scalar_select 0, %s6, %s4
  loop: start=0, step=1, limit=4
  $region2: #{_lambda_.142} parent=0 // loop_pre_header
    _
  $region3: #{_lambda_.142} parent=0 // loop_header
    %s9 = sphi 0, %s13
    %p10 = scmp.ge.s32.totalorder %s9, 4
    %s19 = sphi 0, %s21
    %s22 = sphi 0, %s19
    %s23 = sphi 0, %s22
    %s39 = sphi 0, %s23
    %s45 = sphi 0, %s47
    %s48 = sphi 0, %s45
    %s49 = sphi 0, %s48
    %s65 = sphi 0, %s49
    %s71 = sphi 0, %s73
    %s74 = sphi 0, %s71
    %s75 = sphi 0, %s74
    %s91 = sphi 0, %s75
    %s97 = sphi 0, %s99
    %s100 = sphi 0, %s97
    %s101 = sphi 0, %s100
    %s117 = sphi 0, %s101
  $region4: #{_lambda_.142} parent=0 // loop_header_branch
    %12 = sbr.rel (%p10) target = $region8
  $region5: #{_lambda_.142} parent=0 // loop_body
    %s14 = ssub.s32 %s9, 1
    %s15 = ssub.s32 %s9, 2
    %s16 = sadd.s32 %s9, 1
    %s17 = ssub.s32 %s9, %s16
    %p18 = scmp.eq.s32.totalorder %s17, 0
    %s20 = sadd.s32 %s19, 1
    %s21 = scalar_select %p18, %s19, %s20
    %p24 = pneg %p18
    %p25 = scmp.eq.s32.totalorder %s9, 1
    %p26 = por %p24, %p25
    %p27 = scmp.ne.s32.totalorder %s19, %s22
    %p28 = scmp.eq.s32.totalorder %s9, 0
    %p29 = por %p27, %p28
    %p30 = scmp.ne.s32.totalorder %s19, %s22
    %p31 = scmp.eq.s32.totalorder %s14, 1
    %p32 = por %p30, %p31
    %p33 = scmp.ne.s32.totalorder %s22, %s23
    %p34 = scmp.eq.s32.totalorder %s14, 0
    %p35 = por %p33, %p34
    %p36 = scmp.ne.s32.totalorder %s22, %s23
    %p37 = scmp.eq.s32.totalorder %s15, 1
    %p38 = por %p36, %p37
    %p40 = scmp.ne.s32.totalorder %s23, %s39
    %p41 = scmp.eq.s32.totalorder %s15, 0
    %p42 = por %p40, %p41
    %s43 = ssub.s32 %s9, %s16
    %p44 = scmp.eq.s32.totalorder %s43, 0
    %s46 = sadd.s32 %s45, 1
    %s47 = scalar_select %p44, %s45, %s46
    %p50 = pneg %p44
    %p51 = scmp.eq.s32.totalorder %s9, 1
    %p52 = por %p50, %p51
    %p53 = scmp.ne.s32.totalorder %s45, %s48
    %p54 = scmp.eq.s32.totalorder %s9, 0
    %p55 = por %p53, %p54
    %p56 = scmp.ne.s32.totalorder %s45, %s48
    %p57 = scmp.eq.s32.totalorder %s14, 1
    %p58 = por %p56, %p57
    %p59 = scmp.ne.s32.totalorder %s48, %s49
    %p60 = scmp.eq.s32.totalorder %s14, 0
    %p61 = por %p59, %p60
    %p62 = scmp.ne.s32.totalorder %s48, %s49
    %p63 = scmp.eq.s32.totalorder %s15, 1
    %p64 = por %p62, %p63
    %p66 = scmp.ne.s32.totalorder %s49, %s65
    %p67 = scmp.eq.s32.totalorder %s15, 0
    %p68 = por %p66, %p67
    %s69 = ssub.s32 %s9, %s16
    %p70 = scmp.eq.s32.totalorder %s69, 0
    %s72 = sadd.s32 %s71, 1
    %s73 = scalar_select %p70, %s71, %s72
    %p76 = pneg %p70
    %p77 = scmp.eq.s32.totalorder %s9, 1
    %p78 = por %p76, %p77
    %p79 = scmp.ne.s32.totalorder %s71, %s74
    %p80 = scmp.eq.s32.totalorder %s9, 0
    %p81 = por %p79, %p80
    %p82 = scmp.ne.s32.totalorder %s71, %s74
    %p83 = scmp.eq.s32.totalorder %s14, 1
    %p84 = por %p82, %p83
    %p85 = scmp.ne.s32.totalorder %s74, %s75
    %p86 = scmp.eq.s32.totalorder %s14, 0
    %p87 = por %p85, %p86
    %p88 = scmp.ne.s32.totalorder %s74, %s75
    %p89 = scmp.eq.s32.totalorder %s15, 1
    %p90 = por %p88, %p89
    %p92 = scmp.ne.s32.totalorder %s75, %s91
    %p93 = scmp.eq.s32.totalorder %s15, 0
    %p94 = por %p92, %p93
    %s95 = ssub.s32 %s9, %s16
    %p96 = scmp.eq.s32.totalorder %s95, 0
    %s98 = sadd.s32 %s97, 1
    %s99 = scalar_select %p96, %s97, %s98
    %p102 = pneg %p96
    %p103 = scmp.eq.s32.totalorder %s9, 1
    %p104 = por %p102, %p103
    %p105 = scmp.ne.s32.totalorder %s97, %s100
    %p106 = scmp.eq.s32.totalorder %s9, 0
    %p107 = por %p105, %p106
    %p108 = scmp.ne.s32.totalorder %s97, %s100
    %p109 = scmp.eq.s32.totalorder %s14, 1
    %p110 = por %p108, %p109
    %p111 = scmp.ne.s32.totalorder %s100, %s101
    %p112 = scmp.eq.s32.totalorder %s14, 0
    %p113 = por %p111, %p112
    %p114 = scmp.ne.s32.totalorder %s100, %s101
    %p115 = scmp.eq.s32.totalorder %s15, 1
    %p116 = por %p114, %p115
    %p118 = scmp.ne.s32.totalorder %s101, %s117
    %p119 = scmp.eq.s32.totalorder %s15, 0
    %p120 = por %p118, %p119
    %p121 = scmp.le.s32.totalorder 1, %s9
    %p122 = scmp.lt.s32.totalorder %s9, 3
    %p123 = pnand %p121, %p122
    %p124 = pneg %p123
    // Predicated region
    $region9: #{_lambda_.142} parent=5 // pred_check
      _
    $region10: #{_lambda_.142} parent=5 // pred_check_branch
      %126 = sbr.rel (%p123) target = $region12
    $region11: #{_lambda_.142} parent=5 // pred_region
      %s127 = ssub.s32 %s9, 1
    $region12: #{_lambda_.142} parent=5 // pred_fallthru
      _
    %p128 = scmp.lt.s32.totalorder %s9, 2
    // Predicated region
    $region13: #{_lambda_.142} parent=5 // pred_check
      %p129 = pneg %p128
    $region14: #{_lambda_.142} parent=5 // pred_check_branch
      %131 = sbr.rel (%p129) target = $region16
    $region15: #{_lambda_.142} parent=5 // pred_region
      // Predicated region
      $region17: #{_lambda_.142} parent=15 // pred_check
        %p132 = pneg %p29
      $region18: #{_lambda_.142} parent=15 // pred_check_branch
        %134 = sbr.rel (%p132) target = $region20
      $region19: #{_lambda_.142} parent=15 // pred_region
        %p135 = scmp.lt.s32.totalorder %s9, 1
        %s136 = scalar_select %p135, %s9, 1
        %s137 = smul.addr %s136, 2
        %s138 = smul.addr %s137, 8
        %s139 = scalar_lea.vmem %s0, %s138
      $region20: #{_lambda_.142} parent=15 // pred_fallthru
        _
      // Predicated region
      $region21: #{_lambda_.142} parent=15 // pred_check
        %p140 = pneg %p55
      $region22: #{_lambda_.142} parent=15 // pred_check_branch
        %142 = sbr.rel (%p140) target = $region24
      $region23: #{_lambda_.142} parent=15 // pred_region
        %p143 = scmp.lt.s32.totalorder %s9, 1
        %s144 = scalar_select %p143, %s9, 1
        %s145 = smul.addr %s144, 8
        %s146 = scalar_lea.vmem %s1, %s145
      $region24: #{_lambda_.142} parent=15 // pred_fallthru
        _
      // Predicated region
      $region25: #{_lambda_.142} parent=15 // pred_check
        %p147 = pneg %p81
      $region26: #{_lambda_.142} parent=15 // pred_check_branch
        %149 = sbr.rel (%p147) target = $region28
      $region27: #{_lambda_.142} parent=15 // pred_region
        %p150 = scmp.lt.s32.totalorder %s9, 1
        %s151 = scalar_select %p150, %s9, 1
        %s152 = smul.addr %s151, 8
        %s153 = scalar_lea.vmem %s2, %s152
      $region28: #{_lambda_.142} parent=15 // pred_fallthru
        _
    $region16: #{_lambda_.142} parent=5 // pred_fallthru
      _
    %p154 = scmp.le.s32.totalorder 1, %s9
    %p155 = scmp.lt.s32.totalorder %s9, 3
    %p156 = pnand %p154, %p155
    %p157 = pneg %p156
    // Predicated region
    $region29: #{_lambda_.142} parent=5 // pred_check
      _
    $region30: #{_lambda_.142} parent=5 // pred_check_branch
      %159 = sbr.rel (%p156) target = $region32
    $region31: #{_lambda_.142} parent=5 // pred_region
      %s160 = ssub.s32 %s9, 1
      %p161 = scmp.lt.s32.totalorder %s14, 1
      %s162 = scalar_select %p161, %s14, 1
      %s163 = smul.addr %s162, 2
      %s164 = smul.addr %s163, 8
      %s165 = scalar_lea.vmem %s0, %s164
      %p166 = pneg %p35
      %p167 = pneg %p32
      %p168 = scmp.lt.s32.totalorder %s14, 1
      %s169 = scalar_select %p168, %s14, 1
      %s170 = smul.addr %s169, 8
      %s171 = scalar_lea.vmem %s1, %s170
      %p172 = pneg %p61
      %p173 = pneg %p58
      %p174 = scmp.lt.s32.totalorder %s14, 1
      %s175 = scalar_select %p174, %s14, 1
      %s176 = smul.addr %s175, 8
      %s177 = scalar_lea.vmem %s2, %s176
      %p178 = pneg %p87
      %p179 = pneg %p84
      %p180 = pneg %p113
      %p181 = pneg %p110
      %p182 = scmp.lt.s32.totalorder %s14, 1
      %s183 = scalar_select %p182, %s14, 1
      %s184 = smul.addr %s183, 2
      %s185 = smul.addr %s184, 8
      %s186 = scalar_lea.vmem %s3, %s185
      %p187 = scmp.lt.s32.totalorder %s14, 1
      %s188 = scalar_select %p187, %s14, 1
      %s189 = smul.addr %s188, 2
      %s190 = smul.addr %s189, 8
      %s191 = scalar_lea.vmem %s0, %s190
      %p192 = scmp.lt.s32.totalorder %s14, 1
      %s193 = scalar_select %p192, %s14, 1
      %s194 = smul.addr %s193, 8
      %s195 = scalar_lea.vmem %s1, %s194
      %p196 = scmp.lt.s32.totalorder %s14, 1
      %s197 = scalar_select %p196, %s14, 1
      %s198 = smul.addr %s197, 8
      %s199 = scalar_lea.vmem %s2, %s198
      %p200 = scmp.lt.s32.totalorder %s14, 1
      %s201 = scalar_select %p200, %s14, 1
      %s202 = smul.addr %s201, 2
      %s203 = smul.addr %s202, 8
      %s204 = scalar_lea.vmem %s3, %s203
      %v206 = vld [vmem:[%s191] sm:$0xff]
      %v207 = vld [vmem:[%s191 + $0x8] sm:$0xff]
      %v208 = vld [vmem:[%s195] sm:$0xff]
      %v209 = vld [vmem:[%s199] sm:$0xff]
      %v210 = vpack.c.bf16 %v207, %v206
      %v211 = vpack.c.bf16 %v208, %v208
      %v212 = vpack.c.bf16 %v209, %v209
      %vm213 = vcmask 130048
      %v215 = vsel %vm213, %v210, 0
      %v218 = vsel %vm213, %v211, 0
      %220 = vmatprep.subr.bf16.mxu0 0
      %221 = vmatpush1.bf16.xpose.msra.mxu0 %v218
      %222 = vmatprep.subr.bf16.mxu0 0
      %223 = vmatpush1.bf16.xpose.msra.mxu0 0
      %224 = vmatprep.subr.bf16.mxu0 0
      %225 = vmatpush1.bf16.xpose.msra.mxu0 0
      %226 = vmatprep.subr.bf16.mxu0 0
      %227 = vmatpush1.bf16.xpose.msra.mxu0 0
      %228 = vmatprep.subr.bf16.mxu0 0
      %229 = vmatpush1.bf16.xpose.msra.mxu0 0
      %230 = vmatprep.subr.bf16.mxu0 0
      %231 = vmatpush1.bf16.xpose.msra.mxu0 0
      %232 = vmatprep.subr.bf16.mxu0 0
      %233 = vmatpush1.bf16.xpose.msra.mxu0 0
      %234 = vmatprep.subr.bf16.mxu0 0
      %235 = vmatpush1.bf16.xpose.msra.mxu0 0
      %236 = vmatprep.subr.bf16.mxu0 0
      %237 = vmatpush1.bf16.xpose.msra.mxu0 0
      %238 = vmatprep.subr.bf16.mxu0 0
      %239 = vmatpush1.bf16.xpose.msra.mxu0 0
      %240 = vmatprep.subr.bf16.mxu0 0
      %241 = vmatpush1.bf16.xpose.msra.mxu0 0
      %242 = vmatprep.subr.bf16.mxu0 0
      %243 = vmatpush1.bf16.xpose.msra.mxu0 0
      %244 = vmatprep.subr.bf16.mxu0 0
      %245 = vmatpush1.bf16.xpose.msra.mxu0 0
      %246 = vmatprep.subr.bf16.mxu0 0
      %247 = vmatpush1.bf16.xpose.msra.mxu0 0
      %248 = vmatprep.subr.bf16.mxu0 0
      %249 = vmatpush1.bf16.xpose.msra.mxu0 0
      %250 = vmatprep.subr.bf16.mxu0 0
      %251 = vmatpush1.bf16.xpose.msra.mxu0 0
      %252 = vmatprep.mubr.bf16.mxu0 0
      %253 = vmatmul.mubr.bf16.gmra.mrb[0].mxu0 %v215
      %v254 = vpop.f32.mrb[0].mxu0
      %v255 = vadd.f32 0.0, %v254
      %v256 = vpop.f32.mrb[0].mxu0
      %v257 = vpop.f32.mrb[0].mxu0
      %v258 = vadd.f32 0.0, %v257
      %v259 = vpop.f32.mrb[0].mxu0
      %260 = vdwg.mxu0
      %v261 = vmul.f32 %v255, 0.25
      %v262 = vmul.f32 %v258, 0.25
      %vm263 = vcmask 64512
      %v264 = vsel %vm263, %v261, -inf
      %265 = vmax.xlane.f32.xlu0 %v264
      %v266 = vpop.xlane.xlu0 %265
      %v267 = vsel %vm263, %v262, -inf
      %268 = vmax.xlane.f32.xlu0 %v267
      %v269 = vpop.xlane.xlu0 %268
      %v270 = vsub.f32 %v261, %v266
      %v271 = vsub.f32 %v262, %v269
      %v272 = vmul.f32 %v270, 1.442695
      %v273 = vpow.pop %v272
      %v274 = vmul.f32 %v271, 1.442695
      %v275 = vpow.pop %v274
      %v276 = vsel %vm263, %v273, 0.0
      %277 = vadd.xlane.f32.xlu0 %v276
      %v278 = vpop.xlane.xlu0 %277
      %v279 = vsel %vm263, %v275, 0.0
      %280 = vadd.xlane.f32.xlu0 %v279
      %v281 = vpop.xlane.xlu0 %280
      %v282 = vrcp.pop %v278
      %v283 = vrcp.pop %v281
      %v284 = vmul.f32 %v273, %v282
      %v285 = vmul.f32 %v275, %v283
      %v286 = vpack.c.bf16 %v285, %v284
      %v288 = vsel %vm263, %v286, 0
      %vm290 = vcmask 1043456
      %v292 = vsel %vm290, %v212, 0
      %294 = vmatprep.subr.bf16.mxu0 0
      %295 = vmatpush1.bf16.msra.mxu0 %v292
      %296 = vmatprep.subr.bf16.mxu0 0
      %297 = vmatpush1.bf16.msra.mxu0 0
      %298 = vmatprep.subr.bf16.mxu0 0
      %299 = vmatpush1.bf16.msra.mxu0 0
      %300 = vmatprep.subr.bf16.mxu0 0
      %301 = vmatpush1.bf16.msra.mxu0 0
      %302 = vmatprep.subr.bf16.mxu0 0
      %303 = vmatpush1.bf16.msra.mxu0 0
      %304 = vmatprep.subr.bf16.mxu0 0
      %305 = vmatpush1.bf16.msra.mxu0 0
      %306 = vmatprep.subr.bf16.mxu0 0
      %307 = vmatpush1.bf16.msra.mxu0 0
      %308 = vmatprep.subr.bf16.mxu0 0
      %309 = vmatpush1.bf16.msra.mxu0 0
      %310 = vmatprep.subr.bf16.mxu0 0
      %311 = vmatpush1.bf16.msra.mxu0 0
      %312 = vmatprep.subr.bf16.mxu0 0
      %313 = vmatpush1.bf16.msra.mxu0 0
      %314 = vmatprep.subr.bf16.mxu0 0
      %315 = vmatpush1.bf16.msra.mxu0 0
      %316 = vmatprep.subr.bf16.mxu0 0
      %317 = vmatpush1.bf16.msra.mxu0 0
      %318 = vmatprep.subr.bf16.mxu0 0
      %319 = vmatpush1.bf16.msra.mxu0 0
      %320 = vmatprep.subr.bf16.mxu0 0
      %321 = vmatpush1.bf16.msra.mxu0 0
      %322 = vmatprep.subr.bf16.mxu0 0
      %323 = vmatpush1.bf16.msra.mxu0 0
      %324 = vmatprep.subr.bf16.mxu0 0
      %325 = vmatpush1.bf16.msra.mxu0 0
      %326 = vmatprep.mubr.bf16.mxu0 0
      %327 = vmatmul.mubr.bf16.gmra.mrb[0].mxu0 %v288
      %v328 = vpop.f32.mrb[0].mxu0
      %v329 = vadd.f32 0.0, %v328
      %v330 = vpop.f32.mrb[0].mxu0
      %v331 = vpop.f32.mrb[0].mxu0
      %v332 = vadd.f32 0.0, %v331
      %v333 = vpop.f32.mrb[0].mxu0
      %334 = vdwg.mxu0
      %336 = vrot.lane.b32.xlu0 %v210, 112
      %v337 = vpop.permute.xlu0 %336
      %339 = vrot.lane.b32.xlu0 %v211, 112
      %v340 = vpop.permute.xlu0 %339
      %v342 = vsel %vm213, %v337, 0
      %v345 = vsel %vm213, %v340, 0
      %347 = vmatprep.subr.bf16.mxu0 0
      %348 = vmatpush1.bf16.xpose.msra.mxu0 %v345
      %349 = vmatprep.subr.bf16.mxu0 0
      %350 = vmatpush1.bf16.xpose.msra.mxu0 0
      %351 = vmatprep.subr.bf16.mxu0 0
      %352 = vmatpush1.bf16.xpose.msra.mxu0 0
      %353 = vmatprep.subr.bf16.mxu0 0
      %354 = vmatpush1.bf16.xpose.msra.mxu0 0
      %355 = vmatprep.subr.bf16.mxu0 0
      %356 = vmatpush1.bf16.xpose.msra.mxu0 0
      %357 = vmatprep.subr.bf16.mxu0 0
      %358 = vmatpush1.bf16.xpose.msra.mxu0 0
      %359 = vmatprep.subr.bf16.mxu0 0
      %360 = vmatpush1.bf16.xpose.msra.mxu0 0
      %361 = vmatprep.subr.bf16.mxu0 0
      %362 = vmatpush1.bf16.xpose.msra.mxu0 0
      %363 = vmatprep.subr.bf16.mxu0 0
      %364 = vmatpush1.bf16.xpose.msra.mxu0 0
      %365 = vmatprep.subr.bf16.mxu0 0
      %366 = vmatpush1.bf16.xpose.msra.mxu0 0
      %367 = vmatprep.subr.bf16.mxu0 0
      %368 = vmatpush1.bf16.xpose.msra.mxu0 0
      %369 = vmatprep.subr.bf16.mxu0 0
      %370 = vmatpush1.bf16.xpose.msra.mxu0 0
      %371 = vmatprep.subr.bf16.mxu0 0
      %372 = vmatpush1.bf16.xpose.msra.mxu0 0
      %373 = vmatprep.subr.bf16.mxu0 0
      %374 = vmatpush1.bf16.xpose.msra.mxu0 0
      %375 = vmatprep.subr.bf16.mxu0 0
      %376 = vmatpush1.bf16.xpose.msra.mxu0 0
      %377 = vmatprep.subr.bf16.mxu0 0
      %378 = vmatpush1.bf16.xpose.msra.mxu0 0
      %379 = vmatprep.mubr.bf16.mxu0 0
      %380 = vmatmul.mubr.bf16.gmra.mrb[0].mxu0 %v342
      %v381 = vpop.f32.mrb[0].mxu0
      %v382 = vadd.f32 0.0, %v381
      %v383 = vpop.f32.mrb[0].mxu0
      %v384 = vpop.f32.mrb[0].mxu0
      %v385 = vadd.f32 0.0, %v384
      %v386 = vpop.f32.mrb[0].mxu0
      %387 = vdwg.mxu0
      %v388 = vmul.f32 %v382, 0.25
      %v389 = vmul.f32 %v385, 0.25
      %v390 = vsel %vm263, %v388, -inf
      %391 = vmax.xlane.f32.xlu0 %v390
      %v392 = vpop.xlane.xlu0 %391
      %v393 = vsel %vm263, %v389, -inf
      %394 = vmax.xlane.f32.xlu0 %v393
      %v395 = vpop.xlane.xlu0 %394
      %v396 = vsub.f32 %v388, %v392
      %v397 = vsub.f32 %v389, %v395
      %v398 = vmul.f32 %v396, 1.442695
      %v399 = vpow.pop %v398
      %v400 = vmul.f32 %v397, 1.442695
      %v401 = vpow.pop %v400
      %v402 = vsel %vm263, %v399, 0.0
      %403 = vadd.xlane.f32.xlu0 %v402
      %v404 = vpop.xlane.xlu0 %403
      %v405 = vsel %vm263, %v401, 0.0
      %406 = vadd.xlane.f32.xlu0 %v405
      %v407 = vpop.xlane.xlu0 %406
      %v408 = vrcp.pop %v404
      %v409 = vrcp.pop %v407
      %v410 = vmul.f32 %v399, %v408
      %v411 = vmul.f32 %v401, %v409
      %v412 = vpack.c.bf16 %v411, %v410
      %414 = vrot.lane.b32.xlu0 %v212, 112
      %v415 = vpop.permute.xlu0 %414
      %v417 = vsel %vm263, %v412, 0
      %v420 = vsel %vm290, %v415, 0
      %422 = vmatprep.subr.bf16.mxu0 0
      %423 = vmatpush1.bf16.msra.mxu0 %v420
      %424 = vmatprep.subr.bf16.mxu0 0
      %425 = vmatpush1.bf16.msra.mxu0 0
      %426 = vmatprep.subr.bf16.mxu0 0
      %427 = vmatpush1.bf16.msra.mxu0 0
      %428 = vmatprep.subr.bf16.mxu0 0
      %429 = vmatpush1.bf16.msra.mxu0 0
      %430 = vmatprep.subr.bf16.mxu0 0
      %431 = vmatpush1.bf16.msra.mxu0 0
      %432 = vmatprep.subr.bf16.mxu0 0
      %433 = vmatpush1.bf16.msra.mxu0 0
      %434 = vmatprep.subr.bf16.mxu0 0
      %435 = vmatpush1.bf16.msra.mxu0 0
      %436 = vmatprep.subr.bf16.mxu0 0
      %437 = vmatpush1.bf16.msra.mxu0 0
      %438 = vmatprep.subr.bf16.mxu0 0
      %439 = vmatpush1.bf16.msra.mxu0 0
      %440 = vmatprep.subr.bf16.mxu0 0
      %441 = vmatpush1.bf16.msra.mxu0 0
      %442 = vmatprep.subr.bf16.mxu0 0
      %443 = vmatpush1.bf16.msra.mxu0 0
      %444 = vmatprep.subr.bf16.mxu0 0
      %445 = vmatpush1.bf16.msra.mxu0 0
      %446 = vmatprep.subr.bf16.mxu0 0
      %447 = vmatpush1.bf16.msra.mxu0 0
      %448 = vmatprep.subr.bf16.mxu0 0
      %449 = vmatpush1.bf16.msra.mxu0 0
      %450 = vmatprep.subr.bf16.mxu0 0
      %451 = vmatpush1.bf16.msra.mxu0 0
      %452 = vmatprep.subr.bf16.mxu0 0
      %453 = vmatpush1.bf16.msra.mxu0 0
      %454 = vmatprep.mubr.bf16.mxu0 0
      %455 = vmatmul.mubr.bf16.gmra.mrb[0].mxu0 %v417
      %v456 = vpop.f32.mrb[0].mxu0
      %v457 = vadd.f32 0.0, %v456
      %v458 = vpop.f32.mrb[0].mxu0
      %v459 = vpop.f32.mrb[0].mxu0
      %v460 = vadd.f32 0.0, %v459
      %v461 = vpop.f32.mrb[0].mxu0
      %462 = vdwg.mxu0
      %465 = vrot.lane.b32.xlu0 %v457, 16
      %v466 = vpop.permute.xlu0 %465
      %467 = vrot.lane.b32.xlu0 %v460, 16
      %v468 = vpop.permute.xlu0 %467
      %v471 = vsel %vm213, %v329, %v466
      %v472 = vsel %vm213, %v332, %v468
      %vm473 = vcmask 261120
      %474 = vst.msk [vmem:[%s204] sm:$0xff] %vm473, %v471
      %475 = vst.msk [vmem:[%s204 + $0x8] sm:$0xff] %vm473, %v472
      %p476 = scmp.lt.s32.totalorder %s14, 1
      %s477 = scalar_select %p476, %s14, 1
      %s478 = smul.addr %s477, 2
      %s479 = smul.addr %s478, 8
      %s480 = scalar_lea.vmem %s3, %s479
      // Predicated region
      $region33: #{_lambda_.142} parent=31 // pred_check
        %p481 = pneg %p110
      $region34: #{_lambda_.142} parent=31 // pred_check_branch
        %483 = sbr.rel (%p481) target = $region36
      $region35: #{_lambda_.142} parent=31 // pred_region
        _
      $region36: #{_lambda_.142} parent=31 // pred_fallthru
        _
    $region32: #{_lambda_.142} parent=5 // pred_fallthru
      _
    %p484 = scmp.le.s32.totalorder 2, %s9
    // Predicated region
    $region37: #{_lambda_.142} parent=5 // pred_check
      %p485 = pneg %p484
    $region38: #{_lambda_.142} parent=5 // pred_check_branch
      %487 = sbr.rel (%p485) target = $region40
    $region39: #{_lambda_.142} parent=5 // pred_region
      %s488 = ssub.s32 %s9, 2
      // Predicated region
      $region41: #{_lambda_.142} parent=39 // pred_check
        %p489 = pneg %p116
      $region42: #{_lambda_.142} parent=39 // pred_check_branch
        %491 = sbr.rel (%p489) target = $region44
      $region43: #{_lambda_.142} parent=39 // pred_region
        %p492 = scmp.lt.s32.totalorder %s15, 1
        %s493 = scalar_select %p492, %s15, 1
        %s494 = smul.addr %s493, 2
        %s495 = smul.addr %s494, 8
        %s496 = scalar_lea.vmem %s3, %s495
      $region44: #{_lambda_.142} parent=39 // pred_fallthru
        _
    $region40: #{_lambda_.142} parent=5 // pred_fallthru
      _
  $region6: #{_lambda_.142} parent=0 // loop_footer
    %s13 = sadd.s32 1, %s9
  $region7: #{_lambda_.142} parent=0 // loop_footer_branch
    %8 = sbr.rel target = $region3
  $region8: #{_lambda_.142} parent=0 // loop_exit
    _

// kernel: _lambda_.105
$region0: #{_lambda_.105}
  #allocation0 [shape = 'u32[]', space=smem, size = 0x4, offset = 0x4, fixed_abs, tag = 'smem constant byte address 0x4 - core index']
  #allocation1 [shape = 'u32[144,128]{1,0:T(1,128)}', space=vmem, size = 0x12000, scoped, tag = 'internal scratch']
  %s0 = inlined_call_operand.vmem [shape: f32[64,32], index: 0, kind: input, shape index: {}]
  %s1 = inlined_call_operand.vmem [shape: f32[1,32], index: 1, kind: input, shape index: {}]
  %s2 = inlined_call_operand.vmem [shape: f32[1,32], index: 2, kind: input, shape index: {}]
  %s3 = inlined_call_operand.vmem [shape: f32[64,32], index: 3, kind: output, shape index: {}]
  %s4 = sld [smem:[#allocation0]]
  $region22: #{_lambda_.105} parent=0
    _
  %s6 = ssub.s32 1, %s4
  %s7 = scalar_select 0, %s6, %s4
  // Predicated region
  $region2: #{_lambda_.105} parent=0 // pred_check
    _
  $region3: #{_lambda_.105} parent=0 // pred_check_branch
    %9 = sbr.rel (0) target = $region5
  $region4: #{_lambda_.105} parent=0 // pred_region
    _
  $region5: #{_lambda_.105} parent=0 // pred_fallthru
    _
  // Predicated region
  $region6: #{_lambda_.105} parent=0 // pred_check
    _
  $region7: #{_lambda_.105} parent=0 // pred_check_branch
    %11 = sbr.rel (0) target = $region9
  $region8: #{_lambda_.105} parent=0 // pred_region
    _
  $region9: #{_lambda_.105} parent=0 // pred_fallthru
    _
  // Predicated region
  $region10: #{_lambda_.105} parent=0 // pred_check
    _
  $region11: #{_lambda_.105} parent=0 // pred_check_branch
    %13 = sbr.rel (0) target = $region13
  $region12: #{_lambda_.105} parent=0 // pred_region
    _
  $region13: #{_lambda_.105} parent=0 // pred_fallthru
    _
  %v14 = vld [vmem:[%s0] sm:$0xff]
  %v15 = vld [vmem:[%s0 + $0x8] sm:$0xff]
  %v16 = vld [vmem:[%s0 + $0x10] sm:$0xff]
  %v17 = vld [vmem:[%s0 + $0x18] sm:$0xff]
  %v18 = vld [vmem:[%s0 + $0x20] sm:$0xff]
  %v19 = vld [vmem:[%s0 + $0x28] sm:$0xff]
  %v20 = vld [vmem:[%s0 + $0x30] sm:$0xff]
  %v21 = vld [vmem:[%s0 + $0x38] sm:$0xff]
  %vm22 = vcmask 261120
  %v23 = vsel %vm22, %v14, 0.0
  %24 = vadd.xlane.f32.xlu0 %v23
  %v25 = vpop.xlane.xlu0 %24
  %v26 = vsel %vm22, %v15, 0.0
  %27 = vadd.xlane.f32.xlu0 %v26
  %v28 = vpop.xlane.xlu0 %27
  %v29 = vsel %vm22, %v16, 0.0
  %30 = vadd.xlane.f32.xlu0 %v29
  %v31 = vpop.xlane.xlu0 %30
  %v32 = vsel %vm22, %v17, 0.0
  %33 = vadd.xlane.f32.xlu0 %v32
  %v34 = vpop.xlane.xlu0 %33
  %v35 = vsel %vm22, %v18, 0.0
  %36 = vadd.xlane.f32.xlu0 %v35
  %v37 = vpop.xlane.xlu0 %36
  %v38 = vsel %vm22, %v19, 0.0
  %39 = vadd.xlane.f32.xlu0 %v38
  %v40 = vpop.xlane.xlu0 %39
  %v41 = vsel %vm22, %v20, 0.0
  %42 = vadd.xlane.f32.xlu0 %v41
  %v43 = vpop.xlane.xlu0 %42
  %v44 = vsel %vm22, %v21, 0.0
  %45 = vadd.xlane.f32.xlu0 %v44
  %v46 = vpop.xlane.xlu0 %45
  %v47 = vrcp.pop 32.0
  %v48 = vmul.f32 %v25, %v47
  %v49 = vmul.f32 %v28, %v47
  %v50 = vmul.f32 %v31, %v47
  %v51 = vmul.f32 %v34, %v47
  %v52 = vmul.f32 %v37, %v47
  %v53 = vmul.f32 %v40, %v47
  %v54 = vmul.f32 %v43, %v47
  %v55 = vmul.f32 %v46, %v47
  %v56 = vsub.f32 %v14, %v48
  %v57 = vsub.f32 %v15, %v49
  %v58 = vsub.f32 %v16, %v50
  %v59 = vsub.f32 %v17, %v51
  %v60 = vsub.f32 %v18, %v52
  %v61 = vsub.f32 %v19, %v53
  %v62 = vsub.f32 %v20, %v54
  %v63 = vsub.f32 %v21, %v55
  %v64 = vmul.f32 %v56, %v56
  %v65 = vmul.f32 %v57, %v57
  %v66 = vmul.f32 %v58, %v58
  %v67 = vmul.f32 %v59, %v59
  %v68 = vmul.f32 %v60, %v60
  %v69 = vmul.f32 %v61, %v61
  %v70 = vmul.f32 %v62, %v62
  %v71 = vmul.f32 %v63, %v63
  %v72 = vsel %vm22, %v64, 0.0
  %73 = vadd.xlane.f32.xlu0 %v72
  %v74 = vpop.xlane.xlu0 %73
  %v75 = vsel %vm22, %v65, 0.0
  %76 = vadd.xlane.f32.xlu0 %v75
  %v77 = vpop.xlane.xlu0 %76
  %v78 = vsel %vm22, %v66, 0.0
  %79 = vadd.xlane.f32.xlu0 %v78
  %v80 = vpop.xlane.xlu0 %79
  %v81 = vsel %vm22, %v67, 0.0
  %82 = vadd.xlane.f32.xlu0 %v81
  %v83 = vpop.xlane.xlu0 %82
  %v84 = vsel %vm22, %v68, 0.0
  %85 = vadd.xlane.f32.xlu0 %v84
  %v86 = vpop.xlane.xlu0 %85
  %v87 = vsel %vm22, %v69, 0.0
  %88 = vadd.xlane.f32.xlu0 %v87
  %v89 = vpop.xlane.xlu0 %88
  %v90 = vsel %vm22, %v70, 0.0
  %91 = vadd.xlane.f32.xlu0 %v90
  %v92 = vpop.xlane.xlu0 %91
  %v93 = vsel %vm22, %v71, 0.0
  %94 = vadd.xlane.f32.xlu0 %v93
  %v95 = vpop.xlane.xlu0 %94
  %v96 = vmul.f32 %v74, %v47
  %v97 = vmul.f32 %v77, %v47
  %v98 = vmul.f32 %v80, %v47
  %v99 = vmul.f32 %v83, %v47
  %v100 = vmul.f32 %v86, %v47
  %v101 = vmul.f32 %v89, %v47
  %v102 = vmul.f32 %v92, %v47
  %v103 = vmul.f32 %v95, %v47
  %v104 = vadd.f32 %v96, 1e-05
  %v105 = vadd.f32 %v97, 1e-05
  %v106 = vadd.f32 %v98, 1e-05
  %v107 = vadd.f32 %v99, 1e-05
  %v108 = vadd.f32 %v100, 1e-05
  %v109 = vadd.f32 %v101, 1e-05
  %v110 = vadd.f32 %v102, 1e-05
  %v111 = vadd.f32 %v103, 1e-05
  %v112 = vrsqrt.pop %v104
  %v113 = vrsqrt.pop %v105
  %v114 = vrsqrt.pop %v106
  %v115 = vrsqrt.pop %v107
  %v116 = vrsqrt.pop %v108
  %v117 = vrsqrt.pop %v109
  %v118 = vrsqrt.pop %v110
  %v119 = vrsqrt.pop %v111
  %v120 = vmul.f32 %v56, %v112
  %v121 = vmul.f32 %v57, %v113
  %v122 = vmul.f32 %v58, %v114
  %v123 = vmul.f32 %v59, %v115
  %v124 = vmul.f32 %v60, %v116
  %v125 = vmul.f32 %v61, %v117
  %v126 = vmul.f32 %v62, %v118
  %v127 = vmul.f32 %v63, %v119
  %v128 = vld [vmem:[%s1] sm:$0x1]
  %v130 = vlaneseq
  %v131 = vshrl.u32 %v130, 7
  %v132 = vsub.s32 0, %v131
  %v133 = vrot.slane %v128, %v132
  %v135 = vmul.f32 %v120, %v133
  %v136 = vmul.f32 %v121, %v133
  %v137 = vmul.f32 %v122, %v133
  %v138 = vmul.f32 %v123, %v133
  %v139 = vmul.f32 %v124, %v133
  %v140 = vmul.f32 %v125, %v133
  %v141 = vmul.f32 %v126, %v133
  %v142 = vmul.f32 %v127, %v133
  %v143 = vld [vmem:[%s2] sm:$0x1]
  %v145 = vlaneseq
  %v146 = vshrl.u32 %v145, 7
  %v147 = vsub.s32 0, %v146
  %v148 = vrot.slane %v143, %v147
  %v150 = vadd.f32 %v135, %v148
  %v151 = vadd.f32 %v136, %v148
  %v152 = vadd.f32 %v137, %v148
  %v153 = vadd.f32 %v138, %v148
  %v154 = vadd.f32 %v139, %v148
  %v155 = vadd.f32 %v140, %v148
  %v156 = vadd.f32 %v141, %v148
  %v157 = vadd.f32 %v142, %v148
  %158 = vst.msk [vmem:[%s3] sm:$0xff] %vm22, %v150
  %159 = vst.msk [vmem:[%s3 + $0x8] sm:$0xff] %vm22, %v151
  %160 = vst.msk [vmem:[%s3 + $0x10] sm:$0xff] %vm22, %v152
  %161 = vst.msk [vmem:[%s3 + $0x18] sm:$0xff] %vm22, %v153
  %162 = vst.msk [vmem:[%s3 + $0x20] sm:$0xff] %vm22, %v154
  %163 = vst.msk [vmem:[%s3 + $0x28] sm:$0xff] %vm22, %v155
  %164 = vst.msk [vmem:[%s3 + $0x30] sm:$0xff] %vm22, %v156
  %165 = vst.msk [vmem:[%s3 + $0x38] sm:$0xff] %vm22, %v157
  // Predicated region
  $region14: #{_lambda_.105} parent=0 // pred_check
    _
  $region15: #{_lambda_.105} parent=0 // pred_check_branch
    %167 = sbr.rel (0) target = $region17
  $region16: #{_lambda_.105} parent=0 // pred_region
    _
  $region17: #{_lambda_.105} parent=0 // pred_fallthru
    _
  // Predicated region
  $region18: #{_lambda_.105} parent=0 // pred_check
    _
  $region19: #{_lambda_.105} parent=0 // pred_check_branch
    %169 = sbr.rel (0) target = $region21
  $region20: #{_lambda_.105} parent=0 // pred_region
    _
  $region21: #{_lambda_.105} parent=0 // pred_fallthru
    _

// kernel: _lambda_.106
$region0: #{_lambda_.106}
  #allocation0 [shape = 'u32[]', space=smem, size = 0x4, offset = 0x4, fixed_abs, tag = 'smem constant byte address 0x4 - core index']
  #allocation1 [shape = 'u32[144,128]{1,0:T(1,128)}', space=vmem, size = 0x12000, scoped, tag = 'internal scratch']
  #allocation2 [shape = 'f32[64,128]{1,0:T(8,128)}', space=vmem, size = 0x8000, scoped, tag = 'scratch operand']
  %s0 = inlined_call_operand.vmem [shape: bf16[64,128], index: 0, kind: input, shape index: {}]
  %s1 = inlined_call_operand.vmem [shape: bf16[128,128], index: 1, kind: input, shape index: {}]
  %s2 = inlined_call_operand.vmem [shape: f32[1,128], index: 2, kind: input, shape index: {}]
  %s3 = inlined_call_operand.vmem [shape: f32[64,128], index: 3, kind: output, shape index: {}]
  %s4 = sld [smem:[#allocation0]]
  $region30: #{_lambda_.106} parent=0
    _
  %s6 = ssub.s32 1, %s4
  %s7 = scalar_select 0, %s6, %s4
  // Predicated region
  $region2: #{_lambda_.106} parent=0 // pred_check
    _
  $region3: #{_lambda_.106} parent=0 // pred_check_branch
    %9 = sbr.rel (0) target = $region5
  $region4: #{_lambda_.106} parent=0 // pred_region
    _
  $region5: #{_lambda_.106} parent=0 // pred_fallthru
    _
  // Predicated region
  $region6: #{_lambda_.106} parent=0 // pred_check
    _
  $region7: #{_lambda_.106} parent=0 // pred_check_branch
    %11 = sbr.rel (0) target = $region9
  $region8: #{_lambda_.106} parent=0 // pred_region
    _
  $region9: #{_lambda_.106} parent=0 // pred_fallthru
    _
  // Predicated region
  $region10: #{_lambda_.106} parent=0 // pred_check
    _
  $region11: #{_lambda_.106} parent=0 // pred_check_branch
    %13 = sbr.rel (0) target = $region13
  $region12: #{_lambda_.106} parent=0 // pred_region
    _
  $region13: #{_lambda_.106} parent=0 // pred_fallthru
    _
  %p15 = scmp.eq.s32.totalorder 0, 0
  // Predicated region
  $region14: #{_lambda_.106} parent=0 // pred_check
    %p16 = pneg %p15
  $region15: #{_lambda_.106} parent=0 // pred_check_branch
    %18 = sbr.rel (%p16) target = $region17
  $region16: #{_lambda_.106} parent=0 // pred_region
    %19 = vst [vmem:[#allocation2] sm:$0xff] 0.0
    %20 = vst [vmem:[#allocation2 + $0x8] sm:$0xff] 0.0
    %21 = vst [vmem:[#allocation2 + $0x10] sm:$0xff] 0.0
    %22 = vst [vmem:[#allocation2 + $0x18] sm:$0xff] 0.0
    %23 = vst [vmem:[#allocation2 + $0x20] sm:$0xff] 0.0
    %24 = vst [vmem:[#allocation2 + $0x28] sm:$0xff] 0.0
    %25 = vst [vmem:[#allocation2 + $0x30] sm:$0xff] 0.0
    %26 = vst [vmem:[#allocation2 + $0x38] sm:$0xff] 0.0
  $region17: #{_lambda_.106} parent=0 // pred_fallthru
    _
  %v27 = vld [vmem:[#allocation2] sm:$0xff]
  %v28 = vld [vmem:[#allocation2 + $0x8] sm:$0xff]
  %v29 = vld [vmem:[#allocation2 + $0x10] sm:$0xff]
  %v30 = vld [vmem:[#allocation2 + $0x18] sm:$0xff]
  %v31 = vld [vmem:[#allocation2 + $0x20] sm:$0xff]
  %v32 = vld [vmem:[#allocation2 + $0x28] sm:$0xff]
  %v33 = vld [vmem:[#allocation2 + $0x30] sm:$0xff]
  %v34 = vld [vmem:[#allocation2 + $0x38] sm:$0xff]
  %v35 = vld [vmem:[%s0] sm:$0xf]
  %v36 = vld [vmem:[%s0 + $0x4] sm:$0xf]
  %v37 = vld [vmem:[%s0 + $0x8] sm:$0xf]
  %v38 = vld [vmem:[%s0 + $0xc] sm:$0xf]
  %v39 = vld [vmem:[%s0 + $0x10] sm:$0xf]
  %v40 = vld [vmem:[%s0 + $0x14] sm:$0xf]
  %v41 = vld [vmem:[%s0 + $0x18] sm:$0xf]
  %v42 = vld [vmem:[%s0 + $0x1c] sm:$0xf]
  %v43 = vld [vmem:[%s1] sm:$0xf]
  %v44 = vld [vmem:[%s1 + $0x4] sm:$0xf]
  %v45 = vld [vmem:[%s1 + $0x8] sm:$0xf]
  %v46 = vld [vmem:[%s1 + $0xc] sm:$0xf]
  %v47 = vld [vmem:[%s1 + $0x10] sm:$0xf]
  %v48 = vld [vmem:[%s1 + $0x14] sm:$0xf]
  %v49 = vld [vmem:[%s1 + $0x18] sm:$0xf]
  %v50 = vld [vmem:[%s1 + $0x1c] sm:$0xf]
  %v51 = vld [vmem:[%s1 + $0x20] sm:$0xf]
  %v52 = vld [vmem:[%s1 + $0x24] sm:$0xf]
  %v53 = vld [vmem:[%s1 + $0x28] sm:$0xf]
  %v54 = vld [vmem:[%s1 + $0x2c] sm:$0xf]
  %v55 = vld [vmem:[%s1 + $0x30] sm:$0xf]
  %v56 = vld [vmem:[%s1 + $0x34] sm:$0xf]
  %v57 = vld [vmem:[%s1 + $0x38] sm:$0xf]
  %v58 = vld [vmem:[%s1 + $0x3c] sm:$0xf]
  %v67 = vunpack.c.l.b16 %v35
  %v68 = vunpack.c.l.b16 %v36
  %v69 = vunpack.c.l.b16 %v37
  %v70 = vunpack.c.l.b16 %v38
  %v71 = vunpack.c.l.b16 %v39
  %v72 = vunpack.c.l.b16 %v40
  %v73 = vunpack.c.l.b16 %v41
  %v74 = vunpack.c.l.b16 %v42
  %v75 = vpack.c.b16 %v68, %v67
  %v76 = vpack.c.b16 %v70, %v69
  %v77 = vpack.c.b16 %v72, %v71
  %v78 = vpack.c.b16 %v74, %v73
  %v99 = vunpack.c.l.b16 %v43
  %v100 = vunpack.c.l.b16 %v44
  %v101 = vunpack.c.l.b16 %v45
  %v102 = vunpack.c.l.b16 %v46
  %v103 = vunpack.c.l.b16 %v47
  %v104 = vunpack.c.l.b16 %v48
  %v105 = vunpack.c.l.b16 %v49
  %v106 = vunpack.c.l.b16 %v50
  %v107 = vunpack.c.l.b16 %v51
  %v108 = vunpack.c.l.b16 %v52
  %v109 = vunpack.c.l.b16 %v53
  %v110 = vunpack.c.l.b16 %v54
  %v111 = vunpack.c.l.b16 %v55
  %v112 = vunpack.c.l.b16 %v56
  %v113 = vunpack.c.l.b16 %v57
  %v114 = vunpack.c.l.b16 %v58
  %v115 = vpack.c.b16 %v100, %v99
  %v116 = vpack.c.b16 %v102, %v101
  %v117 = vpack.c.b16 %v104, %v103
  %v118 = vpack.c.b16 %v106, %v105
  %v119 = vpack.c.b16 %v108, %v107
  %v120 = vpack.c.b16 %v110, %v109
  %v121 = vpack.c.b16 %v112, %v111
  %v122 = vpack.c.b16 %v114, %v113
  %131 = vmatprep.subr.bf16.mxu0 0
  %132 = vmatpush1.bf16.msra.mxu0 %v115
  %133 = vmatprep.subr.bf16.mxu0 0
  %134 = vmatpush1.bf16.msra.mxu0 %v116
  %135 = vmatprep.subr.bf16.mxu0 0
  %136 = vmatpush1.bf16.msra.mxu0 %v117
  %137 = vmatprep.subr.bf16.mxu0 0
  %138 = vmatpush1.bf16.msra.mxu0 %v118
  %139 = vmatprep.subr.bf16.mxu0 0
  %140 = vmatpush1.bf16.msra.mxu0 %v119
  %141 = vmatprep.subr.bf16.mxu0 0
  %142 = vmatpush1.bf16.msra.mxu0 %v120
  %143 = vmatprep.subr.bf16.mxu0 0
  %144 = vmatpush1.bf16.msra.mxu0 %v121
  %145 = vmatprep.subr.bf16.mxu0 0
  %146 = vmatpush1.bf16.msra.mxu0 %v122
  %147 = vmatprep.subr.bf16.mxu0 0
  %148 = vmatpush1.bf16.msra.mxu0 0
  %149 = vmatprep.subr.bf16.mxu0 0
  %150 = vmatpush1.bf16.msra.mxu0 0
  %151 = vmatprep.subr.bf16.mxu0 0
  %152 = vmatpush1.bf16.msra.mxu0 0
  %153 = vmatprep.subr.bf16.mxu0 0
  %154 = vmatpush1.bf16.msra.mxu0 0
  %155 = vmatprep.subr.bf16.mxu0 0
  %156 = vmatpush1.bf16.msra.mxu0 0
  %157 = vmatprep.subr.bf16.mxu0 0
  %158 = vmatpush1.bf16.msra.mxu0 0
  %159 = vmatprep.subr.bf16.mxu0 0
  %160 = vmatpush1.bf16.msra.mxu0 0
  %161 = vmatprep.subr.bf16.mxu0 0
  %162 = vmatpush1.bf16.msra.mxu0 0
  %163 = vmatprep.mubr.bf16.mxu0 0
  %164 = vmatmul.mubr.bf16.gmra.mrb[0].mxu0 %v75
  %v165 = vpop.f32.mrb[0].mxu0
  %v166 = vadd.f32 0.0, %v165
  %v167 = vpop.f32.mrb[0].mxu0
  %v168 = vpop.f32.mrb[0].mxu0
  %v169 = vadd.f32 0.0, %v168
  %v170 = vpop.f32.mrb[0].mxu0
  %171 = vmatprep.mubr.bf16.mxu0 0
  %172 = vmatmul.mubr.bf16.gmra.mrb[0].mxu0 %v76
  %v173 = vpop.f32.mrb[0].mxu0
  %v174 = vadd.f32 0.0, %v173
  %v175 = vpop.f32.mrb[0].mxu0
  %v176 = vpop.f32.mrb[0].mxu0
  %v177 = vadd.f32 0.0, %v176
  %v178 = vpop.f32.mrb[0].mxu0
  %179 = vmatprep.mubr.bf16.mxu0 0
  %180 = vmatmul.mubr.bf16.gmra.mrb[0].mxu0 %v77
  %v181 = vpop.f32.mrb[0].mxu0
  %v182 = vadd.f32 0.0, %v181
  %v183 = vpop.f32.mrb[0].mxu0
  %v184 = vpop.f32.mrb[0].mxu0
  %v185 = vadd.f32 0.0, %v184
  %v186 = vpop.f32.mrb[0].mxu0
  %187 = vmatprep.mubr.bf16.mxu0 0
  %188 = vmatmul.mubr.bf16.gmra.mrb[0].mxu0 %v78
  %v189 = vpop.f32.mrb[0].mxu0
  %v190 = vadd.f32 0.0, %v189
  %v191 = vpop.f32.mrb[0].mxu0
  %v192 = vpop.f32.mrb[0].mxu0
  %v193 = vadd.f32 0.0, %v192
  %v194 = vpop.f32.mrb[0].mxu0
  %195 = vdwg.mxu0
  %v196 = vadd.f32 %v27, %v166
  %v197 = vadd.f32 %v28, %v169
  %v198 = vadd.f32 %v29, %v174
  %v199 = vadd.f32 %v30, %v177
  %v200 = vadd.f32 %v31, %v182
  %v201 = vadd.f32 %v32, %v185
  %v202 = vadd.f32 %v33, %v190
  %v203 = vadd.f32 %v34, %v193
  %204 = vst [vmem:[#allocation2] sm:$0xff] %v196
  %205 = vst [vmem:[#allocation2 + $0x8] sm:$0xff] %v197
  %206 = vst [vmem:[#allocation2 + $0x10] sm:$0xff] %v198
  %207 = vst [vmem:[#allocation2 + $0x18] sm:$0xff] %v199
  %208 = vst [vmem:[#allocation2 + $0x20] sm:$0xff] %v200
  %209 = vst [vmem:[#allocation2 + $0x28] sm:$0xff] %v201
  %210 = vst [vmem:[#allocation2 + $0x30] sm:$0xff] %v202
  %211 = vst [vmem:[#allocation2 + $0x38] sm:$0xff] %v203
  // Predicated region
  $region18: #{_lambda_.106} parent=0 // pred_check
    %p212 = pneg %p15
  $region19: #{_lambda_.106} parent=0 // pred_check_branch
    %214 = sbr.rel (%p212) target = $region21
  $region20: #{_lambda_.106} parent=0 // pred_region
    %v215 = vld [vmem:[#allocation2] sm:$0xff]
    %v216 = vld [vmem:[#allocation2 + $0x8] sm:$0xff]
    %v217 = vld [vmem:[#allocation2 + $0x10] sm:$0xff]
    %v218 = vld [vmem:[#allocation2 + $0x18] sm:$0xff]
    %v219 = vld [vmem:[#allocation2 + $0x20] sm:$0xff]
    %v220 = vld [vmem:[#allocation2 + $0x28] sm:$0xff]
    %v221 = vld [vmem:[#allocation2 + $0x30] sm:$0xff]
    %v222 = vld [vmem:[#allocation2 + $0x38] sm:$0xff]
    %v223 = vld [vmem:[%s2] sm:$0x1]
    %v225 = vlaneseq
    %v226 = vshrl.u32 %v225, 7
    %v227 = vsub.s32 0, %v226
    %v228 = vrot.slane %v223, %v227
    %v230 = vadd.f32 %v215, %v228
    %v231 = vadd.f32 %v216, %v228
    %v232 = vadd.f32 %v217, %v228
    %v233 = vadd.f32 %v218, %v228
    %v234 = vadd.f32 %v219, %v228
    %v235 = vadd.f32 %v220, %v228
    %v236 = vadd.f32 %v221, %v228
    %v237 = vadd.f32 %v222, %v228
    %238 = vst [vmem:[%s3] sm:$0xff] %v230
    %239 = vst [vmem:[%s3 + $0x8] sm:$0xff] %v231
    %240 = vst [vmem:[%s3 + $0x10] sm:$0xff] %v232
    %241 = vst [vmem:[%s3 + $0x18] sm:$0xff] %v233
    %242 = vst [vmem:[%s3 + $0x20] sm:$0xff] %v234
    %243 = vst [vmem:[%s3 + $0x28] sm:$0xff] %v235
    %244 = vst [vmem:[%s3 + $0x30] sm:$0xff] %v236
    %245 = vst [vmem:[%s3 + $0x38] sm:$0xff] %v237
  $region21: #{_lambda_.106} parent=0 // pred_fallthru
    _
  // Predicated region
  $region22: #{_lambda_.106} parent=0 // pred_check
    _
  $region23: #{_lambda_.106} parent=0 // pred_check_branch
    %247 = sbr.rel (0) target = $region25
  $region24: #{_lambda_.106} parent=0 // pred_region
    _
  $region25: #{_lambda_.106} parent=0 // pred_fallthru
    _
  // Predicated region
  $region26: #{_lambda_.106} parent=0 // pred_check
    _
  $region27: #{_lambda_.106} parent=0 // pred_check_branch
    %249 = sbr.rel (0) target = $region29
  $region28: #{_lambda_.106} parent=0 // pred_region
    _
  $region29: #{_lambda_.106} parent=0 // pred_fallthru
    _

// kernel: _lambda_.107
$region0: #{_lambda_.107}
  #allocation0 [shape = 'u32[]', space=smem, size = 0x4, offset = 0x4, fixed_abs, tag = 'smem constant byte address 0x4 - core index']
  #allocation1 [shape = 'u32[144,128]{1,0:T(1,128)}', space=vmem, size = 0x12000, scoped, tag = 'internal scratch']
  %s0 = inlined_call_operand.vmem [shape: f32[2,32,32], index: 0, kind: input, shape index: {}]
  %s1 = inlined_call_operand.vmem [shape: f32[2,32,32], index: 1, kind: input, shape index: {}]
  %s2 = inlined_call_operand.vmem [shape: f32[2,32,32], index: 2, kind: input, shape index: {}]
  %s3 = inlined_call_operand.vmem [shape: f32[2,32,32], index: 3, kind: output, shape index: {}]
  %s4 = sld [smem:[#allocation0]]
  $region45: #{_lambda_.107} parent=0
    _
  %s6 = ssub.s32 1, %s4
  %s7 = scalar_select 0, %s6, %s4
  loop: start=0, step=1, limit=4
  $region2: #{_lambda_.107} parent=0 // loop_pre_header
    _
  $region3: #{_lambda_.107} parent=0 // loop_header
    %s9 = sphi 0, %s13
    %p10 = scmp.ge.s32.totalorder %s9, 4
    %s19 = sphi 0, %s21
    %s22 = sphi 0, %s19
    %s23 = sphi 0, %s22
    %s39 = sphi 0, %s23
    %s45 = sphi 0, %s47
    %s48 = sphi 0, %s45
    %s49 = sphi 0, %s48
    %s65 = sphi 0, %s49
    %s71 = sphi 0, %s73
    %s74 = sphi 0, %s71
    %s75 = sphi 0, %s74
    %s91 = sphi 0, %s75
    %s97 = sphi 0, %s99
    %s100 = sphi 0, %s97
    %s101 = sphi 0, %s100
    %s117 = sphi 0, %s101
  $region4: #{_lambda_.107} parent=0 // loop_header_branch
    %12 = sbr.rel (%p10) target = $region8
  $region5: #{_lambda_.107} parent=0 // loop_body
    %s14 = ssub.s32 %s9, 1
    %s15 = ssub.s32 %s9, 2
    %s16 = sadd.s32 %s9, 1
    %s17 = ssub.s32 %s9, %s16
    %p18 = scmp.eq.s32.totalorder %s17, 0
    %s20 = sadd.s32 %s19, 1
    %s21 = scalar_select %p18, %s19, %s20
    %p24 = pneg %p18
    %p25 = scmp.eq.s32.totalorder %s9, 1
    %p26 = por %p24, %p25
    %p27 = scmp.ne.s32.totalorder %s19, %s22
    %p28 = scmp.eq.s32.totalorder %s9, 0
    %p29 = por %p27, %p28
    %p30 = scmp.ne.s32.totalorder %s19, %s22
    %p31 = scmp.eq.s32.totalorder %s14, 1
    %p32 = por %p30, %p31
    %p33 = scmp.ne.s32.totalorder %s22, %s23
    %p34 = scmp.eq.s32.totalorder %s14, 0
    %p35 = por %p33, %p34
    %p36 = scmp.ne.s32.totalorder %s22, %s23
    %p37 = scmp.eq.s32.totalorder %s15, 1
    %p38 = por %p36, %p37
    %p40 = scmp.ne.s32.totalorder %s23, %s39
    %p41 = scmp.eq.s32.totalorder %s15, 0
    %p42 = por %p40, %p41
    %s43 = ssub.s32 %s9, %s16
    %p44 = scmp.eq.s32.totalorder %s43, 0
    %s46 = sadd.s32 %s45, 1
    %s47 = scalar_select %p44, %s45, %s46
    %p50 = pneg %p44
    %p51 = scmp.eq.s32.totalorder %s9, 1
    %p52 = por %p50, %p51
    %p53 = scmp.ne.s32.totalorder %s45, %s48
    %p54 = scmp.eq.s32.totalorder %s9, 0
    %p55 = por %p53, %p54
    %p56 = scmp.ne.s32.totalorder %s45, %s48
    %p57 = scmp.eq.s32.totalorder %s14, 1
    %p58 = por %p56, %p57
    %p59 = scmp.ne.s32.totalorder %s48, %s49
    %p60 = scmp.eq.s32.totalorder %s14, 0
    %p61 = por %p59, %p60
    %p62 = scmp.ne.s32.totalorder %s48, %s49
    %p63 = scmp.eq.s32.totalorder %s15, 1
    %p64 = por %p62, %p63
    %p66 = scmp.ne.s32.totalorder %s49, %s65
    %p67 = scmp.eq.s32.totalorder %s15, 0
    %p68 = por %p66, %p67
    %s69 = ssub.s32 %s9, %s16
    %p70 = scmp.eq.s32.totalorder %s69, 0
    %s72 = sadd.s32 %s71, 1
    %s73 = scalar_select %p70, %s71, %s72
    %p76 = pneg %p70
    %p77 = scmp.eq.s32.totalorder %s9, 1
    %p78 = por %p76, %p77
    %p79 = scmp.ne.s32.totalorder %s71, %s74
    %p80 = scmp.eq.s32.totalorder %s9, 0
    %p81 = por %p79, %p80
    %p82 = scmp.ne.s32.totalorder %s71, %s74
    %p83 = scmp.eq.s32.totalorder %s14, 1
    %p84 = por %p82, %p83
    %p85 = scmp.ne.s32.totalorder %s74, %s75
    %p86 = scmp.eq.s32.totalorder %s14, 0
    %p87 = por %p85, %p86
    %p88 = scmp.ne.s32.totalorder %s74, %s75
    %p89 = scmp.eq.s32.totalorder %s15, 1
    %p90 = por %p88, %p89
    %p92 = scmp.ne.s32.totalorder %s75, %s91
    %p93 = scmp.eq.s32.totalorder %s15, 0
    %p94 = por %p92, %p93
    %s95 = ssub.s32 %s9, %s16
    %p96 = scmp.eq.s32.totalorder %s95, 0
    %s98 = sadd.s32 %s97, 1
    %s99 = scalar_select %p96, %s97, %s98
    %p102 = pneg %p96
    %p103 = scmp.eq.s32.totalorder %s9, 1
    %p104 = por %p102, %p103
    %p105 = scmp.ne.s32.totalorder %s97, %s100
    %p106 = scmp.eq.s32.totalorder %s9, 0
    %p107 = por %p105, %p106
    %p108 = scmp.ne.s32.totalorder %s97, %s100
    %p109 = scmp.eq.s32.totalorder %s14, 1
    %p110 = por %p108, %p109
    %p111 = scmp.ne.s32.totalorder %s100, %s101
    %p112 = scmp.eq.s32.totalorder %s14, 0
    %p113 = por %p111, %p112
    %p114 = scmp.ne.s32.totalorder %s100, %s101
    %p115 = scmp.eq.s32.totalorder %s15, 1
    %p116 = por %p114, %p115
    %p118 = scmp.ne.s32.totalorder %s101, %s117
    %p119 = scmp.eq.s32.totalorder %s15, 0
    %p120 = por %p118, %p119
    %p121 = scmp.le.s32.totalorder 1, %s9
    %p122 = scmp.lt.s32.totalorder %s9, 3
    %p123 = pnand %p121, %p122
    %p124 = pneg %p123
    // Predicated region
    $region9: #{_lambda_.107} parent=5 // pred_check
      _
    $region10: #{_lambda_.107} parent=5 // pred_check_branch
      %126 = sbr.rel (%p123) target = $region12
    $region11: #{_lambda_.107} parent=5 // pred_region
      %s127 = ssub.s32 %s9, 1
    $region12: #{_lambda_.107} parent=5 // pred_fallthru
      _
    %p128 = scmp.lt.s32.totalorder %s9, 2
    // Predicated region
    $region13: #{_lambda_.107} parent=5 // pred_check
      %p129 = pneg %p128
    $region14: #{_lambda_.107} parent=5 // pred_check_branch
      %131 = sbr.rel (%p129) target = $region16
    $region15: #{_lambda_.107} parent=5 // pred_region
      // Predicated region
      $region17: #{_lambda_.107} parent=15 // pred_check
        %p132 = pneg %p29
      $region18: #{_lambda_.107} parent=15 // pred_check_branch
        %134 = sbr.rel (%p132) target = $region20
      $region19: #{_lambda_.107} parent=15 // pred_region
        %p135 = scmp.lt.s32.totalorder %s9, 1
        %s136 = scalar_select %p135, %s9, 1
        %s137 = smul.addr %s136, 4
        %s138 = smul.addr %s137, 8
        %s139 = scalar_lea.vmem %s0, %s138
      $region20: #{_lambda_.107} parent=15 // pred_fallthru
        _
      // Predicated region
      $region21: #{_lambda_.107} parent=15 // pred_check
        %p140 = pneg %p55
      $region22: #{_lambda_.107} parent=15 // pred_check_branch
        %142 = sbr.rel (%p140) target = $region24
      $region23: #{_lambda_.107} parent=15 // pred_region
        %p143 = scmp.lt.s32.totalorder %s9, 1
        %s144 = scalar_select %p143, %s9, 1
        %s145 = smul.addr %s144, 4
        %s146 = smul.addr %s145, 8
        %s147 = scalar_lea.vmem %s1, %s146
      $region24: #{_lambda_.107} parent=15 // pred_fallthru
        _
      // Predicated region
      $region25: #{_lambda_.107} parent=15 // pred_check
        %p148 = pneg %p81
      $region26: #{_lambda_.107} parent=15 // pred_check_branch
        %150 = sbr.rel (%p148) target = $region28
      $region27: #{_lambda_.107} parent=15 // pred_region
        %p151 = scmp.lt.s32.totalorder %s9, 1
        %s152 = scalar_select %p151, %s9, 1
        %s153 = smul.addr %s152, 4
        %s154 = smul.addr %s153, 8
        %s155 = scalar_lea.vmem %s2, %s154
      $region28: #{_lambda_.107} parent=15 // pred_fallthru
        _
    $region16: #{_lambda_.107} parent=5 // pred_fallthru
      _
    %p156 = scmp.le.s32.totalorder 1, %s9
    %p157 = scmp.lt.s32.totalorder %s9, 3
    %p158 = pnand %p156, %p157
    %p159 = pneg %p158
    // Predicated region
    $region29: #{_lambda_.107} parent=5 // pred_check
      _
    $region30: #{_lambda_.107} parent=5 // pred_check_branch
      %161 = sbr.rel (%p158) target = $region32
    $region31: #{_lambda_.107} parent=5 // pred_region
      %s162 = ssub.s32 %s9, 1
      %p163 = scmp.lt.s32.totalorder %s14, 1
      %s164 = scalar_select %p163, %s14, 1
      %s165 = smul.addr %s164, 4
      %s166 = smul.addr %s165, 8
      %s167 = scalar_lea.vmem %s0, %s166
      %p168 = pneg %p35
      %p169 = pneg %p32
      %p170 = scmp.lt.s32.totalorder %s14, 1
      %s171 = scalar_select %p170, %s14, 1
      %s172 = smul.addr %s171, 4
      %s173 = smul.addr %s172, 8
      %s174 = scalar_lea.vmem %s1, %s173
      %p175 = pneg %p61
      %p176 = pneg %p58
      %p177 = scmp.lt.s32.totalorder %s14, 1
      %s178 = scalar_select %p177, %s14, 1
      %s179 = smul.addr %s178, 4
      %s180 = smul.addr %s179, 8
      %s181 = scalar_lea.vmem %s2, %s180
      %p182 = pneg %p87
      %p183 = pneg %p84
      %p184 = pneg %p113
      %p185 = pneg %p110
      %p186 = scmp.lt.s32.totalorder %s14, 1
      %s187 = scalar_select %p186, %s14, 1
      %s188 = smul.addr %s187, 4
      %s189 = smul.addr %s188, 8
      %s190 = scalar_lea.vmem %s3, %s189
      %p191 = scmp.lt.s32.totalorder %s14, 1
      %s192 = scalar_select %p191, %s14, 1
      %s193 = smul.addr %s192, 4
      %s194 = smul.addr %s193, 8
      %s195 = scalar_lea.vmem %s0, %s194
      %p196 = scmp.lt.s32.totalorder %s14, 1
      %s197 = scalar_select %p196, %s14, 1
      %s198 = smul.addr %s197, 4
      %s199 = smul.addr %s198, 8
      %s200 = scalar_lea.vmem %s1, %s199
      %p201 = scmp.lt.s32.totalorder %s14, 1
      %s202 = scalar_select %p201, %s14, 1
      %s203 = smul.addr %s202, 4
      %s204 = smul.addr %s203, 8
      %s205 = scalar_lea.vmem %s2, %s204
      %p206 = scmp.lt.s32.totalorder %s14, 1
      %s207 = scalar_select %p206, %s14, 1
      %s208 = smul.addr %s207, 4
      %s209 = smul.addr %s208, 8
      %s210 = scalar_lea.vmem %s3, %s209
      %v212 = vld [vmem:[%s195] sm:$0xff]
      %v213 = vld [vmem:[%s195 + $0x8] sm:$0xff]
      %v214 = vld [vmem:[%s195 + $0x10] sm:$0xff]
      %v215 = vld [vmem:[%s195 + $0x18] sm:$0xff]
      %v216 = vld [vmem:[%s200] sm:$0xff]
      %v217 = vld [vmem:[%s200 + $0x8] sm:$0xff]
      %v218 = vld [vmem:[%s200 + $0x10] sm:$0xff]
      %v219 = vld [vmem:[%s200 + $0x18] sm:$0xff]
      %v220 = vld [vmem:[%s205] sm:$0xff]
      %v221 = vld [vmem:[%s205 + $0x8] sm:$0xff]
      %v222 = vld [vmem:[%s205 + $0x10] sm:$0xff]
      %v223 = vld [vmem:[%s205 + $0x18] sm:$0xff]
      %v224 = vpack.c.bf16 %v213, %v212
      %v225 = vpack.c.bf16 %v215, %v214
      %v226 = vpack.c.bf16 %v217, %v216
      %v227 = vpack.c.bf16 %v219, %v218
      %v228 = vpack.c.bf16 %v221, %v220
      %v229 = vpack.c.bf16 %v223, %v222
      %vm230 = vcmask 130048
      %v232 = vsel %vm230, %v224, 0
      %v235 = vsel %vm230, %v225, 0
      %v238 = vsel %vm230, %v226, 0
      %v241 = vsel %vm230, %v227, 0
      %243 = vmatprep.subr.bf16.mxu0 0
      %244 = vmatpush1.bf16.xpose.msra.mxu0 %v238
      %245 = vmatprep.subr.bf16.mxu0 0
      %246 = vmatpush1.bf16.xpose.msra.mxu0 %v241
      %247 = vmatprep.subr.bf16.mxu0 0
      %248 = vmatpush1.bf16.xpose.msra.mxu0 0
      %249 = vmatprep.subr.bf16.mxu0 0
      %250 = vmatpush1.bf16.xpose.msra.mxu0 0
      %251 = vmatprep.subr.bf16.mxu0 0
      %252 = vmatpush1.bf16.xpose.msra.mxu0 0
      %253 = vmatprep.subr.bf16.mxu0 0
      %254 = vmatpush1.bf16.xpose.msra.mxu0 0
      %255 = vmatprep.subr.bf16.mxu0 0
      %256 = vmatpush1.bf16.xpose.msra.mxu0 0
      %257 = vmatprep.subr.bf16.mxu0 0
      %258 = vmatpush1.bf16.xpose.msra.mxu0 0
      %259 = vmatprep.subr.bf16.mxu0 0
      %260 = vmatpush1.bf16.xpose.msra.mxu0 0
      %261 = vmatprep.subr.bf16.mxu0 0
      %262 = vmatpush1.bf16.xpose.msra.mxu0 0
      %263 = vmatprep.subr.bf16.mxu0 0
      %264 = vmatpush1.bf16.xpose.msra.mxu0 0
      %265 = vmatprep.subr.bf16.mxu0 0
      %266 = vmatpush1.bf16.xpose.msra.mxu0 0
      %267 = vmatprep.subr.bf16.mxu0 0
      %268 = vmatpush1.bf16.xpose.msra.mxu0 0
      %269 = vmatprep.subr.bf16.mxu0 0
      %270 = vmatpush1.bf16.xpose.msra.mxu0 0
      %271 = vmatprep.subr.bf16.mxu0 0
      %272 = vmatpush1.bf16.xpose.msra.mxu0 0
      %273 = vmatprep.subr.bf16.mxu0 0
      %274 = vmatpush1.bf16.xpose.msra.mxu0 0
      %275 = vmatprep.mubr.bf16.mxu0 0
      %276 = vmatmul.mubr.bf16.gmra.mrb[0].mxu0 %v232
      %v277 = vpop.f32.mrb[0].mxu0
      %v278 = vadd.f32 0.0, %v277
      %v279 = vpop.f32.mrb[0].mxu0
      %v280 = vpop.f32.mrb[0].mxu0
      %v281 = vadd.f32 0.0, %v280
      %v282 = vpop.f32.mrb[0].mxu0
      %283 = vmatprep.mubr.bf16.mxu0 0
      %284 = vmatmul.mubr.bf16.gmra.mrb[0].mxu0 %v235
      %v285 = vpop.f32.mrb[0].mxu0
      %v286 = vadd.f32 0.0, %v285
      %v287 = vpop.f32.mrb[0].mxu0
      %v288 = vpop.f32.mrb[0].mxu0
      %v289 = vadd.f32 0.0, %v288
      %v290 = vpop.f32.mrb[0].mxu0
      %291 = vdwg.mxu0
      %v292 = vmul.f32 %v278, 0.25
      %v293 = vmul.f32 %v281, 0.25
      %v294 = vmul.f32 %v286, 0.25
      %v295 = vmul.f32 %v289, 0.25
      %vm296 = vcmask 261120
      %v297 = vsel %vm296, %v292, -inf
      %298 = vmax.xlane.f32.xlu0 %v297
      %v299 = vpop.xlane.xlu0 %298
      %v300 = vsel %vm296, %v293, -inf
      %301 = vmax.xlane.f32.xlu0 %v300
      %v302 = vpop.xlane.xlu0 %301
      %v303 = vsel %vm296, %v294, -inf
      %304 = vmax.xlane.f32.xlu0 %v303
      %v305 = vpop.xlane.xlu0 %304
      %v306 = vsel %vm296, %v295, -inf
      %307 = vmax.xlane.f32.xlu0 %v306
      %v308 = vpop.xlane.xlu0 %307
      %v309 = vsub.f32 %v292, %v299
      %v310 = vsub.f32 %v293, %v302
      %v311 = vsub.f32 %v294, %v305
      %v312 = vsub.f32 %v295, %v308
      %v313 = vmul.f32 %v309, 1.442695
      %v314 = vpow.pop %v313
      %v315 = vmul.f32 %v310, 1.442695
      %v316 = vpow.pop %v315
      %v317 = vmul.f32 %v311, 1.442695
      %v318 = vpow.pop %v317
      %v319 = vmul.f32 %v312, 1.442695
      %v320 = vpow.pop %v319
      %v321 = vsel %vm296, %v314, 0.0
      %322 = vadd.xlane.f32.xlu0 %v321
      %v323 = vpop.xlane.xlu0 %322
      %v324 = vsel %vm296, %v316, 0.0
      %325 = vadd.xlane.f32.xlu0 %v324
      %v326 = vpop.xlane.xlu0 %325
      %v327 = vsel %vm296, %v318, 0.0
      %328 = vadd.xlane.f32.xlu0 %v327
      %v329 = vpop.xlane.xlu0 %328
      %v330 = vsel %vm296, %v320, 0.0
      %331 = vadd.xlane.f32.xlu0 %v330
      %v332 = vpop.xlane.xlu0 %331
      %v333 = vrcp.pop %v323
      %v334 = vrcp.pop %v326
      %v335 = vrcp.pop %v329
      %v336 = vrcp.pop %v332
      %v337 = vmul.f32 %v314, %v333
      %v338 = vmul.f32 %v316, %v334
      %v339 = vmul.f32 %v318, %v335
      %v340 = vmul.f32 %v320, %v336
      %v341 = vpack.c.bf16 %v338, %v337
      %v342 = vpack.c.bf16 %v340, %v339
      %v344 = vsel %vm296, %v341, 0
      %v347 = vsel %vm296, %v342, 0
      %349 = vmatprep.subr.bf16.mxu0 0
      %350 = vmatpush1.bf16.msra.mxu0 %v228
      %351 = vmatprep.subr.bf16.mxu0 0
      %352 = vmatpush1.bf16.msra.mxu0 %v229
      %353 = vmatprep.subr.bf16.mxu0 0
      %354 = vmatpush1.bf16.msra.mxu0 0
      %355 = vmatprep.subr.bf16.mxu0 0
      %356 = vmatpush1.bf16.msra.mxu0 0
      %357 = vmatprep.subr.bf16.mxu0 0
      %358 = vmatpush1.bf16.msra.mxu0 0
      %359 = vmatprep.subr.bf16.mxu0 0
      %360 = vmatpush1.bf16.msra.mxu0 0
      %361 = vmatprep.subr.bf16.mxu0 0
      %362 = vmatpush1.bf16.msra.mxu0 0
      %363 = vmatprep.subr.bf16.mxu0 0
      %364 = vmatpush1.bf16.msra.mxu0 0
      %365 = vmatprep.subr.bf16.mxu0 0
      %366 = vmatpush1.bf16.msra.mxu0 0
      %367 = vmatprep.subr.bf16.mxu0 0
      %368 = vmatpush1.bf16.msra.mxu0 0
      %369 = vmatprep.subr.bf16.mxu0 0
      %370 = vmatpush1.bf16.msra.mxu0 0
      %371 = vmatprep.subr.bf16.mxu0 0
      %372 = vmatpush1.bf16.msra.mxu0 0
      %373 = vmatprep.subr.bf16.mxu0 0
      %374 = vmatpush1.bf16.msra.mxu0 0
      %375 = vmatprep.subr.bf16.mxu0 0
      %376 = vmatpush1.bf16.msra.mxu0 0
      %377 = vmatprep.subr.bf16.mxu0 0
      %378 = vmatpush1.bf16.msra.mxu0 0
      %379 = vmatprep.subr.bf16.mxu0 0
      %380 = vmatpush1.bf16.msra.mxu0 0
      %381 = vmatprep.mubr.bf16.mxu0 0
      %382 = vmatmul.mubr.bf16.gmra.mrb[0].mxu0 %v344
      %v383 = vpop.f32.mrb[0].mxu0
      %v384 = vadd.f32 0.0, %v383
      %v385 = vpop.f32.mrb[0].mxu0
      %v386 = vpop.f32.mrb[0].mxu0
      %v387 = vadd.f32 0.0, %v386
      %v388 = vpop.f32.mrb[0].mxu0
      %389 = vmatprep.mubr.bf16.mxu0 0
      %390 = vmatmul.mubr.bf16.gmra.mrb[0].mxu0 %v347
      %v391 = vpop.f32.mrb[0].mxu0
      %v392 = vadd.f32 0.0, %v391
      %v393 = vpop.f32.mrb[0].mxu0
      %v394 = vpop.f32.mrb[0].mxu0
      %v395 = vadd.f32 0.0, %v394
      %v396 = vpop.f32.mrb[0].mxu0
      %397 = vdwg.mxu0
      %400 = vrot.lane.b32.xlu0 %v224, 112
      %v401 = vpop.permute.xlu0 %400
      %402 = vrot.lane.b32.xlu0 %v225, 112
      %v403 = vpop.permute.xlu0 %402
      %406 = vrot.lane.b32.xlu0 %v226, 112
      %v407 = vpop.permute.xlu0 %406
      %408 = vrot.lane.b32.xlu0 %v227, 112
      %v409 = vpop.permute.xlu0 %408
      %v411 = vsel %vm230, %v401, 0
      %v414 = vsel %vm230, %v403, 0
      %v417 = vsel %vm230, %v407, 0
      %v420 = vsel %vm230, %v409, 0
      %422 = vmatprep.subr.bf16.mxu0 0
      %423 = vmatpush1.bf16.xpose.msra.mxu0 %v417
      %424 = vmatprep.subr.bf16.mxu0 0
      %425 = vmatpush1.bf16.xpose.msra.mxu0 %v420
      %426 = vmatprep.subr.bf16.mxu0 0
      %427 = vmatpush1.bf16.xpose.msra.mxu0 0
      %428 = vmatprep.subr.bf16.mxu0 0
      %429 = vmatpush1.bf16.xpose.msra.mxu0 0
      %430 = vmatprep.subr.bf16.mxu0 0
      %431 = vmatpush1.bf16.xpose.msra.mxu0 0
      %432 = vmatprep.subr.bf16.mxu0 0
      %433 = vmatpush1.bf16.xpose.msra.mxu0 0
      %434 = vmatprep.subr.bf16.mxu0 0
      %435 = vmatpush1.bf16.xpose.msra.mxu0 0
      %436 = vmatprep.subr.bf16.mxu0 0
      %437 = vmatpush1.bf16.xpose.msra.mxu0 0
      %438 = vmatprep.subr.bf16.mxu0 0
      %439 = vmatpush1.bf16.xpose.msra.mxu0 0
      %440 = vmatprep.subr.bf16.mxu0 0
      %441 = vmatpush1.bf16.xpose.msra.mxu0 0
      %442 = vmatprep.subr.bf16.mxu0 0
      %443 = vmatpush1.bf16.xpose.msra.mxu0 0
      %444 = vmatprep.subr.bf16.mxu0 0
      %445 = vmatpush1.bf16.xpose.msra.mxu0 0
      %446 = vmatprep.subr.bf16.mxu0 0
      %447 = vmatpush1.bf16.xpose.msra.mxu0 0
      %448 = vmatprep.subr.bf16.mxu0 0
      %449 = vmatpush1.bf16.xpose.msra.mxu0 0
      %450 = vmatprep.subr.bf16.mxu0 0
      %451 = vmatpush1.bf16.xpose.msra.mxu0 0
      %452 = vmatprep.subr.bf16.mxu0 0
      %453 = vmatpush1.bf16.xpose.msra.mxu0 0
      %454 = vmatprep.mubr.bf16.mxu0 0
      %455 = vmatmul.mubr.bf16.gmra.mrb[0].mxu0 %v411
      %v456 = vpop.f32.mrb[0].mxu0
      %v457 = vadd.f32 0.0, %v456
      %v458 = vpop.f32.mrb[0].mxu0
      %v459 = vpop.f32.mrb[0].mxu0
      %v460 = vadd.f32 0.0, %v459
      %v461 = vpop.f32.mrb[0].mxu0
      %462 = vmatprep.mubr.bf16.mxu0 0
      %463 = vmatmul.mubr.bf16.gmra.mrb[0].mxu0 %v414
      %v464 = vpop.f32.mrb[0].mxu0
      %v465 = vadd.f32 0.0, %v464
      %v466 = vpop.f32.mrb[0].mxu0
      %v467 = vpop.f32.mrb[0].mxu0
      %v468 = vadd.f32 0.0, %v467
      %v469 = vpop.f32.mrb[0].mxu0
      %470 = vdwg.mxu0
      %v471 = vmul.f32 %v457, 0.25
      %v472 = vmul.f32 %v460, 0.25
      %v473 = vmul.f32 %v465, 0.25
      %v474 = vmul.f32 %v468, 0.25
      %v475 = vsel %vm296, %v471, -inf
      %476 = vmax.xlane.f32.xlu0 %v475
      %v477 = vpop.xlane.xlu0 %476
      %v478 = vsel %vm296, %v472, -inf
      %479 = vmax.xlane.f32.xlu0 %v478
      %v480 = vpop.xlane.xlu0 %479
      %v481 = vsel %vm296, %v473, -inf
      %482 = vmax.xlane.f32.xlu0 %v481
      %v483 = vpop.xlane.xlu0 %482
      %v484 = vsel %vm296, %v474, -inf
      %485 = vmax.xlane.f32.xlu0 %v484
      %v486 = vpop.xlane.xlu0 %485
      %v487 = vsub.f32 %v471, %v477
      %v488 = vsub.f32 %v472, %v480
      %v489 = vsub.f32 %v473, %v483
      %v490 = vsub.f32 %v474, %v486
      %v491 = vmul.f32 %v487, 1.442695
      %v492 = vpow.pop %v491
      %v493 = vmul.f32 %v488, 1.442695
      %v494 = vpow.pop %v493
      %v495 = vmul.f32 %v489, 1.442695
      %v496 = vpow.pop %v495
      %v497 = vmul.f32 %v490, 1.442695
      %v498 = vpow.pop %v497
      %v499 = vsel %vm296, %v492, 0.0
      %500 = vadd.xlane.f32.xlu0 %v499
      %v501 = vpop.xlane.xlu0 %500
      %v502 = vsel %vm296, %v494, 0.0
      %503 = vadd.xlane.f32.xlu0 %v502
      %v504 = vpop.xlane.xlu0 %503
      %v505 = vsel %vm296, %v496, 0.0
      %506 = vadd.xlane.f32.xlu0 %v505
      %v507 = vpop.xlane.xlu0 %506
      %v508 = vsel %vm296, %v498, 0.0
      %509 = vadd.xlane.f32.xlu0 %v508
      %v510 = vpop.xlane.xlu0 %509
      %v511 = vrcp.pop %v501
      %v512 = vrcp.pop %v504
      %v513 = vrcp.pop %v507
      %v514 = vrcp.pop %v510
      %v515 = vmul.f32 %v492, %v511
      %v516 = vmul.f32 %v494, %v512
      %v517 = vmul.f32 %v496, %v513
      %v518 = vmul.f32 %v498, %v514
      %v519 = vpack.c.bf16 %v516, %v515
      %v520 = vpack.c.bf16 %v518, %v517
      %523 = vrot.lane.b32.xlu0 %v228, 112
      %v524 = vpop.permute.xlu0 %523
      %525 = vrot.lane.b32.xlu0 %v229, 112
      %v526 = vpop.permute.xlu0 %525
      %v530 = vsel %vm296, %v519, 0
      %v533 = vsel %vm296, %v520, 0
      %535 = vmatprep.subr.bf16.mxu0 0
      %536 = vmatpush1.bf16.msra.mxu0 %v524
      %537 = vmatprep.subr.bf16.mxu0 0
      %538 = vmatpush1.bf16.msra.mxu0 %v526
      %539 = vmatprep.subr.bf16.mxu0 0
      %540 = vmatpush1.bf16.msra.mxu0 0
      %541 = vmatprep.subr.bf16.mxu0 0
      %542 = vmatpush1.bf16.msra.mxu0 0
      %543 = vmatprep.subr.bf16.mxu0 0
      %544 = vmatpush1.bf16.msra.mxu0 0
      %545 = vmatprep.subr.bf16.mxu0 0
      %546 = vmatpush1.bf16.msra.mxu0 0
      %547 = vmatprep.subr.bf16.mxu0 0
      %548 = vmatpush1.bf16.msra.mxu0 0
      %549 = vmatprep.subr.bf16.mxu0 0
      %550 = vmatpush1.bf16.msra.mxu0 0
      %551 = vmatprep.subr.bf16.mxu0 0
      %552 = vmatpush1.bf16.msra.mxu0 0
      %553 = vmatprep.subr.bf16.mxu0 0
      %554 = vmatpush1.bf16.msra.mxu0 0
      %555 = vmatprep.subr.bf16.mxu0 0
      %556 = vmatpush1.bf16.msra.mxu0 0
      %557 = vmatprep.subr.bf16.mxu0 0
      %558 = vmatpush1.bf16.msra.mxu0 0
      %559 = vmatprep.subr.bf16.mxu0 0
      %560 = vmatpush1.bf16.msra.mxu0 0
      %561 = vmatprep.subr.bf16.mxu0 0
      %562 = vmatpush1.bf16.msra.mxu0 0
      %563 = vmatprep.subr.bf16.mxu0 0
      %564 = vmatpush1.bf16.msra.mxu0 0
      %565 = vmatprep.subr.bf16.mxu0 0
      %566 = vmatpush1.bf16.msra.mxu0 0
      %567 = vmatprep.mubr.bf16.mxu0 0
      %568 = vmatmul.mubr.bf16.gmra.mrb[0].mxu0 %v530
      %v569 = vpop.f32.mrb[0].mxu0
      %v570 = vadd.f32 0.0, %v569
      %v571 = vpop.f32.mrb[0].mxu0
      %v572 = vpop.f32.mrb[0].mxu0
      %v573 = vadd.f32 0.0, %v572
      %v574 = vpop.f32.mrb[0].mxu0
      %575 = vmatprep.mubr.bf16.mxu0 0
      %576 = vmatmul.mubr.bf16.gmra.mrb[0].mxu0 %v533
      %v577 = vpop.f32.mrb[0].mxu0
      %v578 = vadd.f32 0.0, %v577
      %v579 = vpop.f32.mrb[0].mxu0
      %v580 = vpop.f32.mrb[0].mxu0
      %v581 = vadd.f32 0.0, %v580
      %v582 = vpop.f32.mrb[0].mxu0
      %583 = vdwg.mxu0
      %588 = vrot.lane.b32.xlu0 %v570, 16
      %v589 = vpop.permute.xlu0 %588
      %590 = vrot.lane.b32.xlu0 %v573, 16
      %v591 = vpop.permute.xlu0 %590
      %592 = vrot.lane.b32.xlu0 %v578, 16
      %v593 = vpop.permute.xlu0 %592
      %594 = vrot.lane.b32.xlu0 %v581, 16
      %v595 = vpop.permute.xlu0 %594
      %v600 = vsel %vm230, %v384, %v589
      %v601 = vsel %vm230, %v387, %v591
      %v602 = vsel %vm230, %v392, %v593
      %v603 = vsel %vm230, %v395, %v595
      %604 = vst.msk [vmem:[%s210] sm:$0xff] %vm296, %v600
      %605 = vst.msk [vmem:[%s210 + $0x8] sm:$0xff] %vm296, %v601
      %606 = vst.msk [vmem:[%s210 + $0x10] sm:$0xff] %vm296, %v602
      %607 = vst.msk [vmem:[%s210 + $0x18] sm:$0xff] %vm296, %v603
      %p608 = scmp.lt.s32.totalorder %s14, 1
      %s609 = scalar_select %p608, %s14, 1
      %s610 = smul.addr %s609, 4
      %s611 = smul.addr %s610, 8
      %s612 = scalar_lea.vmem %s3, %s611
      // Predicated region
      $region33: #{_lambda_.107} parent=31 // pred_check
        %p613 = pneg %p110
      $region34: #{_lambda_.107} parent=31 // pred_check_branch
        %615 = sbr.rel (%p613) target = $region36
      $region35: #{_lambda_.107} parent=31 // pred_region
        _
      $region36: #{_lambda_.107} parent=31 // pred_fallthru
        _
    $region32: #{_lambda_.107} parent=5 // pred_fallthru
      _
    %p616 = scmp.le.s32.totalorder 2, %s9
    // Predicated region
    $region37: #{_lambda_.107} parent=5 // pred_check
      %p617 = pneg %p616
    $region38: #{_lambda_.107} parent=5 // pred_check_branch
      %619 = sbr.rel (%p617) target = $region40
    $region39: #{_lambda_.107} parent=5 // pred_region
      %s620 = ssub.s32 %s9, 2
      // Predicated region
      $region41: #{_lambda_.107} parent=39 // pred_check
        %p621 = pneg %p116
      $region42: #{_lambda_.107} parent=39 // pred_check_branch
        %623 = sbr.rel (%p621) target = $region44
      $region43: #{_lambda_.107} parent=39 // pred_region
        %p624 = scmp.lt.s32.totalorder %s15, 1
        %s625 = scalar_select %p624, %s15, 1
        %s626 = smul.addr %s625, 4
        %s627 = smul.addr %s626, 8
        %s628 = scalar_lea.vmem %s3, %s627
      $region44: #{_lambda_.107} parent=39 // pred_fallthru
        _
    $region40: #{_lambda_.107} parent=5 // pred_fallthru
      _
  $region6: #{_lambda_.107} parent=0 // loop_footer
    %s13 = sadd.s32 1, %s9
  $region7: #{_lambda_.107} parent=0 // loop_footer_branch
    %8 = sbr.rel target = $region3
  $region8: #{_lambda_.107} parent=0 // loop_exit
    _

// kernel: _lambda_.180
$region0: #{_lambda_.180}
  #allocation0 [shape = 'u32[]', space=smem, size = 0x4, offset = 0x4, fixed_abs, tag = 'smem constant byte address 0x4 - core index']
  #allocation1 [shape = 'u32[144,128]{1,0:T(1,128)}', space=vmem, size = 0x12000, scoped, tag = 'internal scratch']
  %s0 = inlined_call_operand.vmem [shape: f32[2,32,32], index: 0, kind: input, shape index: {}]
  %s1 = inlined_call_operand.vmem [shape: f32[2,16,32], index: 1, kind: input, shape index: {}]
  %s2 = inlined_call_operand.vmem [shape: f32[2,16,32], index: 2, kind: input, shape index: {}]
  %s3 = inlined_call_operand.vmem [shape: f32[2,32,32], index: 3, kind: output, shape index: {}]
  %s4 = sld [smem:[#allocation0]]
  $region45: #{_lambda_.180} parent=0
    _
  %s6 = ssub.s32 1, %s4
  %s7 = scalar_select 0, %s6, %s4
  loop: start=0, step=1, limit=4
  $region2: #{_lambda_.180} parent=0 // loop_pre_header
    _
  $region3: #{_lambda_.180} parent=0 // loop_header
    %s9 = sphi 0, %s13
    %p10 = scmp.ge.s32.totalorder %s9, 4
    %s19 = sphi 0, %s21
    %s22 = sphi 0, %s19
    %s23 = sphi 0, %s22
    %s39 = sphi 0, %s23
    %s45 = sphi 0, %s47
    %s48 = sphi 0, %s45
    %s49 = sphi 0, %s48
    %s65 = sphi 0, %s49
    %s71 = sphi 0, %s73
    %s74 = sphi 0, %s71
    %s75 = sphi 0, %s74
    %s91 = sphi 0, %s75
    %s97 = sphi 0, %s99
    %s100 = sphi 0, %s97
    %s101 = sphi 0, %s100
    %s117 = sphi 0, %s101
  $region4: #{_lambda_.180} parent=0 // loop_header_branch
    %12 = sbr.rel (%p10) target = $region8
  $region5: #{_lambda_.180} parent=0 // loop_body
    %s14 = ssub.s32 %s9, 1
    %s15 = ssub.s32 %s9, 2
    %s16 = sadd.s32 %s9, 1
    %s17 = ssub.s32 %s9, %s16
    %p18 = scmp.eq.s32.totalorder %s17, 0
    %s20 = sadd.s32 %s19, 1
    %s21 = scalar_select %p18, %s19, %s20
    %p24 = pneg %p18
    %p25 = scmp.eq.s32.totalorder %s9, 1
    %p26 = por %p24, %p25
    %p27 = scmp.ne.s32.totalorder %s19, %s22
    %p28 = scmp.eq.s32.totalorder %s9, 0
    %p29 = por %p27, %p28
    %p30 = scmp.ne.s32.totalorder %s19, %s22
    %p31 = scmp.eq.s32.totalorder %s14, 1
    %p32 = por %p30, %p31
    %p33 = scmp.ne.s32.totalorder %s22, %s23
    %p34 = scmp.eq.s32.totalorder %s14, 0
    %p35 = por %p33, %p34
    %p36 = scmp.ne.s32.totalorder %s22, %s23
    %p37 = scmp.eq.s32.totalorder %s15, 1
    %p38 = por %p36, %p37
    %p40 = scmp.ne.s32.totalorder %s23, %s39
    %p41 = scmp.eq.s32.totalorder %s15, 0
    %p42 = por %p40, %p41
    %s43 = ssub.s32 %s9, %s16
    %p44 = scmp.eq.s32.totalorder %s43, 0
    %s46 = sadd.s32 %s45, 1
    %s47 = scalar_select %p44, %s45, %s46
    %p50 = pneg %p44
    %p51 = scmp.eq.s32.totalorder %s9, 1
    %p52 = por %p50, %p51
    %p53 = scmp.ne.s32.totalorder %s45, %s48
    %p54 = scmp.eq.s32.totalorder %s9, 0
    %p55 = por %p53, %p54
    %p56 = scmp.ne.s32.totalorder %s45, %s48
    %p57 = scmp.eq.s32.totalorder %s14, 1
    %p58 = por %p56, %p57
    %p59 = scmp.ne.s32.totalorder %s48, %s49
    %p60 = scmp.eq.s32.totalorder %s14, 0
    %p61 = por %p59, %p60
    %p62 = scmp.ne.s32.totalorder %s48, %s49
    %p63 = scmp.eq.s32.totalorder %s15, 1
    %p64 = por %p62, %p63
    %p66 = scmp.ne.s32.totalorder %s49, %s65
    %p67 = scmp.eq.s32.totalorder %s15, 0
    %p68 = por %p66, %p67
    %s69 = ssub.s32 %s9, %s16
    %p70 = scmp.eq.s32.totalorder %s69, 0
    %s72 = sadd.s32 %s71, 1
    %s73 = scalar_select %p70, %s71, %s72
    %p76 = pneg %p70
    %p77 = scmp.eq.s32.totalorder %s9, 1
    %p78 = por %p76, %p77
    %p79 = scmp.ne.s32.totalorder %s71, %s74
    %p80 = scmp.eq.s32.totalorder %s9, 0
    %p81 = por %p79, %p80
    %p82 = scmp.ne.s32.totalorder %s71, %s74
    %p83 = scmp.eq.s32.totalorder %s14, 1
    %p84 = por %p82, %p83
    %p85 = scmp.ne.s32.totalorder %s74, %s75
    %p86 = scmp.eq.s32.totalorder %s14, 0
    %p87 = por %p85, %p86
    %p88 = scmp.ne.s32.totalorder %s74, %s75
    %p89 = scmp.eq.s32.totalorder %s15, 1
    %p90 = por %p88, %p89
    %p92 = scmp.ne.s32.totalorder %s75, %s91
    %p93 = scmp.eq.s32.totalorder %s15, 0
    %p94 = por %p92, %p93
    %s95 = ssub.s32 %s9, %s16
    %p96 = scmp.eq.s32.totalorder %s95, 0
    %s98 = sadd.s32 %s97, 1
    %s99 = scalar_select %p96, %s97, %s98
    %p102 = pneg %p96
    %p103 = scmp.eq.s32.totalorder %s9, 1
    %p104 = por %p102, %p103
    %p105 = scmp.ne.s32.totalorder %s97, %s100
    %p106 = scmp.eq.s32.totalorder %s9, 0
    %p107 = por %p105, %p106
    %p108 = scmp.ne.s32.totalorder %s97, %s100
    %p109 = scmp.eq.s32.totalorder %s14, 1
    %p110 = por %p108, %p109
    %p111 = scmp.ne.s32.totalorder %s100, %s101
    %p112 = scmp.eq.s32.totalorder %s14, 0
    %p113 = por %p111, %p112
    %p114 = scmp.ne.s32.totalorder %s100, %s101
    %p115 = scmp.eq.s32.totalorder %s15, 1
    %p116 = por %p114, %p115
    %p118 = scmp.ne.s32.totalorder %s101, %s117
    %p119 = scmp.eq.s32.totalorder %s15, 0
    %p120 = por %p118, %p119
    %p121 = scmp.le.s32.totalorder 1, %s9
    %p122 = scmp.lt.s32.totalorder %s9, 3
    %p123 = pnand %p121, %p122
    %p124 = pneg %p123
    // Predicated region
    $region9: #{_lambda_.180} parent=5 // pred_check
      _
    $region10: #{_lambda_.180} parent=5 // pred_check_branch
      %126 = sbr.rel (%p123) target = $region12
    $region11: #{_lambda_.180} parent=5 // pred_region
      %s127 = ssub.s32 %s9, 1
    $region12: #{_lambda_.180} parent=5 // pred_fallthru
      _
    %p128 = scmp.lt.s32.totalorder %s9, 2
    // Predicated region
    $region13: #{_lambda_.180} parent=5 // pred_check
      %p129 = pneg %p128
    $region14: #{_lambda_.180} parent=5 // pred_check_branch
      %131 = sbr.rel (%p129) target = $region16
    $region15: #{_lambda_.180} parent=5 // pred_region
      // Predicated region
      $region17: #{_lambda_.180} parent=15 // pred_check
        %p132 = pneg %p29
      $region18: #{_lambda_.180} parent=15 // pred_check_branch
        %134 = sbr.rel (%p132) target = $region20
      $region19: #{_lambda_.180} parent=15 // pred_region
        %p135 = scmp.lt.s32.totalorder %s9, 1
        %s136 = scalar_select %p135, %s9, 1
        %s137 = smul.addr %s136, 4
        %s138 = smul.addr %s137, 8
        %s139 = scalar_lea.vmem %s0, %s138
      $region20: #{_lambda_.180} parent=15 // pred_fallthru
        _
      // Predicated region
      $region21: #{_lambda_.180} parent=15 // pred_check
        %p140 = pneg %p55
      $region22: #{_lambda_.180} parent=15 // pred_check_branch
        %142 = sbr.rel (%p140) target = $region24
      $region23: #{_lambda_.180} parent=15 // pred_region
        %p143 = scmp.lt.s32.totalorder %s9, 1
        %s144 = scalar_select %p143, %s9, 1
        %s145 = smul.addr %s144, 2
        %s146 = smul.addr %s145, 8
        %s147 = scalar_lea.vmem %s1, %s146
      $region24: #{_lambda_.180} parent=15 // pred_fallthru
        _
      // Predicated region
      $region25: #{_lambda_.180} parent=15 // pred_check
        %p148 = pneg %p81
      $region26: #{_lambda_.180} parent=15 // pred_check_branch
        %150 = sbr.rel (%p148) target = $region28
      $region27: #{_lambda_.180} parent=15 // pred_region
        %p151 = scmp.lt.s32.totalorder %s9, 1
        %s152 = scalar_select %p151, %s9, 1
        %s153 = smul.addr %s152, 2
        %s154 = smul.addr %s153, 8
        %s155 = scalar_lea.vmem %s2, %s154
      $region28: #{_lambda_.180} parent=15 // pred_fallthru
        _
    $region16: #{_lambda_.180} parent=5 // pred_fallthru
      _
    %p156 = scmp.le.s32.totalorder 1, %s9
    %p157 = scmp.lt.s32.totalorder %s9, 3
    %p158 = pnand %p156, %p157
    %p159 = pneg %p158
    // Predicated region
    $region29: #{_lambda_.180} parent=5 // pred_check
      _
    $region30: #{_lambda_.180} parent=5 // pred_check_branch
      %161 = sbr.rel (%p158) target = $region32
    $region31: #{_lambda_.180} parent=5 // pred_region
      %s162 = ssub.s32 %s9, 1
      %p163 = scmp.lt.s32.totalorder %s14, 1
      %s164 = scalar_select %p163, %s14, 1
      %s165 = smul.addr %s164, 4
      %s166 = smul.addr %s165, 8
      %s167 = scalar_lea.vmem %s0, %s166
      %p168 = pneg %p35
      %p169 = pneg %p32
      %p170 = scmp.lt.s32.totalorder %s14, 1
      %s171 = scalar_select %p170, %s14, 1
      %s172 = smul.addr %s171, 2
      %s173 = smul.addr %s172, 8
      %s174 = scalar_lea.vmem %s1, %s173
      %p175 = pneg %p61
      %p176 = pneg %p58
      %p177 = scmp.lt.s32.totalorder %s14, 1
      %s178 = scalar_select %p177, %s14, 1
      %s179 = smul.addr %s178, 2
      %s180 = smul.addr %s179, 8
      %s181 = scalar_lea.vmem %s2, %s180
      %p182 = pneg %p87
      %p183 = pneg %p84
      %p184 = pneg %p113
      %p185 = pneg %p110
      %p186 = scmp.lt.s32.totalorder %s14, 1
      %s187 = scalar_select %p186, %s14, 1
      %s188 = smul.addr %s187, 4
      %s189 = smul.addr %s188, 8
      %s190 = scalar_lea.vmem %s3, %s189
      %p191 = scmp.lt.s32.totalorder %s14, 1
      %s192 = scalar_select %p191, %s14, 1
      %s193 = smul.addr %s192, 4
      %s194 = smul.addr %s193, 8
      %s195 = scalar_lea.vmem %s0, %s194
      %p196 = scmp.lt.s32.totalorder %s14, 1
      %s197 = scalar_select %p196, %s14, 1
      %s198 = smul.addr %s197, 2
      %s199 = smul.addr %s198, 8
      %s200 = scalar_lea.vmem %s1, %s199
      %p201 = scmp.lt.s32.totalorder %s14, 1
      %s202 = scalar_select %p201, %s14, 1
      %s203 = smul.addr %s202, 2
      %s204 = smul.addr %s203, 8
      %s205 = scalar_lea.vmem %s2, %s204
      %p206 = scmp.lt.s32.totalorder %s14, 1
      %s207 = scalar_select %p206, %s14, 1
      %s208 = smul.addr %s207, 4
      %s209 = smul.addr %s208, 8
      %s210 = scalar_lea.vmem %s3, %s209
      %v212 = vld [vmem:[%s195] sm:$0xff]
      %v213 = vld [vmem:[%s195 + $0x8] sm:$0xff]
      %v214 = vld [vmem:[%s195 + $0x10] sm:$0xff]
      %v215 = vld [vmem:[%s195 + $0x18] sm:$0xff]
      %v216 = vld [vmem:[%s200] sm:$0xff]
      %v217 = vld [vmem:[%s200 + $0x8] sm:$0xff]
      %v218 = vld [vmem:[%s205] sm:$0xff]
      %v219 = vld [vmem:[%s205 + $0x8] sm:$0xff]
      %v220 = vpack.c.bf16 %v213, %v212
      %v221 = vpack.c.bf16 %v215, %v214
      %v222 = vpack.c.bf16 %v217, %v216
      %v223 = vpack.c.bf16 %v219, %v218
      %vm224 = vcmask 130048
      %v226 = vsel %vm224, %v220, 0
      %v229 = vsel %vm224, %v221, 0
      %v232 = vsel %vm224, %v222, 0
      %234 = vmatprep.subr.bf16.mxu0 0
      %235 = vmatpush1.bf16.xpose.msra.mxu0 %v232
      %236 = vmatprep.subr.bf16.mxu0 0
      %237 = vmatpush1.bf16.xpose.msra.mxu0 0
      %238 = vmatprep.subr.bf16.mxu0 0
      %239 = vmatpush1.bf16.xpose.msra.mxu0 0
      %240 = vmatprep.subr.bf16.mxu0 0
      %241 = vmatpush1.bf16.xpose.msra.mxu0 0
      %242 = vmatprep.subr.bf16.mxu0 0
      %243 = vmatpush1.bf16.xpose.msra.mxu0 0
      %244 = vmatprep.subr.bf16.mxu0 0
      %245 = vmatpush1.bf16.xpose.msra.mxu0 0
      %246 = vmatprep.subr.bf16.mxu0 0
      %247 = vmatpush1.bf16.xpose.msra.mxu0 0
      %248 = vmatprep.subr.bf16.mxu0 0
      %249 = vmatpush1.bf16.xpose.msra.mxu0 0
      %250 = vmatprep.subr.bf16.mxu0 0
      %251 = vmatpush1.bf16.xpose.msra.mxu0 0
      %252 = vmatprep.subr.bf16.mxu0 0
      %253 = vmatpush1.bf16.xpose.msra.mxu0 0
      %254 = vmatprep.subr.bf16.mxu0 0
      %255 = vmatpush1.bf16.xpose.msra.mxu0 0
      %256 = vmatprep.subr.bf16.mxu0 0
      %257 = vmatpush1.bf16.xpose.msra.mxu0 0
      %258 = vmatprep.subr.bf16.mxu0 0
      %259 = vmatpush1.bf16.xpose.msra.mxu0 0
      %260 = vmatprep.subr.bf16.mxu0 0
      %261 = vmatpush1.bf16.xpose.msra.mxu0 0
      %262 = vmatprep.subr.bf16.mxu0 0
      %263 = vmatpush1.bf16.xpose.msra.mxu0 0
      %264 = vmatprep.subr.bf16.mxu0 0
      %265 = vmatpush1.bf16.xpose.msra.mxu0 0
      %266 = vmatprep.mubr.bf16.mxu0 0
      %267 = vmatmul.mubr.bf16.gmra.mrb[0].mxu0 %v226
      %v268 = vpop.f32.mrb[0].mxu0
      %v269 = vadd.f32 0.0, %v268
      %v270 = vpop.f32.mrb[0].mxu0
      %v271 = vpop.f32.mrb[0].mxu0
      %v272 = vadd.f32 0.0, %v271
      %v273 = vpop.f32.mrb[0].mxu0
      %274 = vmatprep.mubr.bf16.mxu0 0
      %275 = vmatmul.mubr.bf16.gmra.mrb[0].mxu0 %v229
      %v276 = vpop.f32.mrb[0].mxu0
      %v277 = vadd.f32 0.0, %v276
      %v278 = vpop.f32.mrb[0].mxu0
      %v279 = vpop.f32.mrb[0].mxu0
      %v280 = vadd.f32 0.0, %v279
      %v281 = vpop.f32.mrb[0].mxu0
      %282 = vdwg.mxu0
      %v283 = vmul.f32 %v269, 0.25
      %v284 = vmul.f32 %v272, 0.25
      %v285 = vmul.f32 %v277, 0.25
      %v286 = vmul.f32 %v280, 0.25
      %v287 = vsel %vm224, %v283, -inf
      %288 = vmax.xlane.f32.xlu0 %v287
      %v289 = vpop.xlane.xlu0 %288
      %v290 = vsel %vm224, %v284, -inf
      %291 = vmax.xlane.f32.xlu0 %v290
      %v292 = vpop.xlane.xlu0 %291
      %v293 = vsel %vm224, %v285, -inf
      %294 = vmax.xlane.f32.xlu0 %v293
      %v295 = vpop.xlane.xlu0 %294
      %v296 = vsel %vm224, %v286, -inf
      %297 = vmax.xlane.f32.xlu0 %v296
      %v298 = vpop.xlane.xlu0 %297
      %v299 = vsub.f32 %v283, %v289
      %v300 = vsub.f32 %v284, %v292
      %v301 = vsub.f32 %v285, %v295
      %v302 = vsub.f32 %v286, %v298
      %v303 = vmul.f32 %v299, 1.442695
      %v304 = vpow.pop %v303
      %v305 = vmul.f32 %v300, 1.442695
      %v306 = vpow.pop %v305
      %v307 = vmul.f32 %v301, 1.442695
      %v308 = vpow.pop %v307
      %v309 = vmul.f32 %v302, 1.442695
      %v310 = vpow.pop %v309
      %v311 = vsel %vm224, %v304, 0.0
      %312 = vadd.xlane.f32.xlu0 %v311
      %v313 = vpop.xlane.xlu0 %312
      %v314 = vsel %vm224, %v306, 0.0
      %315 = vadd.xlane.f32.xlu0 %v314
      %v316 = vpop.xlane.xlu0 %315
      %v317 = vsel %vm224, %v308, 0.0
      %318 = vadd.xlane.f32.xlu0 %v317
      %v319 = vpop.xlane.xlu0 %318
      %v320 = vsel %vm224, %v310, 0.0
      %321 = vadd.xlane.f32.xlu0 %v320
      %v322 = vpop.xlane.xlu0 %321
      %v323 = vrcp.pop %v313
      %v324 = vrcp.pop %v316
      %v325 = vrcp.pop %v319
      %v326 = vrcp.pop %v322
      %v327 = vmul.f32 %v304, %v323
      %v328 = vmul.f32 %v306, %v324
      %v329 = vmul.f32 %v308, %v325
      %v330 = vmul.f32 %v310, %v326
      %v331 = vpack.c.bf16 %v328, %v327
      %v332 = vpack.c.bf16 %v330, %v329
      %v334 = vsel %vm224, %v331, 0
      %v337 = vsel %vm224, %v332, 0
      %339 = vmatprep.subr.bf16.mxu0 0
      %340 = vmatpush1.bf16.msra.mxu0 %v223
      %341 = vmatprep.subr.bf16.mxu0 0
      %342 = vmatpush1.bf16.msra.mxu0 0
      %343 = vmatprep.subr.bf16.mxu0 0
      %344 = vmatpush1.bf16.msra.mxu0 0
      %345 = vmatprep.subr.bf16.mxu0 0
      %346 = vmatpush1.bf16.msra.mxu0 0
      %347 = vmatprep.subr.bf16.mxu0 0
      %348 = vmatpush1.bf16.msra.mxu0 0
      %349 = vmatprep.subr.bf16.mxu0 0
      %350 = vmatpush1.bf16.msra.mxu0 0
      %351 = vmatprep.subr.bf16.mxu0 0
      %352 = vmatpush1.bf16.msra.mxu0 0
      %353 = vmatprep.subr.bf16.mxu0 0
      %354 = vmatpush1.bf16.msra.mxu0 0
      %355 = vmatprep.subr.bf16.mxu0 0
      %356 = vmatpush1.bf16.msra.mxu0 0
      %357 = vmatprep.subr.bf16.mxu0 0
      %358 = vmatpush1.bf16.msra.mxu0 0
      %359 = vmatprep.subr.bf16.mxu0 0
      %360 = vmatpush1.bf16.msra.mxu0 0
      %361 = vmatprep.subr.bf16.mxu0 0
      %362 = vmatpush1.bf16.msra.mxu0 0
      %363 = vmatprep.subr.bf16.mxu0 0
      %364 = vmatpush1.bf16.msra.mxu0 0
      %365 = vmatprep.subr.bf16.mxu0 0
      %366 = vmatpush1.bf16.msra.mxu0 0
      %367 = vmatprep.subr.bf16.mxu0 0
      %368 = vmatpush1.bf16.msra.mxu0 0
      %369 = vmatprep.subr.bf16.mxu0 0
      %370 = vmatpush1.bf16.msra.mxu0 0
      %371 = vmatprep.mubr.bf16.mxu0 0
      %372 = vmatmul.mubr.bf16.gmra.mrb[0].mxu0 %v334
      %v373 = vpop.f32.mrb[0].mxu0
      %v374 = vadd.f32 0.0, %v373
      %v375 = vpop.f32.mrb[0].mxu0
      %v376 = vpop.f32.mrb[0].mxu0
      %v377 = vadd.f32 0.0, %v376
      %v378 = vpop.f32.mrb[0].mxu0
      %379 = vmatprep.mubr.bf16.mxu0 0
      %380 = vmatmul.mubr.bf16.gmra.mrb[0].mxu0 %v337
      %v381 = vpop.f32.mrb[0].mxu0
      %v382 = vadd.f32 0.0, %v381
      %v383 = vpop.f32.mrb[0].mxu0
      %v384 = vpop.f32.mrb[0].mxu0
      %v385 = vadd.f32 0.0, %v384
      %v386 = vpop.f32.mrb[0].mxu0
      %387 = vdwg.mxu0
      %390 = vrot.lane.b32.xlu0 %v220, 112
      %v391 = vpop.permute.xlu0 %390
      %392 = vrot.lane.b32.xlu0 %v221, 112
      %v393 = vpop.permute.xlu0 %392
      %395 = vrot.lane.b32.xlu0 %v222, 112
      %v396 = vpop.permute.xlu0 %395
      %v398 = vsel %vm224, %v391, 0
      %v401 = vsel %vm224, %v393, 0
      %v404 = vsel %vm224, %v396, 0
      %406 = vmatprep.subr.bf16.mxu0 0
      %407 = vmatpush1.bf16.xpose.msra.mxu0 %v404
      %408 = vmatprep.subr.bf16.mxu0 0
      %409 = vmatpush1.bf16.xpose.msra.mxu0 0
      %410 = vmatprep.subr.bf16.mxu0 0
      %411 = vmatpush1.bf16.xpose.msra.mxu0 0
      %412 = vmatprep.subr.bf16.mxu0 0
      %413 = vmatpush1.bf16.xpose.msra.mxu0 0
      %414 = vmatprep.subr.bf16.mxu0 0
      %415 = vmatpush1.bf16.xpose.msra.mxu0 0
      %416 = vmatprep.subr.bf16.mxu0 0
      %417 = vmatpush1.bf16.xpose.msra.mxu0 0
      %418 = vmatprep.subr.bf16.mxu0 0
      %419 = vmatpush1.bf16.xpose.msra.mxu0 0
      %420 = vmatprep.subr.bf16.mxu0 0
      %421 = vmatpush1.bf16.xpose.msra.mxu0 0
      %422 = vmatprep.subr.bf16.mxu0 0
      %423 = vmatpush1.bf16.xpose.msra.mxu0 0
      %424 = vmatprep.subr.bf16.mxu0 0
      %425 = vmatpush1.bf16.xpose.msra.mxu0 0
      %426 = vmatprep.subr.bf16.mxu0 0
      %427 = vmatpush1.bf16.xpose.msra.mxu0 0
      %428 = vmatprep.subr.bf16.mxu0 0
      %429 = vmatpush1.bf16.xpose.msra.mxu0 0
      %430 = vmatprep.subr.bf16.mxu0 0
      %431 = vmatpush1.bf16.xpose.msra.mxu0 0
      %432 = vmatprep.subr.bf16.mxu0 0
      %433 = vmatpush1.bf16.xpose.msra.mxu0 0
      %434 = vmatprep.subr.bf16.mxu0 0
      %435 = vmatpush1.bf16.xpose.msra.mxu0 0
      %436 = vmatprep.subr.bf16.mxu0 0
      %437 = vmatpush1.bf16.xpose.msra.mxu0 0
      %438 = vmatprep.mubr.bf16.mxu0 0
      %439 = vmatmul.mubr.bf16.gmra.mrb[0].mxu0 %v398
      %v440 = vpop.f32.mrb[0].mxu0
      %v441 = vadd.f32 0.0, %v440
      %v442 = vpop.f32.mrb[0].mxu0
      %v443 = vpop.f32.mrb[0].mxu0
      %v444 = vadd.f32 0.0, %v443
      %v445 = vpop.f32.mrb[0].mxu0
      %446 = vmatprep.mubr.bf16.mxu0 0
      %447 = vmatmul.mubr.bf16.gmra.mrb[0].mxu0 %v401
      %v448 = vpop.f32.mrb[0].mxu0
      %v449 = vadd.f32 0.0, %v448
      %v450 = vpop.f32.mrb[0].mxu0
      %v451 = vpop.f32.mrb[0].mxu0
      %v452 = vadd.f32 0.0, %v451
      %v453 = vpop.f32.mrb[0].mxu0
      %454 = vdwg.mxu0
      %v455 = vmul.f32 %v441, 0.25
      %v456 = vmul.f32 %v444, 0.25
      %v457 = vmul.f32 %v449, 0.25
      %v458 = vmul.f32 %v452, 0.25
      %v459 = vsel %vm224, %v455, -inf
      %460 = vmax.xlane.f32.xlu0 %v459
      %v461 = vpop.xlane.xlu0 %460
      %v462 = vsel %vm224, %v456, -inf
      %463 = vmax.xlane.f32.xlu0 %v462
      %v464 = vpop.xlane.xlu0 %463
      %v465 = vsel %vm224, %v457, -inf
      %466 = vmax.xlane.f32.xlu0 %v465
      %v467 = vpop.xlane.xlu0 %466
      %v468 = vsel %vm224, %v458, -inf
      %469 = vmax.xlane.f32.xlu0 %v468
      %v470 = vpop.xlane.xlu0 %469
      %v471 = vsub.f32 %v455, %v461
      %v472 = vsub.f32 %v456, %v464
      %v473 = vsub.f32 %v457, %v467
      %v474 = vsub.f32 %v458, %v470
      %v475 = vmul.f32 %v471, 1.442695
      %v476 = vpow.pop %v475
      %v477 = vmul.f32 %v472, 1.442695
      %v478 = vpow.pop %v477
      %v479 = vmul.f32 %v473, 1.442695
      %v480 = vpow.pop %v479
      %v481 = vmul.f32 %v474, 1.442695
      %v482 = vpow.pop %v481
      %v483 = vsel %vm224, %v476, 0.0
      %484 = vadd.xlane.f32.xlu0 %v483
      %v485 = vpop.xlane.xlu0 %484
      %v486 = vsel %vm224, %v478, 0.0
      %487 = vadd.xlane.f32.xlu0 %v486
      %v488 = vpop.xlane.xlu0 %487
      %v489 = vsel %vm224, %v480, 0.0
      %490 = vadd.xlane.f32.xlu0 %v489
      %v491 = vpop.xlane.xlu0 %490
      %v492 = vsel %vm224, %v482, 0.0
      %493 = vadd.xlane.f32.xlu0 %v492
      %v494 = vpop.xlane.xlu0 %493
      %v495 = vrcp.pop %v485
      %v496 = vrcp.pop %v488
      %v497 = vrcp.pop %v491
      %v498 = vrcp.pop %v494
      %v499 = vmul.f32 %v476, %v495
      %v500 = vmul.f32 %v478, %v496
      %v501 = vmul.f32 %v480, %v497
      %v502 = vmul.f32 %v482, %v498
      %v503 = vpack.c.bf16 %v500, %v499
      %v504 = vpack.c.bf16 %v502, %v501
      %506 = vrot.lane.b32.xlu0 %v223, 112
      %v507 = vpop.permute.xlu0 %506
      %v510 = vsel %vm224, %v503, 0
      %v513 = vsel %vm224, %v504, 0
      %515 = vmatprep.subr.bf16.mxu0 0
      %516 = vmatpush1.bf16.msra.mxu0 %v507
      %517 = vmatprep.subr.bf16.mxu0 0
      %518 = vmatpush1.bf16.msra.mxu0 0
      %519 = vmatprep.subr.bf16.mxu0 0
      %520 = vmatpush1.bf16.msra.mxu0 0
      %521 = vmatprep.subr.bf16.mxu0 0
      %522 = vmatpush1.bf16.msra.mxu0 0
      %523 = vmatprep.subr.bf16.mxu0 0
      %524 = vmatpush1.bf16.msra.mxu0 0
      %525 = vmatprep.subr.bf16.mxu0 0
      %526 = vmatpush1.bf16.msra.mxu0 0
      %527 = vmatprep.subr.bf16.mxu0 0
      %528 = vmatpush1.bf16.msra.mxu0 0
      %529 = vmatprep.subr.bf16.mxu0 0
      %530 = vmatpush1.bf16.msra.mxu0 0
      %531 = vmatprep.subr.bf16.mxu0 0
      %532 = vmatpush1.bf16.msra.mxu0 0
      %533 = vmatprep.subr.bf16.mxu0 0
      %534 = vmatpush1.bf16.msra.mxu0 0
      %535 = vmatprep.subr.bf16.mxu0 0
      %536 = vmatpush1.bf16.msra.mxu0 0
      %537 = vmatprep.subr.bf16.mxu0 0
      %538 = vmatpush1.bf16.msra.mxu0 0
      %539 = vmatprep.subr.bf16.mxu0 0
      %540 = vmatpush1.bf16.msra.mxu0 0
      %541 = vmatprep.subr.bf16.mxu0 0
      %542 = vmatpush1.bf16.msra.mxu0 0
      %543 = vmatprep.subr.bf16.mxu0 0
      %544 = vmatpush1.bf16.msra.mxu0 0
      %545 = vmatprep.subr.bf16.mxu0 0
      %546 = vmatpush1.bf16.msra.mxu0 0
      %547 = vmatprep.mubr.bf16.mxu0 0
      %548 = vmatmul.mubr.bf16.gmra.mrb[0].mxu0 %v510
      %v549 = vpop.f32.mrb[0].mxu0
      %v550 = vadd.f32 0.0, %v549
      %v551 = vpop.f32.mrb[0].mxu0
      %v552 = vpop.f32.mrb[0].mxu0
      %v553 = vadd.f32 0.0, %v552
      %v554 = vpop.f32.mrb[0].mxu0
      %555 = vmatprep.mubr.bf16.mxu0 0
      %556 = vmatmul.mubr.bf16.gmra.mrb[0].mxu0 %v513
      %v557 = vpop.f32.mrb[0].mxu0
      %v558 = vadd.f32 0.0, %v557
      %v559 = vpop.f32.mrb[0].mxu0
      %v560 = vpop.f32.mrb[0].mxu0
      %v561 = vadd.f32 0.0, %v560
      %v562 = vpop.f32.mrb[0].mxu0
      %563 = vdwg.mxu0
      %568 = vrot.lane.b32.xlu0 %v550, 16
      %v569 = vpop.permute.xlu0 %568
      %570 = vrot.lane.b32.xlu0 %v553, 16
      %v571 = vpop.permute.xlu0 %570
      %572 = vrot.lane.b32.xlu0 %v558, 16
      %v573 = vpop.permute.xlu0 %572
      %574 = vrot.lane.b32.xlu0 %v561, 16
      %v575 = vpop.permute.xlu0 %574
      %v580 = vsel %vm224, %v374, %v569
      %v581 = vsel %vm224, %v377, %v571
      %v582 = vsel %vm224, %v382, %v573
      %v583 = vsel %vm224, %v385, %v575
      %vm584 = vcmask 261120
      %585 = vst.msk [vmem:[%s210] sm:$0xff] %vm584, %v580
      %586 = vst.msk [vmem:[%s210 + $0x8] sm:$0xff] %vm584, %v581
      %587 = vst.msk [vmem:[%s210 + $0x10] sm:$0xff] %vm584, %v582
      %588 = vst.msk [vmem:[%s210 + $0x18] sm:$0xff] %vm584, %v583
      %p589 = scmp.lt.s32.totalorder %s14, 1
      %s590 = scalar_select %p589, %s14, 1
      %s591 = smul.addr %s590, 4
      %s592 = smul.addr %s591, 8
      %s593 = scalar_lea.vmem %s3, %s592
      // Predicated region
      $region33: #{_lambda_.180} parent=31 // pred_check
        %p594 = pneg %p110
      $region34: #{_lambda_.180} parent=31 // pred_check_branch
        %596 = sbr.rel (%p594) target = $region36
      $region35: #{_lambda_.180} parent=31 // pred_region
        _
      $region36: #{_lambda_.180} parent=31 // pred_fallthru
        _
    $region32: #{_lambda_.180} parent=5 // pred_fallthru
      _
    %p597 = scmp.le.s32.totalorder 2, %s9
    // Predicated region
    $region37: #{_lambda_.180} parent=5 // pred_check
      %p598 = pneg %p597
    $region38: #{_lambda_.180} parent=5 // pred_check_branch
      %600 = sbr.rel (%p598) target = $region40
    $region39: #{_lambda_.180} parent=5 // pred_region
      %s601 = ssub.s32 %s9, 2
      // Predicated region
      $region41: #{_lambda_.180} parent=39 // pred_check
        %p602 = pneg %p116
      $region42: #{_lambda_.180} parent=39 // pred_check_branch
        %604 = sbr.rel (%p602) target = $region44
      $region43: #{_lambda_.180} parent=39 // pred_region
        %p605 = scmp.lt.s32.totalorder %s15, 1
        %s606 = scalar_select %p605, %s15, 1
        %s607 = smul.addr %s606, 4
        %s608 = smul.addr %s607, 8
        %s609 = scalar_lea.vmem %s3, %s608
      $region44: #{_lambda_.180} parent=39 // pred_fallthru
        _
    $region40: #{_lambda_.180} parent=5 // pred_fallthru
      _
  $region6: #{_lambda_.180} parent=0 // loop_footer
    %s13 = sadd.s32 1, %s9
  $region7: #{_lambda_.180} parent=0 // loop_footer_branch
    %8 = sbr.rel target = $region3
  $region8: #{_lambda_.180} parent=0 // loop_exit
    _

// kernel: _lambda_.185
$region0: #{_lambda_.185}
  #allocation0 [shape = 'u32[]', space=smem, size = 0x4, offset = 0x4, fixed_abs, tag = 'smem constant byte address 0x4 - core index']
  #allocation1 [shape = 'u32[144,128]{1,0:T(1,128)}', space=vmem, size = 0x12000, scoped, tag = 'internal scratch']
  %s0 = inlined_call_operand.vmem [shape: f32[2,32,32], index: 0, kind: input, shape index: {}]
  %s1 = inlined_call_operand.vmem [shape: f32[2,8,32], index: 1, kind: input, shape index: {}]
  %s2 = inlined_call_operand.vmem [shape: f32[2,8,32], index: 2, kind: input, shape index: {}]
  %s3 = inlined_call_operand.vmem [shape: f32[2,32,32], index: 3, kind: output, shape index: {}]
  %s4 = sld [smem:[#allocation0]]
  $region45: #{_lambda_.185} parent=0
    _
  %s6 = ssub.s32 1, %s4
  %s7 = scalar_select 0, %s6, %s4
  loop: start=0, step=1, limit=4
  $region2: #{_lambda_.185} parent=0 // loop_pre_header
    _
  $region3: #{_lambda_.185} parent=0 // loop_header
    %s9 = sphi 0, %s13
    %p10 = scmp.ge.s32.totalorder %s9, 4
    %s19 = sphi 0, %s21
    %s22 = sphi 0, %s19
    %s23 = sphi 0, %s22
    %s39 = sphi 0, %s23
    %s45 = sphi 0, %s47
    %s48 = sphi 0, %s45
    %s49 = sphi 0, %s48
    %s65 = sphi 0, %s49
    %s71 = sphi 0, %s73
    %s74 = sphi 0, %s71
    %s75 = sphi 0, %s74
    %s91 = sphi 0, %s75
    %s97 = sphi 0, %s99
    %s100 = sphi 0, %s97
    %s101 = sphi 0, %s100
    %s117 = sphi 0, %s101
  $region4: #{_lambda_.185} parent=0 // loop_header_branch
    %12 = sbr.rel (%p10) target = $region8
  $region5: #{_lambda_.185} parent=0 // loop_body
    %s14 = ssub.s32 %s9, 1
    %s15 = ssub.s32 %s9, 2
    %s16 = sadd.s32 %s9, 1
    %s17 = ssub.s32 %s9, %s16
    %p18 = scmp.eq.s32.totalorder %s17, 0
    %s20 = sadd.s32 %s19, 1
    %s21 = scalar_select %p18, %s19, %s20
    %p24 = pneg %p18
    %p25 = scmp.eq.s32.totalorder %s9, 1
    %p26 = por %p24, %p25
    %p27 = scmp.ne.s32.totalorder %s19, %s22
    %p28 = scmp.eq.s32.totalorder %s9, 0
    %p29 = por %p27, %p28
    %p30 = scmp.ne.s32.totalorder %s19, %s22
    %p31 = scmp.eq.s32.totalorder %s14, 1
    %p32 = por %p30, %p31
    %p33 = scmp.ne.s32.totalorder %s22, %s23
    %p34 = scmp.eq.s32.totalorder %s14, 0
    %p35 = por %p33, %p34
    %p36 = scmp.ne.s32.totalorder %s22, %s23
    %p37 = scmp.eq.s32.totalorder %s15, 1
    %p38 = por %p36, %p37
    %p40 = scmp.ne.s32.totalorder %s23, %s39
    %p41 = scmp.eq.s32.totalorder %s15, 0
    %p42 = por %p40, %p41
    %s43 = ssub.s32 %s9, %s16
    %p44 = scmp.eq.s32.totalorder %s43, 0
    %s46 = sadd.s32 %s45, 1
    %s47 = scalar_select %p44, %s45, %s46
    %p50 = pneg %p44
    %p51 = scmp.eq.s32.totalorder %s9, 1
    %p52 = por %p50, %p51
    %p53 = scmp.ne.s32.totalorder %s45, %s48
    %p54 = scmp.eq.s32.totalorder %s9, 0
    %p55 = por %p53, %p54
    %p56 = scmp.ne.s32.totalorder %s45, %s48
    %p57 = scmp.eq.s32.totalorder %s14, 1
    %p58 = por %p56, %p57
    %p59 = scmp.ne.s32.totalorder %s48, %s49
    %p60 = scmp.eq.s32.totalorder %s14, 0
    %p61 = por %p59, %p60
    %p62 = scmp.ne.s32.totalorder %s48, %s49
    %p63 = scmp.eq.s32.totalorder %s15, 1
    %p64 = por %p62, %p63
    %p66 = scmp.ne.s32.totalorder %s49, %s65
    %p67 = scmp.eq.s32.totalorder %s15, 0
    %p68 = por %p66, %p67
    %s69 = ssub.s32 %s9, %s16
    %p70 = scmp.eq.s32.totalorder %s69, 0
    %s72 = sadd.s32 %s71, 1
    %s73 = scalar_select %p70, %s71, %s72
    %p76 = pneg %p70
    %p77 = scmp.eq.s32.totalorder %s9, 1
    %p78 = por %p76, %p77
    %p79 = scmp.ne.s32.totalorder %s71, %s74
    %p80 = scmp.eq.s32.totalorder %s9, 0
    %p81 = por %p79, %p80
    %p82 = scmp.ne.s32.totalorder %s71, %s74
    %p83 = scmp.eq.s32.totalorder %s14, 1
    %p84 = por %p82, %p83
    %p85 = scmp.ne.s32.totalorder %s74, %s75
    %p86 = scmp.eq.s32.totalorder %s14, 0
    %p87 = por %p85, %p86
    %p88 = scmp.ne.s32.totalorder %s74, %s75
    %p89 = scmp.eq.s32.totalorder %s15, 1
    %p90 = por %p88, %p89
    %p92 = scmp.ne.s32.totalorder %s75, %s91
    %p93 = scmp.eq.s32.totalorder %s15, 0
    %p94 = por %p92, %p93
    %s95 = ssub.s32 %s9, %s16
    %p96 = scmp.eq.s32.totalorder %s95, 0
    %s98 = sadd.s32 %s97, 1
    %s99 = scalar_select %p96, %s97, %s98
    %p102 = pneg %p96
    %p103 = scmp.eq.s32.totalorder %s9, 1
    %p104 = por %p102, %p103
    %p105 = scmp.ne.s32.totalorder %s97, %s100
    %p106 = scmp.eq.s32.totalorder %s9, 0
    %p107 = por %p105, %p106
    %p108 = scmp.ne.s32.totalorder %s97, %s100
    %p109 = scmp.eq.s32.totalorder %s14, 1
    %p110 = por %p108, %p109
    %p111 = scmp.ne.s32.totalorder %s100, %s101
    %p112 = scmp.eq.s32.totalorder %s14, 0
    %p113 = por %p111, %p112
    %p114 = scmp.ne.s32.totalorder %s100, %s101
    %p115 = scmp.eq.s32.totalorder %s15, 1
    %p116 = por %p114, %p115
    %p118 = scmp.ne.s32.totalorder %s101, %s117
    %p119 = scmp.eq.s32.totalorder %s15, 0
    %p120 = por %p118, %p119
    %p121 = scmp.le.s32.totalorder 1, %s9
    %p122 = scmp.lt.s32.totalorder %s9, 3
    %p123 = pnand %p121, %p122
    %p124 = pneg %p123
    // Predicated region
    $region9: #{_lambda_.185} parent=5 // pred_check
      _
    $region10: #{_lambda_.185} parent=5 // pred_check_branch
      %126 = sbr.rel (%p123) target = $region12
    $region11: #{_lambda_.185} parent=5 // pred_region
      %s127 = ssub.s32 %s9, 1
    $region12: #{_lambda_.185} parent=5 // pred_fallthru
      _
    %p128 = scmp.lt.s32.totalorder %s9, 2
    // Predicated region
    $region13: #{_lambda_.185} parent=5 // pred_check
      %p129 = pneg %p128
    $region14: #{_lambda_.185} parent=5 // pred_check_branch
      %131 = sbr.rel (%p129) target = $region16
    $region15: #{_lambda_.185} parent=5 // pred_region
      // Predicated region
      $region17: #{_lambda_.185} parent=15 // pred_check
        %p132 = pneg %p29
      $region18: #{_lambda_.185} parent=15 // pred_check_branch
        %134 = sbr.rel (%p132) target = $region20
      $region19: #{_lambda_.185} parent=15 // pred_region
        %p135 = scmp.lt.s32.totalorder %s9, 1
        %s136 = scalar_select %p135, %s9, 1
        %s137 = smul.addr %s136, 4
        %s138 = smul.addr %s137, 8
        %s139 = scalar_lea.vmem %s0, %s138
      $region20: #{_lambda_.185} parent=15 // pred_fallthru
        _
      // Predicated region
      $region21: #{_lambda_.185} parent=15 // pred_check
        %p140 = pneg %p55
      $region22: #{_lambda_.185} parent=15 // pred_check_branch
        %142 = sbr.rel (%p140) target = $region24
      $region23: #{_lambda_.185} parent=15 // pred_region
        %p143 = scmp.lt.s32.totalorder %s9, 1
        %s144 = scalar_select %p143, %s9, 1
        %s145 = smul.addr %s144, 8
        %s146 = scalar_lea.vmem %s1, %s145
      $region24: #{_lambda_.185} parent=15 // pred_fallthru
        _
      // Predicated region
      $region25: #{_lambda_.185} parent=15 // pred_check
        %p147 = pneg %p81
      $region26: #{_lambda_.185} parent=15 // pred_check_branch
        %149 = sbr.rel (%p147) target = $region28
      $region27: #{_lambda_.185} parent=15 // pred_region
        %p150 = scmp.lt.s32.totalorder %s9, 1
        %s151 = scalar_select %p150, %s9, 1
        %s152 = smul.addr %s151, 8
        %s153 = scalar_lea.vmem %s2, %s152
      $region28: #{_lambda_.185} parent=15 // pred_fallthru
        _
    $region16: #{_lambda_.185} parent=5 // pred_fallthru
      _
    %p154 = scmp.le.s32.totalorder 1, %s9
    %p155 = scmp.lt.s32.totalorder %s9, 3
    %p156 = pnand %p154, %p155
    %p157 = pneg %p156
    // Predicated region
    $region29: #{_lambda_.185} parent=5 // pred_check
      _
    $region30: #{_lambda_.185} parent=5 // pred_check_branch
      %159 = sbr.rel (%p156) target = $region32
    $region31: #{_lambda_.185} parent=5 // pred_region
      %s160 = ssub.s32 %s9, 1
      %p161 = scmp.lt.s32.totalorder %s14, 1
      %s162 = scalar_select %p161, %s14, 1
      %s163 = smul.addr %s162, 4
      %s164 = smul.addr %s163, 8
      %s165 = scalar_lea.vmem %s0, %s164
      %p166 = pneg %p35
      %p167 = pneg %p32
      %p168 = scmp.lt.s32.totalorder %s14, 1
      %s169 = scalar_select %p168, %s14, 1
      %s170 = smul.addr %s169, 8
      %s171 = scalar_lea.vmem %s1, %s170
      %p172 = pneg %p61
      %p173 = pneg %p58
      %p174 = scmp.lt.s32.totalorder %s14, 1
      %s175 = scalar_select %p174, %s14, 1
      %s176 = smul.addr %s175, 8
      %s177 = scalar_lea.vmem %s2, %s176
      %p178 = pneg %p87
      %p179 = pneg %p84
      %p180 = pneg %p113
      %p181 = pneg %p110
      %p182 = scmp.lt.s32.totalorder %s14, 1
      %s183 = scalar_select %p182, %s14, 1
      %s184 = smul.addr %s183, 4
      %s185 = smul.addr %s184, 8
      %s186 = scalar_lea.vmem %s3, %s185
      %p187 = scmp.lt.s32.totalorder %s14, 1
      %s188 = scalar_select %p187, %s14, 1
      %s189 = smul.addr %s188, 4
      %s190 = smul.addr %s189, 8
      %s191 = scalar_lea.vmem %s0, %s190
      %p192 = scmp.lt.s32.totalorder %s14, 1
      %s193 = scalar_select %p192, %s14, 1
      %s194 = smul.addr %s193, 8
      %s195 = scalar_lea.vmem %s1, %s194
      %p196 = scmp.lt.s32.totalorder %s14, 1
      %s197 = scalar_select %p196, %s14, 1
      %s198 = smul.addr %s197, 8
      %s199 = scalar_lea.vmem %s2, %s198
      %p200 = scmp.lt.s32.totalorder %s14, 1
      %s201 = scalar_select %p200, %s14, 1
      %s202 = smul.addr %s201, 4
      %s203 = smul.addr %s202, 8
      %s204 = scalar_lea.vmem %s3, %s203
      %v206 = vld [vmem:[%s191] sm:$0xff]
      %v207 = vld [vmem:[%s191 + $0x8] sm:$0xff]
      %v208 = vld [vmem:[%s191 + $0x10] sm:$0xff]
      %v209 = vld [vmem:[%s191 + $0x18] sm:$0xff]
      %v210 = vld [vmem:[%s195] sm:$0xff]
      %v211 = vld [vmem:[%s199] sm:$0xff]
      %v212 = vpack.c.bf16 %v207, %v206
      %v213 = vpack.c.bf16 %v209, %v208
      %v214 = vpack.c.bf16 %v210, %v210
      %v215 = vpack.c.bf16 %v211, %v211
      %vm216 = vcmask 130048
      %v218 = vsel %vm216, %v212, 0
      %v221 = vsel %vm216, %v213, 0
      %v224 = vsel %vm216, %v214, 0
      %226 = vmatprep.subr.bf16.mxu0 0
      %227 = vmatpush1.bf16.xpose.msra.mxu0 %v224
      %228 = vmatprep.subr.bf16.mxu0 0
      %229 = vmatpush1.bf16.xpose.msra.mxu0 0
      %230 = vmatprep.subr.bf16.mxu0 0
      %231 = vmatpush1.bf16.xpose.msra.mxu0 0
      %232 = vmatprep.subr.bf16.mxu0 0
      %233 = vmatpush1.bf16.xpose.msra.mxu0 0
      %234 = vmatprep.subr.bf16.mxu0 0
      %235 = vmatpush1.bf16.xpose.msra.mxu0 0
      %236 = vmatprep.subr.bf16.mxu0 0
      %237 = vmatpush1.bf16.xpose.msra.mxu0 0
      %238 = vmatprep.subr.bf16.mxu0 0
      %239 = vmatpush1.bf16.xpose.msra.mxu0 0
      %240 = vmatprep.subr.bf16.mxu0 0
      %241 = vmatpush1.bf16.xpose.msra.mxu0 0
      %242 = vmatprep.subr.bf16.mxu0 0
      %243 = vmatpush1.bf16.xpose.msra.mxu0 0
      %244 = vmatprep.subr.bf16.mxu0 0
      %245 = vmatpush1.bf16.xpose.msra.mxu0 0
      %246 = vmatprep.subr.bf16.mxu0 0
      %247 = vmatpush1.bf16.xpose.msra.mxu0 0
      %248 = vmatprep.subr.bf16.mxu0 0
      %249 = vmatpush1.bf16.xpose.msra.mxu0 0
      %250 = vmatprep.subr.bf16.mxu0 0
      %251 = vmatpush1.bf16.xpose.msra.mxu0 0
      %252 = vmatprep.subr.bf16.mxu0 0
      %253 = vmatpush1.bf16.xpose.msra.mxu0 0
      %254 = vmatprep.subr.bf16.mxu0 0
      %255 = vmatpush1.bf16.xpose.msra.mxu0 0
      %256 = vmatprep.subr.bf16.mxu0 0
      %257 = vmatpush1.bf16.xpose.msra.mxu0 0
      %258 = vmatprep.mubr.bf16.mxu0 0
      %259 = vmatmul.mubr.bf16.gmra.mrb[0].mxu0 %v218
      %v260 = vpop.f32.mrb[0].mxu0
      %v261 = vadd.f32 0.0, %v260
      %v262 = vpop.f32.mrb[0].mxu0
      %v263 = vpop.f32.mrb[0].mxu0
      %v264 = vadd.f32 0.0, %v263
      %v265 = vpop.f32.mrb[0].mxu0
      %266 = vmatprep.mubr.bf16.mxu0 0
      %267 = vmatmul.mubr.bf16.gmra.mrb[0].mxu0 %v221
      %v268 = vpop.f32.mrb[0].mxu0
      %v269 = vadd.f32 0.0, %v268
      %v270 = vpop.f32.mrb[0].mxu0
      %v271 = vpop.f32.mrb[0].mxu0
      %v272 = vadd.f32 0.0, %v271
      %v273 = vpop.f32.mrb[0].mxu0
      %274 = vdwg.mxu0
      %v275 = vmul.f32 %v261, 0.25
      %v276 = vmul.f32 %v264, 0.25
      %v277 = vmul.f32 %v269, 0.25
      %v278 = vmul.f32 %v272, 0.25
      %vm279 = vcmask 64512
      %v280 = vsel %vm279, %v275, -inf
      %281 = vmax.xlane.f32.xlu0 %v280
      %v282 = vpop.xlane.xlu0 %281
      %v283 = vsel %vm279, %v276, -inf
      %284 = vmax.xlane.f32.xlu0 %v283
      %v285 = vpop.xlane.xlu0 %284
      %v286 = vsel %vm279, %v277, -inf
      %287 = vmax.xlane.f32.xlu0 %v286
      %v288 = vpop.xlane.xlu0 %287
      %v289 = vsel %vm279, %v278, -inf
      %290 = vmax.xlane.f32.xlu0 %v289
      %v291 = vpop.xlane.xlu0 %290
      %v292 = vsub.f32 %v275, %v282
      %v293 = vsub.f32 %v276, %v285
      %v294 = vsub.f32 %v277, %v288
      %v295 = vsub.f32 %v278, %v291
      %v296 = vmul.f32 %v292, 1.442695
      %v297 = vpow.pop %v296
      %v298 = vmul.f32 %v293, 1.442695
      %v299 = vpow.pop %v298
      %v300 = vmul.f32 %v294, 1.442695
      %v301 = vpow.pop %v300
      %v302 = vmul.f32 %v295, 1.442695
      %v303 = vpow.pop %v302
      %v304 = vsel %vm279, %v297, 0.0
      %305 = vadd.xlane.f32.xlu0 %v304
      %v306 = vpop.xlane.xlu0 %305
      %v307 = vsel %vm279, %v299, 0.0
      %308 = vadd.xlane.f32.xlu0 %v307
      %v309 = vpop.xlane.xlu0 %308
      %v310 = vsel %vm279, %v301, 0.0
      %311 = vadd.xlane.f32.xlu0 %v310
      %v312 = vpop.xlane.xlu0 %311
      %v313 = vsel %vm279, %v303, 0.0
      %314 = vadd.xlane.f32.xlu0 %v313
      %v315 = vpop.xlane.xlu0 %314
      %v316 = vrcp.pop %v306
      %v317 = vrcp.pop %v309
      %v318 = vrcp.pop %v312
      %v319 = vrcp.pop %v315
      %v320 = vmul.f32 %v297, %v316
      %v321 = vmul.f32 %v299, %v317
      %v322 = vmul.f32 %v301, %v318
      %v323 = vmul.f32 %v303, %v319
      %v324 = vpack.c.bf16 %v321, %v320
      %v325 = vpack.c.bf16 %v323, %v322
      %v327 = vsel %vm279, %v324, 0
      %v330 = vsel %vm279, %v325, 0
      %vm332 = vcmask 1043456
      %v334 = vsel %vm332, %v215, 0
      %336 = vmatprep.subr.bf16.mxu0 0
      %337 = vmatpush1.bf16.msra.mxu0 %v334
      %338 = vmatprep.subr.bf16.mxu0 0
      %339 = vmatpush1.bf16.msra.mxu0 0
      %340 = vmatprep.subr.bf16.mxu0 0
      %341 = vmatpush1.bf16.msra.mxu0 0
      %342 = vmatprep.subr.bf16.mxu0 0
      %343 = vmatpush1.bf16.msra.mxu0 0
      %344 = vmatprep.subr.bf16.mxu0 0
      %345 = vmatpush1.bf16.msra.mxu0 0
      %346 = vmatprep.subr.bf16.mxu0 0
      %347 = vmatpush1.bf16.msra.mxu0 0
      %348 = vmatprep.subr.bf16.mxu0 0
      %349 = vmatpush1.bf16.msra.mxu0 0
      %350 = vmatprep.subr.bf16.mxu0 0
      %351 = vmatpush1.bf16.msra.mxu0 0
      %352 = vmatprep.subr.bf16.mxu0 0
      %353 = vmatpush1.bf16.msra.mxu0 0
      %354 = vmatprep.subr.bf16.mxu0 0
      %355 = vmatpush1.bf16.msra.mxu0 0
      %356 = vmatprep.subr.bf16.mxu0 0
      %357 = vmatpush1.bf16.msra.mxu0 0
      %358 = vmatprep.subr.bf16.mxu0 0
      %359 = vmatpush1.bf16.msra.mxu0 0
      %360 = vmatprep.subr.bf16.mxu0 0
      %361 = vmatpush1.bf16.msra.mxu0 0
      %362 = vmatprep.subr.bf16.mxu0 0
      %363 = vmatpush1.bf16.msra.mxu0 0
      %364 = vmatprep.subr.bf16.mxu0 0
      %365 = vmatpush1.bf16.msra.mxu0 0
      %366 = vmatprep.subr.bf16.mxu0 0
      %367 = vmatpush1.bf16.msra.mxu0 0
      %368 = vmatprep.mubr.bf16.mxu0 0
      %369 = vmatmul.mubr.bf16.gmra.mrb[0].mxu0 %v327
      %v370 = vpop.f32.mrb[0].mxu0
      %v371 = vadd.f32 0.0, %v370
      %v372 = vpop.f32.mrb[0].mxu0
      %v373 = vpop.f32.mrb[0].mxu0
      %v374 = vadd.f32 0.0, %v373
      %v375 = vpop.f32.mrb[0].mxu0
      %376 = vmatprep.mubr.bf16.mxu0 0
      %377 = vmatmul.mubr.bf16.gmra.mrb[0].mxu0 %v330
      %v378 = vpop.f32.mrb[0].mxu0
      %v379 = vadd.f32 0.0, %v378
      %v380 = vpop.f32.mrb[0].mxu0
      %v381 = vpop.f32.mrb[0].mxu0
      %v382 = vadd.f32 0.0, %v381
      %v383 = vpop.f32.mrb[0].mxu0
      %384 = vdwg.mxu0
      %387 = vrot.lane.b32.xlu0 %v212, 112
      %v388 = vpop.permute.xlu0 %387
      %389 = vrot.lane.b32.xlu0 %v213, 112
      %v390 = vpop.permute.xlu0 %389
      %392 = vrot.lane.b32.xlu0 %v214, 112
      %v393 = vpop.permute.xlu0 %392
      %v395 = vsel %vm216, %v388, 0
      %v398 = vsel %vm216, %v390, 0
      %v401 = vsel %vm216, %v393, 0
      %403 = vmatprep.subr.bf16.mxu0 0
      %404 = vmatpush1.bf16.xpose.msra.mxu0 %v401
      %405 = vmatprep.subr.bf16.mxu0 0
      %406 = vmatpush1.bf16.xpose.msra.mxu0 0
      %407 = vmatprep.subr.bf16.mxu0 0
      %408 = vmatpush1.bf16.xpose.msra.mxu0 0
      %409 = vmatprep.subr.bf16.mxu0 0
      %410 = vmatpush1.bf16.xpose.msra.mxu0 0
      %411 = vmatprep.subr.bf16.mxu0 0
      %412 = vmatpush1.bf16.xpose.msra.mxu0 0
      %413 = vmatprep.subr.bf16.mxu0 0
      %414 = vmatpush1.bf16.xpose.msra.mxu0 0
      %415 = vmatprep.subr.bf16.mxu0 0
      %416 = vmatpush1.bf16.xpose.msra.mxu0 0
      %417 = vmatprep.subr.bf16.mxu0 0
      %418 = vmatpush1.bf16.xpose.msra.mxu0 0
      %419 = vmatprep.subr.bf16.mxu0 0
      %420 = vmatpush1.bf16.xpose.msra.mxu0 0
      %421 = vmatprep.subr.bf16.mxu0 0
      %422 = vmatpush1.bf16.xpose.msra.mxu0 0
      %423 = vmatprep.subr.bf16.mxu0 0
      %424 = vmatpush1.bf16.xpose.msra.mxu0 0
      %425 = vmatprep.subr.bf16.mxu0 0
      %426 = vmatpush1.bf16.xpose.msra.mxu0 0
      %427 = vmatprep.subr.bf16.mxu0 0
      %428 = vmatpush1.bf16.xpose.msra.mxu0 0
      %429 = vmatprep.subr.bf16.mxu0 0
      %430 = vmatpush1.bf16.xpose.msra.mxu0 0
      %431 = vmatprep.subr.bf16.mxu0 0
      %432 = vmatpush1.bf16.xpose.msra.mxu0 0
      %433 = vmatprep.subr.bf16.mxu0 0
      %434 = vmatpush1.bf16.xpose.msra.mxu0 0
      %435 = vmatprep.mubr.bf16.mxu0 0
      %436 = vmatmul.mubr.bf16.gmra.mrb[0].mxu0 %v395
      %v437 = vpop.f32.mrb[0].mxu0
      %v438 = vadd.f32 0.0, %v437
      %v439 = vpop.f32.mrb[0].mxu0
      %v440 = vpop.f32.mrb[0].mxu0
      %v441 = vadd.f32 0.0, %v440
      %v442 = vpop.f32.mrb[0].mxu0
      %443 = vmatprep.mubr.bf16.mxu0 0
      %444 = vmatmul.mubr.bf16.gmra.mrb[0].mxu0 %v398
      %v445 = vpop.f32.mrb[0].mxu0
      %v446 = vadd.f32 0.0, %v445
      %v447 = vpop.f32.mrb[0].mxu0
      %v448 = vpop.f32.mrb[0].mxu0
      %v449 = vadd.f32 0.0, %v448
      %v450 = vpop.f32.mrb[0].mxu0
      %451 = vdwg.mxu0
      %v452 = vmul.f32 %v438, 0.25
      %v453 = vmul.f32 %v441, 0.25
      %v454 = vmul.f32 %v446, 0.25
      %v455 = vmul.f32 %v449, 0.25
      %v456 = vsel %vm279, %v452, -inf
      %457 = vmax.xlane.f32.xlu0 %v456
      %v458 = vpop.xlane.xlu0 %457
      %v459 = vsel %vm279, %v453, -inf
      %460 = vmax.xlane.f32.xlu0 %v459
      %v461 = vpop.xlane.xlu0 %460
      %v462 = vsel %vm279, %v454, -inf
      %463 = vmax.xlane.f32.xlu0 %v462
      %v464 = vpop.xlane.xlu0 %463
      %v465 = vsel %vm279, %v455, -inf
      %466 = vmax.xlane.f32.xlu0 %v465
      %v467 = vpop.xlane.xlu0 %466
      %v468 = vsub.f32 %v452, %v458
      %v469 = vsub.f32 %v453, %v461
      %v470 = vsub.f32 %v454, %v464
      %v471 = vsub.f32 %v455, %v467
      %v472 = vmul.f32 %v468, 1.442695
      %v473 = vpow.pop %v472
      %v474 = vmul.f32 %v469, 1.442695
      %v475 = vpow.pop %v474
      %v476 = vmul.f32 %v470, 1.442695
      %v477 = vpow.pop %v476
      %v478 = vmul.f32 %v471, 1.442695
      %v479 = vpow.pop %v478
      %v480 = vsel %vm279, %v473, 0.0
      %481 = vadd.xlane.f32.xlu0 %v480
      %v482 = vpop.xlane.xlu0 %481
      %v483 = vsel %vm279, %v475, 0.0
      %484 = vadd.xlane.f32.xlu0 %v483
      %v485 = vpop.xlane.xlu0 %484
      %v486 = vsel %vm279, %v477, 0.0
      %487 = vadd.xlane.f32.xlu0 %v486
      %v488 = vpop.xlane.xlu0 %487
      %v489 = vsel %vm279, %v479, 0.0
      %490 = vadd.xlane.f32.xlu0 %v489
      %v491 = vpop.xlane.xlu0 %490
      %v492 = vrcp.pop %v482
      %v493 = vrcp.pop %v485
      %v494 = vrcp.pop %v488
      %v495 = vrcp.pop %v491
      %v496 = vmul.f32 %v473, %v492
      %v497 = vmul.f32 %v475, %v493
      %v498 = vmul.f32 %v477, %v494
      %v499 = vmul.f32 %v479, %v495
      %v500 = vpack.c.bf16 %v497, %v496
      %v501 = vpack.c.bf16 %v499, %v498
      %503 = vrot.lane.b32.xlu0 %v215, 112
      %v504 = vpop.permute.xlu0 %503
      %v506 = vsel %vm279, %v500, 0
      %v509 = vsel %vm279, %v501, 0
      %v512 = vsel %vm332, %v504, 0
      %514 = vmatprep.subr.bf16.mxu0 0
      %515 = vmatpush1.bf16.msra.mxu0 %v512
      %516 = vmatprep.subr.bf16.mxu0 0
      %517 = vmatpush1.bf16.msra.mxu0 0
      %518 = vmatprep.subr.bf16.mxu0 0
      %519 = vmatpush1.bf16.msra.mxu0 0
      %520 = vmatprep.subr.bf16.mxu0 0
      %521 = vmatpush1.bf16.msra.mxu0 0
      %522 = vmatprep.subr.bf16.mxu0 0
      %523 = vmatpush1.bf16.msra.mxu0 0
      %524 = vmatprep.subr.bf16.mxu0 0
      %525 = vmatpush1.bf16.msra.mxu0 0
      %526 = vmatprep.subr.bf16.mxu0 0
      %527 = vmatpush1.bf16.msra.mxu0 0
      %528 = vmatprep.subr.bf16.mxu0 0
      %529 = vmatpush1.bf16.msra.mxu0 0
      %530 = vmatprep.subr.bf16.mxu0 0
      %531 = vmatpush1.bf16.msra.mxu0 0
      %532 = vmatprep.subr.bf16.mxu0 0
      %533 = vmatpush1.bf16.msra.mxu0 0
      %534 = vmatprep.subr.bf16.mxu0 0
      %535 = vmatpush1.bf16.msra.mxu0 0
      %536 = vmatprep.subr.bf16.mxu0 0
      %537 = vmatpush1.bf16.msra.mxu0 0
      %538 = vmatprep.subr.bf16.mxu0 0
      %539 = vmatpush1.bf16.msra.mxu0 0
      %540 = vmatprep.subr.bf16.mxu0 0
      %541 = vmatpush1.bf16.msra.mxu0 0
      %542 = vmatprep.subr.bf16.mxu0 0
      %543 = vmatpush1.bf16.msra.mxu0 0
      %544 = vmatprep.subr.bf16.mxu0 0
      %545 = vmatpush1.bf16.msra.mxu0 0
      %546 = vmatprep.mubr.bf16.mxu0 0
      %547 = vmatmul.mubr.bf16.gmra.mrb[0].mxu0 %v506
      %v548 = vpop.f32.mrb[0].mxu0
      %v549 = vadd.f32 0.0, %v548
      %v550 = vpop.f32.mrb[0].mxu0
      %v551 = vpop.f32.mrb[0].mxu0
      %v552 = vadd.f32 0.0, %v551
      %v553 = vpop.f32.mrb[0].mxu0
      %554 = vmatprep.mubr.bf16.mxu0 0
      %555 = vmatmul.mubr.bf16.gmra.mrb[0].mxu0 %v509
      %v556 = vpop.f32.mrb[0].mxu0
      %v557 = vadd.f32 0.0, %v556
      %v558 = vpop.f32.mrb[0].mxu0
      %v559 = vpop.f32.mrb[0].mxu0
      %v560 = vadd.f32 0.0, %v559
      %v561 = vpop.f32.mrb[0].mxu0
      %562 = vdwg.mxu0
      %567 = vrot.lane.b32.xlu0 %v549, 16
      %v568 = vpop.permute.xlu0 %567
      %569 = vrot.lane.b32.xlu0 %v552, 16
      %v570 = vpop.permute.xlu0 %569
      %571 = vrot.lane.b32.xlu0 %v557, 16
      %v572 = vpop.permute.xlu0 %571
      %573 = vrot.lane.b32.xlu0 %v560, 16
      %v574 = vpop.permute.xlu0 %573
      %v579 = vsel %vm216, %v371, %v568
      %v580 = vsel %vm216, %v374, %v570
      %v581 = vsel %vm216, %v379, %v572
      %v582 = vsel %vm216, %v382, %v574
      %vm583 = vcmask 261120
      %584 = vst.msk [vmem:[%s204] sm:$0xff] %vm583, %v579
      %585 = vst.msk [vmem:[%s204 + $0x8] sm:$0xff] %vm583, %v580
      %586 = vst.msk [vmem:[%s204 + $0x10] sm:$0xff] %vm583, %v581
      %587 = vst.msk [vmem:[%s204 + $0x18] sm:$0xff] %vm583, %v582
      %p588 = scmp.lt.s32.totalorder %s14, 1
      %s589 = scalar_select %p588, %s14, 1
      %s590 = smul.addr %s589, 4
      %s591 = smul.addr %s590, 8
      %s592 = scalar_lea.vmem %s3, %s591
      // Predicated region
      $region33: #{_lambda_.185} parent=31 // pred_check
        %p593 = pneg %p110
      $region34: #{_lambda_.185} parent=31 // pred_check_branch
        %595 = sbr.rel (%p593) target = $region36
      $region35: #{_lambda_.185} parent=31 // pred_region
        _
      $region36: #{_lambda_.185} parent=31 // pred_fallthru
        _
    $region32: #{_lambda_.185} parent=5 // pred_fallthru
      _
    %p596 = scmp.le.s32.totalorder 2, %s9
    // Predicated region
    $region37: #{_lambda_.185} parent=5 // pred_check
      %p597 = pneg %p596
    $region38: #{_lambda_.185} parent=5 // pred_check_branch
      %599 = sbr.rel (%p597) target = $region40
    $region39: #{_lambda_.185} parent=5 // pred_region
      %s600 = ssub.s32 %s9, 2
      // Predicated region
      $region41: #{_lambda_.185} parent=39 // pred_check
        %p601 = pneg %p116
      $region42: #{_lambda_.185} parent=39 // pred_check_branch
        %603 = sbr.rel (%p601) target = $region44
      $region43: #{_lambda_.185} parent=39 // pred_region
        %p604 = scmp.lt.s32.totalorder %s15, 1
        %s605 = scalar_select %p604, %s15, 1
        %s606 = smul.addr %s605, 4
        %s607 = smul.addr %s606, 8
        %s608 = scalar_lea.vmem %s3, %s607
      $region44: #{_lambda_.185} parent=39 // pred_fallthru
        _
    $region40: #{_lambda_.185} parent=5 // pred_fallthru
      _
  $region6: #{_lambda_.185} parent=0 // loop_footer
    %s13 = sadd.s32 1, %s9
  $region7: #{_lambda_.185} parent=0 // loop_footer_branch
    %8 = sbr.rel target = $region3
  $region8: #{_lambda_.185} parent=0 // loop_exit
    _

// kernel: _lambda_.188
$region0: #{_lambda_.188}
  #allocation0 [shape = 'u32[]', space=smem, size = 0x4, offset = 0x4, fixed_abs, tag = 'smem constant byte address 0x4 - core index']
  #allocation1 [shape = 'u32[144,128]{1,0:T(1,128)}', space=vmem, size = 0x12000, scoped, tag = 'internal scratch']
  #allocation2 [shape = 'f32[64,128]{1,0:T(8,128)}', space=vmem, size = 0x8000, scoped, tag = 'scratch operand']
  %s0 = inlined_call_operand.vmem [shape: bf16[64,128], index: 0, kind: input, shape index: {}]
  %s1 = inlined_call_operand.vmem [shape: bf16[128,128], index: 1, kind: input, shape index: {}]
  %s2 = inlined_call_operand.vmem [shape: f32[1,128], index: 2, kind: input, shape index: {}]
  %s3 = inlined_call_operand.vmem [shape: f32[64,128], index: 3, kind: output, shape index: {}]
  %s4 = sld [smem:[#allocation0]]
  $region30: #{_lambda_.188} parent=0
    _
  %s6 = ssub.s32 1, %s4
  %s7 = scalar_select 0, %s6, %s4
  // Predicated region
  $region2: #{_lambda_.188} parent=0 // pred_check
    _
  $region3: #{_lambda_.188} parent=0 // pred_check_branch
    %9 = sbr.rel (0) target = $region5
  $region4: #{_lambda_.188} parent=0 // pred_region
    _
  $region5: #{_lambda_.188} parent=0 // pred_fallthru
    _
  // Predicated region
  $region6: #{_lambda_.188} parent=0 // pred_check
    _
  $region7: #{_lambda_.188} parent=0 // pred_check_branch
    %11 = sbr.rel (0) target = $region9
  $region8: #{_lambda_.188} parent=0 // pred_region
    _
  $region9: #{_lambda_.188} parent=0 // pred_fallthru
    _
  // Predicated region
  $region10: #{_lambda_.188} parent=0 // pred_check
    _
  $region11: #{_lambda_.188} parent=0 // pred_check_branch
    %13 = sbr.rel (0) target = $region13
  $region12: #{_lambda_.188} parent=0 // pred_region
    _
  $region13: #{_lambda_.188} parent=0 // pred_fallthru
    _
  %p15 = scmp.eq.s32.totalorder 0, 0
  // Predicated region
  $region14: #{_lambda_.188} parent=0 // pred_check
    %p16 = pneg %p15
  $region15: #{_lambda_.188} parent=0 // pred_check_branch
    %18 = sbr.rel (%p16) target = $region17
  $region16: #{_lambda_.188} parent=0 // pred_region
    %19 = vst [vmem:[#allocation2] sm:$0xff] 0.0
    %20 = vst [vmem:[#allocation2 + $0x8] sm:$0xff] 0.0
    %21 = vst [vmem:[#allocation2 + $0x10] sm:$0xff] 0.0
    %22 = vst [vmem:[#allocation2 + $0x18] sm:$0xff] 0.0
    %23 = vst [vmem:[#allocation2 + $0x20] sm:$0xff] 0.0
    %24 = vst [vmem:[#allocation2 + $0x28] sm:$0xff] 0.0
    %25 = vst [vmem:[#allocation2 + $0x30] sm:$0xff] 0.0
    %26 = vst [vmem:[#allocation2 + $0x38] sm:$0xff] 0.0
  $region17: #{_lambda_.188} parent=0 // pred_fallthru
    _
  %v27 = vld [vmem:[#allocation2] sm:$0xff]
  %v28 = vld [vmem:[#allocation2 + $0x8] sm:$0xff]
  %v29 = vld [vmem:[#allocation2 + $0x10] sm:$0xff]
  %v30 = vld [vmem:[#allocation2 + $0x18] sm:$0xff]
  %v31 = vld [vmem:[#allocation2 + $0x20] sm:$0xff]
  %v32 = vld [vmem:[#allocation2 + $0x28] sm:$0xff]
  %v33 = vld [vmem:[#allocation2 + $0x30] sm:$0xff]
  %v34 = vld [vmem:[#allocation2 + $0x38] sm:$0xff]
  %v35 = vld [vmem:[%s0] sm:$0xf]
  %v36 = vld [vmem:[%s0 + $0x4] sm:$0xf]
  %v37 = vld [vmem:[%s0 + $0x8] sm:$0xf]
  %v38 = vld [vmem:[%s0 + $0xc] sm:$0xf]
  %v39 = vld [vmem:[%s0 + $0x10] sm:$0xf]
  %v40 = vld [vmem:[%s0 + $0x14] sm:$0xf]
  %v41 = vld [vmem:[%s0 + $0x18] sm:$0xf]
  %v42 = vld [vmem:[%s0 + $0x1c] sm:$0xf]
  %v43 = vld [vmem:[%s1] sm:$0xf]
  %v44 = vld [vmem:[%s1 + $0x4] sm:$0xf]
  %v45 = vld [vmem:[%s1 + $0x8] sm:$0xf]
  %v46 = vld [vmem:[%s1 + $0xc] sm:$0xf]
  %v47 = vld [vmem:[%s1 + $0x10] sm:$0xf]
  %v48 = vld [vmem:[%s1 + $0x14] sm:$0xf]
  %v49 = vld [vmem:[%s1 + $0x18] sm:$0xf]
  %v50 = vld [vmem:[%s1 + $0x1c] sm:$0xf]
  %v51 = vld [vmem:[%s1 + $0x20] sm:$0xf]
  %v52 = vld [vmem:[%s1 + $0x24] sm:$0xf]
  %v53 = vld [vmem:[%s1 + $0x28] sm:$0xf]
  %v54 = vld [vmem:[%s1 + $0x2c] sm:$0xf]
  %v55 = vld [vmem:[%s1 + $0x30] sm:$0xf]
  %v56 = vld [vmem:[%s1 + $0x34] sm:$0xf]
  %v57 = vld [vmem:[%s1 + $0x38] sm:$0xf]
  %v58 = vld [vmem:[%s1 + $0x3c] sm:$0xf]
  %v67 = vunpack.c.l.b16 %v35
  %v68 = vunpack.c.l.b16 %v36
  %v69 = vunpack.c.l.b16 %v37
  %v70 = vunpack.c.l.b16 %v38
  %v71 = vunpack.c.l.b16 %v39
  %v72 = vunpack.c.l.b16 %v40
  %v73 = vunpack.c.l.b16 %v41
  %v74 = vunpack.c.l.b16 %v42
  %v75 = vpack.c.b16 %v68, %v67
  %v76 = vpack.c.b16 %v70, %v69
  %v77 = vpack.c.b16 %v72, %v71
  %v78 = vpack.c.b16 %v74, %v73
  %v99 = vunpack.c.l.b16 %v43
  %v100 = vunpack.c.l.b16 %v44
  %v101 = vunpack.c.l.b16 %v45
  %v102 = vunpack.c.l.b16 %v46
  %v103 = vunpack.c.l.b16 %v47
  %v104 = vunpack.c.l.b16 %v48
  %v105 = vunpack.c.l.b16 %v49
  %v106 = vunpack.c.l.b16 %v50
  %v107 = vunpack.c.l.b16 %v51
  %v108 = vunpack.c.l.b16 %v52
  %v109 = vunpack.c.l.b16 %v53
  %v110 = vunpack.c.l.b16 %v54
  %v111 = vunpack.c.l.b16 %v55
  %v112 = vunpack.c.l.b16 %v56
  %v113 = vunpack.c.l.b16 %v57
  %v114 = vunpack.c.l.b16 %v58
  %v115 = vpack.c.b16 %v100, %v99
  %v116 = vpack.c.b16 %v102, %v101
  %v117 = vpack.c.b16 %v104, %v103
  %v118 = vpack.c.b16 %v106, %v105
  %v119 = vpack.c.b16 %v108, %v107
  %v120 = vpack.c.b16 %v110, %v109
  %v121 = vpack.c.b16 %v112, %v111
  %v122 = vpack.c.b16 %v114, %v113
  %131 = vmatprep.subr.bf16.mxu0 0
  %132 = vmatpush1.bf16.msra.mxu0 %v115
  %133 = vmatprep.subr.bf16.mxu0 0
  %134 = vmatpush1.bf16.msra.mxu0 %v116
  %135 = vmatprep.subr.bf16.mxu0 0
  %136 = vmatpush1.bf16.msra.mxu0 %v117
  %137 = vmatprep.subr.bf16.mxu0 0
  %138 = vmatpush1.bf16.msra.mxu0 %v118
  %139 = vmatprep.subr.bf16.mxu0 0
  %140 = vmatpush1.bf16.msra.mxu0 %v119
  %141 = vmatprep.subr.bf16.mxu0 0
  %142 = vmatpush1.bf16.msra.mxu0 %v120
  %143 = vmatprep.subr.bf16.mxu0 0
  %144 = vmatpush1.bf16.msra.mxu0 %v121
  %145 = vmatprep.subr.bf16.mxu0 0
  %146 = vmatpush1.bf16.msra.mxu0 %v122
  %147 = vmatprep.subr.bf16.mxu0 0
  %148 = vmatpush1.bf16.msra.mxu0 0
  %149 = vmatprep.subr.bf16.mxu0 0
  %150 = vmatpush1.bf16.msra.mxu0 0
  %151 = vmatprep.subr.bf16.mxu0 0
  %152 = vmatpush1.bf16.msra.mxu0 0
  %153 = vmatprep.subr.bf16.mxu0 0
  %154 = vmatpush1.bf16.msra.mxu0 0
  %155 = vmatprep.subr.bf16.mxu0 0
  %156 = vmatpush1.bf16.msra.mxu0 0
  %157 = vmatprep.subr.bf16.mxu0 0
  %158 = vmatpush1.bf16.msra.mxu0 0
  %159 = vmatprep.subr.bf16.mxu0 0
  %160 = vmatpush1.bf16.msra.mxu0 0
  %161 = vmatprep.subr.bf16.mxu0 0
  %162 = vmatpush1.bf16.msra.mxu0 0
  %163 = vmatprep.mubr.bf16.mxu0 0
  %164 = vmatmul.mubr.bf16.gmra.mrb[0].mxu0 %v75
  %v165 = vpop.f32.mrb[0].mxu0
  %v166 = vadd.f32 0.0, %v165
  %v167 = vpop.f32.mrb[0].mxu0
  %v168 = vpop.f32.mrb[0].mxu0
  %v169 = vadd.f32 0.0, %v168
  %v170 = vpop.f32.mrb[0].mxu0
  %171 = vmatprep.mubr.bf16.mxu0 0
  %172 = vmatmul.mubr.bf16.gmra.mrb[0].mxu0 %v76
  %v173 = vpop.f32.mrb[0].mxu0
  %v174 = vadd.f32 0.0, %v173
  %v175 = vpop.f32.mrb[0].mxu0
  %v176 = vpop.f32.mrb[0].mxu0
  %v177 = vadd.f32 0.0, %v176
  %v178 = vpop.f32.mrb[0].mxu0
  %179 = vmatprep.mubr.bf16.mxu0 0
  %180 = vmatmul.mubr.bf16.gmra.mrb[0].mxu0 %v77
  %v181 = vpop.f32.mrb[0].mxu0
  %v182 = vadd.f32 0.0, %v181
  %v183 = vpop.f32.mrb[0].mxu0
  %v184 = vpop.f32.mrb[0].mxu0
  %v185 = vadd.f32 0.0, %v184
  %v186 = vpop.f32.mrb[0].mxu0
  %187 = vmatprep.mubr.bf16.mxu0 0
  %188 = vmatmul.mubr.bf16.gmra.mrb[0].mxu0 %v78
  %v189 = vpop.f32.mrb[0].mxu0
  %v190 = vadd.f32 0.0, %v189
  %v191 = vpop.f32.mrb[0].mxu0
  %v192 = vpop.f32.mrb[0].mxu0
  %v193 = vadd.f32 0.0, %v192
  %v194 = vpop.f32.mrb[0].mxu0
  %195 = vdwg.mxu0
  %v196 = vadd.f32 %v27, %v166
  %v197 = vadd.f32 %v28, %v169
  %v198 = vadd.f32 %v29, %v174
  %v199 = vadd.f32 %v30, %v177
  %v200 = vadd.f32 %v31, %v182
  %v201 = vadd.f32 %v32, %v185
  %v202 = vadd.f32 %v33, %v190
  %v203 = vadd.f32 %v34, %v193
  %204 = vst [vmem:[#allocation2] sm:$0xff] %v196
  %205 = vst [vmem:[#allocation2 + $0x8] sm:$0xff] %v197
  %206 = vst [vmem:[#allocation2 + $0x10] sm:$0xff] %v198
  %207 = vst [vmem:[#allocation2 + $0x18] sm:$0xff] %v199
  %208 = vst [vmem:[#allocation2 + $0x20] sm:$0xff] %v200
  %209 = vst [vmem:[#allocation2 + $0x28] sm:$0xff] %v201
  %210 = vst [vmem:[#allocation2 + $0x30] sm:$0xff] %v202
  %211 = vst [vmem:[#allocation2 + $0x38] sm:$0xff] %v203
  // Predicated region
  $region18: #{_lambda_.188} parent=0 // pred_check
    %p212 = pneg %p15
  $region19: #{_lambda_.188} parent=0 // pred_check_branch
    %214 = sbr.rel (%p212) target = $region21
  $region20: #{_lambda_.188} parent=0 // pred_region
    %v215 = vld [vmem:[#allocation2] sm:$0xff]
    %v216 = vld [vmem:[#allocation2 + $0x8] sm:$0xff]
    %v217 = vld [vmem:[#allocation2 + $0x10] sm:$0xff]
    %v218 = vld [vmem:[#allocation2 + $0x18] sm:$0xff]
    %v219 = vld [vmem:[#allocation2 + $0x20] sm:$0xff]
    %v220 = vld [vmem:[#allocation2 + $0x28] sm:$0xff]
    %v221 = vld [vmem:[#allocation2 + $0x30] sm:$0xff]
    %v222 = vld [vmem:[#allocation2 + $0x38] sm:$0xff]
    %v223 = vld [vmem:[%s2] sm:$0x1]
    %v225 = vlaneseq
    %v226 = vshrl.u32 %v225, 7
    %v227 = vsub.s32 0, %v226
    %v228 = vrot.slane %v223, %v227
    %v230 = vadd.f32 %v215, %v228
    %v231 = vadd.f32 %v216, %v228
    %v232 = vadd.f32 %v217, %v228
    %v233 = vadd.f32 %v218, %v228
    %v234 = vadd.f32 %v219, %v228
    %v235 = vadd.f32 %v220, %v228
    %v236 = vadd.f32 %v221, %v228
    %v237 = vadd.f32 %v222, %v228
    %v238 = vmul.f32 %v230, %v230
    %v239 = vmul.f32 %v231, %v231
    %v240 = vmul.f32 %v232, %v232
    %v241 = vmul.f32 %v233, %v233
    %v242 = vmul.f32 %v234, %v234
    %v243 = vmul.f32 %v235, %v235
    %v244 = vmul.f32 %v236, %v236
    %v245 = vmul.f32 %v237, %v237
    %v246 = vmul.f32 %v230, %v238
    %v247 = vmul.f32 %v231, %v239
    %v248 = vmul.f32 %v232, %v240
    %v249 = vmul.f32 %v233, %v241
    %v250 = vmul.f32 %v234, %v242
    %v251 = vmul.f32 %v235, %v243
    %v252 = vmul.f32 %v236, %v244
    %v253 = vmul.f32 %v237, %v245
    %v254 = vmul.f32 %v246, 0.044715
    %v255 = vmul.f32 %v247, 0.044715
    %v256 = vmul.f32 %v248, 0.044715
    %v257 = vmul.f32 %v249, 0.044715
    %v258 = vmul.f32 %v250, 0.044715
    %v259 = vmul.f32 %v251, 0.044715
    %v260 = vmul.f32 %v252, 0.044715
    %v261 = vmul.f32 %v253, 0.044715
    %v262 = vadd.f32 %v230, %v254
    %v263 = vadd.f32 %v231, %v255
    %v264 = vadd.f32 %v232, %v256
    %v265 = vadd.f32 %v233, %v257
    %v266 = vadd.f32 %v234, %v258
    %v267 = vadd.f32 %v235, %v259
    %v268 = vadd.f32 %v236, %v260
    %v269 = vadd.f32 %v237, %v261
    %v270 = vmul.f32 %v262, 0.7978846
    %v271 = vmul.f32 %v263, 0.7978846
    %v272 = vmul.f32 %v264, 0.7978846
    %v273 = vmul.f32 %v265, 0.7978846
    %v274 = vmul.f32 %v266, 0.7978846
    %v275 = vmul.f32 %v267, 0.7978846
    %v276 = vmul.f32 %v268, 0.7978846
    %v277 = vmul.f32 %v269, 0.7978846
    %v278 = vtanh.pop %v270
    %v279 = vtanh.pop %v271
    %v280 = vtanh.pop %v272
    %v281 = vtanh.pop %v273
    %v282 = vtanh.pop %v274
    %v283 = vtanh.pop %v275
    %v284 = vtanh.pop %v276
    %v285 = vtanh.pop %v277
    %v286 = vadd.f32 %v278, 1.0
    %v287 = vadd.f32 %v279, 1.0
    %v288 = vadd.f32 %v280, 1.0
    %v289 = vadd.f32 %v281, 1.0
    %v290 = vadd.f32 %v282, 1.0
    %v291 = vadd.f32 %v283, 1.0
    %v292 = vadd.f32 %v284, 1.0
    %v293 = vadd.f32 %v285, 1.0
    %v294 = vmul.f32 %v286, 0.5
    %v295 = vmul.f32 %v287, 0.5
    %v296 = vmul.f32 %v288, 0.5
    %v297 = vmul.f32 %v289, 0.5
    %v298 = vmul.f32 %v290, 0.5
    %v299 = vmul.f32 %v291, 0.5
    %v300 = vmul.f32 %v292, 0.5
    %v301 = vmul.f32 %v293, 0.5
    %v302 = vmul.f32 %v230, %v294
    %v303 = vmul.f32 %v231, %v295
    %v304 = vmul.f32 %v232, %v296
    %v305 = vmul.f32 %v233, %v297
    %v306 = vmul.f32 %v234, %v298
    %v307 = vmul.f32 %v235, %v299
    %v308 = vmul.f32 %v236, %v300
    %v309 = vmul.f32 %v237, %v301
    %310 = vst [vmem:[%s3] sm:$0xff] %v302
    %311 = vst [vmem:[%s3 + $0x8] sm:$0xff] %v303
    %312 = vst [vmem:[%s3 + $0x10] sm:$0xff] %v304
    %313 = vst [vmem:[%s3 + $0x18] sm:$0xff] %v305
    %314 = vst [vmem:[%s3 + $0x20] sm:$0xff] %v306
    %315 = vst [vmem:[%s3 + $0x28] sm:$0xff] %v307
    %316 = vst [vmem:[%s3 + $0x30] sm:$0xff] %v308
    %317 = vst [vmem:[%s3 + $0x38] sm:$0xff] %v309
  $region21: #{_lambda_.188} parent=0 // pred_fallthru
    _
  // Predicated region
  $region22: #{_lambda_.188} parent=0 // pred_check
    _
  $region23: #{_lambda_.188} parent=0 // pred_check_branch
    %319 = sbr.rel (0) target = $region25
  $region24: #{_lambda_.188} parent=0 // pred_region
    _
  $region25: #{_lambda_.188} parent=0 // pred_fallthru
    _
  // Predicated region
  $region26: #{_lambda_.188} parent=0 // pred_check
    _
  $region27: #{_lambda_.188} parent=0 // pred_check_branch
    %321 = sbr.rel (0) target = $region29
  $region28: #{_lambda_.188} parent=0 // pred_region
    _
  $region29: #{_lambda_.188} parent=0 // pred_fallthru
    _

// kernel: _lambda_.209
$region0: #{_lambda_.209}
  #allocation0 [shape = 'u32[]', space=smem, size = 0x4, offset = 0x4, fixed_abs, tag = 'smem constant byte address 0x4 - core index']
  #allocation1 [shape = 'u32[144,128]{1,0:T(1,128)}', space=vmem, size = 0x12000, scoped, tag = 'internal scratch']
  %s0 = inlined_call_operand.vmem [shape: f32[16,32], index: 0, kind: input, shape index: {}]
  %s1 = inlined_call_operand.vmem [shape: f32[16,32], index: 1, kind: input, shape index: {}]
  %s2 = inlined_call_operand.vmem [shape: f32[1,128], index: 2, kind: output, shape index: {}]
  %s3 = sld [smem:[#allocation0]]
  $region22: #{_lambda_.209} parent=0
    _
  %s5 = ssub.s32 1, %s3
  %s6 = scalar_select 0, %s5, %s3
  // Predicated region
  $region2: #{_lambda_.209} parent=0 // pred_check
    _
  $region3: #{_lambda_.209} parent=0 // pred_check_branch
    %8 = sbr.rel (0) target = $region5
  $region4: #{_lambda_.209} parent=0 // pred_region
    _
  $region5: #{_lambda_.209} parent=0 // pred_fallthru
    _
  // Predicated region
  $region6: #{_lambda_.209} parent=0 // pred_check
    _
  $region7: #{_lambda_.209} parent=0 // pred_check_branch
    %10 = sbr.rel (0) target = $region9
  $region8: #{_lambda_.209} parent=0 // pred_region
    _
  $region9: #{_lambda_.209} parent=0 // pred_fallthru
    _
  %p11 = scmp.eq.s32.totalorder 0, 0
  // Predicated region
  $region10: #{_lambda_.209} parent=0 // pred_check
    %p12 = pneg %p11
  $region11: #{_lambda_.209} parent=0 // pred_check_branch
    %14 = sbr.rel (%p12) target = $region13
  $region12: #{_lambda_.209} parent=0 // pred_region
    %15 = vst [vmem:[%s2] sm:$0x1] 0.0
  $region13: #{_lambda_.209} parent=0 // pred_fallthru
    _
  %v16 = vld [vmem:[%s0] sm:$0xff]
  %v17 = vld [vmem:[%s0 + $0x8] sm:$0xff]
  %v18 = vld [vmem:[%s1] sm:$0xff]
  %v19 = vld [vmem:[%s1 + $0x8] sm:$0xff]
  %v20 = vmul.f32 %v18, 1.442695
  %v21 = vpow.pop %v20
  %v22 = vmul.f32 %v19, 1.442695
  %v23 = vpow.pop %v22
  %v24 = vmul.f32 %v16, %v16
  %v25 = vmul.f32 %v17, %v17
  %v26 = vadd.f32 %v21, %v24
  %v27 = vadd.f32 %v23, %v25
  %v28 = vsub.f32 %v26, %v18
  %v29 = vsub.f32 %v27, %v19
  %v30 = vsub.f32 %v28, 1.0
  %v31 = vsub.f32 %v29, 1.0
  %vm32 = vcmask 261120
  %v33 = vsel %vm32, %v30, 0.0
  %v34 = vsel %vm32, %v31, 0.0
  %v35 = vadd.f32 %v33, %v34
  %36 = vadd.xlane.f32.xlu0 %v35
  %v37 = vpop.xlane.xlu0 %36
  %v38 = vrot.slane %v37, 4
  %v39 = vadd.f32 %v37, %v38
  %v40 = vrot.slane %v39, 2
  %v41 = vadd.f32 %v39, %v40
  %v42 = vrot.slane %v41, 1
  %v43 = vadd.f32 %v41, %v42
  %s44 = vtos %v43
  %v45 = vld [vmem:[%s2] sm:$0x1]
  %v46 = vstv %s44
  %v47 = vadd.f32 %v45, %v46
  %48 = vst [vmem:[%s2] sm:$0x1] %v47
  // Predicated region
  $region14: #{_lambda_.209} parent=0 // pred_check
    _
  $region15: #{_lambda_.209} parent=0 // pred_check_branch
    %50 = sbr.rel (0) target = $region17
  $region16: #{_lambda_.209} parent=0 // pred_region
    _
  $region17: #{_lambda_.209} parent=0 // pred_fallthru
    _
  // Predicated region
  $region18: #{_lambda_.209} parent=0 // pred_check
    _
  $region19: #{_lambda_.209} parent=0 // pred_check_branch
    %52 = sbr.rel (0) target = $region21
  $region20: #{_lambda_.209} parent=0 // pred_region
    _
  $region21: #{_lambda_.209} parent=0 // pred_fallthru
    _

</llo_original>
